<compile_context>
chip_gen: v5e
topology: v5e:2x2
jax: 0.10.0
libtpu: 0.0.40
codegen_flags: <defaults>
</compile_context>

<pallas_src>
import jax
import jax.numpy as jnp
from jax.experimental import pallas as pl
from jax.experimental.pallas import tpu as pltpu

C1P = 8     # conv1 out-channels padded 6 -> 8 ; pooled act lane width = 14*8 = 112
C2P = 16    # conv2 out-channels (already 16) ; conv2 act lane width = 10*16 = 160
FCP = 128   # all FC feature dims padded to one full lane tile


# ---------------------------------------------------------------------------
# The single fused kernel (one grid step == one batch element)
# ---------------------------------------------------------------------------
def _net_kernel(xp_ref, w1_ref, b1_ref, w2_ref, b2_ref, w3_ref, b3_ref,
                w4_ref, b4_ref, w5_ref, b5_ref, out_ref):
    f32 = jnp.float32
    xall = xp_ref[...]                         # (4, 16, 48) parity-split input

    # ---- conv1 (5x5) + bias + ReLU + 2x2/2 max-pool --------------------------
    # Output parity (ph, pw) of the conv is computed from contiguous slices of
    # the parity-split input; the pool is then just a max over the 4 parities.
    p1 = None                                  # pooled activation, (14, 14*C1P)
    for ph in range(2):
        for pw in range(2):
            acc = jnp.zeros((14, 14 * C1P), f32)
            for kh in range(5):
                for kw in range(5):
                    pa = (ph + kh) % 2
                    pb = (pw + kw) % 2
                    oi = (ph + kh) // 2
                    oj = (pw + kw) // 2
                    lhs = xall[2 * pa + pb, oi:oi + 14, oj * 3:(oj + 14) * 3]
                    acc = acc + jnp.dot(lhs, w1_ref[kh * 5 + kw],
                                        preferred_element_type=f32)
            h = jnp.maximum(acc + b1_ref[...], 0.0)          # (14, 112)
            p1 = h if p1 is None else jnp.maximum(p1, h)

    # ---- conv2 (5x5) + bias + ReLU  (shift-and-accumulate over 25 taps) ------
    acc2 = jnp.zeros((10, 10 * C2P), f32)
    for kh in range(5):
        for kw in range(5):
            lhs = p1[kh:kh + 10, kw * C1P:(kw + 10) * C1P]   # (10, 80)
            acc2 = acc2 + jnp.dot(lhs, w2_ref[kh * 5 + kw],
                                  preferred_element_type=f32)
    h2 = jnp.maximum(acc2 + b2_ref[...], 0.0)                # (10, 160)

    # ---- 2x2/2 max-pool + NCHW flatten + fc3, fused as 25 tiny dots ----------
    acc3 = jnp.zeros((1, FCP), f32)
    for m in range(5):
        rmax = jnp.maximum(h2[2 * m:2 * m + 1, :], h2[2 * m + 1:2 * m + 2, :])
        for n in range(5):
            g = jnp.maximum(rmax[:, (2 * n) * C2P:(2 * n + 1) * C2P],
                            rmax[:, (2 * n + 1) * C2P:(2 * n + 2) * C2P])
            acc3 = acc3 + jnp.dot(g, w3_ref[m, n], preferred_element_type=f32)
    f3 = jnp.maximum(acc3 + b3_ref[...], 0.0)                # (1, 128)

    # ---- fc4 + ReLU, fc5  (lane-dense, 128-padded) ---------------------------
    f4 = jnp.maximum(jnp.dot(f3, w4_ref[...], preferred_element_type=f32)
                     + b4_ref[...], 0.0)                     # (1, 128)
    f5 = jnp.dot(f4, w5_ref[...], preferred_element_type=f32) + b5_ref[...]
    out_ref[...] = f5                                        # (1, 128)


# ---------------------------------------------------------------------------
# One-time host-side weight preparation (pre-transposed / pre-padded slabs)
# ---------------------------------------------------------------------------
def prepare_params(params):
    f32 = jnp.float32
    w1, b1 = params["w1"].astype(f32), params["b1"].astype(f32)
    w2, b2 = params["w2"].astype(f32), params["b2"].astype(f32)
    w3, b3 = params["w3"].astype(f32), params["b3"].astype(f32)
    w4, b4 = params["w4"].astype(f32), params["b4"].astype(f32)
    w5, b5 = params["w5"].astype(f32), params["b5"].astype(f32)

    eye14 = jnp.eye(14, dtype=f32)
    eye10 = jnp.eye(10, dtype=f32)

    # Per-tap block-diagonal weights for the 2-D "rows x (width*channels)" layout:
    #   conv1 tap: (14*3, 14*C1P)   conv2 tap: (10*C1P, 10*C2P)
    w1_taps, w2_taps = [], []
    for kh in range(5):
        for kw in range(5):
            t1 = jnp.zeros((3, C1P), f32).at[:, :6].set(w1[:, :, kh, kw].T)
            w1_taps.append(jnp.kron(eye14, t1))
            t2 = jnp.zeros((C1P, C2P), f32).at[:6, :].set(w2[:, :, kh, kw].T)
            w2_taps.append(jnp.kron(eye10, t2))
    w1s = jnp.stack(w1_taps)                                  # (25, 42, 112)
    w2s = jnp.stack(w2_taps)                                  # (25, 80, 160)

    b1r = jnp.tile(jnp.zeros((C1P,), f32).at[:6].set(b1), 14).reshape(1, 14 * C1P)
    b2r = jnp.tile(b2, 10).reshape(1, 10 * C2P)

    # fc3 weight as (h, w, c, out) blocks matching PyTorch's channel-major
    # flatten (feature index = c*25 + h*5 + w), output padded 120 -> 128.
    w3b = jnp.transpose(w3.reshape(120, 16, 5, 5), (2, 3, 1, 0))   # (5,5,16,120)
    w3b = jnp.pad(w3b, ((0, 0), (0, 0), (0, 0), (0, FCP - 120)))
    b3p = jnp.pad(b3, (0, FCP - 120)).reshape(1, FCP)

    w4p = jnp.zeros((FCP, FCP), f32).at[:120, :84].set(w4.T)
    b4p = jnp.pad(b4, (0, FCP - 84)).reshape(1, FCP)
    w5p = jnp.zeros((FCP, FCP), f32).at[:84, :10].set(w5.T)
    b5p = jnp.pad(b5, (0, FCP - 10)).reshape(1, FCP)

    return dict(w1s=w1s, b1r=b1r, w2s=w2s, b2r=b2r, w3b=w3b, b3p=b3p,
                w4p=w4p, b4p=b4p, w5p=w5p, b5p=b5p)


# ---------------------------------------------------------------------------
# Forward pass: one pallas_call for the whole network
# ---------------------------------------------------------------------------
def net_forward(x_nchw, prepped):
    B = x_nchw.shape[0]
    x = jnp.transpose(x_nchw, (0, 2, 3, 1)).astype(jnp.float32)   # (B,32,32,3)
    # One-time parity split (space-to-batch mod 2) + fold (W, C) into the lane
    # dim.  This is the only host-side layout glue; everything else is in-kernel.
    parts = [x[:, a::2, b::2, :].reshape(B, 16, 16 * 3)
             for a in range(2) for b in range(2)]
    xp = jnp.stack(parts, axis=1)                                 # (B, 4, 16, 48)

    const3 = lambda i: (0, 0, 0)
    const2 = lambda i: (0, 0)

    out = pl.pallas_call(
        _net_kernel,
        grid=(B,),
        out_shape=jax.ShapeDtypeStruct((B, 1, FCP), jnp.float32),
        in_specs=[
            pl.BlockSpec((None, 4, 16, 48), lambda i: (i, 0, 0, 0)),
            pl.BlockSpec((25, 42, 14 * C1P), const3),
            pl.BlockSpec((1, 14 * C1P), const2),
            pl.BlockSpec((25, 10 * C1P, 10 * C2P), const3),
            pl.BlockSpec((1, 10 * C2P), const2),
            pl.BlockSpec((5, 5, C2P, FCP), lambda i: (0, 0, 0, 0)),
            pl.BlockSpec((1, FCP), const2),
            pl.BlockSpec((FCP, FCP), const2),
            pl.BlockSpec((1, FCP), const2),
            pl.BlockSpec((FCP, FCP), const2),
            pl.BlockSpec((1, FCP), const2),
        ],
        out_specs=pl.BlockSpec((None, 1, FCP), lambda i: (i, 0, 0)),
        compiler_params=pltpu.CompilerParams(
            dimension_semantics=("parallel",)),
    )(xp, prepped["w1s"], prepped["b1r"], prepped["w2s"], prepped["b2r"],
      prepped["w3b"], prepped["b3p"], prepped["w4p"], prepped["b4p"],
      prepped["w5p"], prepped["b5p"])

    return out[:, 0, :10]                                         # (B, 10)


# ---------------------------------------------------------------------------
# Pure-JAX reference (for correctness check)
# ---------------------------------------------------------------------------
def net_forward_ref(x_nchw, params):
    x = jnp.transpose(x_nchw, (0, 2, 3, 1))
    dn = ("NHWC", "HWIO", "NHWC")

    def conv(x, w, b):
        w_hwio = jnp.transpose(w, (2, 3, 1, 0))
        y = jax.lax.conv_general_dilated(x, w_hwio, (1, 1), "VALID",
                                         dimension_numbers=dn)
        return jnp.maximum(y + b[None, None, None, :], 0.0)

    def pool(x):
        B, H, W, C = x.shape
        return jnp.max(x.reshape(B, H // 2, 2, W // 2, 2, C), axis=(2, 4))

    x = pool(conv(x, params["w1"], params["b1"]))
    x = pool(conv(x, params["w2"], params["b2"]))
    B = x.shape[0]
    x = jnp.transpose(x, (0, 3, 1, 2)).reshape(B, 400)
    x = jnp.maximum(x @ params["w3"].T + params["b3"], 0.0)
    x = jnp.maximum(x @ params["w4"].T + params["b4"], 0.0)
    return x @ params["w5"].T + params["b5"]


# ---------------------------------------------------------------------------
# Deterministic parameter init (PyTorch shapes from Net.__init__)
# ---------------------------------------------------------------------------
def init_params(key):
    ks = jax.random.split(key, 10)
    f32 = jnp.float32
    return {
        "w1": jax.random.normal(ks[0], (6, 3, 5, 5), f32) * 0.1,
        "b1": jax.random.normal(ks[1], (6,), f32) * 0.1,
        "w2": jax.random.normal(ks[2], (16, 6, 5, 5), f32) * 0.1,
        "b2": jax.random.normal(ks[3], (16,), f32) * 0.1,
        "w3": jax.random.normal(ks[4], (120, 400), f32) * 0.05,
        "b3": jax.random.normal(ks[5], (120,), f32) * 0.05,
        "w4": jax.random.normal(ks[6], (84, 120), f32) * 0.05,
        "b4": jax.random.normal(ks[7], (84,), f32) * 0.05,
        "w5": jax.random.normal(ks[8], (10, 84), f32) * 0.05,
        "b5": jax.random.normal(ks[9], (10,), f32) * 0.05,
    }


if __name__ == "__main__":
    key = jax.random.PRNGKey(0)
    k_x, k_p = jax.random.split(key)
    # Input must be (B, 3, 32, 32) so that the flatten produces 400 features.
    x = jax.random.normal(k_x, (2, 3, 32, 32), jnp.float32)
    params = init_params(k_p)

    prepped = prepare_params(params)          # one-time weight re-layout (host)
    out = jax.block_until_ready(net_forward(x, prepped))
    assert out.shape == (2, 10)

    ref = jax.block_until_ready(net_forward_ref(x, params))
    assert jnp.allclose(out, ref, atol=1e-3, rtol=1e-3), "mismatch vs reference"

    print("KERNEL_OK")
</pallas_src>

<mosaic_0001>
module attributes {stable_mosaic.version = 11 : i64} {
  func.func @_net_kernel(%arg0: i32, %arg1: memref<1x4x16x48xf32, #tpu.memory_space<vmem>>, %arg2: memref<25x42x112xf32, #tpu.memory_space<vmem>>, %arg3: memref<1x112xf32, #tpu.memory_space<vmem>>, %arg4: memref<25x80x160xf32, #tpu.memory_space<vmem>>, %arg5: memref<1x160xf32, #tpu.memory_space<vmem>>, %arg6: memref<5x5x16x128xf32, #tpu.memory_space<vmem>>, %arg7: memref<1x128xf32, #tpu.memory_space<vmem>>, %arg8: memref<128x128xf32, #tpu.memory_space<vmem>>, %arg9: memref<1x128xf32, #tpu.memory_space<vmem>>, %arg10: memref<128x128xf32, #tpu.memory_space<vmem>>, %arg11: memref<1x128xf32, #tpu.memory_space<vmem>>, %arg12: memref<1x1x128xf32, #tpu.memory_space<vmem>>) attributes {dimension_semantics = [#tpu.dimension_semantics<parallel>], iteration_bounds = array<i64: 2>, scalar_prefetch = 0 : i64, scratch_operands = 0 : i64, tpu.core_type = #tpu.core_type<tc>, window_params = [{transform_indices = @transform_0, window_bounds = array<i64: 1, 4, 16, 48>}, {pipeline_mode = #tpu.pipeline_mode<synchronous>, transform_indices = @transform_1, window_bounds = array<i64: 25, 42, 112>}, {pipeline_mode = #tpu.pipeline_mode<synchronous>, transform_indices = @transform_2, window_bounds = array<i64: 1, 112>}, {pipeline_mode = #tpu.pipeline_mode<synchronous>, transform_indices = @transform_3, window_bounds = array<i64: 25, 80, 160>}, {pipeline_mode = #tpu.pipeline_mode<synchronous>, transform_indices = @transform_4, window_bounds = array<i64: 1, 160>}, {pipeline_mode = #tpu.pipeline_mode<synchronous>, transform_indices = @transform_5, window_bounds = array<i64: 5, 5, 16, 128>}, {pipeline_mode = #tpu.pipeline_mode<synchronous>, transform_indices = @transform_6, window_bounds = array<i64: 1, 128>}, {pipeline_mode = #tpu.pipeline_mode<synchronous>, transform_indices = @transform_7, window_bounds = array<i64: 128, 128>}, {pipeline_mode = #tpu.pipeline_mode<synchronous>, transform_indices = @transform_8, window_bounds = array<i64: 1, 128>}, {pipeline_mode = #tpu.pipeline_mode<synchronous>, transform_indices = @transform_9, window_bounds = array<i64: 128, 128>}, {pipeline_mode = #tpu.pipeline_mode<synchronous>, transform_indices = @transform_10, window_bounds = array<i64: 1, 128>}, {transform_indices = @transform_11, window_bounds = array<i64: 1, 1, 128>}]} {
    %c0 = arith.constant 0 : index
    %c0_0 = arith.constant 0 : index
    %c0_1 = arith.constant 0 : index
    %c0_2 = arith.constant 0 : index
    %0 = vector.load %arg1[%c0, %c0_0, %c0_1, %c0_2] : memref<1x4x16x48xf32, #tpu.memory_space<vmem>>, vector<1x4x16x48xf32>
    %1 = vector.shape_cast %0 : vector<1x4x16x48xf32> to vector<4x16x48xf32>
    %cst = arith.constant 0.000000e+00 : f32
    %2 = vector.broadcast %cst : f32 to vector<14x112xf32>
    %3 = vector.extract_strided_slice %1 {offsets = [0, 0, 0], sizes = [1, 14, 42], strides = [1, 1, 1]} : vector<4x16x48xf32> to vector<1x14x42xf32>
    %4 = vector.shape_cast %3 : vector<1x14x42xf32> to vector<14x42xf32>
    %c0_3 = arith.constant 0 : index
    %c0_4 = arith.constant 0 : index
    %c0_5 = arith.constant 0 : index
    %5 = vector.load %arg2[%c0_3, %c0_4, %c0_5] : memref<25x42x112xf32, #tpu.memory_space<vmem>>, vector<1x42x112xf32>
    %6 = vector.shape_cast %5 : vector<1x42x112xf32> to vector<42x112xf32>
    %cst_6 = arith.constant dense<0.000000e+00> : vector<14x112xf32>
    %7 = tpu.matmul %4, %6, %cst_6 {dimension_numbers = #tpu.dot_dimension_numbers<[1], [0], [0], [1], [0, 0, 1, 1], [], []>} : vector<14x42xf32>, vector<42x112xf32>, vector<14x112xf32> -> vector<14x112xf32>
    %8 = arith.addf %2, %7 : vector<14x112xf32>
    %9 = vector.extract_strided_slice %1 {offsets = [1, 0, 0], sizes = [1, 14, 42], strides = [1, 1, 1]} : vector<4x16x48xf32> to vector<1x14x42xf32>
    %10 = vector.shape_cast %9 : vector<1x14x42xf32> to vector<14x42xf32>
    %c1 = arith.constant 1 : index
    %c0_7 = arith.constant 0 : index
    %c0_8 = arith.constant 0 : index
    %11 = vector.load %arg2[%c1, %c0_7, %c0_8] : memref<25x42x112xf32, #tpu.memory_space<vmem>>, vector<1x42x112xf32>
    %12 = vector.shape_cast %11 : vector<1x42x112xf32> to vector<42x112xf32>
    %cst_9 = arith.constant dense<0.000000e+00> : vector<14x112xf32>
    %13 = tpu.matmul %10, %12, %cst_9 {dimension_numbers = #tpu.dot_dimension_numbers<[1], [0], [0], [1], [0, 0, 1, 1], [], []>} : vector<14x42xf32>, vector<42x112xf32>, vector<14x112xf32> -> vector<14x112xf32>
    %14 = arith.addf %8, %13 : vector<14x112xf32>
    %15 = vector.extract_strided_slice %1 {offsets = [0, 0, 3], sizes = [1, 14, 42], strides = [1, 1, 1]} : vector<4x16x48xf32> to vector<1x14x42xf32>
    %16 = vector.shape_cast %15 : vector<1x14x42xf32> to vector<14x42xf32>
    %c2 = arith.constant 2 : index
    %c0_10 = arith.constant 0 : index
    %c0_11 = arith.constant 0 : index
    %17 = vector.load %arg2[%c2, %c0_10, %c0_11] : memref<25x42x112xf32, #tpu.memory_space<vmem>>, vector<1x42x112xf32>
    %18 = vector.shape_cast %17 : vector<1x42x112xf32> to vector<42x112xf32>
    %cst_12 = arith.constant dense<0.000000e+00> : vector<14x112xf32>
    %19 = tpu.matmul %16, %18, %cst_12 {dimension_numbers = #tpu.dot_dimension_numbers<[1], [0], [0], [1], [0, 0, 1, 1], [], []>} : vector<14x42xf32>, vector<42x112xf32>, vector<14x112xf32> -> vector<14x112xf32>
    %20 = arith.addf %14, %19 : vector<14x112xf32>
    %21 = vector.extract_strided_slice %1 {offsets = [1, 0, 3], sizes = [1, 14, 42], strides = [1, 1, 1]} : vector<4x16x48xf32> to vector<1x14x42xf32>
    %22 = vector.shape_cast %21 : vector<1x14x42xf32> to vector<14x42xf32>
    %c3 = arith.constant 3 : index
    %c0_13 = arith.constant 0 : index
    %c0_14 = arith.constant 0 : index
    %23 = vector.load %arg2[%c3, %c0_13, %c0_14] : memref<25x42x112xf32, #tpu.memory_space<vmem>>, vector<1x42x112xf32>
    %24 = vector.shape_cast %23 : vector<1x42x112xf32> to vector<42x112xf32>
    %cst_15 = arith.constant dense<0.000000e+00> : vector<14x112xf32>
    %25 = tpu.matmul %22, %24, %cst_15 {dimension_numbers = #tpu.dot_dimension_numbers<[1], [0], [0], [1], [0, 0, 1, 1], [], []>} : vector<14x42xf32>, vector<42x112xf32>, vector<14x112xf32> -> vector<14x112xf32>
    %26 = arith.addf %20, %25 : vector<14x112xf32>
    %27 = vector.extract_strided_slice %1 {offsets = [0, 0, 6], sizes = [1, 14, 42], strides = [1, 1, 1]} : vector<4x16x48xf32> to vector<1x14x42xf32>
    %28 = vector.shape_cast %27 : vector<1x14x42xf32> to vector<14x42xf32>
    %c4 = arith.constant 4 : index
    %c0_16 = arith.constant 0 : index
    %c0_17 = arith.constant 0 : index
    %29 = vector.load %arg2[%c4, %c0_16, %c0_17] : memref<25x42x112xf32, #tpu.memory_space<vmem>>, vector<1x42x112xf32>
    %30 = vector.shape_cast %29 : vector<1x42x112xf32> to vector<42x112xf32>
    %cst_18 = arith.constant dense<0.000000e+00> : vector<14x112xf32>
    %31 = tpu.matmul %28, %30, %cst_18 {dimension_numbers = #tpu.dot_dimension_numbers<[1], [0], [0], [1], [0, 0, 1, 1], [], []>} : vector<14x42xf32>, vector<42x112xf32>, vector<14x112xf32> -> vector<14x112xf32>
    %32 = arith.addf %26, %31 : vector<14x112xf32>
    %33 = vector.extract_strided_slice %1 {offsets = [2, 0, 0], sizes = [1, 14, 42], strides = [1, 1, 1]} : vector<4x16x48xf32> to vector<1x14x42xf32>
    %34 = vector.shape_cast %33 : vector<1x14x42xf32> to vector<14x42xf32>
    %c5 = arith.constant 5 : index
    %c0_19 = arith.constant 0 : index
    %c0_20 = arith.constant 0 : index
    %35 = vector.load %arg2[%c5, %c0_19, %c0_20] : memref<25x42x112xf32, #tpu.memory_space<vmem>>, vector<1x42x112xf32>
    %36 = vector.shape_cast %35 : vector<1x42x112xf32> to vector<42x112xf32>
    %cst_21 = arith.constant dense<0.000000e+00> : vector<14x112xf32>
    %37 = tpu.matmul %34, %36, %cst_21 {dimension_numbers = #tpu.dot_dimension_numbers<[1], [0], [0], [1], [0, 0, 1, 1], [], []>} : vector<14x42xf32>, vector<42x112xf32>, vector<14x112xf32> -> vector<14x112xf32>
    %38 = arith.addf %32, %37 : vector<14x112xf32>
    %39 = vector.extract_strided_slice %1 {offsets = [3, 0, 0], sizes = [1, 14, 42], strides = [1, 1, 1]} : vector<4x16x48xf32> to vector<1x14x42xf32>
    %40 = vector.shape_cast %39 : vector<1x14x42xf32> to vector<14x42xf32>
    %c6 = arith.constant 6 : index
    %c0_22 = arith.constant 0 : index
    %c0_23 = arith.constant 0 : index
    %41 = vector.load %arg2[%c6, %c0_22, %c0_23] : memref<25x42x112xf32, #tpu.memory_space<vmem>>, vector<1x42x112xf32>
    %42 = vector.shape_cast %41 : vector<1x42x112xf32> to vector<42x112xf32>
    %cst_24 = arith.constant dense<0.000000e+00> : vector<14x112xf32>
    %43 = tpu.matmul %40, %42, %cst_24 {dimension_numbers = #tpu.dot_dimension_numbers<[1], [0], [0], [1], [0, 0, 1, 1], [], []>} : vector<14x42xf32>, vector<42x112xf32>, vector<14x112xf32> -> vector<14x112xf32>
    %44 = arith.addf %38, %43 : vector<14x112xf32>
    %45 = vector.extract_strided_slice %1 {offsets = [2, 0, 3], sizes = [1, 14, 42], strides = [1, 1, 1]} : vector<4x16x48xf32> to vector<1x14x42xf32>
    %46 = vector.shape_cast %45 : vector<1x14x42xf32> to vector<14x42xf32>
    %c7 = arith.constant 7 : index
    %c0_25 = arith.constant 0 : index
    %c0_26 = arith.constant 0 : index
    %47 = vector.load %arg2[%c7, %c0_25, %c0_26] : memref<25x42x112xf32, #tpu.memory_space<vmem>>, vector<1x42x112xf32>
    %48 = vector.shape_cast %47 : vector<1x42x112xf32> to vector<42x112xf32>
    %cst_27 = arith.constant dense<0.000000e+00> : vector<14x112xf32>
    %49 = tpu.matmul %46, %48, %cst_27 {dimension_numbers = #tpu.dot_dimension_numbers<[1], [0], [0], [1], [0, 0, 1, 1], [], []>} : vector<14x42xf32>, vector<42x112xf32>, vector<14x112xf32> -> vector<14x112xf32>
    %50 = arith.addf %44, %49 : vector<14x112xf32>
    %51 = vector.extract_strided_slice %1 {offsets = [3, 0, 3], sizes = [1, 14, 42], strides = [1, 1, 1]} : vector<4x16x48xf32> to vector<1x14x42xf32>
    %52 = vector.shape_cast %51 : vector<1x14x42xf32> to vector<14x42xf32>
    %c8 = arith.constant 8 : index
    %c0_28 = arith.constant 0 : index
    %c0_29 = arith.constant 0 : index
    %53 = vector.load %arg2[%c8, %c0_28, %c0_29] : memref<25x42x112xf32, #tpu.memory_space<vmem>>, vector<1x42x112xf32>
    %54 = vector.shape_cast %53 : vector<1x42x112xf32> to vector<42x112xf32>
    %cst_30 = arith.constant dense<0.000000e+00> : vector<14x112xf32>
    %55 = tpu.matmul %52, %54, %cst_30 {dimension_numbers = #tpu.dot_dimension_numbers<[1], [0], [0], [1], [0, 0, 1, 1], [], []>} : vector<14x42xf32>, vector<42x112xf32>, vector<14x112xf32> -> vector<14x112xf32>
    %56 = arith.addf %50, %55 : vector<14x112xf32>
    %57 = vector.extract_strided_slice %1 {offsets = [2, 0, 6], sizes = [1, 14, 42], strides = [1, 1, 1]} : vector<4x16x48xf32> to vector<1x14x42xf32>
    %58 = vector.shape_cast %57 : vector<1x14x42xf32> to vector<14x42xf32>
    %c9 = arith.constant 9 : index
    %c0_31 = arith.constant 0 : index
    %c0_32 = arith.constant 0 : index
    %59 = vector.load %arg2[%c9, %c0_31, %c0_32] : memref<25x42x112xf32, #tpu.memory_space<vmem>>, vector<1x42x112xf32>
    %60 = vector.shape_cast %59 : vector<1x42x112xf32> to vector<42x112xf32>
    %cst_33 = arith.constant dense<0.000000e+00> : vector<14x112xf32>
    %61 = tpu.matmul %58, %60, %cst_33 {dimension_numbers = #tpu.dot_dimension_numbers<[1], [0], [0], [1], [0, 0, 1, 1], [], []>} : vector<14x42xf32>, vector<42x112xf32>, vector<14x112xf32> -> vector<14x112xf32>
    %62 = arith.addf %56, %61 : vector<14x112xf32>
    %63 = vector.extract_strided_slice %1 {offsets = [0, 1, 0], sizes = [1, 14, 42], strides = [1, 1, 1]} : vector<4x16x48xf32> to vector<1x14x42xf32>
    %64 = vector.shape_cast %63 : vector<1x14x42xf32> to vector<14x42xf32>
    %c10 = arith.constant 10 : index
    %c0_34 = arith.constant 0 : index
    %c0_35 = arith.constant 0 : index
    %65 = vector.load %arg2[%c10, %c0_34, %c0_35] : memref<25x42x112xf32, #tpu.memory_space<vmem>>, vector<1x42x112xf32>
    %66 = vector.shape_cast %65 : vector<1x42x112xf32> to vector<42x112xf32>
    %cst_36 = arith.constant dense<0.000000e+00> : vector<14x112xf32>
    %67 = tpu.matmul %64, %66, %cst_36 {dimension_numbers = #tpu.dot_dimension_numbers<[1], [0], [0], [1], [0, 0, 1, 1], [], []>} : vector<14x42xf32>, vector<42x112xf32>, vector<14x112xf32> -> vector<14x112xf32>
    %68 = arith.addf %62, %67 : vector<14x112xf32>
    %69 = vector.extract_strided_slice %1 {offsets = [1, 1, 0], sizes = [1, 14, 42], strides = [1, 1, 1]} : vector<4x16x48xf32> to vector<1x14x42xf32>
    %70 = vector.shape_cast %69 : vector<1x14x42xf32> to vector<14x42xf32>
    %c11 = arith.constant 11 : index
    %c0_37 = arith.constant 0 : index
    %c0_38 = arith.constant 0 : index
    %71 = vector.load %arg2[%c11, %c0_37, %c0_38] : memref<25x42x112xf32, #tpu.memory_space<vmem>>, vector<1x42x112xf32>
    %72 = vector.shape_cast %71 : vector<1x42x112xf32> to vector<42x112xf32>
    %cst_39 = arith.constant dense<0.000000e+00> : vector<14x112xf32>
    %73 = tpu.matmul %70, %72, %cst_39 {dimension_numbers = #tpu.dot_dimension_numbers<[1], [0], [0], [1], [0, 0, 1, 1], [], []>} : vector<14x42xf32>, vector<42x112xf32>, vector<14x112xf32> -> vector<14x112xf32>
    %74 = arith.addf %68, %73 : vector<14x112xf32>
    %75 = vector.extract_strided_slice %1 {offsets = [0, 1, 3], sizes = [1, 14, 42], strides = [1, 1, 1]} : vector<4x16x48xf32> to vector<1x14x42xf32>
    %76 = vector.shape_cast %75 : vector<1x14x42xf32> to vector<14x42xf32>
    %c12 = arith.constant 12 : index
    %c0_40 = arith.constant 0 : index
    %c0_41 = arith.constant 0 : index
    %77 = vector.load %arg2[%c12, %c0_40, %c0_41] : memref<25x42x112xf32, #tpu.memory_space<vmem>>, vector<1x42x112xf32>
    %78 = vector.shape_cast %77 : vector<1x42x112xf32> to vector<42x112xf32>
    %cst_42 = arith.constant dense<0.000000e+00> : vector<14x112xf32>
    %79 = tpu.matmul %76, %78, %cst_42 {dimension_numbers = #tpu.dot_dimension_numbers<[1], [0], [0], [1], [0, 0, 1, 1], [], []>} : vector<14x42xf32>, vector<42x112xf32>, vector<14x112xf32> -> vector<14x112xf32>
    %80 = arith.addf %74, %79 : vector<14x112xf32>
    %81 = vector.extract_strided_slice %1 {offsets = [1, 1, 3], sizes = [1, 14, 42], strides = [1, 1, 1]} : vector<4x16x48xf32> to vector<1x14x42xf32>
    %82 = vector.shape_cast %81 : vector<1x14x42xf32> to vector<14x42xf32>
    %c13 = arith.constant 13 : index
    %c0_43 = arith.constant 0 : index
    %c0_44 = arith.constant 0 : index
    %83 = vector.load %arg2[%c13, %c0_43, %c0_44] : memref<25x42x112xf32, #tpu.memory_space<vmem>>, vector<1x42x112xf32>
    %84 = vector.shape_cast %83 : vector<1x42x112xf32> to vector<42x112xf32>
    %cst_45 = arith.constant dense<0.000000e+00> : vector<14x112xf32>
    %85 = tpu.matmul %82, %84, %cst_45 {dimension_numbers = #tpu.dot_dimension_numbers<[1], [0], [0], [1], [0, 0, 1, 1], [], []>} : vector<14x42xf32>, vector<42x112xf32>, vector<14x112xf32> -> vector<14x112xf32>
    %86 = arith.addf %80, %85 : vector<14x112xf32>
    %87 = vector.extract_strided_slice %1 {offsets = [0, 1, 6], sizes = [1, 14, 42], strides = [1, 1, 1]} : vector<4x16x48xf32> to vector<1x14x42xf32>
    %88 = vector.shape_cast %87 : vector<1x14x42xf32> to vector<14x42xf32>
    %c14 = arith.constant 14 : index
    %c0_46 = arith.constant 0 : index
    %c0_47 = arith.constant 0 : index
    %89 = vector.load %arg2[%c14, %c0_46, %c0_47] : memref<25x42x112xf32, #tpu.memory_space<vmem>>, vector<1x42x112xf32>
    %90 = vector.shape_cast %89 : vector<1x42x112xf32> to vector<42x112xf32>
    %cst_48 = arith.constant dense<0.000000e+00> : vector<14x112xf32>
    %91 = tpu.matmul %88, %90, %cst_48 {dimension_numbers = #tpu.dot_dimension_numbers<[1], [0], [0], [1], [0, 0, 1, 1], [], []>} : vector<14x42xf32>, vector<42x112xf32>, vector<14x112xf32> -> vector<14x112xf32>
    %92 = arith.addf %86, %91 : vector<14x112xf32>
    %93 = vector.extract_strided_slice %1 {offsets = [2, 1, 0], sizes = [1, 14, 42], strides = [1, 1, 1]} : vector<4x16x48xf32> to vector<1x14x42xf32>
    %94 = vector.shape_cast %93 : vector<1x14x42xf32> to vector<14x42xf32>
    %c15 = arith.constant 15 : index
    %c0_49 = arith.constant 0 : index
    %c0_50 = arith.constant 0 : index
    %95 = vector.load %arg2[%c15, %c0_49, %c0_50] : memref<25x42x112xf32, #tpu.memory_space<vmem>>, vector<1x42x112xf32>
    %96 = vector.shape_cast %95 : vector<1x42x112xf32> to vector<42x112xf32>
    %cst_51 = arith.constant dense<0.000000e+00> : vector<14x112xf32>
    %97 = tpu.matmul %94, %96, %cst_51 {dimension_numbers = #tpu.dot_dimension_numbers<[1], [0], [0], [1], [0, 0, 1, 1], [], []>} : vector<14x42xf32>, vector<42x112xf32>, vector<14x112xf32> -> vector<14x112xf32>
    %98 = arith.addf %92, %97 : vector<14x112xf32>
    %99 = vector.extract_strided_slice %1 {offsets = [3, 1, 0], sizes = [1, 14, 42], strides = [1, 1, 1]} : vector<4x16x48xf32> to vector<1x14x42xf32>
    %100 = vector.shape_cast %99 : vector<1x14x42xf32> to vector<14x42xf32>
    %c16 = arith.constant 16 : index
    %c0_52 = arith.constant 0 : index
    %c0_53 = arith.constant 0 : index
    %101 = vector.load %arg2[%c16, %c0_52, %c0_53] : memref<25x42x112xf32, #tpu.memory_space<vmem>>, vector<1x42x112xf32>
    %102 = vector.shape_cast %101 : vector<1x42x112xf32> to vector<42x112xf32>
    %cst_54 = arith.constant dense<0.000000e+00> : vector<14x112xf32>
    %103 = tpu.matmul %100, %102, %cst_54 {dimension_numbers = #tpu.dot_dimension_numbers<[1], [0], [0], [1], [0, 0, 1, 1], [], []>} : vector<14x42xf32>, vector<42x112xf32>, vector<14x112xf32> -> vector<14x112xf32>
    %104 = arith.addf %98, %103 : vector<14x112xf32>
    %105 = vector.extract_strided_slice %1 {offsets = [2, 1, 3], sizes = [1, 14, 42], strides = [1, 1, 1]} : vector<4x16x48xf32> to vector<1x14x42xf32>
    %106 = vector.shape_cast %105 : vector<1x14x42xf32> to vector<14x42xf32>
    %c17 = arith.constant 17 : index
    %c0_55 = arith.constant 0 : index
    %c0_56 = arith.constant 0 : index
    %107 = vector.load %arg2[%c17, %c0_55, %c0_56] : memref<25x42x112xf32, #tpu.memory_space<vmem>>, vector<1x42x112xf32>
    %108 = vector.shape_cast %107 : vector<1x42x112xf32> to vector<42x112xf32>
    %cst_57 = arith.constant dense<0.000000e+00> : vector<14x112xf32>
    %109 = tpu.matmul %106, %108, %cst_57 {dimension_numbers = #tpu.dot_dimension_numbers<[1], [0], [0], [1], [0, 0, 1, 1], [], []>} : vector<14x42xf32>, vector<42x112xf32>, vector<14x112xf32> -> vector<14x112xf32>
    %110 = arith.addf %104, %109 : vector<14x112xf32>
    %111 = vector.extract_strided_slice %1 {offsets = [3, 1, 3], sizes = [1, 14, 42], strides = [1, 1, 1]} : vector<4x16x48xf32> to vector<1x14x42xf32>
    %112 = vector.shape_cast %111 : vector<1x14x42xf32> to vector<14x42xf32>
    %c18 = arith.constant 18 : index
    %c0_58 = arith.constant 0 : index
    %c0_59 = arith.constant 0 : index
    %113 = vector.load %arg2[%c18, %c0_58, %c0_59] : memref<25x42x112xf32, #tpu.memory_space<vmem>>, vector<1x42x112xf32>
    %114 = vector.shape_cast %113 : vector<1x42x112xf32> to vector<42x112xf32>
    %cst_60 = arith.constant dense<0.000000e+00> : vector<14x112xf32>
    %115 = tpu.matmul %112, %114, %cst_60 {dimension_numbers = #tpu.dot_dimension_numbers<[1], [0], [0], [1], [0, 0, 1, 1], [], []>} : vector<14x42xf32>, vector<42x112xf32>, vector<14x112xf32> -> vector<14x112xf32>
    %116 = arith.addf %110, %115 : vector<14x112xf32>
    %117 = vector.extract_strided_slice %1 {offsets = [2, 1, 6], sizes = [1, 14, 42], strides = [1, 1, 1]} : vector<4x16x48xf32> to vector<1x14x42xf32>
    %118 = vector.shape_cast %117 : vector<1x14x42xf32> to vector<14x42xf32>
    %c19 = arith.constant 19 : index
    %c0_61 = arith.constant 0 : index
    %c0_62 = arith.constant 0 : index
    %119 = vector.load %arg2[%c19, %c0_61, %c0_62] : memref<25x42x112xf32, #tpu.memory_space<vmem>>, vector<1x42x112xf32>
    %120 = vector.shape_cast %119 : vector<1x42x112xf32> to vector<42x112xf32>
    %cst_63 = arith.constant dense<0.000000e+00> : vector<14x112xf32>
    %121 = tpu.matmul %118, %120, %cst_63 {dimension_numbers = #tpu.dot_dimension_numbers<[1], [0], [0], [1], [0, 0, 1, 1], [], []>} : vector<14x42xf32>, vector<42x112xf32>, vector<14x112xf32> -> vector<14x112xf32>
    %122 = arith.addf %116, %121 : vector<14x112xf32>
    %123 = vector.extract_strided_slice %1 {offsets = [0, 2, 0], sizes = [1, 14, 42], strides = [1, 1, 1]} : vector<4x16x48xf32> to vector<1x14x42xf32>
    %124 = vector.shape_cast %123 : vector<1x14x42xf32> to vector<14x42xf32>
    %c20 = arith.constant 20 : index
    %c0_64 = arith.constant 0 : index
    %c0_65 = arith.constant 0 : index
    %125 = vector.load %arg2[%c20, %c0_64, %c0_65] : memref<25x42x112xf32, #tpu.memory_space<vmem>>, vector<1x42x112xf32>
    %126 = vector.shape_cast %125 : vector<1x42x112xf32> to vector<42x112xf32>
    %cst_66 = arith.constant dense<0.000000e+00> : vector<14x112xf32>
    %127 = tpu.matmul %124, %126, %cst_66 {dimension_numbers = #tpu.dot_dimension_numbers<[1], [0], [0], [1], [0, 0, 1, 1], [], []>} : vector<14x42xf32>, vector<42x112xf32>, vector<14x112xf32> -> vector<14x112xf32>
    %128 = arith.addf %122, %127 : vector<14x112xf32>
    %129 = vector.extract_strided_slice %1 {offsets = [1, 2, 0], sizes = [1, 14, 42], strides = [1, 1, 1]} : vector<4x16x48xf32> to vector<1x14x42xf32>
    %130 = vector.shape_cast %129 : vector<1x14x42xf32> to vector<14x42xf32>
    %c21 = arith.constant 21 : index
    %c0_67 = arith.constant 0 : index
    %c0_68 = arith.constant 0 : index
    %131 = vector.load %arg2[%c21, %c0_67, %c0_68] : memref<25x42x112xf32, #tpu.memory_space<vmem>>, vector<1x42x112xf32>
    %132 = vector.shape_cast %131 : vector<1x42x112xf32> to vector<42x112xf32>
    %cst_69 = arith.constant dense<0.000000e+00> : vector<14x112xf32>
    %133 = tpu.matmul %130, %132, %cst_69 {dimension_numbers = #tpu.dot_dimension_numbers<[1], [0], [0], [1], [0, 0, 1, 1], [], []>} : vector<14x42xf32>, vector<42x112xf32>, vector<14x112xf32> -> vector<14x112xf32>
    %134 = arith.addf %128, %133 : vector<14x112xf32>
    %135 = vector.extract_strided_slice %1 {offsets = [0, 2, 3], sizes = [1, 14, 42], strides = [1, 1, 1]} : vector<4x16x48xf32> to vector<1x14x42xf32>
    %136 = vector.shape_cast %135 : vector<1x14x42xf32> to vector<14x42xf32>
    %c22 = arith.constant 22 : index
    %c0_70 = arith.constant 0 : index
    %c0_71 = arith.constant 0 : index
    %137 = vector.load %arg2[%c22, %c0_70, %c0_71] : memref<25x42x112xf32, #tpu.memory_space<vmem>>, vector<1x42x112xf32>
    %138 = vector.shape_cast %137 : vector<1x42x112xf32> to vector<42x112xf32>
    %cst_72 = arith.constant dense<0.000000e+00> : vector<14x112xf32>
    %139 = tpu.matmul %136, %138, %cst_72 {dimension_numbers = #tpu.dot_dimension_numbers<[1], [0], [0], [1], [0, 0, 1, 1], [], []>} : vector<14x42xf32>, vector<42x112xf32>, vector<14x112xf32> -> vector<14x112xf32>
    %140 = arith.addf %134, %139 : vector<14x112xf32>
    %141 = vector.extract_strided_slice %1 {offsets = [1, 2, 3], sizes = [1, 14, 42], strides = [1, 1, 1]} : vector<4x16x48xf32> to vector<1x14x42xf32>
    %142 = vector.shape_cast %141 : vector<1x14x42xf32> to vector<14x42xf32>
    %c23 = arith.constant 23 : index
    %c0_73 = arith.constant 0 : index
    %c0_74 = arith.constant 0 : index
    %143 = vector.load %arg2[%c23, %c0_73, %c0_74] : memref<25x42x112xf32, #tpu.memory_space<vmem>>, vector<1x42x112xf32>
    %144 = vector.shape_cast %143 : vector<1x42x112xf32> to vector<42x112xf32>
    %cst_75 = arith.constant dense<0.000000e+00> : vector<14x112xf32>
    %145 = tpu.matmul %142, %144, %cst_75 {dimension_numbers = #tpu.dot_dimension_numbers<[1], [0], [0], [1], [0, 0, 1, 1], [], []>} : vector<14x42xf32>, vector<42x112xf32>, vector<14x112xf32> -> vector<14x112xf32>
    %146 = arith.addf %140, %145 : vector<14x112xf32>
    %147 = vector.extract_strided_slice %1 {offsets = [0, 2, 6], sizes = [1, 14, 42], strides = [1, 1, 1]} : vector<4x16x48xf32> to vector<1x14x42xf32>
    %148 = vector.shape_cast %147 : vector<1x14x42xf32> to vector<14x42xf32>
    %c24 = arith.constant 24 : index
    %c0_76 = arith.constant 0 : index
    %c0_77 = arith.constant 0 : index
    %149 = vector.load %arg2[%c24, %c0_76, %c0_77] : memref<25x42x112xf32, #tpu.memory_space<vmem>>, vector<1x42x112xf32>
    %150 = vector.shape_cast %149 : vector<1x42x112xf32> to vector<42x112xf32>
    %cst_78 = arith.constant dense<0.000000e+00> : vector<14x112xf32>
    %151 = tpu.matmul %148, %150, %cst_78 {dimension_numbers = #tpu.dot_dimension_numbers<[1], [0], [0], [1], [0, 0, 1, 1], [], []>} : vector<14x42xf32>, vector<42x112xf32>, vector<14x112xf32> -> vector<14x112xf32>
    %152 = arith.addf %146, %151 : vector<14x112xf32>
    %c0_79 = arith.constant 0 : index
    %c0_80 = arith.constant 0 : index
    %153 = vector.load %arg3[%c0_79, %c0_80] : memref<1x112xf32, #tpu.memory_space<vmem>>, vector<1x112xf32>
    %154 = vector.broadcast %153 : vector<1x112xf32> to vector<14x112xf32>
    %155 = arith.addf %152, %154 : vector<14x112xf32>
    %cst_81 = arith.constant 0.000000e+00 : f32
    %156 = vector.broadcast %cst_81 : f32 to vector<14x112xf32>
    %157 = arith.maximumf %155, %156 : vector<14x112xf32>
    %cst_82 = arith.constant 0.000000e+00 : f32
    %158 = vector.broadcast %cst_82 : f32 to vector<14x112xf32>
    %159 = vector.extract_strided_slice %1 {offsets = [1, 0, 0], sizes = [1, 14, 42], strides = [1, 1, 1]} : vector<4x16x48xf32> to vector<1x14x42xf32>
    %160 = vector.shape_cast %159 : vector<1x14x42xf32> to vector<14x42xf32>
    %c0_83 = arith.constant 0 : index
    %c0_84 = arith.constant 0 : index
    %c0_85 = arith.constant 0 : index
    %161 = vector.load %arg2[%c0_83, %c0_84, %c0_85] : memref<25x42x112xf32, #tpu.memory_space<vmem>>, vector<1x42x112xf32>
    %162 = vector.shape_cast %161 : vector<1x42x112xf32> to vector<42x112xf32>
    %cst_86 = arith.constant dense<0.000000e+00> : vector<14x112xf32>
    %163 = tpu.matmul %160, %162, %cst_86 {dimension_numbers = #tpu.dot_dimension_numbers<[1], [0], [0], [1], [0, 0, 1, 1], [], []>} : vector<14x42xf32>, vector<42x112xf32>, vector<14x112xf32> -> vector<14x112xf32>
    %164 = arith.addf %158, %163 : vector<14x112xf32>
    %165 = vector.extract_strided_slice %1 {offsets = [0, 0, 3], sizes = [1, 14, 42], strides = [1, 1, 1]} : vector<4x16x48xf32> to vector<1x14x42xf32>
    %166 = vector.shape_cast %165 : vector<1x14x42xf32> to vector<14x42xf32>
    %c1_87 = arith.constant 1 : index
    %c0_88 = arith.constant 0 : index
    %c0_89 = arith.constant 0 : index
    %167 = vector.load %arg2[%c1_87, %c0_88, %c0_89] : memref<25x42x112xf32, #tpu.memory_space<vmem>>, vector<1x42x112xf32>
    %168 = vector.shape_cast %167 : vector<1x42x112xf32> to vector<42x112xf32>
    %cst_90 = arith.constant dense<0.000000e+00> : vector<14x112xf32>
    %169 = tpu.matmul %166, %168, %cst_90 {dimension_numbers = #tpu.dot_dimension_numbers<[1], [0], [0], [1], [0, 0, 1, 1], [], []>} : vector<14x42xf32>, vector<42x112xf32>, vector<14x112xf32> -> vector<14x112xf32>
    %170 = arith.addf %164, %169 : vector<14x112xf32>
    %171 = vector.extract_strided_slice %1 {offsets = [1, 0, 3], sizes = [1, 14, 42], strides = [1, 1, 1]} : vector<4x16x48xf32> to vector<1x14x42xf32>
    %172 = vector.shape_cast %171 : vector<1x14x42xf32> to vector<14x42xf32>
    %c2_91 = arith.constant 2 : index
    %c0_92 = arith.constant 0 : index
    %c0_93 = arith.constant 0 : index
    %173 = vector.load %arg2[%c2_91, %c0_92, %c0_93] : memref<25x42x112xf32, #tpu.memory_space<vmem>>, vector<1x42x112xf32>
    %174 = vector.shape_cast %173 : vector<1x42x112xf32> to vector<42x112xf32>
    %cst_94 = arith.constant dense<0.000000e+00> : vector<14x112xf32>
    %175 = tpu.matmul %172, %174, %cst_94 {dimension_numbers = #tpu.dot_dimension_numbers<[1], [0], [0], [1], [0, 0, 1, 1], [], []>} : vector<14x42xf32>, vector<42x112xf32>, vector<14x112xf32> -> vector<14x112xf32>
    %176 = arith.addf %170, %175 : vector<14x112xf32>
    %177 = vector.extract_strided_slice %1 {offsets = [0, 0, 6], sizes = [1, 14, 42], strides = [1, 1, 1]} : vector<4x16x48xf32> to vector<1x14x42xf32>
    %178 = vector.shape_cast %177 : vector<1x14x42xf32> to vector<14x42xf32>
    %c3_95 = arith.constant 3 : index
    %c0_96 = arith.constant 0 : index
    %c0_97 = arith.constant 0 : index
    %179 = vector.load %arg2[%c3_95, %c0_96, %c0_97] : memref<25x42x112xf32, #tpu.memory_space<vmem>>, vector<1x42x112xf32>
    %180 = vector.shape_cast %179 : vector<1x42x112xf32> to vector<42x112xf32>
    %cst_98 = arith.constant dense<0.000000e+00> : vector<14x112xf32>
    %181 = tpu.matmul %178, %180, %cst_98 {dimension_numbers = #tpu.dot_dimension_numbers<[1], [0], [0], [1], [0, 0, 1, 1], [], []>} : vector<14x42xf32>, vector<42x112xf32>, vector<14x112xf32> -> vector<14x112xf32>
    %182 = arith.addf %176, %181 : vector<14x112xf32>
    %183 = vector.extract_strided_slice %1 {offsets = [1, 0, 6], sizes = [1, 14, 42], strides = [1, 1, 1]} : vector<4x16x48xf32> to vector<1x14x42xf32>
    %184 = vector.shape_cast %183 : vector<1x14x42xf32> to vector<14x42xf32>
    %c4_99 = arith.constant 4 : index
    %c0_100 = arith.constant 0 : index
    %c0_101 = arith.constant 0 : index
    %185 = vector.load %arg2[%c4_99, %c0_100, %c0_101] : memref<25x42x112xf32, #tpu.memory_space<vmem>>, vector<1x42x112xf32>
    %186 = vector.shape_cast %185 : vector<1x42x112xf32> to vector<42x112xf32>
    %cst_102 = arith.constant dense<0.000000e+00> : vector<14x112xf32>
    %187 = tpu.matmul %184, %186, %cst_102 {dimension_numbers = #tpu.dot_dimension_numbers<[1], [0], [0], [1], [0, 0, 1, 1], [], []>} : vector<14x42xf32>, vector<42x112xf32>, vector<14x112xf32> -> vector<14x112xf32>
    %188 = arith.addf %182, %187 : vector<14x112xf32>
    %189 = vector.extract_strided_slice %1 {offsets = [3, 0, 0], sizes = [1, 14, 42], strides = [1, 1, 1]} : vector<4x16x48xf32> to vector<1x14x42xf32>
    %190 = vector.shape_cast %189 : vector<1x14x42xf32> to vector<14x42xf32>
    %c5_103 = arith.constant 5 : index
    %c0_104 = arith.constant 0 : index
    %c0_105 = arith.constant 0 : index
    %191 = vector.load %arg2[%c5_103, %c0_104, %c0_105] : memref<25x42x112xf32, #tpu.memory_space<vmem>>, vector<1x42x112xf32>
    %192 = vector.shape_cast %191 : vector<1x42x112xf32> to vector<42x112xf32>
    %cst_106 = arith.constant dense<0.000000e+00> : vector<14x112xf32>
    %193 = tpu.matmul %190, %192, %cst_106 {dimension_numbers = #tpu.dot_dimension_numbers<[1], [0], [0], [1], [0, 0, 1, 1], [], []>} : vector<14x42xf32>, vector<42x112xf32>, vector<14x112xf32> -> vector<14x112xf32>
    %194 = arith.addf %188, %193 : vector<14x112xf32>
    %195 = vector.extract_strided_slice %1 {offsets = [2, 0, 3], sizes = [1, 14, 42], strides = [1, 1, 1]} : vector<4x16x48xf32> to vector<1x14x42xf32>
    %196 = vector.shape_cast %195 : vector<1x14x42xf32> to vector<14x42xf32>
    %c6_107 = arith.constant 6 : index
    %c0_108 = arith.constant 0 : index
    %c0_109 = arith.constant 0 : index
    %197 = vector.load %arg2[%c6_107, %c0_108, %c0_109] : memref<25x42x112xf32, #tpu.memory_space<vmem>>, vector<1x42x112xf32>
    %198 = vector.shape_cast %197 : vector<1x42x112xf32> to vector<42x112xf32>
    %cst_110 = arith.constant dense<0.000000e+00> : vector<14x112xf32>
    %199 = tpu.matmul %196, %198, %cst_110 {dimension_numbers = #tpu.dot_dimension_numbers<[1], [0], [0], [1], [0, 0, 1, 1], [], []>} : vector<14x42xf32>, vector<42x112xf32>, vector<14x112xf32> -> vector<14x112xf32>
    %200 = arith.addf %194, %199 : vector<14x112xf32>
    %201 = vector.extract_strided_slice %1 {offsets = [3, 0, 3], sizes = [1, 14, 42], strides = [1, 1, 1]} : vector<4x16x48xf32> to vector<1x14x42xf32>
    %202 = vector.shape_cast %201 : vector<1x14x42xf32> to vector<14x42xf32>
    %c7_111 = arith.constant 7 : index
    %c0_112 = arith.constant 0 : index
    %c0_113 = arith.constant 0 : index
    %203 = vector.load %arg2[%c7_111, %c0_112, %c0_113] : memref<25x42x112xf32, #tpu.memory_space<vmem>>, vector<1x42x112xf32>
    %204 = vector.shape_cast %203 : vector<1x42x112xf32> to vector<42x112xf32>
    %cst_114 = arith.constant dense<0.000000e+00> : vector<14x112xf32>
    %205 = tpu.matmul %202, %204, %cst_114 {dimension_numbers = #tpu.dot_dimension_numbers<[1], [0], [0], [1], [0, 0, 1, 1], [], []>} : vector<14x42xf32>, vector<42x112xf32>, vector<14x112xf32> -> vector<14x112xf32>
    %206 = arith.addf %200, %205 : vector<14x112xf32>
    %207 = vector.extract_strided_slice %1 {offsets = [2, 0, 6], sizes = [1, 14, 42], strides = [1, 1, 1]} : vector<4x16x48xf32> to vector<1x14x42xf32>
    %208 = vector.shape_cast %207 : vector<1x14x42xf32> to vector<14x42xf32>
    %c8_115 = arith.constant 8 : index
    %c0_116 = arith.constant 0 : index
    %c0_117 = arith.constant 0 : index
    %209 = vector.load %arg2[%c8_115, %c0_116, %c0_117] : memref<25x42x112xf32, #tpu.memory_space<vmem>>, vector<1x42x112xf32>
    %210 = vector.shape_cast %209 : vector<1x42x112xf32> to vector<42x112xf32>
    %cst_118 = arith.constant dense<0.000000e+00> : vector<14x112xf32>
    %211 = tpu.matmul %208, %210, %cst_118 {dimension_numbers = #tpu.dot_dimension_numbers<[1], [0], [0], [1], [0, 0, 1, 1], [], []>} : vector<14x42xf32>, vector<42x112xf32>, vector<14x112xf32> -> vector<14x112xf32>
    %212 = arith.addf %206, %211 : vector<14x112xf32>
    %213 = vector.extract_strided_slice %1 {offsets = [3, 0, 6], sizes = [1, 14, 42], strides = [1, 1, 1]} : vector<4x16x48xf32> to vector<1x14x42xf32>
    %214 = vector.shape_cast %213 : vector<1x14x42xf32> to vector<14x42xf32>
    %c9_119 = arith.constant 9 : index
    %c0_120 = arith.constant 0 : index
    %c0_121 = arith.constant 0 : index
    %215 = vector.load %arg2[%c9_119, %c0_120, %c0_121] : memref<25x42x112xf32, #tpu.memory_space<vmem>>, vector<1x42x112xf32>
    %216 = vector.shape_cast %215 : vector<1x42x112xf32> to vector<42x112xf32>
    %cst_122 = arith.constant dense<0.000000e+00> : vector<14x112xf32>
    %217 = tpu.matmul %214, %216, %cst_122 {dimension_numbers = #tpu.dot_dimension_numbers<[1], [0], [0], [1], [0, 0, 1, 1], [], []>} : vector<14x42xf32>, vector<42x112xf32>, vector<14x112xf32> -> vector<14x112xf32>
    %218 = arith.addf %212, %217 : vector<14x112xf32>
    %219 = vector.extract_strided_slice %1 {offsets = [1, 1, 0], sizes = [1, 14, 42], strides = [1, 1, 1]} : vector<4x16x48xf32> to vector<1x14x42xf32>
    %220 = vector.shape_cast %219 : vector<1x14x42xf32> to vector<14x42xf32>
    %c10_123 = arith.constant 10 : index
    %c0_124 = arith.constant 0 : index
    %c0_125 = arith.constant 0 : index
    %221 = vector.load %arg2[%c10_123, %c0_124, %c0_125] : memref<25x42x112xf32, #tpu.memory_space<vmem>>, vector<1x42x112xf32>
    %222 = vector.shape_cast %221 : vector<1x42x112xf32> to vector<42x112xf32>
    %cst_126 = arith.constant dense<0.000000e+00> : vector<14x112xf32>
    %223 = tpu.matmul %220, %222, %cst_126 {dimension_numbers = #tpu.dot_dimension_numbers<[1], [0], [0], [1], [0, 0, 1, 1], [], []>} : vector<14x42xf32>, vector<42x112xf32>, vector<14x112xf32> -> vector<14x112xf32>
    %224 = arith.addf %218, %223 : vector<14x112xf32>
    %225 = vector.extract_strided_slice %1 {offsets = [0, 1, 3], sizes = [1, 14, 42], strides = [1, 1, 1]} : vector<4x16x48xf32> to vector<1x14x42xf32>
    %226 = vector.shape_cast %225 : vector<1x14x42xf32> to vector<14x42xf32>
    %c11_127 = arith.constant 11 : index
    %c0_128 = arith.constant 0 : index
    %c0_129 = arith.constant 0 : index
    %227 = vector.load %arg2[%c11_127, %c0_128, %c0_129] : memref<25x42x112xf32, #tpu.memory_space<vmem>>, vector<1x42x112xf32>
    %228 = vector.shape_cast %227 : vector<1x42x112xf32> to vector<42x112xf32>
    %cst_130 = arith.constant dense<0.000000e+00> : vector<14x112xf32>
    %229 = tpu.matmul %226, %228, %cst_130 {dimension_numbers = #tpu.dot_dimension_numbers<[1], [0], [0], [1], [0, 0, 1, 1], [], []>} : vector<14x42xf32>, vector<42x112xf32>, vector<14x112xf32> -> vector<14x112xf32>
    %230 = arith.addf %224, %229 : vector<14x112xf32>
    %231 = vector.extract_strided_slice %1 {offsets = [1, 1, 3], sizes = [1, 14, 42], strides = [1, 1, 1]} : vector<4x16x48xf32> to vector<1x14x42xf32>
    %232 = vector.shape_cast %231 : vector<1x14x42xf32> to vector<14x42xf32>
    %c12_131 = arith.constant 12 : index
    %c0_132 = arith.constant 0 : index
    %c0_133 = arith.constant 0 : index
    %233 = vector.load %arg2[%c12_131, %c0_132, %c0_133] : memref<25x42x112xf32, #tpu.memory_space<vmem>>, vector<1x42x112xf32>
    %234 = vector.shape_cast %233 : vector<1x42x112xf32> to vector<42x112xf32>
    %cst_134 = arith.constant dense<0.000000e+00> : vector<14x112xf32>
    %235 = tpu.matmul %232, %234, %cst_134 {dimension_numbers = #tpu.dot_dimension_numbers<[1], [0], [0], [1], [0, 0, 1, 1], [], []>} : vector<14x42xf32>, vector<42x112xf32>, vector<14x112xf32> -> vector<14x112xf32>
    %236 = arith.addf %230, %235 : vector<14x112xf32>
    %237 = vector.extract_strided_slice %1 {offsets = [0, 1, 6], sizes = [1, 14, 42], strides = [1, 1, 1]} : vector<4x16x48xf32> to vector<1x14x42xf32>
    %238 = vector.shape_cast %237 : vector<1x14x42xf32> to vector<14x42xf32>
    %c13_135 = arith.constant 13 : index
    %c0_136 = arith.constant 0 : index
    %c0_137 = arith.constant 0 : index
    %239 = vector.load %arg2[%c13_135, %c0_136, %c0_137] : memref<25x42x112xf32, #tpu.memory_space<vmem>>, vector<1x42x112xf32>
    %240 = vector.shape_cast %239 : vector<1x42x112xf32> to vector<42x112xf32>
    %cst_138 = arith.constant dense<0.000000e+00> : vector<14x112xf32>
    %241 = tpu.matmul %238, %240, %cst_138 {dimension_numbers = #tpu.dot_dimension_numbers<[1], [0], [0], [1], [0, 0, 1, 1], [], []>} : vector<14x42xf32>, vector<42x112xf32>, vector<14x112xf32> -> vector<14x112xf32>
    %242 = arith.addf %236, %241 : vector<14x112xf32>
    %243 = vector.extract_strided_slice %1 {offsets = [1, 1, 6], sizes = [1, 14, 42], strides = [1, 1, 1]} : vector<4x16x48xf32> to vector<1x14x42xf32>
    %244 = vector.shape_cast %243 : vector<1x14x42xf32> to vector<14x42xf32>
    %c14_139 = arith.constant 14 : index
    %c0_140 = arith.constant 0 : index
    %c0_141 = arith.constant 0 : index
    %245 = vector.load %arg2[%c14_139, %c0_140, %c0_141] : memref<25x42x112xf32, #tpu.memory_space<vmem>>, vector<1x42x112xf32>
    %246 = vector.shape_cast %245 : vector<1x42x112xf32> to vector<42x112xf32>
    %cst_142 = arith.constant dense<0.000000e+00> : vector<14x112xf32>
    %247 = tpu.matmul %244, %246, %cst_142 {dimension_numbers = #tpu.dot_dimension_numbers<[1], [0], [0], [1], [0, 0, 1, 1], [], []>} : vector<14x42xf32>, vector<42x112xf32>, vector<14x112xf32> -> vector<14x112xf32>
    %248 = arith.addf %242, %247 : vector<14x112xf32>
    %249 = vector.extract_strided_slice %1 {offsets = [3, 1, 0], sizes = [1, 14, 42], strides = [1, 1, 1]} : vector<4x16x48xf32> to vector<1x14x42xf32>
    %250 = vector.shape_cast %249 : vector<1x14x42xf32> to vector<14x42xf32>
    %c15_143 = arith.constant 15 : index
    %c0_144 = arith.constant 0 : index
    %c0_145 = arith.constant 0 : index
    %251 = vector.load %arg2[%c15_143, %c0_144, %c0_145] : memref<25x42x112xf32, #tpu.memory_space<vmem>>, vector<1x42x112xf32>
    %252 = vector.shape_cast %251 : vector<1x42x112xf32> to vector<42x112xf32>
    %cst_146 = arith.constant dense<0.000000e+00> : vector<14x112xf32>
    %253 = tpu.matmul %250, %252, %cst_146 {dimension_numbers = #tpu.dot_dimension_numbers<[1], [0], [0], [1], [0, 0, 1, 1], [], []>} : vector<14x42xf32>, vector<42x112xf32>, vector<14x112xf32> -> vector<14x112xf32>
    %254 = arith.addf %248, %253 : vector<14x112xf32>
    %255 = vector.extract_strided_slice %1 {offsets = [2, 1, 3], sizes = [1, 14, 42], strides = [1, 1, 1]} : vector<4x16x48xf32> to vector<1x14x42xf32>
    %256 = vector.shape_cast %255 : vector<1x14x42xf32> to vector<14x42xf32>
    %c16_147 = arith.constant 16 : index
    %c0_148 = arith.constant 0 : index
    %c0_149 = arith.constant 0 : index
    %257 = vector.load %arg2[%c16_147, %c0_148, %c0_149] : memref<25x42x112xf32, #tpu.memory_space<vmem>>, vector<1x42x112xf32>
    %258 = vector.shape_cast %257 : vector<1x42x112xf32> to vector<42x112xf32>
    %cst_150 = arith.constant dense<0.000000e+00> : vector<14x112xf32>
    %259 = tpu.matmul %256, %258, %cst_150 {dimension_numbers = #tpu.dot_dimension_numbers<[1], [0], [0], [1], [0, 0, 1, 1], [], []>} : vector<14x42xf32>, vector<42x112xf32>, vector<14x112xf32> -> vector<14x112xf32>
    %260 = arith.addf %254, %259 : vector<14x112xf32>
    %261 = vector.extract_strided_slice %1 {offsets = [3, 1, 3], sizes = [1, 14, 42], strides = [1, 1, 1]} : vector<4x16x48xf32> to vector<1x14x42xf32>
    %262 = vector.shape_cast %261 : vector<1x14x42xf32> to vector<14x42xf32>
    %c17_151 = arith.constant 17 : index
    %c0_152 = arith.constant 0 : index
    %c0_153 = arith.constant 0 : index
    %263 = vector.load %arg2[%c17_151, %c0_152, %c0_153] : memref<25x42x112xf32, #tpu.memory_space<vmem>>, vector<1x42x112xf32>
    %264 = vector.shape_cast %263 : vector<1x42x112xf32> to vector<42x112xf32>
    %cst_154 = arith.constant dense<0.000000e+00> : vector<14x112xf32>
    %265 = tpu.matmul %262, %264, %cst_154 {dimension_numbers = #tpu.dot_dimension_numbers<[1], [0], [0], [1], [0, 0, 1, 1], [], []>} : vector<14x42xf32>, vector<42x112xf32>, vector<14x112xf32> -> vector<14x112xf32>
    %266 = arith.addf %260, %265 : vector<14x112xf32>
    %267 = vector.extract_strided_slice %1 {offsets = [2, 1, 6], sizes = [1, 14, 42], strides = [1, 1, 1]} : vector<4x16x48xf32> to vector<1x14x42xf32>
    %268 = vector.shape_cast %267 : vector<1x14x42xf32> to vector<14x42xf32>
    %c18_155 = arith.constant 18 : index
    %c0_156 = arith.constant 0 : index
    %c0_157 = arith.constant 0 : index
    %269 = vector.load %arg2[%c18_155, %c0_156, %c0_157] : memref<25x42x112xf32, #tpu.memory_space<vmem>>, vector<1x42x112xf32>
    %270 = vector.shape_cast %269 : vector<1x42x112xf32> to vector<42x112xf32>
    %cst_158 = arith.constant dense<0.000000e+00> : vector<14x112xf32>
    %271 = tpu.matmul %268, %270, %cst_158 {dimension_numbers = #tpu.dot_dimension_numbers<[1], [0], [0], [1], [0, 0, 1, 1], [], []>} : vector<14x42xf32>, vector<42x112xf32>, vector<14x112xf32> -> vector<14x112xf32>
    %272 = arith.addf %266, %271 : vector<14x112xf32>
    %273 = vector.extract_strided_slice %1 {offsets = [3, 1, 6], sizes = [1, 14, 42], strides = [1, 1, 1]} : vector<4x16x48xf32> to vector<1x14x42xf32>
    %274 = vector.shape_cast %273 : vector<1x14x42xf32> to vector<14x42xf32>
    %c19_159 = arith.constant 19 : index
    %c0_160 = arith.constant 0 : index
    %c0_161 = arith.constant 0 : index
    %275 = vector.load %arg2[%c19_159, %c0_160, %c0_161] : memref<25x42x112xf32, #tpu.memory_space<vmem>>, vector<1x42x112xf32>
    %276 = vector.shape_cast %275 : vector<1x42x112xf32> to vector<42x112xf32>
    %cst_162 = arith.constant dense<0.000000e+00> : vector<14x112xf32>
    %277 = tpu.matmul %274, %276, %cst_162 {dimension_numbers = #tpu.dot_dimension_numbers<[1], [0], [0], [1], [0, 0, 1, 1], [], []>} : vector<14x42xf32>, vector<42x112xf32>, vector<14x112xf32> -> vector<14x112xf32>
    %278 = arith.addf %272, %277 : vector<14x112xf32>
    %279 = vector.extract_strided_slice %1 {offsets = [1, 2, 0], sizes = [1, 14, 42], strides = [1, 1, 1]} : vector<4x16x48xf32> to vector<1x14x42xf32>
    %280 = vector.shape_cast %279 : vector<1x14x42xf32> to vector<14x42xf32>
    %c20_163 = arith.constant 20 : index
    %c0_164 = arith.constant 0 : index
    %c0_165 = arith.constant 0 : index
    %281 = vector.load %arg2[%c20_163, %c0_164, %c0_165] : memref<25x42x112xf32, #tpu.memory_space<vmem>>, vector<1x42x112xf32>
    %282 = vector.shape_cast %281 : vector<1x42x112xf32> to vector<42x112xf32>
    %cst_166 = arith.constant dense<0.000000e+00> : vector<14x112xf32>
    %283 = tpu.matmul %280, %282, %cst_166 {dimension_numbers = #tpu.dot_dimension_numbers<[1], [0], [0], [1], [0, 0, 1, 1], [], []>} : vector<14x42xf32>, vector<42x112xf32>, vector<14x112xf32> -> vector<14x112xf32>
    %284 = arith.addf %278, %283 : vector<14x112xf32>
    %285 = vector.extract_strided_slice %1 {offsets = [0, 2, 3], sizes = [1, 14, 42], strides = [1, 1, 1]} : vector<4x16x48xf32> to vector<1x14x42xf32>
    %286 = vector.shape_cast %285 : vector<1x14x42xf32> to vector<14x42xf32>
    %c21_167 = arith.constant 21 : index
    %c0_168 = arith.constant 0 : index
    %c0_169 = arith.constant 0 : index
    %287 = vector.load %arg2[%c21_167, %c0_168, %c0_169] : memref<25x42x112xf32, #tpu.memory_space<vmem>>, vector<1x42x112xf32>
    %288 = vector.shape_cast %287 : vector<1x42x112xf32> to vector<42x112xf32>
    %cst_170 = arith.constant dense<0.000000e+00> : vector<14x112xf32>
    %289 = tpu.matmul %286, %288, %cst_170 {dimension_numbers = #tpu.dot_dimension_numbers<[1], [0], [0], [1], [0, 0, 1, 1], [], []>} : vector<14x42xf32>, vector<42x112xf32>, vector<14x112xf32> -> vector<14x112xf32>
    %290 = arith.addf %284, %289 : vector<14x112xf32>
    %291 = vector.extract_strided_slice %1 {offsets = [1, 2, 3], sizes = [1, 14, 42], strides = [1, 1, 1]} : vector<4x16x48xf32> to vector<1x14x42xf32>
    %292 = vector.shape_cast %291 : vector<1x14x42xf32> to vector<14x42xf32>
    %c22_171 = arith.constant 22 : index
    %c0_172 = arith.constant 0 : index
    %c0_173 = arith.constant 0 : index
    %293 = vector.load %arg2[%c22_171, %c0_172, %c0_173] : memref<25x42x112xf32, #tpu.memory_space<vmem>>, vector<1x42x112xf32>
    %294 = vector.shape_cast %293 : vector<1x42x112xf32> to vector<42x112xf32>
    %cst_174 = arith.constant dense<0.000000e+00> : vector<14x112xf32>
    %295 = tpu.matmul %292, %294, %cst_174 {dimension_numbers = #tpu.dot_dimension_numbers<[1], [0], [0], [1], [0, 0, 1, 1], [], []>} : vector<14x42xf32>, vector<42x112xf32>, vector<14x112xf32> -> vector<14x112xf32>
    %296 = arith.addf %290, %295 : vector<14x112xf32>
    %297 = vector.extract_strided_slice %1 {offsets = [0, 2, 6], sizes = [1, 14, 42], strides = [1, 1, 1]} : vector<4x16x48xf32> to vector<1x14x42xf32>
    %298 = vector.shape_cast %297 : vector<1x14x42xf32> to vector<14x42xf32>
    %c23_175 = arith.constant 23 : index
    %c0_176 = arith.constant 0 : index
    %c0_177 = arith.constant 0 : index
    %299 = vector.load %arg2[%c23_175, %c0_176, %c0_177] : memref<25x42x112xf32, #tpu.memory_space<vmem>>, vector<1x42x112xf32>
    %300 = vector.shape_cast %299 : vector<1x42x112xf32> to vector<42x112xf32>
    %cst_178 = arith.constant dense<0.000000e+00> : vector<14x112xf32>
    %301 = tpu.matmul %298, %300, %cst_178 {dimension_numbers = #tpu.dot_dimension_numbers<[1], [0], [0], [1], [0, 0, 1, 1], [], []>} : vector<14x42xf32>, vector<42x112xf32>, vector<14x112xf32> -> vector<14x112xf32>
    %302 = arith.addf %296, %301 : vector<14x112xf32>
    %303 = vector.extract_strided_slice %1 {offsets = [1, 2, 6], sizes = [1, 14, 42], strides = [1, 1, 1]} : vector<4x16x48xf32> to vector<1x14x42xf32>
    %304 = vector.shape_cast %303 : vector<1x14x42xf32> to vector<14x42xf32>
    %c24_179 = arith.constant 24 : index
    %c0_180 = arith.constant 0 : index
    %c0_181 = arith.constant 0 : index
    %305 = vector.load %arg2[%c24_179, %c0_180, %c0_181] : memref<25x42x112xf32, #tpu.memory_space<vmem>>, vector<1x42x112xf32>
    %306 = vector.shape_cast %305 : vector<1x42x112xf32> to vector<42x112xf32>
    %cst_182 = arith.constant dense<0.000000e+00> : vector<14x112xf32>
    %307 = tpu.matmul %304, %306, %cst_182 {dimension_numbers = #tpu.dot_dimension_numbers<[1], [0], [0], [1], [0, 0, 1, 1], [], []>} : vector<14x42xf32>, vector<42x112xf32>, vector<14x112xf32> -> vector<14x112xf32>
    %308 = arith.addf %302, %307 : vector<14x112xf32>
    %c0_183 = arith.constant 0 : index
    %c0_184 = arith.constant 0 : index
    %309 = vector.load %arg3[%c0_183, %c0_184] : memref<1x112xf32, #tpu.memory_space<vmem>>, vector<1x112xf32>
    %310 = vector.broadcast %309 : vector<1x112xf32> to vector<14x112xf32>
    %311 = arith.addf %308, %310 : vector<14x112xf32>
    %cst_185 = arith.constant 0.000000e+00 : f32
    %312 = vector.broadcast %cst_185 : f32 to vector<14x112xf32>
    %313 = arith.maximumf %311, %312 : vector<14x112xf32>
    %314 = arith.maximumf %157, %313 : vector<14x112xf32>
    %cst_186 = arith.constant 0.000000e+00 : f32
    %315 = vector.broadcast %cst_186 : f32 to vector<14x112xf32>
    %316 = vector.extract_strided_slice %1 {offsets = [2, 0, 0], sizes = [1, 14, 42], strides = [1, 1, 1]} : vector<4x16x48xf32> to vector<1x14x42xf32>
    %317 = vector.shape_cast %316 : vector<1x14x42xf32> to vector<14x42xf32>
    %c0_187 = arith.constant 0 : index
    %c0_188 = arith.constant 0 : index
    %c0_189 = arith.constant 0 : index
    %318 = vector.load %arg2[%c0_187, %c0_188, %c0_189] : memref<25x42x112xf32, #tpu.memory_space<vmem>>, vector<1x42x112xf32>
    %319 = vector.shape_cast %318 : vector<1x42x112xf32> to vector<42x112xf32>
    %cst_190 = arith.constant dense<0.000000e+00> : vector<14x112xf32>
    %320 = tpu.matmul %317, %319, %cst_190 {dimension_numbers = #tpu.dot_dimension_numbers<[1], [0], [0], [1], [0, 0, 1, 1], [], []>} : vector<14x42xf32>, vector<42x112xf32>, vector<14x112xf32> -> vector<14x112xf32>
    %321 = arith.addf %315, %320 : vector<14x112xf32>
    %322 = vector.extract_strided_slice %1 {offsets = [3, 0, 0], sizes = [1, 14, 42], strides = [1, 1, 1]} : vector<4x16x48xf32> to vector<1x14x42xf32>
    %323 = vector.shape_cast %322 : vector<1x14x42xf32> to vector<14x42xf32>
    %c1_191 = arith.constant 1 : index
    %c0_192 = arith.constant 0 : index
    %c0_193 = arith.constant 0 : index
    %324 = vector.load %arg2[%c1_191, %c0_192, %c0_193] : memref<25x42x112xf32, #tpu.memory_space<vmem>>, vector<1x42x112xf32>
    %325 = vector.shape_cast %324 : vector<1x42x112xf32> to vector<42x112xf32>
    %cst_194 = arith.constant dense<0.000000e+00> : vector<14x112xf32>
    %326 = tpu.matmul %323, %325, %cst_194 {dimension_numbers = #tpu.dot_dimension_numbers<[1], [0], [0], [1], [0, 0, 1, 1], [], []>} : vector<14x42xf32>, vector<42x112xf32>, vector<14x112xf32> -> vector<14x112xf32>
    %327 = arith.addf %321, %326 : vector<14x112xf32>
    %328 = vector.extract_strided_slice %1 {offsets = [2, 0, 3], sizes = [1, 14, 42], strides = [1, 1, 1]} : vector<4x16x48xf32> to vector<1x14x42xf32>
    %329 = vector.shape_cast %328 : vector<1x14x42xf32> to vector<14x42xf32>
    %c2_195 = arith.constant 2 : index
    %c0_196 = arith.constant 0 : index
    %c0_197 = arith.constant 0 : index
    %330 = vector.load %arg2[%c2_195, %c0_196, %c0_197] : memref<25x42x112xf32, #tpu.memory_space<vmem>>, vector<1x42x112xf32>
    %331 = vector.shape_cast %330 : vector<1x42x112xf32> to vector<42x112xf32>
    %cst_198 = arith.constant dense<0.000000e+00> : vector<14x112xf32>
    %332 = tpu.matmul %329, %331, %cst_198 {dimension_numbers = #tpu.dot_dimension_numbers<[1], [0], [0], [1], [0, 0, 1, 1], [], []>} : vector<14x42xf32>, vector<42x112xf32>, vector<14x112xf32> -> vector<14x112xf32>
    %333 = arith.addf %327, %332 : vector<14x112xf32>
    %334 = vector.extract_strided_slice %1 {offsets = [3, 0, 3], sizes = [1, 14, 42], strides = [1, 1, 1]} : vector<4x16x48xf32> to vector<1x14x42xf32>
    %335 = vector.shape_cast %334 : vector<1x14x42xf32> to vector<14x42xf32>
    %c3_199 = arith.constant 3 : index
    %c0_200 = arith.constant 0 : index
    %c0_201 = arith.constant 0 : index
    %336 = vector.load %arg2[%c3_199, %c0_200, %c0_201] : memref<25x42x112xf32, #tpu.memory_space<vmem>>, vector<1x42x112xf32>
    %337 = vector.shape_cast %336 : vector<1x42x112xf32> to vector<42x112xf32>
    %cst_202 = arith.constant dense<0.000000e+00> : vector<14x112xf32>
    %338 = tpu.matmul %335, %337, %cst_202 {dimension_numbers = #tpu.dot_dimension_numbers<[1], [0], [0], [1], [0, 0, 1, 1], [], []>} : vector<14x42xf32>, vector<42x112xf32>, vector<14x112xf32> -> vector<14x112xf32>
    %339 = arith.addf %333, %338 : vector<14x112xf32>
    %340 = vector.extract_strided_slice %1 {offsets = [2, 0, 6], sizes = [1, 14, 42], strides = [1, 1, 1]} : vector<4x16x48xf32> to vector<1x14x42xf32>
    %341 = vector.shape_cast %340 : vector<1x14x42xf32> to vector<14x42xf32>
    %c4_203 = arith.constant 4 : index
    %c0_204 = arith.constant 0 : index
    %c0_205 = arith.constant 0 : index
    %342 = vector.load %arg2[%c4_203, %c0_204, %c0_205] : memref<25x42x112xf32, #tpu.memory_space<vmem>>, vector<1x42x112xf32>
    %343 = vector.shape_cast %342 : vector<1x42x112xf32> to vector<42x112xf32>
    %cst_206 = arith.constant dense<0.000000e+00> : vector<14x112xf32>
    %344 = tpu.matmul %341, %343, %cst_206 {dimension_numbers = #tpu.dot_dimension_numbers<[1], [0], [0], [1], [0, 0, 1, 1], [], []>} : vector<14x42xf32>, vector<42x112xf32>, vector<14x112xf32> -> vector<14x112xf32>
    %345 = arith.addf %339, %344 : vector<14x112xf32>
    %346 = vector.extract_strided_slice %1 {offsets = [0, 1, 0], sizes = [1, 14, 42], strides = [1, 1, 1]} : vector<4x16x48xf32> to vector<1x14x42xf32>
    %347 = vector.shape_cast %346 : vector<1x14x42xf32> to vector<14x42xf32>
    %c5_207 = arith.constant 5 : index
    %c0_208 = arith.constant 0 : index
    %c0_209 = arith.constant 0 : index
    %348 = vector.load %arg2[%c5_207, %c0_208, %c0_209] : memref<25x42x112xf32, #tpu.memory_space<vmem>>, vector<1x42x112xf32>
    %349 = vector.shape_cast %348 : vector<1x42x112xf32> to vector<42x112xf32>
    %cst_210 = arith.constant dense<0.000000e+00> : vector<14x112xf32>
    %350 = tpu.matmul %347, %349, %cst_210 {dimension_numbers = #tpu.dot_dimension_numbers<[1], [0], [0], [1], [0, 0, 1, 1], [], []>} : vector<14x42xf32>, vector<42x112xf32>, vector<14x112xf32> -> vector<14x112xf32>
    %351 = arith.addf %345, %350 : vector<14x112xf32>
    %352 = vector.extract_strided_slice %1 {offsets = [1, 1, 0], sizes = [1, 14, 42], strides = [1, 1, 1]} : vector<4x16x48xf32> to vector<1x14x42xf32>
    %353 = vector.shape_cast %352 : vector<1x14x42xf32> to vector<14x42xf32>
    %c6_211 = arith.constant 6 : index
    %c0_212 = arith.constant 0 : index
    %c0_213 = arith.constant 0 : index
    %354 = vector.load %arg2[%c6_211, %c0_212, %c0_213] : memref<25x42x112xf32, #tpu.memory_space<vmem>>, vector<1x42x112xf32>
    %355 = vector.shape_cast %354 : vector<1x42x112xf32> to vector<42x112xf32>
    %cst_214 = arith.constant dense<0.000000e+00> : vector<14x112xf32>
    %356 = tpu.matmul %353, %355, %cst_214 {dimension_numbers = #tpu.dot_dimension_numbers<[1], [0], [0], [1], [0, 0, 1, 1], [], []>} : vector<14x42xf32>, vector<42x112xf32>, vector<14x112xf32> -> vector<14x112xf32>
    %357 = arith.addf %351, %356 : vector<14x112xf32>
    %358 = vector.extract_strided_slice %1 {offsets = [0, 1, 3], sizes = [1, 14, 42], strides = [1, 1, 1]} : vector<4x16x48xf32> to vector<1x14x42xf32>
    %359 = vector.shape_cast %358 : vector<1x14x42xf32> to vector<14x42xf32>
    %c7_215 = arith.constant 7 : index
    %c0_216 = arith.constant 0 : index
    %c0_217 = arith.constant 0 : index
    %360 = vector.load %arg2[%c7_215, %c0_216, %c0_217] : memref<25x42x112xf32, #tpu.memory_space<vmem>>, vector<1x42x112xf32>
    %361 = vector.shape_cast %360 : vector<1x42x112xf32> to vector<42x112xf32>
    %cst_218 = arith.constant dense<0.000000e+00> : vector<14x112xf32>
    %362 = tpu.matmul %359, %361, %cst_218 {dimension_numbers = #tpu.dot_dimension_numbers<[1], [0], [0], [1], [0, 0, 1, 1], [], []>} : vector<14x42xf32>, vector<42x112xf32>, vector<14x112xf32> -> vector<14x112xf32>
    %363 = arith.addf %357, %362 : vector<14x112xf32>
    %364 = vector.extract_strided_slice %1 {offsets = [1, 1, 3], sizes = [1, 14, 42], strides = [1, 1, 1]} : vector<4x16x48xf32> to vector<1x14x42xf32>
    %365 = vector.shape_cast %364 : vector<1x14x42xf32> to vector<14x42xf32>
    %c8_219 = arith.constant 8 : index
    %c0_220 = arith.constant 0 : index
    %c0_221 = arith.constant 0 : index
    %366 = vector.load %arg2[%c8_219, %c0_220, %c0_221] : memref<25x42x112xf32, #tpu.memory_space<vmem>>, vector<1x42x112xf32>
    %367 = vector.shape_cast %366 : vector<1x42x112xf32> to vector<42x112xf32>
    %cst_222 = arith.constant dense<0.000000e+00> : vector<14x112xf32>
    %368 = tpu.matmul %365, %367, %cst_222 {dimension_numbers = #tpu.dot_dimension_numbers<[1], [0], [0], [1], [0, 0, 1, 1], [], []>} : vector<14x42xf32>, vector<42x112xf32>, vector<14x112xf32> -> vector<14x112xf32>
    %369 = arith.addf %363, %368 : vector<14x112xf32>
    %370 = vector.extract_strided_slice %1 {offsets = [0, 1, 6], sizes = [1, 14, 42], strides = [1, 1, 1]} : vector<4x16x48xf32> to vector<1x14x42xf32>
    %371 = vector.shape_cast %370 : vector<1x14x42xf32> to vector<14x42xf32>
    %c9_223 = arith.constant 9 : index
    %c0_224 = arith.constant 0 : index
    %c0_225 = arith.constant 0 : index
    %372 = vector.load %arg2[%c9_223, %c0_224, %c0_225] : memref<25x42x112xf32, #tpu.memory_space<vmem>>, vector<1x42x112xf32>
    %373 = vector.shape_cast %372 : vector<1x42x112xf32> to vector<42x112xf32>
    %cst_226 = arith.constant dense<0.000000e+00> : vector<14x112xf32>
    %374 = tpu.matmul %371, %373, %cst_226 {dimension_numbers = #tpu.dot_dimension_numbers<[1], [0], [0], [1], [0, 0, 1, 1], [], []>} : vector<14x42xf32>, vector<42x112xf32>, vector<14x112xf32> -> vector<14x112xf32>
    %375 = arith.addf %369, %374 : vector<14x112xf32>
    %376 = vector.extract_strided_slice %1 {offsets = [2, 1, 0], sizes = [1, 14, 42], strides = [1, 1, 1]} : vector<4x16x48xf32> to vector<1x14x42xf32>
    %377 = vector.shape_cast %376 : vector<1x14x42xf32> to vector<14x42xf32>
    %c10_227 = arith.constant 10 : index
    %c0_228 = arith.constant 0 : index
    %c0_229 = arith.constant 0 : index
    %378 = vector.load %arg2[%c10_227, %c0_228, %c0_229] : memref<25x42x112xf32, #tpu.memory_space<vmem>>, vector<1x42x112xf32>
    %379 = vector.shape_cast %378 : vector<1x42x112xf32> to vector<42x112xf32>
    %cst_230 = arith.constant dense<0.000000e+00> : vector<14x112xf32>
    %380 = tpu.matmul %377, %379, %cst_230 {dimension_numbers = #tpu.dot_dimension_numbers<[1], [0], [0], [1], [0, 0, 1, 1], [], []>} : vector<14x42xf32>, vector<42x112xf32>, vector<14x112xf32> -> vector<14x112xf32>
    %381 = arith.addf %375, %380 : vector<14x112xf32>
    %382 = vector.extract_strided_slice %1 {offsets = [3, 1, 0], sizes = [1, 14, 42], strides = [1, 1, 1]} : vector<4x16x48xf32> to vector<1x14x42xf32>
    %383 = vector.shape_cast %382 : vector<1x14x42xf32> to vector<14x42xf32>
    %c11_231 = arith.constant 11 : index
    %c0_232 = arith.constant 0 : index
    %c0_233 = arith.constant 0 : index
    %384 = vector.load %arg2[%c11_231, %c0_232, %c0_233] : memref<25x42x112xf32, #tpu.memory_space<vmem>>, vector<1x42x112xf32>
    %385 = vector.shape_cast %384 : vector<1x42x112xf32> to vector<42x112xf32>
    %cst_234 = arith.constant dense<0.000000e+00> : vector<14x112xf32>
    %386 = tpu.matmul %383, %385, %cst_234 {dimension_numbers = #tpu.dot_dimension_numbers<[1], [0], [0], [1], [0, 0, 1, 1], [], []>} : vector<14x42xf32>, vector<42x112xf32>, vector<14x112xf32> -> vector<14x112xf32>
    %387 = arith.addf %381, %386 : vector<14x112xf32>
    %388 = vector.extract_strided_slice %1 {offsets = [2, 1, 3], sizes = [1, 14, 42], strides = [1, 1, 1]} : vector<4x16x48xf32> to vector<1x14x42xf32>
    %389 = vector.shape_cast %388 : vector<1x14x42xf32> to vector<14x42xf32>
    %c12_235 = arith.constant 12 : index
    %c0_236 = arith.constant 0 : index
    %c0_237 = arith.constant 0 : index
    %390 = vector.load %arg2[%c12_235, %c0_236, %c0_237] : memref<25x42x112xf32, #tpu.memory_space<vmem>>, vector<1x42x112xf32>
    %391 = vector.shape_cast %390 : vector<1x42x112xf32> to vector<42x112xf32>
    %cst_238 = arith.constant dense<0.000000e+00> : vector<14x112xf32>
    %392 = tpu.matmul %389, %391, %cst_238 {dimension_numbers = #tpu.dot_dimension_numbers<[1], [0], [0], [1], [0, 0, 1, 1], [], []>} : vector<14x42xf32>, vector<42x112xf32>, vector<14x112xf32> -> vector<14x112xf32>
    %393 = arith.addf %387, %392 : vector<14x112xf32>
    %394 = vector.extract_strided_slice %1 {offsets = [3, 1, 3], sizes = [1, 14, 42], strides = [1, 1, 1]} : vector<4x16x48xf32> to vector<1x14x42xf32>
    %395 = vector.shape_cast %394 : vector<1x14x42xf32> to vector<14x42xf32>
    %c13_239 = arith.constant 13 : index
    %c0_240 = arith.constant 0 : index
    %c0_241 = arith.constant 0 : index
    %396 = vector.load %arg2[%c13_239, %c0_240, %c0_241] : memref<25x42x112xf32, #tpu.memory_space<vmem>>, vector<1x42x112xf32>
    %397 = vector.shape_cast %396 : vector<1x42x112xf32> to vector<42x112xf32>
    %cst_242 = arith.constant dense<0.000000e+00> : vector<14x112xf32>
    %398 = tpu.matmul %395, %397, %cst_242 {dimension_numbers = #tpu.dot_dimension_numbers<[1], [0], [0], [1], [0, 0, 1, 1], [], []>} : vector<14x42xf32>, vector<42x112xf32>, vector<14x112xf32> -> vector<14x112xf32>
    %399 = arith.addf %393, %398 : vector<14x112xf32>
    %400 = vector.extract_strided_slice %1 {offsets = [2, 1, 6], sizes = [1, 14, 42], strides = [1, 1, 1]} : vector<4x16x48xf32> to vector<1x14x42xf32>
    %401 = vector.shape_cast %400 : vector<1x14x42xf32> to vector<14x42xf32>
    %c14_243 = arith.constant 14 : index
    %c0_244 = arith.constant 0 : index
    %c0_245 = arith.constant 0 : index
    %402 = vector.load %arg2[%c14_243, %c0_244, %c0_245] : memref<25x42x112xf32, #tpu.memory_space<vmem>>, vector<1x42x112xf32>
    %403 = vector.shape_cast %402 : vector<1x42x112xf32> to vector<42x112xf32>
    %cst_246 = arith.constant dense<0.000000e+00> : vector<14x112xf32>
    %404 = tpu.matmul %401, %403, %cst_246 {dimension_numbers = #tpu.dot_dimension_numbers<[1], [0], [0], [1], [0, 0, 1, 1], [], []>} : vector<14x42xf32>, vector<42x112xf32>, vector<14x112xf32> -> vector<14x112xf32>
    %405 = arith.addf %399, %404 : vector<14x112xf32>
    %406 = vector.extract_strided_slice %1 {offsets = [0, 2, 0], sizes = [1, 14, 42], strides = [1, 1, 1]} : vector<4x16x48xf32> to vector<1x14x42xf32>
    %407 = vector.shape_cast %406 : vector<1x14x42xf32> to vector<14x42xf32>
    %c15_247 = arith.constant 15 : index
    %c0_248 = arith.constant 0 : index
    %c0_249 = arith.constant 0 : index
    %408 = vector.load %arg2[%c15_247, %c0_248, %c0_249] : memref<25x42x112xf32, #tpu.memory_space<vmem>>, vector<1x42x112xf32>
    %409 = vector.shape_cast %408 : vector<1x42x112xf32> to vector<42x112xf32>
    %cst_250 = arith.constant dense<0.000000e+00> : vector<14x112xf32>
    %410 = tpu.matmul %407, %409, %cst_250 {dimension_numbers = #tpu.dot_dimension_numbers<[1], [0], [0], [1], [0, 0, 1, 1], [], []>} : vector<14x42xf32>, vector<42x112xf32>, vector<14x112xf32> -> vector<14x112xf32>
    %411 = arith.addf %405, %410 : vector<14x112xf32>
    %412 = vector.extract_strided_slice %1 {offsets = [1, 2, 0], sizes = [1, 14, 42], strides = [1, 1, 1]} : vector<4x16x48xf32> to vector<1x14x42xf32>
    %413 = vector.shape_cast %412 : vector<1x14x42xf32> to vector<14x42xf32>
    %c16_251 = arith.constant 16 : index
    %c0_252 = arith.constant 0 : index
    %c0_253 = arith.constant 0 : index
    %414 = vector.load %arg2[%c16_251, %c0_252, %c0_253] : memref<25x42x112xf32, #tpu.memory_space<vmem>>, vector<1x42x112xf32>
    %415 = vector.shape_cast %414 : vector<1x42x112xf32> to vector<42x112xf32>
    %cst_254 = arith.constant dense<0.000000e+00> : vector<14x112xf32>
    %416 = tpu.matmul %413, %415, %cst_254 {dimension_numbers = #tpu.dot_dimension_numbers<[1], [0], [0], [1], [0, 0, 1, 1], [], []>} : vector<14x42xf32>, vector<42x112xf32>, vector<14x112xf32> -> vector<14x112xf32>
    %417 = arith.addf %411, %416 : vector<14x112xf32>
    %418 = vector.extract_strided_slice %1 {offsets = [0, 2, 3], sizes = [1, 14, 42], strides = [1, 1, 1]} : vector<4x16x48xf32> to vector<1x14x42xf32>
    %419 = vector.shape_cast %418 : vector<1x14x42xf32> to vector<14x42xf32>
    %c17_255 = arith.constant 17 : index
    %c0_256 = arith.constant 0 : index
    %c0_257 = arith.constant 0 : index
    %420 = vector.load %arg2[%c17_255, %c0_256, %c0_257] : memref<25x42x112xf32, #tpu.memory_space<vmem>>, vector<1x42x112xf32>
    %421 = vector.shape_cast %420 : vector<1x42x112xf32> to vector<42x112xf32>
    %cst_258 = arith.constant dense<0.000000e+00> : vector<14x112xf32>
    %422 = tpu.matmul %419, %421, %cst_258 {dimension_numbers = #tpu.dot_dimension_numbers<[1], [0], [0], [1], [0, 0, 1, 1], [], []>} : vector<14x42xf32>, vector<42x112xf32>, vector<14x112xf32> -> vector<14x112xf32>
    %423 = arith.addf %417, %422 : vector<14x112xf32>
    %424 = vector.extract_strided_slice %1 {offsets = [1, 2, 3], sizes = [1, 14, 42], strides = [1, 1, 1]} : vector<4x16x48xf32> to vector<1x14x42xf32>
    %425 = vector.shape_cast %424 : vector<1x14x42xf32> to vector<14x42xf32>
    %c18_259 = arith.constant 18 : index
    %c0_260 = arith.constant 0 : index
    %c0_261 = arith.constant 0 : index
    %426 = vector.load %arg2[%c18_259, %c0_260, %c0_261] : memref<25x42x112xf32, #tpu.memory_space<vmem>>, vector<1x42x112xf32>
    %427 = vector.shape_cast %426 : vector<1x42x112xf32> to vector<42x112xf32>
    %cst_262 = arith.constant dense<0.000000e+00> : vector<14x112xf32>
    %428 = tpu.matmul %425, %427, %cst_262 {dimension_numbers = #tpu.dot_dimension_numbers<[1], [0], [0], [1], [0, 0, 1, 1], [], []>} : vector<14x42xf32>, vector<42x112xf32>, vector<14x112xf32> -> vector<14x112xf32>
    %429 = arith.addf %423, %428 : vector<14x112xf32>
    %430 = vector.extract_strided_slice %1 {offsets = [0, 2, 6], sizes = [1, 14, 42], strides = [1, 1, 1]} : vector<4x16x48xf32> to vector<1x14x42xf32>
    %431 = vector.shape_cast %430 : vector<1x14x42xf32> to vector<14x42xf32>
    %c19_263 = arith.constant 19 : index
    %c0_264 = arith.constant 0 : index
    %c0_265 = arith.constant 0 : index
    %432 = vector.load %arg2[%c19_263, %c0_264, %c0_265] : memref<25x42x112xf32, #tpu.memory_space<vmem>>, vector<1x42x112xf32>
    %433 = vector.shape_cast %432 : vector<1x42x112xf32> to vector<42x112xf32>
    %cst_266 = arith.constant dense<0.000000e+00> : vector<14x112xf32>
    %434 = tpu.matmul %431, %433, %cst_266 {dimension_numbers = #tpu.dot_dimension_numbers<[1], [0], [0], [1], [0, 0, 1, 1], [], []>} : vector<14x42xf32>, vector<42x112xf32>, vector<14x112xf32> -> vector<14x112xf32>
    %435 = arith.addf %429, %434 : vector<14x112xf32>
    %436 = vector.extract_strided_slice %1 {offsets = [2, 2, 0], sizes = [1, 14, 42], strides = [1, 1, 1]} : vector<4x16x48xf32> to vector<1x14x42xf32>
    %437 = vector.shape_cast %436 : vector<1x14x42xf32> to vector<14x42xf32>
    %c20_267 = arith.constant 20 : index
    %c0_268 = arith.constant 0 : index
    %c0_269 = arith.constant 0 : index
    %438 = vector.load %arg2[%c20_267, %c0_268, %c0_269] : memref<25x42x112xf32, #tpu.memory_space<vmem>>, vector<1x42x112xf32>
    %439 = vector.shape_cast %438 : vector<1x42x112xf32> to vector<42x112xf32>
    %cst_270 = arith.constant dense<0.000000e+00> : vector<14x112xf32>
    %440 = tpu.matmul %437, %439, %cst_270 {dimension_numbers = #tpu.dot_dimension_numbers<[1], [0], [0], [1], [0, 0, 1, 1], [], []>} : vector<14x42xf32>, vector<42x112xf32>, vector<14x112xf32> -> vector<14x112xf32>
    %441 = arith.addf %435, %440 : vector<14x112xf32>
    %442 = vector.extract_strided_slice %1 {offsets = [3, 2, 0], sizes = [1, 14, 42], strides = [1, 1, 1]} : vector<4x16x48xf32> to vector<1x14x42xf32>
    %443 = vector.shape_cast %442 : vector<1x14x42xf32> to vector<14x42xf32>
    %c21_271 = arith.constant 21 : index
    %c0_272 = arith.constant 0 : index
    %c0_273 = arith.constant 0 : index
    %444 = vector.load %arg2[%c21_271, %c0_272, %c0_273] : memref<25x42x112xf32, #tpu.memory_space<vmem>>, vector<1x42x112xf32>
    %445 = vector.shape_cast %444 : vector<1x42x112xf32> to vector<42x112xf32>
    %cst_274 = arith.constant dense<0.000000e+00> : vector<14x112xf32>
    %446 = tpu.matmul %443, %445, %cst_274 {dimension_numbers = #tpu.dot_dimension_numbers<[1], [0], [0], [1], [0, 0, 1, 1], [], []>} : vector<14x42xf32>, vector<42x112xf32>, vector<14x112xf32> -> vector<14x112xf32>
    %447 = arith.addf %441, %446 : vector<14x112xf32>
    %448 = vector.extract_strided_slice %1 {offsets = [2, 2, 3], sizes = [1, 14, 42], strides = [1, 1, 1]} : vector<4x16x48xf32> to vector<1x14x42xf32>
    %449 = vector.shape_cast %448 : vector<1x14x42xf32> to vector<14x42xf32>
    %c22_275 = arith.constant 22 : index
    %c0_276 = arith.constant 0 : index
    %c0_277 = arith.constant 0 : index
    %450 = vector.load %arg2[%c22_275, %c0_276, %c0_277] : memref<25x42x112xf32, #tpu.memory_space<vmem>>, vector<1x42x112xf32>
    %451 = vector.shape_cast %450 : vector<1x42x112xf32> to vector<42x112xf32>
    %cst_278 = arith.constant dense<0.000000e+00> : vector<14x112xf32>
    %452 = tpu.matmul %449, %451, %cst_278 {dimension_numbers = #tpu.dot_dimension_numbers<[1], [0], [0], [1], [0, 0, 1, 1], [], []>} : vector<14x42xf32>, vector<42x112xf32>, vector<14x112xf32> -> vector<14x112xf32>
    %453 = arith.addf %447, %452 : vector<14x112xf32>
    %454 = vector.extract_strided_slice %1 {offsets = [3, 2, 3], sizes = [1, 14, 42], strides = [1, 1, 1]} : vector<4x16x48xf32> to vector<1x14x42xf32>
    %455 = vector.shape_cast %454 : vector<1x14x42xf32> to vector<14x42xf32>
    %c23_279 = arith.constant 23 : index
    %c0_280 = arith.constant 0 : index
    %c0_281 = arith.constant 0 : index
    %456 = vector.load %arg2[%c23_279, %c0_280, %c0_281] : memref<25x42x112xf32, #tpu.memory_space<vmem>>, vector<1x42x112xf32>
    %457 = vector.shape_cast %456 : vector<1x42x112xf32> to vector<42x112xf32>
    %cst_282 = arith.constant dense<0.000000e+00> : vector<14x112xf32>
    %458 = tpu.matmul %455, %457, %cst_282 {dimension_numbers = #tpu.dot_dimension_numbers<[1], [0], [0], [1], [0, 0, 1, 1], [], []>} : vector<14x42xf32>, vector<42x112xf32>, vector<14x112xf32> -> vector<14x112xf32>
    %459 = arith.addf %453, %458 : vector<14x112xf32>
    %460 = vector.extract_strided_slice %1 {offsets = [2, 2, 6], sizes = [1, 14, 42], strides = [1, 1, 1]} : vector<4x16x48xf32> to vector<1x14x42xf32>
    %461 = vector.shape_cast %460 : vector<1x14x42xf32> to vector<14x42xf32>
    %c24_283 = arith.constant 24 : index
    %c0_284 = arith.constant 0 : index
    %c0_285 = arith.constant 0 : index
    %462 = vector.load %arg2[%c24_283, %c0_284, %c0_285] : memref<25x42x112xf32, #tpu.memory_space<vmem>>, vector<1x42x112xf32>
    %463 = vector.shape_cast %462 : vector<1x42x112xf32> to vector<42x112xf32>
    %cst_286 = arith.constant dense<0.000000e+00> : vector<14x112xf32>
    %464 = tpu.matmul %461, %463, %cst_286 {dimension_numbers = #tpu.dot_dimension_numbers<[1], [0], [0], [1], [0, 0, 1, 1], [], []>} : vector<14x42xf32>, vector<42x112xf32>, vector<14x112xf32> -> vector<14x112xf32>
    %465 = arith.addf %459, %464 : vector<14x112xf32>
    %c0_287 = arith.constant 0 : index
    %c0_288 = arith.constant 0 : index
    %466 = vector.load %arg3[%c0_287, %c0_288] : memref<1x112xf32, #tpu.memory_space<vmem>>, vector<1x112xf32>
    %467 = vector.broadcast %466 : vector<1x112xf32> to vector<14x112xf32>
    %468 = arith.addf %465, %467 : vector<14x112xf32>
    %cst_289 = arith.constant 0.000000e+00 : f32
    %469 = vector.broadcast %cst_289 : f32 to vector<14x112xf32>
    %470 = arith.maximumf %468, %469 : vector<14x112xf32>
    %471 = arith.maximumf %314, %470 : vector<14x112xf32>
    %cst_290 = arith.constant 0.000000e+00 : f32
    %472 = vector.broadcast %cst_290 : f32 to vector<14x112xf32>
    %473 = vector.extract_strided_slice %1 {offsets = [3, 0, 0], sizes = [1, 14, 42], strides = [1, 1, 1]} : vector<4x16x48xf32> to vector<1x14x42xf32>
    %474 = vector.shape_cast %473 : vector<1x14x42xf32> to vector<14x42xf32>
    %c0_291 = arith.constant 0 : index
    %c0_292 = arith.constant 0 : index
    %c0_293 = arith.constant 0 : index
    %475 = vector.load %arg2[%c0_291, %c0_292, %c0_293] : memref<25x42x112xf32, #tpu.memory_space<vmem>>, vector<1x42x112xf32>
    %476 = vector.shape_cast %475 : vector<1x42x112xf32> to vector<42x112xf32>
    %cst_294 = arith.constant dense<0.000000e+00> : vector<14x112xf32>
    %477 = tpu.matmul %474, %476, %cst_294 {dimension_numbers = #tpu.dot_dimension_numbers<[1], [0], [0], [1], [0, 0, 1, 1], [], []>} : vector<14x42xf32>, vector<42x112xf32>, vector<14x112xf32> -> vector<14x112xf32>
    %478 = arith.addf %472, %477 : vector<14x112xf32>
    %479 = vector.extract_strided_slice %1 {offsets = [2, 0, 3], sizes = [1, 14, 42], strides = [1, 1, 1]} : vector<4x16x48xf32> to vector<1x14x42xf32>
    %480 = vector.shape_cast %479 : vector<1x14x42xf32> to vector<14x42xf32>
    %c1_295 = arith.constant 1 : index
    %c0_296 = arith.constant 0 : index
    %c0_297 = arith.constant 0 : index
    %481 = vector.load %arg2[%c1_295, %c0_296, %c0_297] : memref<25x42x112xf32, #tpu.memory_space<vmem>>, vector<1x42x112xf32>
    %482 = vector.shape_cast %481 : vector<1x42x112xf32> to vector<42x112xf32>
    %cst_298 = arith.constant dense<0.000000e+00> : vector<14x112xf32>
    %483 = tpu.matmul %480, %482, %cst_298 {dimension_numbers = #tpu.dot_dimension_numbers<[1], [0], [0], [1], [0, 0, 1, 1], [], []>} : vector<14x42xf32>, vector<42x112xf32>, vector<14x112xf32> -> vector<14x112xf32>
    %484 = arith.addf %478, %483 : vector<14x112xf32>
    %485 = vector.extract_strided_slice %1 {offsets = [3, 0, 3], sizes = [1, 14, 42], strides = [1, 1, 1]} : vector<4x16x48xf32> to vector<1x14x42xf32>
    %486 = vector.shape_cast %485 : vector<1x14x42xf32> to vector<14x42xf32>
    %c2_299 = arith.constant 2 : index
    %c0_300 = arith.constant 0 : index
    %c0_301 = arith.constant 0 : index
    %487 = vector.load %arg2[%c2_299, %c0_300, %c0_301] : memref<25x42x112xf32, #tpu.memory_space<vmem>>, vector<1x42x112xf32>
    %488 = vector.shape_cast %487 : vector<1x42x112xf32> to vector<42x112xf32>
    %cst_302 = arith.constant dense<0.000000e+00> : vector<14x112xf32>
    %489 = tpu.matmul %486, %488, %cst_302 {dimension_numbers = #tpu.dot_dimension_numbers<[1], [0], [0], [1], [0, 0, 1, 1], [], []>} : vector<14x42xf32>, vector<42x112xf32>, vector<14x112xf32> -> vector<14x112xf32>
    %490 = arith.addf %484, %489 : vector<14x112xf32>
    %491 = vector.extract_strided_slice %1 {offsets = [2, 0, 6], sizes = [1, 14, 42], strides = [1, 1, 1]} : vector<4x16x48xf32> to vector<1x14x42xf32>
    %492 = vector.shape_cast %491 : vector<1x14x42xf32> to vector<14x42xf32>
    %c3_303 = arith.constant 3 : index
    %c0_304 = arith.constant 0 : index
    %c0_305 = arith.constant 0 : index
    %493 = vector.load %arg2[%c3_303, %c0_304, %c0_305] : memref<25x42x112xf32, #tpu.memory_space<vmem>>, vector<1x42x112xf32>
    %494 = vector.shape_cast %493 : vector<1x42x112xf32> to vector<42x112xf32>
    %cst_306 = arith.constant dense<0.000000e+00> : vector<14x112xf32>
    %495 = tpu.matmul %492, %494, %cst_306 {dimension_numbers = #tpu.dot_dimension_numbers<[1], [0], [0], [1], [0, 0, 1, 1], [], []>} : vector<14x42xf32>, vector<42x112xf32>, vector<14x112xf32> -> vector<14x112xf32>
    %496 = arith.addf %490, %495 : vector<14x112xf32>
    %497 = vector.extract_strided_slice %1 {offsets = [3, 0, 6], sizes = [1, 14, 42], strides = [1, 1, 1]} : vector<4x16x48xf32> to vector<1x14x42xf32>
    %498 = vector.shape_cast %497 : vector<1x14x42xf32> to vector<14x42xf32>
    %c4_307 = arith.constant 4 : index
    %c0_308 = arith.constant 0 : index
    %c0_309 = arith.constant 0 : index
    %499 = vector.load %arg2[%c4_307, %c0_308, %c0_309] : memref<25x42x112xf32, #tpu.memory_space<vmem>>, vector<1x42x112xf32>
    %500 = vector.shape_cast %499 : vector<1x42x112xf32> to vector<42x112xf32>
    %cst_310 = arith.constant dense<0.000000e+00> : vector<14x112xf32>
    %501 = tpu.matmul %498, %500, %cst_310 {dimension_numbers = #tpu.dot_dimension_numbers<[1], [0], [0], [1], [0, 0, 1, 1], [], []>} : vector<14x42xf32>, vector<42x112xf32>, vector<14x112xf32> -> vector<14x112xf32>
    %502 = arith.addf %496, %501 : vector<14x112xf32>
    %503 = vector.extract_strided_slice %1 {offsets = [1, 1, 0], sizes = [1, 14, 42], strides = [1, 1, 1]} : vector<4x16x48xf32> to vector<1x14x42xf32>
    %504 = vector.shape_cast %503 : vector<1x14x42xf32> to vector<14x42xf32>
    %c5_311 = arith.constant 5 : index
    %c0_312 = arith.constant 0 : index
    %c0_313 = arith.constant 0 : index
    %505 = vector.load %arg2[%c5_311, %c0_312, %c0_313] : memref<25x42x112xf32, #tpu.memory_space<vmem>>, vector<1x42x112xf32>
    %506 = vector.shape_cast %505 : vector<1x42x112xf32> to vector<42x112xf32>
    %cst_314 = arith.constant dense<0.000000e+00> : vector<14x112xf32>
    %507 = tpu.matmul %504, %506, %cst_314 {dimension_numbers = #tpu.dot_dimension_numbers<[1], [0], [0], [1], [0, 0, 1, 1], [], []>} : vector<14x42xf32>, vector<42x112xf32>, vector<14x112xf32> -> vector<14x112xf32>
    %508 = arith.addf %502, %507 : vector<14x112xf32>
    %509 = vector.extract_strided_slice %1 {offsets = [0, 1, 3], sizes = [1, 14, 42], strides = [1, 1, 1]} : vector<4x16x48xf32> to vector<1x14x42xf32>
    %510 = vector.shape_cast %509 : vector<1x14x42xf32> to vector<14x42xf32>
    %c6_315 = arith.constant 6 : index
    %c0_316 = arith.constant 0 : index
    %c0_317 = arith.constant 0 : index
    %511 = vector.load %arg2[%c6_315, %c0_316, %c0_317] : memref<25x42x112xf32, #tpu.memory_space<vmem>>, vector<1x42x112xf32>
    %512 = vector.shape_cast %511 : vector<1x42x112xf32> to vector<42x112xf32>
    %cst_318 = arith.constant dense<0.000000e+00> : vector<14x112xf32>
    %513 = tpu.matmul %510, %512, %cst_318 {dimension_numbers = #tpu.dot_dimension_numbers<[1], [0], [0], [1], [0, 0, 1, 1], [], []>} : vector<14x42xf32>, vector<42x112xf32>, vector<14x112xf32> -> vector<14x112xf32>
    %514 = arith.addf %508, %513 : vector<14x112xf32>
    %515 = vector.extract_strided_slice %1 {offsets = [1, 1, 3], sizes = [1, 14, 42], strides = [1, 1, 1]} : vector<4x16x48xf32> to vector<1x14x42xf32>
    %516 = vector.shape_cast %515 : vector<1x14x42xf32> to vector<14x42xf32>
    %c7_319 = arith.constant 7 : index
    %c0_320 = arith.constant 0 : index
    %c0_321 = arith.constant 0 : index
    %517 = vector.load %arg2[%c7_319, %c0_320, %c0_321] : memref<25x42x112xf32, #tpu.memory_space<vmem>>, vector<1x42x112xf32>
    %518 = vector.shape_cast %517 : vector<1x42x112xf32> to vector<42x112xf32>
    %cst_322 = arith.constant dense<0.000000e+00> : vector<14x112xf32>
    %519 = tpu.matmul %516, %518, %cst_322 {dimension_numbers = #tpu.dot_dimension_numbers<[1], [0], [0], [1], [0, 0, 1, 1], [], []>} : vector<14x42xf32>, vector<42x112xf32>, vector<14x112xf32> -> vector<14x112xf32>
    %520 = arith.addf %514, %519 : vector<14x112xf32>
    %521 = vector.extract_strided_slice %1 {offsets = [0, 1, 6], sizes = [1, 14, 42], strides = [1, 1, 1]} : vector<4x16x48xf32> to vector<1x14x42xf32>
    %522 = vector.shape_cast %521 : vector<1x14x42xf32> to vector<14x42xf32>
    %c8_323 = arith.constant 8 : index
    %c0_324 = arith.constant 0 : index
    %c0_325 = arith.constant 0 : index
    %523 = vector.load %arg2[%c8_323, %c0_324, %c0_325] : memref<25x42x112xf32, #tpu.memory_space<vmem>>, vector<1x42x112xf32>
    %524 = vector.shape_cast %523 : vector<1x42x112xf32> to vector<42x112xf32>
    %cst_326 = arith.constant dense<0.000000e+00> : vector<14x112xf32>
    %525 = tpu.matmul %522, %524, %cst_326 {dimension_numbers = #tpu.dot_dimension_numbers<[1], [0], [0], [1], [0, 0, 1, 1], [], []>} : vector<14x42xf32>, vector<42x112xf32>, vector<14x112xf32> -> vector<14x112xf32>
    %526 = arith.addf %520, %525 : vector<14x112xf32>
    %527 = vector.extract_strided_slice %1 {offsets = [1, 1, 6], sizes = [1, 14, 42], strides = [1, 1, 1]} : vector<4x16x48xf32> to vector<1x14x42xf32>
    %528 = vector.shape_cast %527 : vector<1x14x42xf32> to vector<14x42xf32>
    %c9_327 = arith.constant 9 : index
    %c0_328 = arith.constant 0 : index
    %c0_329 = arith.constant 0 : index
    %529 = vector.load %arg2[%c9_327, %c0_328, %c0_329] : memref<25x42x112xf32, #tpu.memory_space<vmem>>, vector<1x42x112xf32>
    %530 = vector.shape_cast %529 : vector<1x42x112xf32> to vector<42x112xf32>
    %cst_330 = arith.constant dense<0.000000e+00> : vector<14x112xf32>
    %531 = tpu.matmul %528, %530, %cst_330 {dimension_numbers = #tpu.dot_dimension_numbers<[1], [0], [0], [1], [0, 0, 1, 1], [], []>} : vector<14x42xf32>, vector<42x112xf32>, vector<14x112xf32> -> vector<14x112xf32>
    %532 = arith.addf %526, %531 : vector<14x112xf32>
    %533 = vector.extract_strided_slice %1 {offsets = [3, 1, 0], sizes = [1, 14, 42], strides = [1, 1, 1]} : vector<4x16x48xf32> to vector<1x14x42xf32>
    %534 = vector.shape_cast %533 : vector<1x14x42xf32> to vector<14x42xf32>
    %c10_331 = arith.constant 10 : index
    %c0_332 = arith.constant 0 : index
    %c0_333 = arith.constant 0 : index
    %535 = vector.load %arg2[%c10_331, %c0_332, %c0_333] : memref<25x42x112xf32, #tpu.memory_space<vmem>>, vector<1x42x112xf32>
    %536 = vector.shape_cast %535 : vector<1x42x112xf32> to vector<42x112xf32>
    %cst_334 = arith.constant dense<0.000000e+00> : vector<14x112xf32>
    %537 = tpu.matmul %534, %536, %cst_334 {dimension_numbers = #tpu.dot_dimension_numbers<[1], [0], [0], [1], [0, 0, 1, 1], [], []>} : vector<14x42xf32>, vector<42x112xf32>, vector<14x112xf32> -> vector<14x112xf32>
    %538 = arith.addf %532, %537 : vector<14x112xf32>
    %539 = vector.extract_strided_slice %1 {offsets = [2, 1, 3], sizes = [1, 14, 42], strides = [1, 1, 1]} : vector<4x16x48xf32> to vector<1x14x42xf32>
    %540 = vector.shape_cast %539 : vector<1x14x42xf32> to vector<14x42xf32>
    %c11_335 = arith.constant 11 : index
    %c0_336 = arith.constant 0 : index
    %c0_337 = arith.constant 0 : index
    %541 = vector.load %arg2[%c11_335, %c0_336, %c0_337] : memref<25x42x112xf32, #tpu.memory_space<vmem>>, vector<1x42x112xf32>
    %542 = vector.shape_cast %541 : vector<1x42x112xf32> to vector<42x112xf32>
    %cst_338 = arith.constant dense<0.000000e+00> : vector<14x112xf32>
    %543 = tpu.matmul %540, %542, %cst_338 {dimension_numbers = #tpu.dot_dimension_numbers<[1], [0], [0], [1], [0, 0, 1, 1], [], []>} : vector<14x42xf32>, vector<42x112xf32>, vector<14x112xf32> -> vector<14x112xf32>
    %544 = arith.addf %538, %543 : vector<14x112xf32>
    %545 = vector.extract_strided_slice %1 {offsets = [3, 1, 3], sizes = [1, 14, 42], strides = [1, 1, 1]} : vector<4x16x48xf32> to vector<1x14x42xf32>
    %546 = vector.shape_cast %545 : vector<1x14x42xf32> to vector<14x42xf32>
    %c12_339 = arith.constant 12 : index
    %c0_340 = arith.constant 0 : index
    %c0_341 = arith.constant 0 : index
    %547 = vector.load %arg2[%c12_339, %c0_340, %c0_341] : memref<25x42x112xf32, #tpu.memory_space<vmem>>, vector<1x42x112xf32>
    %548 = vector.shape_cast %547 : vector<1x42x112xf32> to vector<42x112xf32>
    %cst_342 = arith.constant dense<0.000000e+00> : vector<14x112xf32>
    %549 = tpu.matmul %546, %548, %cst_342 {dimension_numbers = #tpu.dot_dimension_numbers<[1], [0], [0], [1], [0, 0, 1, 1], [], []>} : vector<14x42xf32>, vector<42x112xf32>, vector<14x112xf32> -> vector<14x112xf32>
    %550 = arith.addf %544, %549 : vector<14x112xf32>
    %551 = vector.extract_strided_slice %1 {offsets = [2, 1, 6], sizes = [1, 14, 42], strides = [1, 1, 1]} : vector<4x16x48xf32> to vector<1x14x42xf32>
    %552 = vector.shape_cast %551 : vector<1x14x42xf32> to vector<14x42xf32>
    %c13_343 = arith.constant 13 : index
    %c0_344 = arith.constant 0 : index
    %c0_345 = arith.constant 0 : index
    %553 = vector.load %arg2[%c13_343, %c0_344, %c0_345] : memref<25x42x112xf32, #tpu.memory_space<vmem>>, vector<1x42x112xf32>
    %554 = vector.shape_cast %553 : vector<1x42x112xf32> to vector<42x112xf32>
    %cst_346 = arith.constant dense<0.000000e+00> : vector<14x112xf32>
    %555 = tpu.matmul %552, %554, %cst_346 {dimension_numbers = #tpu.dot_dimension_numbers<[1], [0], [0], [1], [0, 0, 1, 1], [], []>} : vector<14x42xf32>, vector<42x112xf32>, vector<14x112xf32> -> vector<14x112xf32>
    %556 = arith.addf %550, %555 : vector<14x112xf32>
    %557 = vector.extract_strided_slice %1 {offsets = [3, 1, 6], sizes = [1, 14, 42], strides = [1, 1, 1]} : vector<4x16x48xf32> to vector<1x14x42xf32>
    %558 = vector.shape_cast %557 : vector<1x14x42xf32> to vector<14x42xf32>
    %c14_347 = arith.constant 14 : index
    %c0_348 = arith.constant 0 : index
    %c0_349 = arith.constant 0 : index
    %559 = vector.load %arg2[%c14_347, %c0_348, %c0_349] : memref<25x42x112xf32, #tpu.memory_space<vmem>>, vector<1x42x112xf32>
    %560 = vector.shape_cast %559 : vector<1x42x112xf32> to vector<42x112xf32>
    %cst_350 = arith.constant dense<0.000000e+00> : vector<14x112xf32>
    %561 = tpu.matmul %558, %560, %cst_350 {dimension_numbers = #tpu.dot_dimension_numbers<[1], [0], [0], [1], [0, 0, 1, 1], [], []>} : vector<14x42xf32>, vector<42x112xf32>, vector<14x112xf32> -> vector<14x112xf32>
    %562 = arith.addf %556, %561 : vector<14x112xf32>
    %563 = vector.extract_strided_slice %1 {offsets = [1, 2, 0], sizes = [1, 14, 42], strides = [1, 1, 1]} : vector<4x16x48xf32> to vector<1x14x42xf32>
    %564 = vector.shape_cast %563 : vector<1x14x42xf32> to vector<14x42xf32>
    %c15_351 = arith.constant 15 : index
    %c0_352 = arith.constant 0 : index
    %c0_353 = arith.constant 0 : index
    %565 = vector.load %arg2[%c15_351, %c0_352, %c0_353] : memref<25x42x112xf32, #tpu.memory_space<vmem>>, vector<1x42x112xf32>
    %566 = vector.shape_cast %565 : vector<1x42x112xf32> to vector<42x112xf32>
    %cst_354 = arith.constant dense<0.000000e+00> : vector<14x112xf32>
    %567 = tpu.matmul %564, %566, %cst_354 {dimension_numbers = #tpu.dot_dimension_numbers<[1], [0], [0], [1], [0, 0, 1, 1], [], []>} : vector<14x42xf32>, vector<42x112xf32>, vector<14x112xf32> -> vector<14x112xf32>
    %568 = arith.addf %562, %567 : vector<14x112xf32>
    %569 = vector.extract_strided_slice %1 {offsets = [0, 2, 3], sizes = [1, 14, 42], strides = [1, 1, 1]} : vector<4x16x48xf32> to vector<1x14x42xf32>
    %570 = vector.shape_cast %569 : vector<1x14x42xf32> to vector<14x42xf32>
    %c16_355 = arith.constant 16 : index
    %c0_356 = arith.constant 0 : index
    %c0_357 = arith.constant 0 : index
    %571 = vector.load %arg2[%c16_355, %c0_356, %c0_357] : memref<25x42x112xf32, #tpu.memory_space<vmem>>, vector<1x42x112xf32>
    %572 = vector.shape_cast %571 : vector<1x42x112xf32> to vector<42x112xf32>
    %cst_358 = arith.constant dense<0.000000e+00> : vector<14x112xf32>
    %573 = tpu.matmul %570, %572, %cst_358 {dimension_numbers = #tpu.dot_dimension_numbers<[1], [0], [0], [1], [0, 0, 1, 1], [], []>} : vector<14x42xf32>, vector<42x112xf32>, vector<14x112xf32> -> vector<14x112xf32>
    %574 = arith.addf %568, %573 : vector<14x112xf32>
    %575 = vector.extract_strided_slice %1 {offsets = [1, 2, 3], sizes = [1, 14, 42], strides = [1, 1, 1]} : vector<4x16x48xf32> to vector<1x14x42xf32>
    %576 = vector.shape_cast %575 : vector<1x14x42xf32> to vector<14x42xf32>
    %c17_359 = arith.constant 17 : index
    %c0_360 = arith.constant 0 : index
    %c0_361 = arith.constant 0 : index
    %577 = vector.load %arg2[%c17_359, %c0_360, %c0_361] : memref<25x42x112xf32, #tpu.memory_space<vmem>>, vector<1x42x112xf32>
    %578 = vector.shape_cast %577 : vector<1x42x112xf32> to vector<42x112xf32>
    %cst_362 = arith.constant dense<0.000000e+00> : vector<14x112xf32>
    %579 = tpu.matmul %576, %578, %cst_362 {dimension_numbers = #tpu.dot_dimension_numbers<[1], [0], [0], [1], [0, 0, 1, 1], [], []>} : vector<14x42xf32>, vector<42x112xf32>, vector<14x112xf32> -> vector<14x112xf32>
    %580 = arith.addf %574, %579 : vector<14x112xf32>
    %581 = vector.extract_strided_slice %1 {offsets = [0, 2, 6], sizes = [1, 14, 42], strides = [1, 1, 1]} : vector<4x16x48xf32> to vector<1x14x42xf32>
    %582 = vector.shape_cast %581 : vector<1x14x42xf32> to vector<14x42xf32>
    %c18_363 = arith.constant 18 : index
    %c0_364 = arith.constant 0 : index
    %c0_365 = arith.constant 0 : index
    %583 = vector.load %arg2[%c18_363, %c0_364, %c0_365] : memref<25x42x112xf32, #tpu.memory_space<vmem>>, vector<1x42x112xf32>
    %584 = vector.shape_cast %583 : vector<1x42x112xf32> to vector<42x112xf32>
    %cst_366 = arith.constant dense<0.000000e+00> : vector<14x112xf32>
    %585 = tpu.matmul %582, %584, %cst_366 {dimension_numbers = #tpu.dot_dimension_numbers<[1], [0], [0], [1], [0, 0, 1, 1], [], []>} : vector<14x42xf32>, vector<42x112xf32>, vector<14x112xf32> -> vector<14x112xf32>
    %586 = arith.addf %580, %585 : vector<14x112xf32>
    %587 = vector.extract_strided_slice %1 {offsets = [1, 2, 6], sizes = [1, 14, 42], strides = [1, 1, 1]} : vector<4x16x48xf32> to vector<1x14x42xf32>
    %588 = vector.shape_cast %587 : vector<1x14x42xf32> to vector<14x42xf32>
    %c19_367 = arith.constant 19 : index
    %c0_368 = arith.constant 0 : index
    %c0_369 = arith.constant 0 : index
    %589 = vector.load %arg2[%c19_367, %c0_368, %c0_369] : memref<25x42x112xf32, #tpu.memory_space<vmem>>, vector<1x42x112xf32>
    %590 = vector.shape_cast %589 : vector<1x42x112xf32> to vector<42x112xf32>
    %cst_370 = arith.constant dense<0.000000e+00> : vector<14x112xf32>
    %591 = tpu.matmul %588, %590, %cst_370 {dimension_numbers = #tpu.dot_dimension_numbers<[1], [0], [0], [1], [0, 0, 1, 1], [], []>} : vector<14x42xf32>, vector<42x112xf32>, vector<14x112xf32> -> vector<14x112xf32>
    %592 = arith.addf %586, %591 : vector<14x112xf32>
    %593 = vector.extract_strided_slice %1 {offsets = [3, 2, 0], sizes = [1, 14, 42], strides = [1, 1, 1]} : vector<4x16x48xf32> to vector<1x14x42xf32>
    %594 = vector.shape_cast %593 : vector<1x14x42xf32> to vector<14x42xf32>
    %c20_371 = arith.constant 20 : index
    %c0_372 = arith.constant 0 : index
    %c0_373 = arith.constant 0 : index
    %595 = vector.load %arg2[%c20_371, %c0_372, %c0_373] : memref<25x42x112xf32, #tpu.memory_space<vmem>>, vector<1x42x112xf32>
    %596 = vector.shape_cast %595 : vector<1x42x112xf32> to vector<42x112xf32>
    %cst_374 = arith.constant dense<0.000000e+00> : vector<14x112xf32>
    %597 = tpu.matmul %594, %596, %cst_374 {dimension_numbers = #tpu.dot_dimension_numbers<[1], [0], [0], [1], [0, 0, 1, 1], [], []>} : vector<14x42xf32>, vector<42x112xf32>, vector<14x112xf32> -> vector<14x112xf32>
    %598 = arith.addf %592, %597 : vector<14x112xf32>
    %599 = vector.extract_strided_slice %1 {offsets = [2, 2, 3], sizes = [1, 14, 42], strides = [1, 1, 1]} : vector<4x16x48xf32> to vector<1x14x42xf32>
    %600 = vector.shape_cast %599 : vector<1x14x42xf32> to vector<14x42xf32>
    %c21_375 = arith.constant 21 : index
    %c0_376 = arith.constant 0 : index
    %c0_377 = arith.constant 0 : index
    %601 = vector.load %arg2[%c21_375, %c0_376, %c0_377] : memref<25x42x112xf32, #tpu.memory_space<vmem>>, vector<1x42x112xf32>
    %602 = vector.shape_cast %601 : vector<1x42x112xf32> to vector<42x112xf32>
    %cst_378 = arith.constant dense<0.000000e+00> : vector<14x112xf32>
    %603 = tpu.matmul %600, %602, %cst_378 {dimension_numbers = #tpu.dot_dimension_numbers<[1], [0], [0], [1], [0, 0, 1, 1], [], []>} : vector<14x42xf32>, vector<42x112xf32>, vector<14x112xf32> -> vector<14x112xf32>
    %604 = arith.addf %598, %603 : vector<14x112xf32>
    %605 = vector.extract_strided_slice %1 {offsets = [3, 2, 3], sizes = [1, 14, 42], strides = [1, 1, 1]} : vector<4x16x48xf32> to vector<1x14x42xf32>
    %606 = vector.shape_cast %605 : vector<1x14x42xf32> to vector<14x42xf32>
    %c22_379 = arith.constant 22 : index
    %c0_380 = arith.constant 0 : index
    %c0_381 = arith.constant 0 : index
    %607 = vector.load %arg2[%c22_379, %c0_380, %c0_381] : memref<25x42x112xf32, #tpu.memory_space<vmem>>, vector<1x42x112xf32>
    %608 = vector.shape_cast %607 : vector<1x42x112xf32> to vector<42x112xf32>
    %cst_382 = arith.constant dense<0.000000e+00> : vector<14x112xf32>
    %609 = tpu.matmul %606, %608, %cst_382 {dimension_numbers = #tpu.dot_dimension_numbers<[1], [0], [0], [1], [0, 0, 1, 1], [], []>} : vector<14x42xf32>, vector<42x112xf32>, vector<14x112xf32> -> vector<14x112xf32>
    %610 = arith.addf %604, %609 : vector<14x112xf32>
    %611 = vector.extract_strided_slice %1 {offsets = [2, 2, 6], sizes = [1, 14, 42], strides = [1, 1, 1]} : vector<4x16x48xf32> to vector<1x14x42xf32>
    %612 = vector.shape_cast %611 : vector<1x14x42xf32> to vector<14x42xf32>
    %c23_383 = arith.constant 23 : index
    %c0_384 = arith.constant 0 : index
    %c0_385 = arith.constant 0 : index
    %613 = vector.load %arg2[%c23_383, %c0_384, %c0_385] : memref<25x42x112xf32, #tpu.memory_space<vmem>>, vector<1x42x112xf32>
    %614 = vector.shape_cast %613 : vector<1x42x112xf32> to vector<42x112xf32>
    %cst_386 = arith.constant dense<0.000000e+00> : vector<14x112xf32>
    %615 = tpu.matmul %612, %614, %cst_386 {dimension_numbers = #tpu.dot_dimension_numbers<[1], [0], [0], [1], [0, 0, 1, 1], [], []>} : vector<14x42xf32>, vector<42x112xf32>, vector<14x112xf32> -> vector<14x112xf32>
    %616 = arith.addf %610, %615 : vector<14x112xf32>
    %617 = vector.extract_strided_slice %1 {offsets = [3, 2, 6], sizes = [1, 14, 42], strides = [1, 1, 1]} : vector<4x16x48xf32> to vector<1x14x42xf32>
    %618 = vector.shape_cast %617 : vector<1x14x42xf32> to vector<14x42xf32>
    %c24_387 = arith.constant 24 : index
    %c0_388 = arith.constant 0 : index
    %c0_389 = arith.constant 0 : index
    %619 = vector.load %arg2[%c24_387, %c0_388, %c0_389] : memref<25x42x112xf32, #tpu.memory_space<vmem>>, vector<1x42x112xf32>
    %620 = vector.shape_cast %619 : vector<1x42x112xf32> to vector<42x112xf32>
    %cst_390 = arith.constant dense<0.000000e+00> : vector<14x112xf32>
    %621 = tpu.matmul %618, %620, %cst_390 {dimension_numbers = #tpu.dot_dimension_numbers<[1], [0], [0], [1], [0, 0, 1, 1], [], []>} : vector<14x42xf32>, vector<42x112xf32>, vector<14x112xf32> -> vector<14x112xf32>
    %622 = arith.addf %616, %621 : vector<14x112xf32>
    %c0_391 = arith.constant 0 : index
    %c0_392 = arith.constant 0 : index
    %623 = vector.load %arg3[%c0_391, %c0_392] : memref<1x112xf32, #tpu.memory_space<vmem>>, vector<1x112xf32>
    %624 = vector.broadcast %623 : vector<1x112xf32> to vector<14x112xf32>
    %625 = arith.addf %622, %624 : vector<14x112xf32>
    %cst_393 = arith.constant 0.000000e+00 : f32
    %626 = vector.broadcast %cst_393 : f32 to vector<14x112xf32>
    %627 = arith.maximumf %625, %626 : vector<14x112xf32>
    %628 = arith.maximumf %471, %627 : vector<14x112xf32>
    %cst_394 = arith.constant 0.000000e+00 : f32
    %629 = vector.broadcast %cst_394 : f32 to vector<10x160xf32>
    %630 = vector.extract_strided_slice %628 {offsets = [0, 0], sizes = [10, 80], strides = [1, 1]} : vector<14x112xf32> to vector<10x80xf32>
    %c0_395 = arith.constant 0 : index
    %c0_396 = arith.constant 0 : index
    %c0_397 = arith.constant 0 : index
    %631 = vector.load %arg4[%c0_395, %c0_396, %c0_397] : memref<25x80x160xf32, #tpu.memory_space<vmem>>, vector<1x80x160xf32>
    %632 = vector.shape_cast %631 : vector<1x80x160xf32> to vector<80x160xf32>
    %cst_398 = arith.constant dense<0.000000e+00> : vector<10x160xf32>
    %633 = tpu.matmul %630, %632, %cst_398 {dimension_numbers = #tpu.dot_dimension_numbers<[1], [0], [0], [1], [0, 0, 1, 1], [], []>} : vector<10x80xf32>, vector<80x160xf32>, vector<10x160xf32> -> vector<10x160xf32>
    %634 = arith.addf %629, %633 : vector<10x160xf32>
    %635 = vector.extract_strided_slice %628 {offsets = [0, 8], sizes = [10, 80], strides = [1, 1]} : vector<14x112xf32> to vector<10x80xf32>
    %c1_399 = arith.constant 1 : index
    %c0_400 = arith.constant 0 : index
    %c0_401 = arith.constant 0 : index
    %636 = vector.load %arg4[%c1_399, %c0_400, %c0_401] : memref<25x80x160xf32, #tpu.memory_space<vmem>>, vector<1x80x160xf32>
    %637 = vector.shape_cast %636 : vector<1x80x160xf32> to vector<80x160xf32>
    %cst_402 = arith.constant dense<0.000000e+00> : vector<10x160xf32>
    %638 = tpu.matmul %635, %637, %cst_402 {dimension_numbers = #tpu.dot_dimension_numbers<[1], [0], [0], [1], [0, 0, 1, 1], [], []>} : vector<10x80xf32>, vector<80x160xf32>, vector<10x160xf32> -> vector<10x160xf32>
    %639 = arith.addf %634, %638 : vector<10x160xf32>
    %640 = vector.extract_strided_slice %628 {offsets = [0, 16], sizes = [10, 80], strides = [1, 1]} : vector<14x112xf32> to vector<10x80xf32>
    %c2_403 = arith.constant 2 : index
    %c0_404 = arith.constant 0 : index
    %c0_405 = arith.constant 0 : index
    %641 = vector.load %arg4[%c2_403, %c0_404, %c0_405] : memref<25x80x160xf32, #tpu.memory_space<vmem>>, vector<1x80x160xf32>
    %642 = vector.shape_cast %641 : vector<1x80x160xf32> to vector<80x160xf32>
    %cst_406 = arith.constant dense<0.000000e+00> : vector<10x160xf32>
    %643 = tpu.matmul %640, %642, %cst_406 {dimension_numbers = #tpu.dot_dimension_numbers<[1], [0], [0], [1], [0, 0, 1, 1], [], []>} : vector<10x80xf32>, vector<80x160xf32>, vector<10x160xf32> -> vector<10x160xf32>
    %644 = arith.addf %639, %643 : vector<10x160xf32>
    %645 = vector.extract_strided_slice %628 {offsets = [0, 24], sizes = [10, 80], strides = [1, 1]} : vector<14x112xf32> to vector<10x80xf32>
    %c3_407 = arith.constant 3 : index
    %c0_408 = arith.constant 0 : index
    %c0_409 = arith.constant 0 : index
    %646 = vector.load %arg4[%c3_407, %c0_408, %c0_409] : memref<25x80x160xf32, #tpu.memory_space<vmem>>, vector<1x80x160xf32>
    %647 = vector.shape_cast %646 : vector<1x80x160xf32> to vector<80x160xf32>
    %cst_410 = arith.constant dense<0.000000e+00> : vector<10x160xf32>
    %648 = tpu.matmul %645, %647, %cst_410 {dimension_numbers = #tpu.dot_dimension_numbers<[1], [0], [0], [1], [0, 0, 1, 1], [], []>} : vector<10x80xf32>, vector<80x160xf32>, vector<10x160xf32> -> vector<10x160xf32>
    %649 = arith.addf %644, %648 : vector<10x160xf32>
    %650 = vector.extract_strided_slice %628 {offsets = [0, 32], sizes = [10, 80], strides = [1, 1]} : vector<14x112xf32> to vector<10x80xf32>
    %c4_411 = arith.constant 4 : index
    %c0_412 = arith.constant 0 : index
    %c0_413 = arith.constant 0 : index
    %651 = vector.load %arg4[%c4_411, %c0_412, %c0_413] : memref<25x80x160xf32, #tpu.memory_space<vmem>>, vector<1x80x160xf32>
    %652 = vector.shape_cast %651 : vector<1x80x160xf32> to vector<80x160xf32>
    %cst_414 = arith.constant dense<0.000000e+00> : vector<10x160xf32>
    %653 = tpu.matmul %650, %652, %cst_414 {dimension_numbers = #tpu.dot_dimension_numbers<[1], [0], [0], [1], [0, 0, 1, 1], [], []>} : vector<10x80xf32>, vector<80x160xf32>, vector<10x160xf32> -> vector<10x160xf32>
    %654 = arith.addf %649, %653 : vector<10x160xf32>
    %655 = vector.extract_strided_slice %628 {offsets = [1, 0], sizes = [10, 80], strides = [1, 1]} : vector<14x112xf32> to vector<10x80xf32>
    %c5_415 = arith.constant 5 : index
    %c0_416 = arith.constant 0 : index
    %c0_417 = arith.constant 0 : index
    %656 = vector.load %arg4[%c5_415, %c0_416, %c0_417] : memref<25x80x160xf32, #tpu.memory_space<vmem>>, vector<1x80x160xf32>
    %657 = vector.shape_cast %656 : vector<1x80x160xf32> to vector<80x160xf32>
    %cst_418 = arith.constant dense<0.000000e+00> : vector<10x160xf32>
    %658 = tpu.matmul %655, %657, %cst_418 {dimension_numbers = #tpu.dot_dimension_numbers<[1], [0], [0], [1], [0, 0, 1, 1], [], []>} : vector<10x80xf32>, vector<80x160xf32>, vector<10x160xf32> -> vector<10x160xf32>
    %659 = arith.addf %654, %658 : vector<10x160xf32>
    %660 = vector.extract_strided_slice %628 {offsets = [1, 8], sizes = [10, 80], strides = [1, 1]} : vector<14x112xf32> to vector<10x80xf32>
    %c6_419 = arith.constant 6 : index
    %c0_420 = arith.constant 0 : index
    %c0_421 = arith.constant 0 : index
    %661 = vector.load %arg4[%c6_419, %c0_420, %c0_421] : memref<25x80x160xf32, #tpu.memory_space<vmem>>, vector<1x80x160xf32>
    %662 = vector.shape_cast %661 : vector<1x80x160xf32> to vector<80x160xf32>
    %cst_422 = arith.constant dense<0.000000e+00> : vector<10x160xf32>
    %663 = tpu.matmul %660, %662, %cst_422 {dimension_numbers = #tpu.dot_dimension_numbers<[1], [0], [0], [1], [0, 0, 1, 1], [], []>} : vector<10x80xf32>, vector<80x160xf32>, vector<10x160xf32> -> vector<10x160xf32>
    %664 = arith.addf %659, %663 : vector<10x160xf32>
    %665 = vector.extract_strided_slice %628 {offsets = [1, 16], sizes = [10, 80], strides = [1, 1]} : vector<14x112xf32> to vector<10x80xf32>
    %c7_423 = arith.constant 7 : index
    %c0_424 = arith.constant 0 : index
    %c0_425 = arith.constant 0 : index
    %666 = vector.load %arg4[%c7_423, %c0_424, %c0_425] : memref<25x80x160xf32, #tpu.memory_space<vmem>>, vector<1x80x160xf32>
    %667 = vector.shape_cast %666 : vector<1x80x160xf32> to vector<80x160xf32>
    %cst_426 = arith.constant dense<0.000000e+00> : vector<10x160xf32>
    %668 = tpu.matmul %665, %667, %cst_426 {dimension_numbers = #tpu.dot_dimension_numbers<[1], [0], [0], [1], [0, 0, 1, 1], [], []>} : vector<10x80xf32>, vector<80x160xf32>, vector<10x160xf32> -> vector<10x160xf32>
    %669 = arith.addf %664, %668 : vector<10x160xf32>
    %670 = vector.extract_strided_slice %628 {offsets = [1, 24], sizes = [10, 80], strides = [1, 1]} : vector<14x112xf32> to vector<10x80xf32>
    %c8_427 = arith.constant 8 : index
    %c0_428 = arith.constant 0 : index
    %c0_429 = arith.constant 0 : index
    %671 = vector.load %arg4[%c8_427, %c0_428, %c0_429] : memref<25x80x160xf32, #tpu.memory_space<vmem>>, vector<1x80x160xf32>
    %672 = vector.shape_cast %671 : vector<1x80x160xf32> to vector<80x160xf32>
    %cst_430 = arith.constant dense<0.000000e+00> : vector<10x160xf32>
    %673 = tpu.matmul %670, %672, %cst_430 {dimension_numbers = #tpu.dot_dimension_numbers<[1], [0], [0], [1], [0, 0, 1, 1], [], []>} : vector<10x80xf32>, vector<80x160xf32>, vector<10x160xf32> -> vector<10x160xf32>
    %674 = arith.addf %669, %673 : vector<10x160xf32>
    %675 = vector.extract_strided_slice %628 {offsets = [1, 32], sizes = [10, 80], strides = [1, 1]} : vector<14x112xf32> to vector<10x80xf32>
    %c9_431 = arith.constant 9 : index
    %c0_432 = arith.constant 0 : index
    %c0_433 = arith.constant 0 : index
    %676 = vector.load %arg4[%c9_431, %c0_432, %c0_433] : memref<25x80x160xf32, #tpu.memory_space<vmem>>, vector<1x80x160xf32>
    %677 = vector.shape_cast %676 : vector<1x80x160xf32> to vector<80x160xf32>
    %cst_434 = arith.constant dense<0.000000e+00> : vector<10x160xf32>
    %678 = tpu.matmul %675, %677, %cst_434 {dimension_numbers = #tpu.dot_dimension_numbers<[1], [0], [0], [1], [0, 0, 1, 1], [], []>} : vector<10x80xf32>, vector<80x160xf32>, vector<10x160xf32> -> vector<10x160xf32>
    %679 = arith.addf %674, %678 : vector<10x160xf32>
    %680 = vector.extract_strided_slice %628 {offsets = [2, 0], sizes = [10, 80], strides = [1, 1]} : vector<14x112xf32> to vector<10x80xf32>
    %c10_435 = arith.constant 10 : index
    %c0_436 = arith.constant 0 : index
    %c0_437 = arith.constant 0 : index
    %681 = vector.load %arg4[%c10_435, %c0_436, %c0_437] : memref<25x80x160xf32, #tpu.memory_space<vmem>>, vector<1x80x160xf32>
    %682 = vector.shape_cast %681 : vector<1x80x160xf32> to vector<80x160xf32>
    %cst_438 = arith.constant dense<0.000000e+00> : vector<10x160xf32>
    %683 = tpu.matmul %680, %682, %cst_438 {dimension_numbers = #tpu.dot_dimension_numbers<[1], [0], [0], [1], [0, 0, 1, 1], [], []>} : vector<10x80xf32>, vector<80x160xf32>, vector<10x160xf32> -> vector<10x160xf32>
    %684 = arith.addf %679, %683 : vector<10x160xf32>
    %685 = vector.extract_strided_slice %628 {offsets = [2, 8], sizes = [10, 80], strides = [1, 1]} : vector<14x112xf32> to vector<10x80xf32>
    %c11_439 = arith.constant 11 : index
    %c0_440 = arith.constant 0 : index
    %c0_441 = arith.constant 0 : index
    %686 = vector.load %arg4[%c11_439, %c0_440, %c0_441] : memref<25x80x160xf32, #tpu.memory_space<vmem>>, vector<1x80x160xf32>
    %687 = vector.shape_cast %686 : vector<1x80x160xf32> to vector<80x160xf32>
    %cst_442 = arith.constant dense<0.000000e+00> : vector<10x160xf32>
    %688 = tpu.matmul %685, %687, %cst_442 {dimension_numbers = #tpu.dot_dimension_numbers<[1], [0], [0], [1], [0, 0, 1, 1], [], []>} : vector<10x80xf32>, vector<80x160xf32>, vector<10x160xf32> -> vector<10x160xf32>
    %689 = arith.addf %684, %688 : vector<10x160xf32>
    %690 = vector.extract_strided_slice %628 {offsets = [2, 16], sizes = [10, 80], strides = [1, 1]} : vector<14x112xf32> to vector<10x80xf32>
    %c12_443 = arith.constant 12 : index
    %c0_444 = arith.constant 0 : index
    %c0_445 = arith.constant 0 : index
    %691 = vector.load %arg4[%c12_443, %c0_444, %c0_445] : memref<25x80x160xf32, #tpu.memory_space<vmem>>, vector<1x80x160xf32>
    %692 = vector.shape_cast %691 : vector<1x80x160xf32> to vector<80x160xf32>
    %cst_446 = arith.constant dense<0.000000e+00> : vector<10x160xf32>
    %693 = tpu.matmul %690, %692, %cst_446 {dimension_numbers = #tpu.dot_dimension_numbers<[1], [0], [0], [1], [0, 0, 1, 1], [], []>} : vector<10x80xf32>, vector<80x160xf32>, vector<10x160xf32> -> vector<10x160xf32>
    %694 = arith.addf %689, %693 : vector<10x160xf32>
    %695 = vector.extract_strided_slice %628 {offsets = [2, 24], sizes = [10, 80], strides = [1, 1]} : vector<14x112xf32> to vector<10x80xf32>
    %c13_447 = arith.constant 13 : index
    %c0_448 = arith.constant 0 : index
    %c0_449 = arith.constant 0 : index
    %696 = vector.load %arg4[%c13_447, %c0_448, %c0_449] : memref<25x80x160xf32, #tpu.memory_space<vmem>>, vector<1x80x160xf32>
    %697 = vector.shape_cast %696 : vector<1x80x160xf32> to vector<80x160xf32>
    %cst_450 = arith.constant dense<0.000000e+00> : vector<10x160xf32>
    %698 = tpu.matmul %695, %697, %cst_450 {dimension_numbers = #tpu.dot_dimension_numbers<[1], [0], [0], [1], [0, 0, 1, 1], [], []>} : vector<10x80xf32>, vector<80x160xf32>, vector<10x160xf32> -> vector<10x160xf32>
    %699 = arith.addf %694, %698 : vector<10x160xf32>
    %700 = vector.extract_strided_slice %628 {offsets = [2, 32], sizes = [10, 80], strides = [1, 1]} : vector<14x112xf32> to vector<10x80xf32>
    %c14_451 = arith.constant 14 : index
    %c0_452 = arith.constant 0 : index
    %c0_453 = arith.constant 0 : index
    %701 = vector.load %arg4[%c14_451, %c0_452, %c0_453] : memref<25x80x160xf32, #tpu.memory_space<vmem>>, vector<1x80x160xf32>
    %702 = vector.shape_cast %701 : vector<1x80x160xf32> to vector<80x160xf32>
    %cst_454 = arith.constant dense<0.000000e+00> : vector<10x160xf32>
    %703 = tpu.matmul %700, %702, %cst_454 {dimension_numbers = #tpu.dot_dimension_numbers<[1], [0], [0], [1], [0, 0, 1, 1], [], []>} : vector<10x80xf32>, vector<80x160xf32>, vector<10x160xf32> -> vector<10x160xf32>
    %704 = arith.addf %699, %703 : vector<10x160xf32>
    %705 = vector.extract_strided_slice %628 {offsets = [3, 0], sizes = [10, 80], strides = [1, 1]} : vector<14x112xf32> to vector<10x80xf32>
    %c15_455 = arith.constant 15 : index
    %c0_456 = arith.constant 0 : index
    %c0_457 = arith.constant 0 : index
    %706 = vector.load %arg4[%c15_455, %c0_456, %c0_457] : memref<25x80x160xf32, #tpu.memory_space<vmem>>, vector<1x80x160xf32>
    %707 = vector.shape_cast %706 : vector<1x80x160xf32> to vector<80x160xf32>
    %cst_458 = arith.constant dense<0.000000e+00> : vector<10x160xf32>
    %708 = tpu.matmul %705, %707, %cst_458 {dimension_numbers = #tpu.dot_dimension_numbers<[1], [0], [0], [1], [0, 0, 1, 1], [], []>} : vector<10x80xf32>, vector<80x160xf32>, vector<10x160xf32> -> vector<10x160xf32>
    %709 = arith.addf %704, %708 : vector<10x160xf32>
    %710 = vector.extract_strided_slice %628 {offsets = [3, 8], sizes = [10, 80], strides = [1, 1]} : vector<14x112xf32> to vector<10x80xf32>
    %c16_459 = arith.constant 16 : index
    %c0_460 = arith.constant 0 : index
    %c0_461 = arith.constant 0 : index
    %711 = vector.load %arg4[%c16_459, %c0_460, %c0_461] : memref<25x80x160xf32, #tpu.memory_space<vmem>>, vector<1x80x160xf32>
    %712 = vector.shape_cast %711 : vector<1x80x160xf32> to vector<80x160xf32>
    %cst_462 = arith.constant dense<0.000000e+00> : vector<10x160xf32>
    %713 = tpu.matmul %710, %712, %cst_462 {dimension_numbers = #tpu.dot_dimension_numbers<[1], [0], [0], [1], [0, 0, 1, 1], [], []>} : vector<10x80xf32>, vector<80x160xf32>, vector<10x160xf32> -> vector<10x160xf32>
    %714 = arith.addf %709, %713 : vector<10x160xf32>
    %715 = vector.extract_strided_slice %628 {offsets = [3, 16], sizes = [10, 80], strides = [1, 1]} : vector<14x112xf32> to vector<10x80xf32>
    %c17_463 = arith.constant 17 : index
    %c0_464 = arith.constant 0 : index
    %c0_465 = arith.constant 0 : index
    %716 = vector.load %arg4[%c17_463, %c0_464, %c0_465] : memref<25x80x160xf32, #tpu.memory_space<vmem>>, vector<1x80x160xf32>
    %717 = vector.shape_cast %716 : vector<1x80x160xf32> to vector<80x160xf32>
    %cst_466 = arith.constant dense<0.000000e+00> : vector<10x160xf32>
    %718 = tpu.matmul %715, %717, %cst_466 {dimension_numbers = #tpu.dot_dimension_numbers<[1], [0], [0], [1], [0, 0, 1, 1], [], []>} : vector<10x80xf32>, vector<80x160xf32>, vector<10x160xf32> -> vector<10x160xf32>
    %719 = arith.addf %714, %718 : vector<10x160xf32>
    %720 = vector.extract_strided_slice %628 {offsets = [3, 24], sizes = [10, 80], strides = [1, 1]} : vector<14x112xf32> to vector<10x80xf32>
    %c18_467 = arith.constant 18 : index
    %c0_468 = arith.constant 0 : index
    %c0_469 = arith.constant 0 : index
    %721 = vector.load %arg4[%c18_467, %c0_468, %c0_469] : memref<25x80x160xf32, #tpu.memory_space<vmem>>, vector<1x80x160xf32>
    %722 = vector.shape_cast %721 : vector<1x80x160xf32> to vector<80x160xf32>
    %cst_470 = arith.constant dense<0.000000e+00> : vector<10x160xf32>
    %723 = tpu.matmul %720, %722, %cst_470 {dimension_numbers = #tpu.dot_dimension_numbers<[1], [0], [0], [1], [0, 0, 1, 1], [], []>} : vector<10x80xf32>, vector<80x160xf32>, vector<10x160xf32> -> vector<10x160xf32>
    %724 = arith.addf %719, %723 : vector<10x160xf32>
    %725 = vector.extract_strided_slice %628 {offsets = [3, 32], sizes = [10, 80], strides = [1, 1]} : vector<14x112xf32> to vector<10x80xf32>
    %c19_471 = arith.constant 19 : index
    %c0_472 = arith.constant 0 : index
    %c0_473 = arith.constant 0 : index
    %726 = vector.load %arg4[%c19_471, %c0_472, %c0_473] : memref<25x80x160xf32, #tpu.memory_space<vmem>>, vector<1x80x160xf32>
    %727 = vector.shape_cast %726 : vector<1x80x160xf32> to vector<80x160xf32>
    %cst_474 = arith.constant dense<0.000000e+00> : vector<10x160xf32>
    %728 = tpu.matmul %725, %727, %cst_474 {dimension_numbers = #tpu.dot_dimension_numbers<[1], [0], [0], [1], [0, 0, 1, 1], [], []>} : vector<10x80xf32>, vector<80x160xf32>, vector<10x160xf32> -> vector<10x160xf32>
    %729 = arith.addf %724, %728 : vector<10x160xf32>
    %730 = vector.extract_strided_slice %628 {offsets = [4, 0], sizes = [10, 80], strides = [1, 1]} : vector<14x112xf32> to vector<10x80xf32>
    %c20_475 = arith.constant 20 : index
    %c0_476 = arith.constant 0 : index
    %c0_477 = arith.constant 0 : index
    %731 = vector.load %arg4[%c20_475, %c0_476, %c0_477] : memref<25x80x160xf32, #tpu.memory_space<vmem>>, vector<1x80x160xf32>
    %732 = vector.shape_cast %731 : vector<1x80x160xf32> to vector<80x160xf32>
    %cst_478 = arith.constant dense<0.000000e+00> : vector<10x160xf32>
    %733 = tpu.matmul %730, %732, %cst_478 {dimension_numbers = #tpu.dot_dimension_numbers<[1], [0], [0], [1], [0, 0, 1, 1], [], []>} : vector<10x80xf32>, vector<80x160xf32>, vector<10x160xf32> -> vector<10x160xf32>
    %734 = arith.addf %729, %733 : vector<10x160xf32>
    %735 = vector.extract_strided_slice %628 {offsets = [4, 8], sizes = [10, 80], strides = [1, 1]} : vector<14x112xf32> to vector<10x80xf32>
    %c21_479 = arith.constant 21 : index
    %c0_480 = arith.constant 0 : index
    %c0_481 = arith.constant 0 : index
    %736 = vector.load %arg4[%c21_479, %c0_480, %c0_481] : memref<25x80x160xf32, #tpu.memory_space<vmem>>, vector<1x80x160xf32>
    %737 = vector.shape_cast %736 : vector<1x80x160xf32> to vector<80x160xf32>
    %cst_482 = arith.constant dense<0.000000e+00> : vector<10x160xf32>
    %738 = tpu.matmul %735, %737, %cst_482 {dimension_numbers = #tpu.dot_dimension_numbers<[1], [0], [0], [1], [0, 0, 1, 1], [], []>} : vector<10x80xf32>, vector<80x160xf32>, vector<10x160xf32> -> vector<10x160xf32>
    %739 = arith.addf %734, %738 : vector<10x160xf32>
    %740 = vector.extract_strided_slice %628 {offsets = [4, 16], sizes = [10, 80], strides = [1, 1]} : vector<14x112xf32> to vector<10x80xf32>
    %c22_483 = arith.constant 22 : index
    %c0_484 = arith.constant 0 : index
    %c0_485 = arith.constant 0 : index
    %741 = vector.load %arg4[%c22_483, %c0_484, %c0_485] : memref<25x80x160xf32, #tpu.memory_space<vmem>>, vector<1x80x160xf32>
    %742 = vector.shape_cast %741 : vector<1x80x160xf32> to vector<80x160xf32>
    %cst_486 = arith.constant dense<0.000000e+00> : vector<10x160xf32>
    %743 = tpu.matmul %740, %742, %cst_486 {dimension_numbers = #tpu.dot_dimension_numbers<[1], [0], [0], [1], [0, 0, 1, 1], [], []>} : vector<10x80xf32>, vector<80x160xf32>, vector<10x160xf32> -> vector<10x160xf32>
    %744 = arith.addf %739, %743 : vector<10x160xf32>
    %745 = vector.extract_strided_slice %628 {offsets = [4, 24], sizes = [10, 80], strides = [1, 1]} : vector<14x112xf32> to vector<10x80xf32>
    %c23_487 = arith.constant 23 : index
    %c0_488 = arith.constant 0 : index
    %c0_489 = arith.constant 0 : index
    %746 = vector.load %arg4[%c23_487, %c0_488, %c0_489] : memref<25x80x160xf32, #tpu.memory_space<vmem>>, vector<1x80x160xf32>
    %747 = vector.shape_cast %746 : vector<1x80x160xf32> to vector<80x160xf32>
    %cst_490 = arith.constant dense<0.000000e+00> : vector<10x160xf32>
    %748 = tpu.matmul %745, %747, %cst_490 {dimension_numbers = #tpu.dot_dimension_numbers<[1], [0], [0], [1], [0, 0, 1, 1], [], []>} : vector<10x80xf32>, vector<80x160xf32>, vector<10x160xf32> -> vector<10x160xf32>
    %749 = arith.addf %744, %748 : vector<10x160xf32>
    %750 = vector.extract_strided_slice %628 {offsets = [4, 32], sizes = [10, 80], strides = [1, 1]} : vector<14x112xf32> to vector<10x80xf32>
    %c24_491 = arith.constant 24 : index
    %c0_492 = arith.constant 0 : index
    %c0_493 = arith.constant 0 : index
    %751 = vector.load %arg4[%c24_491, %c0_492, %c0_493] : memref<25x80x160xf32, #tpu.memory_space<vmem>>, vector<1x80x160xf32>
    %752 = vector.shape_cast %751 : vector<1x80x160xf32> to vector<80x160xf32>
    %cst_494 = arith.constant dense<0.000000e+00> : vector<10x160xf32>
    %753 = tpu.matmul %750, %752, %cst_494 {dimension_numbers = #tpu.dot_dimension_numbers<[1], [0], [0], [1], [0, 0, 1, 1], [], []>} : vector<10x80xf32>, vector<80x160xf32>, vector<10x160xf32> -> vector<10x160xf32>
    %754 = arith.addf %749, %753 : vector<10x160xf32>
    %c0_495 = arith.constant 0 : index
    %c0_496 = arith.constant 0 : index
    %755 = vector.load %arg5[%c0_495, %c0_496] : memref<1x160xf32, #tpu.memory_space<vmem>>, vector<1x160xf32>
    %756 = vector.broadcast %755 : vector<1x160xf32> to vector<10x160xf32>
    %757 = arith.addf %754, %756 : vector<10x160xf32>
    %cst_497 = arith.constant 0.000000e+00 : f32
    %758 = vector.broadcast %cst_497 : f32 to vector<10x160xf32>
    %759 = arith.maximumf %757, %758 : vector<10x160xf32>
    %cst_498 = arith.constant 0.000000e+00 : f32
    %760 = vector.broadcast %cst_498 : f32 to vector<1x128xf32>
    %761 = vector.extract_strided_slice %759 {offsets = [0, 0], sizes = [1, 160], strides = [1, 1]} : vector<10x160xf32> to vector<1x160xf32>
    %762 = vector.extract_strided_slice %759 {offsets = [1, 0], sizes = [1, 160], strides = [1, 1]} : vector<10x160xf32> to vector<1x160xf32>
    %763 = arith.maximumf %761, %762 : vector<1x160xf32>
    %764 = vector.extract_strided_slice %763 {offsets = [0, 0], sizes = [1, 16], strides = [1, 1]} : vector<1x160xf32> to vector<1x16xf32>
    %765 = vector.extract_strided_slice %763 {offsets = [0, 16], sizes = [1, 16], strides = [1, 1]} : vector<1x160xf32> to vector<1x16xf32>
    %766 = arith.maximumf %764, %765 : vector<1x16xf32>
    %c0_499 = arith.constant 0 : index
    %c0_500 = arith.constant 0 : index
    %c0_501 = arith.constant 0 : index
    %c0_502 = arith.constant 0 : index
    %767 = vector.load %arg6[%c0_499, %c0_500, %c0_501, %c0_502] : memref<5x5x16x128xf32, #tpu.memory_space<vmem>>, vector<1x1x16x128xf32>
    %768 = vector.shape_cast %767 : vector<1x1x16x128xf32> to vector<16x128xf32>
    %cst_503 = arith.constant dense<0.000000e+00> : vector<1x128xf32>
    %769 = tpu.matmul %766, %768, %cst_503 {dimension_numbers = #tpu.dot_dimension_numbers<[1], [0], [0], [1], [0, 0, 1, 1], [], []>} : vector<1x16xf32>, vector<16x128xf32>, vector<1x128xf32> -> vector<1x128xf32>
    %770 = arith.addf %760, %769 : vector<1x128xf32>
    %771 = vector.extract_strided_slice %763 {offsets = [0, 32], sizes = [1, 16], strides = [1, 1]} : vector<1x160xf32> to vector<1x16xf32>
    %772 = vector.extract_strided_slice %763 {offsets = [0, 48], sizes = [1, 16], strides = [1, 1]} : vector<1x160xf32> to vector<1x16xf32>
    %773 = arith.maximumf %771, %772 : vector<1x16xf32>
    %c0_504 = arith.constant 0 : index
    %c1_505 = arith.constant 1 : index
    %c0_506 = arith.constant 0 : index
    %c0_507 = arith.constant 0 : index
    %774 = vector.load %arg6[%c0_504, %c1_505, %c0_506, %c0_507] : memref<5x5x16x128xf32, #tpu.memory_space<vmem>>, vector<1x1x16x128xf32>
    %775 = vector.shape_cast %774 : vector<1x1x16x128xf32> to vector<16x128xf32>
    %cst_508 = arith.constant dense<0.000000e+00> : vector<1x128xf32>
    %776 = tpu.matmul %773, %775, %cst_508 {dimension_numbers = #tpu.dot_dimension_numbers<[1], [0], [0], [1], [0, 0, 1, 1], [], []>} : vector<1x16xf32>, vector<16x128xf32>, vector<1x128xf32> -> vector<1x128xf32>
    %777 = arith.addf %770, %776 : vector<1x128xf32>
    %778 = vector.extract_strided_slice %763 {offsets = [0, 64], sizes = [1, 16], strides = [1, 1]} : vector<1x160xf32> to vector<1x16xf32>
    %779 = vector.extract_strided_slice %763 {offsets = [0, 80], sizes = [1, 16], strides = [1, 1]} : vector<1x160xf32> to vector<1x16xf32>
    %780 = arith.maximumf %778, %779 : vector<1x16xf32>
    %c0_509 = arith.constant 0 : index
    %c2_510 = arith.constant 2 : index
    %c0_511 = arith.constant 0 : index
    %c0_512 = arith.constant 0 : index
    %781 = vector.load %arg6[%c0_509, %c2_510, %c0_511, %c0_512] : memref<5x5x16x128xf32, #tpu.memory_space<vmem>>, vector<1x1x16x128xf32>
    %782 = vector.shape_cast %781 : vector<1x1x16x128xf32> to vector<16x128xf32>
    %cst_513 = arith.constant dense<0.000000e+00> : vector<1x128xf32>
    %783 = tpu.matmul %780, %782, %cst_513 {dimension_numbers = #tpu.dot_dimension_numbers<[1], [0], [0], [1], [0, 0, 1, 1], [], []>} : vector<1x16xf32>, vector<16x128xf32>, vector<1x128xf32> -> vector<1x128xf32>
    %784 = arith.addf %777, %783 : vector<1x128xf32>
    %785 = vector.extract_strided_slice %763 {offsets = [0, 96], sizes = [1, 16], strides = [1, 1]} : vector<1x160xf32> to vector<1x16xf32>
    %786 = vector.extract_strided_slice %763 {offsets = [0, 112], sizes = [1, 16], strides = [1, 1]} : vector<1x160xf32> to vector<1x16xf32>
    %787 = arith.maximumf %785, %786 : vector<1x16xf32>
    %c0_514 = arith.constant 0 : index
    %c3_515 = arith.constant 3 : index
    %c0_516 = arith.constant 0 : index
    %c0_517 = arith.constant 0 : index
    %788 = vector.load %arg6[%c0_514, %c3_515, %c0_516, %c0_517] : memref<5x5x16x128xf32, #tpu.memory_space<vmem>>, vector<1x1x16x128xf32>
    %789 = vector.shape_cast %788 : vector<1x1x16x128xf32> to vector<16x128xf32>
    %cst_518 = arith.constant dense<0.000000e+00> : vector<1x128xf32>
    %790 = tpu.matmul %787, %789, %cst_518 {dimension_numbers = #tpu.dot_dimension_numbers<[1], [0], [0], [1], [0, 0, 1, 1], [], []>} : vector<1x16xf32>, vector<16x128xf32>, vector<1x128xf32> -> vector<1x128xf32>
    %791 = arith.addf %784, %790 : vector<1x128xf32>
    %792 = vector.extract_strided_slice %763 {offsets = [0, 128], sizes = [1, 16], strides = [1, 1]} : vector<1x160xf32> to vector<1x16xf32>
    %793 = vector.extract_strided_slice %763 {offsets = [0, 144], sizes = [1, 16], strides = [1, 1]} : vector<1x160xf32> to vector<1x16xf32>
    %794 = arith.maximumf %792, %793 : vector<1x16xf32>
    %c0_519 = arith.constant 0 : index
    %c4_520 = arith.constant 4 : index
    %c0_521 = arith.constant 0 : index
    %c0_522 = arith.constant 0 : index
    %795 = vector.load %arg6[%c0_519, %c4_520, %c0_521, %c0_522] : memref<5x5x16x128xf32, #tpu.memory_space<vmem>>, vector<1x1x16x128xf32>
    %796 = vector.shape_cast %795 : vector<1x1x16x128xf32> to vector<16x128xf32>
    %cst_523 = arith.constant dense<0.000000e+00> : vector<1x128xf32>
    %797 = tpu.matmul %794, %796, %cst_523 {dimension_numbers = #tpu.dot_dimension_numbers<[1], [0], [0], [1], [0, 0, 1, 1], [], []>} : vector<1x16xf32>, vector<16x128xf32>, vector<1x128xf32> -> vector<1x128xf32>
    %798 = arith.addf %791, %797 : vector<1x128xf32>
    %799 = vector.extract_strided_slice %759 {offsets = [2, 0], sizes = [1, 160], strides = [1, 1]} : vector<10x160xf32> to vector<1x160xf32>
    %800 = vector.extract_strided_slice %759 {offsets = [3, 0], sizes = [1, 160], strides = [1, 1]} : vector<10x160xf32> to vector<1x160xf32>
    %801 = arith.maximumf %799, %800 : vector<1x160xf32>
    %802 = vector.extract_strided_slice %801 {offsets = [0, 0], sizes = [1, 16], strides = [1, 1]} : vector<1x160xf32> to vector<1x16xf32>
    %803 = vector.extract_strided_slice %801 {offsets = [0, 16], sizes = [1, 16], strides = [1, 1]} : vector<1x160xf32> to vector<1x16xf32>
    %804 = arith.maximumf %802, %803 : vector<1x16xf32>
    %c1_524 = arith.constant 1 : index
    %c0_525 = arith.constant 0 : index
    %c0_526 = arith.constant 0 : index
    %c0_527 = arith.constant 0 : index
    %805 = vector.load %arg6[%c1_524, %c0_525, %c0_526, %c0_527] : memref<5x5x16x128xf32, #tpu.memory_space<vmem>>, vector<1x1x16x128xf32>
    %806 = vector.shape_cast %805 : vector<1x1x16x128xf32> to vector<16x128xf32>
    %cst_528 = arith.constant dense<0.000000e+00> : vector<1x128xf32>
    %807 = tpu.matmul %804, %806, %cst_528 {dimension_numbers = #tpu.dot_dimension_numbers<[1], [0], [0], [1], [0, 0, 1, 1], [], []>} : vector<1x16xf32>, vector<16x128xf32>, vector<1x128xf32> -> vector<1x128xf32>
    %808 = arith.addf %798, %807 : vector<1x128xf32>
    %809 = vector.extract_strided_slice %801 {offsets = [0, 32], sizes = [1, 16], strides = [1, 1]} : vector<1x160xf32> to vector<1x16xf32>
    %810 = vector.extract_strided_slice %801 {offsets = [0, 48], sizes = [1, 16], strides = [1, 1]} : vector<1x160xf32> to vector<1x16xf32>
    %811 = arith.maximumf %809, %810 : vector<1x16xf32>
    %c1_529 = arith.constant 1 : index
    %c1_530 = arith.constant 1 : index
    %c0_531 = arith.constant 0 : index
    %c0_532 = arith.constant 0 : index
    %812 = vector.load %arg6[%c1_529, %c1_530, %c0_531, %c0_532] : memref<5x5x16x128xf32, #tpu.memory_space<vmem>>, vector<1x1x16x128xf32>
    %813 = vector.shape_cast %812 : vector<1x1x16x128xf32> to vector<16x128xf32>
    %cst_533 = arith.constant dense<0.000000e+00> : vector<1x128xf32>
    %814 = tpu.matmul %811, %813, %cst_533 {dimension_numbers = #tpu.dot_dimension_numbers<[1], [0], [0], [1], [0, 0, 1, 1], [], []>} : vector<1x16xf32>, vector<16x128xf32>, vector<1x128xf32> -> vector<1x128xf32>
    %815 = arith.addf %808, %814 : vector<1x128xf32>
    %816 = vector.extract_strided_slice %801 {offsets = [0, 64], sizes = [1, 16], strides = [1, 1]} : vector<1x160xf32> to vector<1x16xf32>
    %817 = vector.extract_strided_slice %801 {offsets = [0, 80], sizes = [1, 16], strides = [1, 1]} : vector<1x160xf32> to vector<1x16xf32>
    %818 = arith.maximumf %816, %817 : vector<1x16xf32>
    %c1_534 = arith.constant 1 : index
    %c2_535 = arith.constant 2 : index
    %c0_536 = arith.constant 0 : index
    %c0_537 = arith.constant 0 : index
    %819 = vector.load %arg6[%c1_534, %c2_535, %c0_536, %c0_537] : memref<5x5x16x128xf32, #tpu.memory_space<vmem>>, vector<1x1x16x128xf32>
    %820 = vector.shape_cast %819 : vector<1x1x16x128xf32> to vector<16x128xf32>
    %cst_538 = arith.constant dense<0.000000e+00> : vector<1x128xf32>
    %821 = tpu.matmul %818, %820, %cst_538 {dimension_numbers = #tpu.dot_dimension_numbers<[1], [0], [0], [1], [0, 0, 1, 1], [], []>} : vector<1x16xf32>, vector<16x128xf32>, vector<1x128xf32> -> vector<1x128xf32>
    %822 = arith.addf %815, %821 : vector<1x128xf32>
    %823 = vector.extract_strided_slice %801 {offsets = [0, 96], sizes = [1, 16], strides = [1, 1]} : vector<1x160xf32> to vector<1x16xf32>
    %824 = vector.extract_strided_slice %801 {offsets = [0, 112], sizes = [1, 16], strides = [1, 1]} : vector<1x160xf32> to vector<1x16xf32>
    %825 = arith.maximumf %823, %824 : vector<1x16xf32>
    %c1_539 = arith.constant 1 : index
    %c3_540 = arith.constant 3 : index
    %c0_541 = arith.constant 0 : index
    %c0_542 = arith.constant 0 : index
    %826 = vector.load %arg6[%c1_539, %c3_540, %c0_541, %c0_542] : memref<5x5x16x128xf32, #tpu.memory_space<vmem>>, vector<1x1x16x128xf32>
    %827 = vector.shape_cast %826 : vector<1x1x16x128xf32> to vector<16x128xf32>
    %cst_543 = arith.constant dense<0.000000e+00> : vector<1x128xf32>
    %828 = tpu.matmul %825, %827, %cst_543 {dimension_numbers = #tpu.dot_dimension_numbers<[1], [0], [0], [1], [0, 0, 1, 1], [], []>} : vector<1x16xf32>, vector<16x128xf32>, vector<1x128xf32> -> vector<1x128xf32>
    %829 = arith.addf %822, %828 : vector<1x128xf32>
    %830 = vector.extract_strided_slice %801 {offsets = [0, 128], sizes = [1, 16], strides = [1, 1]} : vector<1x160xf32> to vector<1x16xf32>
    %831 = vector.extract_strided_slice %801 {offsets = [0, 144], sizes = [1, 16], strides = [1, 1]} : vector<1x160xf32> to vector<1x16xf32>
    %832 = arith.maximumf %830, %831 : vector<1x16xf32>
    %c1_544 = arith.constant 1 : index
    %c4_545 = arith.constant 4 : index
    %c0_546 = arith.constant 0 : index
    %c0_547 = arith.constant 0 : index
    %833 = vector.load %arg6[%c1_544, %c4_545, %c0_546, %c0_547] : memref<5x5x16x128xf32, #tpu.memory_space<vmem>>, vector<1x1x16x128xf32>
    %834 = vector.shape_cast %833 : vector<1x1x16x128xf32> to vector<16x128xf32>
    %cst_548 = arith.constant dense<0.000000e+00> : vector<1x128xf32>
    %835 = tpu.matmul %832, %834, %cst_548 {dimension_numbers = #tpu.dot_dimension_numbers<[1], [0], [0], [1], [0, 0, 1, 1], [], []>} : vector<1x16xf32>, vector<16x128xf32>, vector<1x128xf32> -> vector<1x128xf32>
    %836 = arith.addf %829, %835 : vector<1x128xf32>
    %837 = vector.extract_strided_slice %759 {offsets = [4, 0], sizes = [1, 160], strides = [1, 1]} : vector<10x160xf32> to vector<1x160xf32>
    %838 = vector.extract_strided_slice %759 {offsets = [5, 0], sizes = [1, 160], strides = [1, 1]} : vector<10x160xf32> to vector<1x160xf32>
    %839 = arith.maximumf %837, %838 : vector<1x160xf32>
    %840 = vector.extract_strided_slice %839 {offsets = [0, 0], sizes = [1, 16], strides = [1, 1]} : vector<1x160xf32> to vector<1x16xf32>
    %841 = vector.extract_strided_slice %839 {offsets = [0, 16], sizes = [1, 16], strides = [1, 1]} : vector<1x160xf32> to vector<1x16xf32>
    %842 = arith.maximumf %840, %841 : vector<1x16xf32>
    %c2_549 = arith.constant 2 : index
    %c0_550 = arith.constant 0 : index
    %c0_551 = arith.constant 0 : index
    %c0_552 = arith.constant 0 : index
    %843 = vector.load %arg6[%c2_549, %c0_550, %c0_551, %c0_552] : memref<5x5x16x128xf32, #tpu.memory_space<vmem>>, vector<1x1x16x128xf32>
    %844 = vector.shape_cast %843 : vector<1x1x16x128xf32> to vector<16x128xf32>
    %cst_553 = arith.constant dense<0.000000e+00> : vector<1x128xf32>
    %845 = tpu.matmul %842, %844, %cst_553 {dimension_numbers = #tpu.dot_dimension_numbers<[1], [0], [0], [1], [0, 0, 1, 1], [], []>} : vector<1x16xf32>, vector<16x128xf32>, vector<1x128xf32> -> vector<1x128xf32>
    %846 = arith.addf %836, %845 : vector<1x128xf32>
    %847 = vector.extract_strided_slice %839 {offsets = [0, 32], sizes = [1, 16], strides = [1, 1]} : vector<1x160xf32> to vector<1x16xf32>
    %848 = vector.extract_strided_slice %839 {offsets = [0, 48], sizes = [1, 16], strides = [1, 1]} : vector<1x160xf32> to vector<1x16xf32>
    %849 = arith.maximumf %847, %848 : vector<1x16xf32>
    %c2_554 = arith.constant 2 : index
    %c1_555 = arith.constant 1 : index
    %c0_556 = arith.constant 0 : index
    %c0_557 = arith.constant 0 : index
    %850 = vector.load %arg6[%c2_554, %c1_555, %c0_556, %c0_557] : memref<5x5x16x128xf32, #tpu.memory_space<vmem>>, vector<1x1x16x128xf32>
    %851 = vector.shape_cast %850 : vector<1x1x16x128xf32> to vector<16x128xf32>
    %cst_558 = arith.constant dense<0.000000e+00> : vector<1x128xf32>
    %852 = tpu.matmul %849, %851, %cst_558 {dimension_numbers = #tpu.dot_dimension_numbers<[1], [0], [0], [1], [0, 0, 1, 1], [], []>} : vector<1x16xf32>, vector<16x128xf32>, vector<1x128xf32> -> vector<1x128xf32>
    %853 = arith.addf %846, %852 : vector<1x128xf32>
    %854 = vector.extract_strided_slice %839 {offsets = [0, 64], sizes = [1, 16], strides = [1, 1]} : vector<1x160xf32> to vector<1x16xf32>
    %855 = vector.extract_strided_slice %839 {offsets = [0, 80], sizes = [1, 16], strides = [1, 1]} : vector<1x160xf32> to vector<1x16xf32>
    %856 = arith.maximumf %854, %855 : vector<1x16xf32>
    %c2_559 = arith.constant 2 : index
    %c2_560 = arith.constant 2 : index
    %c0_561 = arith.constant 0 : index
    %c0_562 = arith.constant 0 : index
    %857 = vector.load %arg6[%c2_559, %c2_560, %c0_561, %c0_562] : memref<5x5x16x128xf32, #tpu.memory_space<vmem>>, vector<1x1x16x128xf32>
    %858 = vector.shape_cast %857 : vector<1x1x16x128xf32> to vector<16x128xf32>
    %cst_563 = arith.constant dense<0.000000e+00> : vector<1x128xf32>
    %859 = tpu.matmul %856, %858, %cst_563 {dimension_numbers = #tpu.dot_dimension_numbers<[1], [0], [0], [1], [0, 0, 1, 1], [], []>} : vector<1x16xf32>, vector<16x128xf32>, vector<1x128xf32> -> vector<1x128xf32>
    %860 = arith.addf %853, %859 : vector<1x128xf32>
    %861 = vector.extract_strided_slice %839 {offsets = [0, 96], sizes = [1, 16], strides = [1, 1]} : vector<1x160xf32> to vector<1x16xf32>
    %862 = vector.extract_strided_slice %839 {offsets = [0, 112], sizes = [1, 16], strides = [1, 1]} : vector<1x160xf32> to vector<1x16xf32>
    %863 = arith.maximumf %861, %862 : vector<1x16xf32>
    %c2_564 = arith.constant 2 : index
    %c3_565 = arith.constant 3 : index
    %c0_566 = arith.constant 0 : index
    %c0_567 = arith.constant 0 : index
    %864 = vector.load %arg6[%c2_564, %c3_565, %c0_566, %c0_567] : memref<5x5x16x128xf32, #tpu.memory_space<vmem>>, vector<1x1x16x128xf32>
    %865 = vector.shape_cast %864 : vector<1x1x16x128xf32> to vector<16x128xf32>
    %cst_568 = arith.constant dense<0.000000e+00> : vector<1x128xf32>
    %866 = tpu.matmul %863, %865, %cst_568 {dimension_numbers = #tpu.dot_dimension_numbers<[1], [0], [0], [1], [0, 0, 1, 1], [], []>} : vector<1x16xf32>, vector<16x128xf32>, vector<1x128xf32> -> vector<1x128xf32>
    %867 = arith.addf %860, %866 : vector<1x128xf32>
    %868 = vector.extract_strided_slice %839 {offsets = [0, 128], sizes = [1, 16], strides = [1, 1]} : vector<1x160xf32> to vector<1x16xf32>
    %869 = vector.extract_strided_slice %839 {offsets = [0, 144], sizes = [1, 16], strides = [1, 1]} : vector<1x160xf32> to vector<1x16xf32>
    %870 = arith.maximumf %868, %869 : vector<1x16xf32>
    %c2_569 = arith.constant 2 : index
    %c4_570 = arith.constant 4 : index
    %c0_571 = arith.constant 0 : index
    %c0_572 = arith.constant 0 : index
    %871 = vector.load %arg6[%c2_569, %c4_570, %c0_571, %c0_572] : memref<5x5x16x128xf32, #tpu.memory_space<vmem>>, vector<1x1x16x128xf32>
    %872 = vector.shape_cast %871 : vector<1x1x16x128xf32> to vector<16x128xf32>
    %cst_573 = arith.constant dense<0.000000e+00> : vector<1x128xf32>
    %873 = tpu.matmul %870, %872, %cst_573 {dimension_numbers = #tpu.dot_dimension_numbers<[1], [0], [0], [1], [0, 0, 1, 1], [], []>} : vector<1x16xf32>, vector<16x128xf32>, vector<1x128xf32> -> vector<1x128xf32>
    %874 = arith.addf %867, %873 : vector<1x128xf32>
    %875 = vector.extract_strided_slice %759 {offsets = [6, 0], sizes = [1, 160], strides = [1, 1]} : vector<10x160xf32> to vector<1x160xf32>
    %876 = vector.extract_strided_slice %759 {offsets = [7, 0], sizes = [1, 160], strides = [1, 1]} : vector<10x160xf32> to vector<1x160xf32>
    %877 = arith.maximumf %875, %876 : vector<1x160xf32>
    %878 = vector.extract_strided_slice %877 {offsets = [0, 0], sizes = [1, 16], strides = [1, 1]} : vector<1x160xf32> to vector<1x16xf32>
    %879 = vector.extract_strided_slice %877 {offsets = [0, 16], sizes = [1, 16], strides = [1, 1]} : vector<1x160xf32> to vector<1x16xf32>
    %880 = arith.maximumf %878, %879 : vector<1x16xf32>
    %c3_574 = arith.constant 3 : index
    %c0_575 = arith.constant 0 : index
    %c0_576 = arith.constant 0 : index
    %c0_577 = arith.constant 0 : index
    %881 = vector.load %arg6[%c3_574, %c0_575, %c0_576, %c0_577] : memref<5x5x16x128xf32, #tpu.memory_space<vmem>>, vector<1x1x16x128xf32>
    %882 = vector.shape_cast %881 : vector<1x1x16x128xf32> to vector<16x128xf32>
    %cst_578 = arith.constant dense<0.000000e+00> : vector<1x128xf32>
    %883 = tpu.matmul %880, %882, %cst_578 {dimension_numbers = #tpu.dot_dimension_numbers<[1], [0], [0], [1], [0, 0, 1, 1], [], []>} : vector<1x16xf32>, vector<16x128xf32>, vector<1x128xf32> -> vector<1x128xf32>
    %884 = arith.addf %874, %883 : vector<1x128xf32>
    %885 = vector.extract_strided_slice %877 {offsets = [0, 32], sizes = [1, 16], strides = [1, 1]} : vector<1x160xf32> to vector<1x16xf32>
    %886 = vector.extract_strided_slice %877 {offsets = [0, 48], sizes = [1, 16], strides = [1, 1]} : vector<1x160xf32> to vector<1x16xf32>
    %887 = arith.maximumf %885, %886 : vector<1x16xf32>
    %c3_579 = arith.constant 3 : index
    %c1_580 = arith.constant 1 : index
    %c0_581 = arith.constant 0 : index
    %c0_582 = arith.constant 0 : index
    %888 = vector.load %arg6[%c3_579, %c1_580, %c0_581, %c0_582] : memref<5x5x16x128xf32, #tpu.memory_space<vmem>>, vector<1x1x16x128xf32>
    %889 = vector.shape_cast %888 : vector<1x1x16x128xf32> to vector<16x128xf32>
    %cst_583 = arith.constant dense<0.000000e+00> : vector<1x128xf32>
    %890 = tpu.matmul %887, %889, %cst_583 {dimension_numbers = #tpu.dot_dimension_numbers<[1], [0], [0], [1], [0, 0, 1, 1], [], []>} : vector<1x16xf32>, vector<16x128xf32>, vector<1x128xf32> -> vector<1x128xf32>
    %891 = arith.addf %884, %890 : vector<1x128xf32>
    %892 = vector.extract_strided_slice %877 {offsets = [0, 64], sizes = [1, 16], strides = [1, 1]} : vector<1x160xf32> to vector<1x16xf32>
    %893 = vector.extract_strided_slice %877 {offsets = [0, 80], sizes = [1, 16], strides = [1, 1]} : vector<1x160xf32> to vector<1x16xf32>
    %894 = arith.maximumf %892, %893 : vector<1x16xf32>
    %c3_584 = arith.constant 3 : index
    %c2_585 = arith.constant 2 : index
    %c0_586 = arith.constant 0 : index
    %c0_587 = arith.constant 0 : index
    %895 = vector.load %arg6[%c3_584, %c2_585, %c0_586, %c0_587] : memref<5x5x16x128xf32, #tpu.memory_space<vmem>>, vector<1x1x16x128xf32>
    %896 = vector.shape_cast %895 : vector<1x1x16x128xf32> to vector<16x128xf32>
    %cst_588 = arith.constant dense<0.000000e+00> : vector<1x128xf32>
    %897 = tpu.matmul %894, %896, %cst_588 {dimension_numbers = #tpu.dot_dimension_numbers<[1], [0], [0], [1], [0, 0, 1, 1], [], []>} : vector<1x16xf32>, vector<16x128xf32>, vector<1x128xf32> -> vector<1x128xf32>
    %898 = arith.addf %891, %897 : vector<1x128xf32>
    %899 = vector.extract_strided_slice %877 {offsets = [0, 96], sizes = [1, 16], strides = [1, 1]} : vector<1x160xf32> to vector<1x16xf32>
    %900 = vector.extract_strided_slice %877 {offsets = [0, 112], sizes = [1, 16], strides = [1, 1]} : vector<1x160xf32> to vector<1x16xf32>
    %901 = arith.maximumf %899, %900 : vector<1x16xf32>
    %c3_589 = arith.constant 3 : index
    %c3_590 = arith.constant 3 : index
    %c0_591 = arith.constant 0 : index
    %c0_592 = arith.constant 0 : index
    %902 = vector.load %arg6[%c3_589, %c3_590, %c0_591, %c0_592] : memref<5x5x16x128xf32, #tpu.memory_space<vmem>>, vector<1x1x16x128xf32>
    %903 = vector.shape_cast %902 : vector<1x1x16x128xf32> to vector<16x128xf32>
    %cst_593 = arith.constant dense<0.000000e+00> : vector<1x128xf32>
    %904 = tpu.matmul %901, %903, %cst_593 {dimension_numbers = #tpu.dot_dimension_numbers<[1], [0], [0], [1], [0, 0, 1, 1], [], []>} : vector<1x16xf32>, vector<16x128xf32>, vector<1x128xf32> -> vector<1x128xf32>
    %905 = arith.addf %898, %904 : vector<1x128xf32>
    %906 = vector.extract_strided_slice %877 {offsets = [0, 128], sizes = [1, 16], strides = [1, 1]} : vector<1x160xf32> to vector<1x16xf32>
    %907 = vector.extract_strided_slice %877 {offsets = [0, 144], sizes = [1, 16], strides = [1, 1]} : vector<1x160xf32> to vector<1x16xf32>
    %908 = arith.maximumf %906, %907 : vector<1x16xf32>
    %c3_594 = arith.constant 3 : index
    %c4_595 = arith.constant 4 : index
    %c0_596 = arith.constant 0 : index
    %c0_597 = arith.constant 0 : index
    %909 = vector.load %arg6[%c3_594, %c4_595, %c0_596, %c0_597] : memref<5x5x16x128xf32, #tpu.memory_space<vmem>>, vector<1x1x16x128xf32>
    %910 = vector.shape_cast %909 : vector<1x1x16x128xf32> to vector<16x128xf32>
    %cst_598 = arith.constant dense<0.000000e+00> : vector<1x128xf32>
    %911 = tpu.matmul %908, %910, %cst_598 {dimension_numbers = #tpu.dot_dimension_numbers<[1], [0], [0], [1], [0, 0, 1, 1], [], []>} : vector<1x16xf32>, vector<16x128xf32>, vector<1x128xf32> -> vector<1x128xf32>
    %912 = arith.addf %905, %911 : vector<1x128xf32>
    %913 = vector.extract_strided_slice %759 {offsets = [8, 0], sizes = [1, 160], strides = [1, 1]} : vector<10x160xf32> to vector<1x160xf32>
    %914 = vector.extract_strided_slice %759 {offsets = [9, 0], sizes = [1, 160], strides = [1, 1]} : vector<10x160xf32> to vector<1x160xf32>
    %915 = arith.maximumf %913, %914 : vector<1x160xf32>
    %916 = vector.extract_strided_slice %915 {offsets = [0, 0], sizes = [1, 16], strides = [1, 1]} : vector<1x160xf32> to vector<1x16xf32>
    %917 = vector.extract_strided_slice %915 {offsets = [0, 16], sizes = [1, 16], strides = [1, 1]} : vector<1x160xf32> to vector<1x16xf32>
    %918 = arith.maximumf %916, %917 : vector<1x16xf32>
    %c4_599 = arith.constant 4 : index
    %c0_600 = arith.constant 0 : index
    %c0_601 = arith.constant 0 : index
    %c0_602 = arith.constant 0 : index
    %919 = vector.load %arg6[%c4_599, %c0_600, %c0_601, %c0_602] : memref<5x5x16x128xf32, #tpu.memory_space<vmem>>, vector<1x1x16x128xf32>
    %920 = vector.shape_cast %919 : vector<1x1x16x128xf32> to vector<16x128xf32>
    %cst_603 = arith.constant dense<0.000000e+00> : vector<1x128xf32>
    %921 = tpu.matmul %918, %920, %cst_603 {dimension_numbers = #tpu.dot_dimension_numbers<[1], [0], [0], [1], [0, 0, 1, 1], [], []>} : vector<1x16xf32>, vector<16x128xf32>, vector<1x128xf32> -> vector<1x128xf32>
    %922 = arith.addf %912, %921 : vector<1x128xf32>
    %923 = vector.extract_strided_slice %915 {offsets = [0, 32], sizes = [1, 16], strides = [1, 1]} : vector<1x160xf32> to vector<1x16xf32>
    %924 = vector.extract_strided_slice %915 {offsets = [0, 48], sizes = [1, 16], strides = [1, 1]} : vector<1x160xf32> to vector<1x16xf32>
    %925 = arith.maximumf %923, %924 : vector<1x16xf32>
    %c4_604 = arith.constant 4 : index
    %c1_605 = arith.constant 1 : index
    %c0_606 = arith.constant 0 : index
    %c0_607 = arith.constant 0 : index
    %926 = vector.load %arg6[%c4_604, %c1_605, %c0_606, %c0_607] : memref<5x5x16x128xf32, #tpu.memory_space<vmem>>, vector<1x1x16x128xf32>
    %927 = vector.shape_cast %926 : vector<1x1x16x128xf32> to vector<16x128xf32>
    %cst_608 = arith.constant dense<0.000000e+00> : vector<1x128xf32>
    %928 = tpu.matmul %925, %927, %cst_608 {dimension_numbers = #tpu.dot_dimension_numbers<[1], [0], [0], [1], [0, 0, 1, 1], [], []>} : vector<1x16xf32>, vector<16x128xf32>, vector<1x128xf32> -> vector<1x128xf32>
    %929 = arith.addf %922, %928 : vector<1x128xf32>
    %930 = vector.extract_strided_slice %915 {offsets = [0, 64], sizes = [1, 16], strides = [1, 1]} : vector<1x160xf32> to vector<1x16xf32>
    %931 = vector.extract_strided_slice %915 {offsets = [0, 80], sizes = [1, 16], strides = [1, 1]} : vector<1x160xf32> to vector<1x16xf32>
    %932 = arith.maximumf %930, %931 : vector<1x16xf32>
    %c4_609 = arith.constant 4 : index
    %c2_610 = arith.constant 2 : index
    %c0_611 = arith.constant 0 : index
    %c0_612 = arith.constant 0 : index
    %933 = vector.load %arg6[%c4_609, %c2_610, %c0_611, %c0_612] : memref<5x5x16x128xf32, #tpu.memory_space<vmem>>, vector<1x1x16x128xf32>
    %934 = vector.shape_cast %933 : vector<1x1x16x128xf32> to vector<16x128xf32>
    %cst_613 = arith.constant dense<0.000000e+00> : vector<1x128xf32>
    %935 = tpu.matmul %932, %934, %cst_613 {dimension_numbers = #tpu.dot_dimension_numbers<[1], [0], [0], [1], [0, 0, 1, 1], [], []>} : vector<1x16xf32>, vector<16x128xf32>, vector<1x128xf32> -> vector<1x128xf32>
    %936 = arith.addf %929, %935 : vector<1x128xf32>
    %937 = vector.extract_strided_slice %915 {offsets = [0, 96], sizes = [1, 16], strides = [1, 1]} : vector<1x160xf32> to vector<1x16xf32>
    %938 = vector.extract_strided_slice %915 {offsets = [0, 112], sizes = [1, 16], strides = [1, 1]} : vector<1x160xf32> to vector<1x16xf32>
    %939 = arith.maximumf %937, %938 : vector<1x16xf32>
    %c4_614 = arith.constant 4 : index
    %c3_615 = arith.constant 3 : index
    %c0_616 = arith.constant 0 : index
    %c0_617 = arith.constant 0 : index
    %940 = vector.load %arg6[%c4_614, %c3_615, %c0_616, %c0_617] : memref<5x5x16x128xf32, #tpu.memory_space<vmem>>, vector<1x1x16x128xf32>
    %941 = vector.shape_cast %940 : vector<1x1x16x128xf32> to vector<16x128xf32>
    %cst_618 = arith.constant dense<0.000000e+00> : vector<1x128xf32>
    %942 = tpu.matmul %939, %941, %cst_618 {dimension_numbers = #tpu.dot_dimension_numbers<[1], [0], [0], [1], [0, 0, 1, 1], [], []>} : vector<1x16xf32>, vector<16x128xf32>, vector<1x128xf32> -> vector<1x128xf32>
    %943 = arith.addf %936, %942 : vector<1x128xf32>
    %944 = vector.extract_strided_slice %915 {offsets = [0, 128], sizes = [1, 16], strides = [1, 1]} : vector<1x160xf32> to vector<1x16xf32>
    %945 = vector.extract_strided_slice %915 {offsets = [0, 144], sizes = [1, 16], strides = [1, 1]} : vector<1x160xf32> to vector<1x16xf32>
    %946 = arith.maximumf %944, %945 : vector<1x16xf32>
    %c4_619 = arith.constant 4 : index
    %c4_620 = arith.constant 4 : index
    %c0_621 = arith.constant 0 : index
    %c0_622 = arith.constant 0 : index
    %947 = vector.load %arg6[%c4_619, %c4_620, %c0_621, %c0_622] : memref<5x5x16x128xf32, #tpu.memory_space<vmem>>, vector<1x1x16x128xf32>
    %948 = vector.shape_cast %947 : vector<1x1x16x128xf32> to vector<16x128xf32>
    %cst_623 = arith.constant dense<0.000000e+00> : vector<1x128xf32>
    %949 = tpu.matmul %946, %948, %cst_623 {dimension_numbers = #tpu.dot_dimension_numbers<[1], [0], [0], [1], [0, 0, 1, 1], [], []>} : vector<1x16xf32>, vector<16x128xf32>, vector<1x128xf32> -> vector<1x128xf32>
    %950 = arith.addf %943, %949 : vector<1x128xf32>
    %c0_624 = arith.constant 0 : index
    %c0_625 = arith.constant 0 : index
    %951 = vector.load %arg7[%c0_624, %c0_625] : memref<1x128xf32, #tpu.memory_space<vmem>>, vector<1x128xf32>
    %952 = arith.addf %950, %951 : vector<1x128xf32>
    %cst_626 = arith.constant 0.000000e+00 : f32
    %953 = vector.broadcast %cst_626 : f32 to vector<1x128xf32>
    %954 = arith.maximumf %952, %953 : vector<1x128xf32>
    %c0_627 = arith.constant 0 : index
    %c0_628 = arith.constant 0 : index
    %955 = vector.load %arg8[%c0_627, %c0_628] : memref<128x128xf32, #tpu.memory_space<vmem>>, vector<128x128xf32>
    %cst_629 = arith.constant dense<0.000000e+00> : vector<1x128xf32>
    %956 = tpu.matmul %954, %955, %cst_629 {dimension_numbers = #tpu.dot_dimension_numbers<[1], [0], [0], [1], [0, 0, 1, 1], [], []>} : vector<1x128xf32>, vector<128x128xf32>, vector<1x128xf32> -> vector<1x128xf32>
    %c0_630 = arith.constant 0 : index
    %c0_631 = arith.constant 0 : index
    %957 = vector.load %arg9[%c0_630, %c0_631] : memref<1x128xf32, #tpu.memory_space<vmem>>, vector<1x128xf32>
    %958 = arith.addf %956, %957 : vector<1x128xf32>
    %cst_632 = arith.constant 0.000000e+00 : f32
    %959 = vector.broadcast %cst_632 : f32 to vector<1x128xf32>
    %960 = arith.maximumf %958, %959 : vector<1x128xf32>
    %c0_633 = arith.constant 0 : index
    %c0_634 = arith.constant 0 : index
    %961 = vector.load %arg10[%c0_633, %c0_634] : memref<128x128xf32, #tpu.memory_space<vmem>>, vector<128x128xf32>
    %cst_635 = arith.constant dense<0.000000e+00> : vector<1x128xf32>
    %962 = tpu.matmul %960, %961, %cst_635 {dimension_numbers = #tpu.dot_dimension_numbers<[1], [0], [0], [1], [0, 0, 1, 1], [], []>} : vector<1x128xf32>, vector<128x128xf32>, vector<1x128xf32> -> vector<1x128xf32>
    %c0_636 = arith.constant 0 : index
    %c0_637 = arith.constant 0 : index
    %963 = vector.load %arg11[%c0_636, %c0_637] : memref<1x128xf32, #tpu.memory_space<vmem>>, vector<1x128xf32>
    %964 = arith.addf %962, %963 : vector<1x128xf32>
    %c0_638 = arith.constant 0 : index
    %c0_639 = arith.constant 0 : index
    %c0_640 = arith.constant 0 : index
    %965 = vector.load %arg12[%c0_638, %c0_639, %c0_640] : memref<1x1x128xf32, #tpu.memory_space<vmem>>, vector<1x1x128xf32>
    %966 = vector.shape_cast %965 : vector<1x1x128xf32> to vector<1x128xf32>
    %967 = vector.shape_cast %964 : vector<1x128xf32> to vector<1x1x128xf32>
    tpu.vector_store %arg12[%c0_638, %c0_639, %c0_640], %967 {strides = array<i32>} : memref<1x1x128xf32, #tpu.memory_space<vmem>>, vector<1x1x128xf32>,
    return
  }
  func.func @transform_0(%arg0: i32) -> (i32, i32, i32, i32) {
    %c0_i32 = arith.constant 0 : i32
    %c0_i32_0 = arith.constant 0 : i32
    %c0_i32_1 = arith.constant 0 : i32
    %c0_i32_2 = arith.constant 0 : i32
    return %arg0, %c0_i32, %c0_i32_0, %c0_i32_1 : i32, i32, i32, i32
  }
  func.func @transform_1(%arg0: i32) -> (i32, i32, i32) {
    %c0_i32 = arith.constant 0 : i32
    %c0_i32_0 = arith.constant 0 : i32
    %c0_i32_1 = arith.constant 0 : i32
    %c0_i32_2 = arith.constant 0 : i32
    return %c0_i32, %c0_i32_0, %c0_i32_1 : i32, i32, i32
  }
  func.func @transform_2(%arg0: i32) -> (i32, i32) {
    %c0_i32 = arith.constant 0 : i32
    %c0_i32_0 = arith.constant 0 : i32
    %c0_i32_1 = arith.constant 0 : i32
    return %c0_i32, %c0_i32_0 : i32, i32
  }
  func.func @transform_3(%arg0: i32) -> (i32, i32, i32) {
    %c0_i32 = arith.constant 0 : i32
    %c0_i32_0 = arith.constant 0 : i32
    %c0_i32_1 = arith.constant 0 : i32
    %c0_i32_2 = arith.constant 0 : i32
    return %c0_i32, %c0_i32_0, %c0_i32_1 : i32, i32, i32
  }
  func.func @transform_4(%arg0: i32) -> (i32, i32) {
    %c0_i32 = arith.constant 0 : i32
    %c0_i32_0 = arith.constant 0 : i32
    %c0_i32_1 = arith.constant 0 : i32
    return %c0_i32, %c0_i32_0 : i32, i32
  }
  func.func @transform_5(%arg0: i32) -> (i32, i32, i32, i32) {
    %c0_i32 = arith.constant 0 : i32
    %c0_i32_0 = arith.constant 0 : i32
    %c0_i32_1 = arith.constant 0 : i32
    %c0_i32_2 = arith.constant 0 : i32
    %c0_i32_3 = arith.constant 0 : i32
    return %c0_i32, %c0_i32_0, %c0_i32_1, %c0_i32_2 : i32, i32, i32, i32
  }
  func.func @transform_6(%arg0: i32) -> (i32, i32) {
    %c0_i32 = arith.constant 0 : i32
    %c0_i32_0 = arith.constant 0 : i32
    %c0_i32_1 = arith.constant 0 : i32
    return %c0_i32, %c0_i32_0 : i32, i32
  }
  func.func @transform_7(%arg0: i32) -> (i32, i32) {
    %c0_i32 = arith.constant 0 : i32
    %c0_i32_0 = arith.constant 0 : i32
    %c0_i32_1 = arith.constant 0 : i32
    return %c0_i32, %c0_i32_0 : i32, i32
  }
  func.func @transform_8(%arg0: i32) -> (i32, i32) {
    %c0_i32 = arith.constant 0 : i32
    %c0_i32_0 = arith.constant 0 : i32
    %c0_i32_1 = arith.constant 0 : i32
    return %c0_i32, %c0_i32_0 : i32, i32
  }
  func.func @transform_9(%arg0: i32) -> (i32, i32) {
    %c0_i32 = arith.constant 0 : i32
    %c0_i32_0 = arith.constant 0 : i32
    %c0_i32_1 = arith.constant 0 : i32
    return %c0_i32, %c0_i32_0 : i32, i32
  }
  func.func @transform_10(%arg0: i32) -> (i32, i32) {
    %c0_i32 = arith.constant 0 : i32
    %c0_i32_0 = arith.constant 0 : i32
    %c0_i32_1 = arith.constant 0 : i32
    return %c0_i32, %c0_i32_0 : i32, i32
  }
  func.func @transform_11(%arg0: i32) -> (i32, i32, i32) {
    %c0_i32 = arith.constant 0 : i32
    %c0_i32_0 = arith.constant 0 : i32
    %c0_i32_1 = arith.constant 0 : i32
    return %arg0, %c0_i32, %c0_i32_0 : i32, i32, i32
  }
}

</mosaic_0001>

<llo_original>
// kernel: tpu_custom_call.1
$region0: #{tpu_custom_call.1}
  #allocation0 [shape = 'u32[]', space=smem, size = 0x4, offset = 0x4, fixed_abs, tag = 'smem constant byte address 0x4 - core index']
  #allocation1 [shape = 'u32[72,128]{1,0:T(1,128)}', space=vmem, size = 0x9000, scoped, tag = 'internal scratch']
  %s0 = inlined_call_operand.hbm [shape: f32[2,4,16,48], index: 0, kind: input, shape index: {}]
  %s1 = inlined_call_operand.hbm [shape: f32[25,42,112], index: 1, kind: input, shape index: {}]
  %s2 = inlined_call_operand.hbm [shape: f32[1,112], index: 2, kind: input, shape index: {}]
  %s3 = inlined_call_operand.hbm [shape: f32[25,80,160], index: 3, kind: input, shape index: {}]
  %s4 = inlined_call_operand.hbm [shape: f32[1,160], index: 4, kind: input, shape index: {}]
  %s5 = inlined_call_operand.hbm [shape: f32[5,5,16,128], index: 5, kind: input, shape index: {}]
  %s6 = inlined_call_operand.hbm [shape: f32[1,128], index: 6, kind: input, shape index: {}]
  %s7 = inlined_call_operand.hbm [shape: f32[128,128], index: 7, kind: input, shape index: {}]
  %s8 = inlined_call_operand.hbm [shape: f32[1,128], index: 8, kind: input, shape index: {}]
  %s9 = inlined_call_operand.hbm [shape: f32[128,128], index: 9, kind: input, shape index: {}]
  %s10 = inlined_call_operand.hbm [shape: f32[1,128], index: 10, kind: input, shape index: {}]
  %s11 = inlined_call_operand.hbm [shape: f32[2,1,128], index: 11, kind: output, shape index: {}]
  %s12 = sld [smem:[#allocation0]]
  $region121: #{tpu_custom_call.1} parent=0
    _
  %s14 = ssub.s32 1, %s12
  %s15 = scalar_select 0, %s14, %s12
  $region1: #{tpu_custom_call.1} parent=0
    #allocation2 [shape = 'u8[65536]{0}', space=vmem, size = 0x10000, scoped, tag = 'input window, operand 0']
    #allocation3 [shape = 's32[2]{0}', space=sflag, size = 0x8, scoped, tag = 'scoped memory for tpu_custom_call.1']
    #allocation4 [shape = 's32[2]{0}', space=sflag, size = 0x8, scoped, tag = 'scoped memory for tpu_custom_call.1']
    #allocation5 [shape = 'u8[614400]{0}', space=vmem, size = 0x96000, scoped, tag = 'input window, operand 1, single buffered']
    #allocation6 [shape = 's32[1]{0}', space=sflag, size = 0x4, scoped, tag = 'scoped memory for tpu_custom_call.1']
    #allocation7 [shape = 'u8[512]{0}', space=vmem, size = 0x400, scoped, tag = 'input window, operand 2, single buffered']
    #allocation8 [shape = 'u8[2048000]{0}', space=vmem, size = 0x1f4000, scoped, tag = 'input window, operand 3, single buffered']
    #allocation9 [shape = 's32[1]{0}', space=sflag, size = 0x4, scoped, tag = 'scoped memory for tpu_custom_call.1']
    #allocation10 [shape = 'u8[1024]{0}', space=vmem, size = 0x400, scoped, tag = 'input window, operand 4, single buffered']
    #allocation11 [shape = 'u8[204800]{0}', space=vmem, size = 0x32000, scoped, tag = 'input window, operand 5, single buffered']
    #allocation12 [shape = 's32[1]{0}', space=sflag, size = 0x4, scoped, tag = 'scoped memory for tpu_custom_call.1']
    #allocation13 [shape = 'u8[512]{0}', space=vmem, size = 0x400, scoped, tag = 'input window, operand 6, single buffered']
    #allocation14 [shape = 'u8[65536]{0}', space=vmem, size = 0x10000, scoped, tag = 'input window, operand 7, single buffered']
    #allocation15 [shape = 's32[1]{0}', space=sflag, size = 0x4, scoped, tag = 'scoped memory for tpu_custom_call.1']
    #allocation16 [shape = 'u8[512]{0}', space=vmem, size = 0x400, scoped, tag = 'input window, operand 8, single buffered']
    #allocation17 [shape = 'u8[65536]{0}', space=vmem, size = 0x10000, scoped, tag = 'input window, operand 9, single buffered']
    #allocation18 [shape = 's32[1]{0}', space=sflag, size = 0x4, scoped, tag = 'scoped memory for tpu_custom_call.1']
    #allocation19 [shape = 'u8[512]{0}', space=vmem, size = 0x400, scoped, tag = 'input window, operand 10, single buffered']
    #allocation20 [shape = 'u8[1024]{0}', space=vmem, size = 0x400, scoped, tag = 'output window, operand 0']
    %16 = vsyncpa [#allocation3], 0
    %s17 = scalar_lea.sflag [#allocation3], 1
    %18 = vsyncpa %s17, 0
    %19 = vsyncpa [#allocation6], 0
    %20 = vsyncpa [#allocation9], 0
    %21 = vsyncpa [#allocation12], 0
    %22 = vsyncpa [#allocation15], 0
    %23 = vsyncpa [#allocation18], 0
    %24 = vsyncpa [#allocation4], 0
    %s25 = scalar_lea.sflag [#allocation4], 1
    %26 = vsyncpa %s25, 0
    loop: start=0, step=1, limit=4
    $region2: #{tpu_custom_call.1} parent=1 // loop_pre_header
      _
    $region3: #{tpu_custom_call.1} parent=1 // loop_header
      %s28 = sphi 0, %s32
      %p29 = scmp.ge.s32.totalorder %s28, 4
      %s38 = sphi 0, %s40
      %s41 = sphi 0, %s38
      %s42 = sphi 0, %s41
      %s58 = sphi 0, %s42
      %s62 = sphi 0, %s62
      %s64 = sphi 0, %s62
      %s65 = sphi 0, %s64
      %s79 = sphi 0, %s65
      %s83 = sphi 0, %s83
      %s85 = sphi 0, %s83
      %s86 = sphi 0, %s85
      %s100 = sphi 0, %s86
      %s104 = sphi 0, %s104
      %s106 = sphi 0, %s104
      %s107 = sphi 0, %s106
      %s121 = sphi 0, %s107
      %s125 = sphi 0, %s125
      %s127 = sphi 0, %s125
      %s128 = sphi 0, %s127
      %s142 = sphi 0, %s128
      %s146 = sphi 0, %s146
      %s148 = sphi 0, %s146
      %s149 = sphi 0, %s148
      %s163 = sphi 0, %s149
      %s167 = sphi 0, %s167
      %s169 = sphi 0, %s167
      %s170 = sphi 0, %s169
      %s184 = sphi 0, %s170
      %s188 = sphi 0, %s188
      %s190 = sphi 0, %s188
      %s191 = sphi 0, %s190
      %s205 = sphi 0, %s191
      %s209 = sphi 0, %s209
      %s211 = sphi 0, %s209
      %s212 = sphi 0, %s211
      %s226 = sphi 0, %s212
      %s230 = sphi 0, %s230
      %s232 = sphi 0, %s230
      %s233 = sphi 0, %s232
      %s247 = sphi 0, %s233
      %s251 = sphi 0, %s251
      %s253 = sphi 0, %s251
      %s254 = sphi 0, %s253
      %s268 = sphi 0, %s254
      %s274 = sphi 0, %s276
      %s277 = sphi 0, %s274
      %s278 = sphi 0, %s277
      %s294 = sphi 0, %s278
    $region4: #{tpu_custom_call.1} parent=1 // loop_header_branch
      %31 = sbr.rel (%p29) target = $region8
    $region5: #{tpu_custom_call.1} parent=1 // loop_body
      %s33 = ssub.s32 %s28, 1
      %s34 = ssub.s32 %s28, 2
      %s35 = sadd.s32 %s28, 1
      %s36 = ssub.s32 %s28, %s35
      %p37 = scmp.eq.s32.totalorder %s36, 0
      %s39 = sadd.s32 %s38, 1
      %s40 = scalar_select %p37, %s38, %s39
      %p43 = pneg %p37
      %p44 = scmp.eq.s32.totalorder %s28, 1
      %p45 = por %p43, %p44
      %p46 = scmp.ne.s32.totalorder %s38, %s41
      %p47 = scmp.eq.s32.totalorder %s28, 0
      %p48 = por %p46, %p47
      %p49 = scmp.ne.s32.totalorder %s38, %s41
      %p50 = scmp.eq.s32.totalorder %s33, 1
      %p51 = por %p49, %p50
      %p52 = scmp.ne.s32.totalorder %s41, %s42
      %p53 = scmp.eq.s32.totalorder %s33, 0
      %p54 = por %p52, %p53
      %p55 = scmp.ne.s32.totalorder %s41, %s42
      %p56 = scmp.eq.s32.totalorder %s34, 1
      %p57 = por %p55, %p56
      %p59 = scmp.ne.s32.totalorder %s42, %s58
      %p60 = scmp.eq.s32.totalorder %s34, 0
      %p61 = por %p59, %p60
      %s63 = sadd.s32 %s62, 1
      %p66 = scmp.eq.s32.totalorder %s28, 1
      %p67 = scmp.ne.s32.totalorder %s62, %s64
      %p68 = scmp.eq.s32.totalorder %s28, 0
      %p69 = por %p67, %p68
      %p70 = scmp.ne.s32.totalorder %s62, %s64
      %p71 = scmp.eq.s32.totalorder %s33, 1
      %p72 = por %p70, %p71
      %p73 = scmp.ne.s32.totalorder %s64, %s65
      %p74 = scmp.eq.s32.totalorder %s33, 0
      %p75 = por %p73, %p74
      %p76 = scmp.ne.s32.totalorder %s64, %s65
      %p77 = scmp.eq.s32.totalorder %s34, 1
      %p78 = por %p76, %p77
      %p80 = scmp.ne.s32.totalorder %s65, %s79
      %p81 = scmp.eq.s32.totalorder %s34, 0
      %p82 = por %p80, %p81
      %s84 = sadd.s32 %s83, 1
      %p87 = scmp.eq.s32.totalorder %s28, 1
      %p88 = scmp.ne.s32.totalorder %s83, %s85
      %p89 = scmp.eq.s32.totalorder %s28, 0
      %p90 = por %p88, %p89
      %p91 = scmp.ne.s32.totalorder %s83, %s85
      %p92 = scmp.eq.s32.totalorder %s33, 1
      %p93 = por %p91, %p92
      %p94 = scmp.ne.s32.totalorder %s85, %s86
      %p95 = scmp.eq.s32.totalorder %s33, 0
      %p96 = por %p94, %p95
      %p97 = scmp.ne.s32.totalorder %s85, %s86
      %p98 = scmp.eq.s32.totalorder %s34, 1
      %p99 = por %p97, %p98
      %p101 = scmp.ne.s32.totalorder %s86, %s100
      %p102 = scmp.eq.s32.totalorder %s34, 0
      %p103 = por %p101, %p102
      %s105 = sadd.s32 %s104, 1
      %p108 = scmp.eq.s32.totalorder %s28, 1
      %p109 = scmp.ne.s32.totalorder %s104, %s106
      %p110 = scmp.eq.s32.totalorder %s28, 0
      %p111 = por %p109, %p110
      %p112 = scmp.ne.s32.totalorder %s104, %s106
      %p113 = scmp.eq.s32.totalorder %s33, 1
      %p114 = por %p112, %p113
      %p115 = scmp.ne.s32.totalorder %s106, %s107
      %p116 = scmp.eq.s32.totalorder %s33, 0
      %p117 = por %p115, %p116
      %p118 = scmp.ne.s32.totalorder %s106, %s107
      %p119 = scmp.eq.s32.totalorder %s34, 1
      %p120 = por %p118, %p119
      %p122 = scmp.ne.s32.totalorder %s107, %s121
      %p123 = scmp.eq.s32.totalorder %s34, 0
      %p124 = por %p122, %p123
      %s126 = sadd.s32 %s125, 1
      %p129 = scmp.eq.s32.totalorder %s28, 1
      %p130 = scmp.ne.s32.totalorder %s125, %s127
      %p131 = scmp.eq.s32.totalorder %s28, 0
      %p132 = por %p130, %p131
      %p133 = scmp.ne.s32.totalorder %s125, %s127
      %p134 = scmp.eq.s32.totalorder %s33, 1
      %p135 = por %p133, %p134
      %p136 = scmp.ne.s32.totalorder %s127, %s128
      %p137 = scmp.eq.s32.totalorder %s33, 0
      %p138 = por %p136, %p137
      %p139 = scmp.ne.s32.totalorder %s127, %s128
      %p140 = scmp.eq.s32.totalorder %s34, 1
      %p141 = por %p139, %p140
      %p143 = scmp.ne.s32.totalorder %s128, %s142
      %p144 = scmp.eq.s32.totalorder %s34, 0
      %p145 = por %p143, %p144
      %s147 = sadd.s32 %s146, 1
      %p150 = scmp.eq.s32.totalorder %s28, 1
      %p151 = scmp.ne.s32.totalorder %s146, %s148
      %p152 = scmp.eq.s32.totalorder %s28, 0
      %p153 = por %p151, %p152
      %p154 = scmp.ne.s32.totalorder %s146, %s148
      %p155 = scmp.eq.s32.totalorder %s33, 1
      %p156 = por %p154, %p155
      %p157 = scmp.ne.s32.totalorder %s148, %s149
      %p158 = scmp.eq.s32.totalorder %s33, 0
      %p159 = por %p157, %p158
      %p160 = scmp.ne.s32.totalorder %s148, %s149
      %p161 = scmp.eq.s32.totalorder %s34, 1
      %p162 = por %p160, %p161
      %p164 = scmp.ne.s32.totalorder %s149, %s163
      %p165 = scmp.eq.s32.totalorder %s34, 0
      %p166 = por %p164, %p165
      %s168 = sadd.s32 %s167, 1
      %p171 = scmp.eq.s32.totalorder %s28, 1
      %p172 = scmp.ne.s32.totalorder %s167, %s169
      %p173 = scmp.eq.s32.totalorder %s28, 0
      %p174 = por %p172, %p173
      %p175 = scmp.ne.s32.totalorder %s167, %s169
      %p176 = scmp.eq.s32.totalorder %s33, 1
      %p177 = por %p175, %p176
      %p178 = scmp.ne.s32.totalorder %s169, %s170
      %p179 = scmp.eq.s32.totalorder %s33, 0
      %p180 = por %p178, %p179
      %p181 = scmp.ne.s32.totalorder %s169, %s170
      %p182 = scmp.eq.s32.totalorder %s34, 1
      %p183 = por %p181, %p182
      %p185 = scmp.ne.s32.totalorder %s170, %s184
      %p186 = scmp.eq.s32.totalorder %s34, 0
      %p187 = por %p185, %p186
      %s189 = sadd.s32 %s188, 1
      %p192 = scmp.eq.s32.totalorder %s28, 1
      %p193 = scmp.ne.s32.totalorder %s188, %s190
      %p194 = scmp.eq.s32.totalorder %s28, 0
      %p195 = por %p193, %p194
      %p196 = scmp.ne.s32.totalorder %s188, %s190
      %p197 = scmp.eq.s32.totalorder %s33, 1
      %p198 = por %p196, %p197
      %p199 = scmp.ne.s32.totalorder %s190, %s191
      %p200 = scmp.eq.s32.totalorder %s33, 0
      %p201 = por %p199, %p200
      %p202 = scmp.ne.s32.totalorder %s190, %s191
      %p203 = scmp.eq.s32.totalorder %s34, 1
      %p204 = por %p202, %p203
      %p206 = scmp.ne.s32.totalorder %s191, %s205
      %p207 = scmp.eq.s32.totalorder %s34, 0
      %p208 = por %p206, %p207
      %s210 = sadd.s32 %s209, 1
      %p213 = scmp.eq.s32.totalorder %s28, 1
      %p214 = scmp.ne.s32.totalorder %s209, %s211
      %p215 = scmp.eq.s32.totalorder %s28, 0
      %p216 = por %p214, %p215
      %p217 = scmp.ne.s32.totalorder %s209, %s211
      %p218 = scmp.eq.s32.totalorder %s33, 1
      %p219 = por %p217, %p218
      %p220 = scmp.ne.s32.totalorder %s211, %s212
      %p221 = scmp.eq.s32.totalorder %s33, 0
      %p222 = por %p220, %p221
      %p223 = scmp.ne.s32.totalorder %s211, %s212
      %p224 = scmp.eq.s32.totalorder %s34, 1
      %p225 = por %p223, %p224
      %p227 = scmp.ne.s32.totalorder %s212, %s226
      %p228 = scmp.eq.s32.totalorder %s34, 0
      %p229 = por %p227, %p228
      %s231 = sadd.s32 %s230, 1
      %p234 = scmp.eq.s32.totalorder %s28, 1
      %p235 = scmp.ne.s32.totalorder %s230, %s232
      %p236 = scmp.eq.s32.totalorder %s28, 0
      %p237 = por %p235, %p236
      %p238 = scmp.ne.s32.totalorder %s230, %s232
      %p239 = scmp.eq.s32.totalorder %s33, 1
      %p240 = por %p238, %p239
      %p241 = scmp.ne.s32.totalorder %s232, %s233
      %p242 = scmp.eq.s32.totalorder %s33, 0
      %p243 = por %p241, %p242
      %p244 = scmp.ne.s32.totalorder %s232, %s233
      %p245 = scmp.eq.s32.totalorder %s34, 1
      %p246 = por %p244, %p245
      %p248 = scmp.ne.s32.totalorder %s233, %s247
      %p249 = scmp.eq.s32.totalorder %s34, 0
      %p250 = por %p248, %p249
      %s252 = sadd.s32 %s251, 1
      %p255 = scmp.eq.s32.totalorder %s28, 1
      %p256 = scmp.ne.s32.totalorder %s251, %s253
      %p257 = scmp.eq.s32.totalorder %s28, 0
      %p258 = por %p256, %p257
      %p259 = scmp.ne.s32.totalorder %s251, %s253
      %p260 = scmp.eq.s32.totalorder %s33, 1
      %p261 = por %p259, %p260
      %p262 = scmp.ne.s32.totalorder %s253, %s254
      %p263 = scmp.eq.s32.totalorder %s33, 0
      %p264 = por %p262, %p263
      %p265 = scmp.ne.s32.totalorder %s253, %s254
      %p266 = scmp.eq.s32.totalorder %s34, 1
      %p267 = por %p265, %p266
      %p269 = scmp.ne.s32.totalorder %s254, %s268
      %p270 = scmp.eq.s32.totalorder %s34, 0
      %p271 = por %p269, %p270
      %s272 = ssub.s32 %s28, %s35
      %p273 = scmp.eq.s32.totalorder %s272, 0
      %s275 = sadd.s32 %s274, 1
      %s276 = scalar_select %p273, %s274, %s275
      %p279 = pneg %p273
      %p280 = scmp.eq.s32.totalorder %s28, 1
      %p281 = por %p279, %p280
      %p282 = scmp.ne.s32.totalorder %s274, %s277
      %p283 = scmp.eq.s32.totalorder %s28, 0
      %p284 = por %p282, %p283
      %p285 = scmp.ne.s32.totalorder %s274, %s277
      %p286 = scmp.eq.s32.totalorder %s33, 1
      %p287 = por %p285, %p286
      %p288 = scmp.ne.s32.totalorder %s277, %s278
      %p289 = scmp.eq.s32.totalorder %s33, 0
      %p290 = por %p288, %p289
      %p291 = scmp.ne.s32.totalorder %s277, %s278
      %p292 = scmp.eq.s32.totalorder %s34, 1
      %p293 = por %p291, %p292
      %p295 = scmp.ne.s32.totalorder %s278, %s294
      %p296 = scmp.eq.s32.totalorder %s34, 0
      %p297 = por %p295, %p296
      %p298 = scmp.le.s32.totalorder 1, %s28
      %p299 = scmp.lt.s32.totalorder %s28, 3
      %p300 = pnand %p298, %p299
      %p301 = pneg %p300
      // Predicated region
      $region9: #{tpu_custom_call.1} parent=5 // pred_check
        _
      $region10: #{tpu_custom_call.1} parent=5 // pred_check_branch
        %303 = sbr.rel (%p300) target = $region12
      $region11: #{tpu_custom_call.1} parent=5 // pred_region
        %s304 = ssub.s32 %s28, 1
        // Predicated region
        $region13: #{tpu_custom_call.1} parent=11 // pred_check
          %p305 = pneg %p75
        $region14: #{tpu_custom_call.1} parent=11 // pred_check_branch
          %307 = sbr.rel (%p305) target = $region16
        $region15: #{tpu_custom_call.1} parent=11 // pred_region
          %309 = vsyncadd [#allocation6], 0
          %s310 = sshll.u32 %s1, 4
          %s311 = int_to_ptr.hbm [resolvable:$true] %s310
          %s312 = sshll.u32 [#allocation5], 4
          %s313 = int_to_ptr.vmem [resolvable:$true] %s312
          %318 = dma.hbm_to_vmem [thread:$0]  %s311, 19200, %s313, [#allocation6], 128, 128, 8
        $region16: #{tpu_custom_call.1} parent=11 // pred_fallthru
          _
        // Predicated region
        $region17: #{tpu_custom_call.1} parent=11 // pred_check
          %p319 = pneg %p96
        $region18: #{tpu_custom_call.1} parent=11 // pred_check_branch
          %321 = sbr.rel (%p319) target = $region20
        $region19: #{tpu_custom_call.1} parent=11 // pred_region
          %323 = vsyncadd [#allocation6], 0
          %s325 = sshll.u32 %s2, 4
          %s326 = int_to_ptr.hbm [resolvable:$true] %s325
          %s327 = sshll.u32 [#allocation7], 4
          %s328 = int_to_ptr.vmem [resolvable:$true] %s327
          %330 = dma.hbm_to_vmem [thread:$0]  %s326, 16, %s328, [#allocation6]
        $region20: #{tpu_custom_call.1} parent=11 // pred_fallthru
          _
        // Predicated region
        $region21: #{tpu_custom_call.1} parent=11 // pred_check
          %p331 = pneg %p117
        $region22: #{tpu_custom_call.1} parent=11 // pred_check_branch
          %333 = sbr.rel (%p331) target = $region24
        $region23: #{tpu_custom_call.1} parent=11 // pred_region
          %335 = vsyncadd [#allocation9], 0
          %s336 = sshll.u32 %s3, 4
          %s337 = int_to_ptr.hbm [resolvable:$true] %s336
          %s338 = sshll.u32 [#allocation8], 4
          %s339 = int_to_ptr.vmem [resolvable:$true] %s338
          %344 = dma.hbm_to_vmem [thread:$0]  %s337, 64000, %s339, [#allocation9], 256, 256, 16
        $region24: #{tpu_custom_call.1} parent=11 // pred_fallthru
          _
        // Predicated region
        $region25: #{tpu_custom_call.1} parent=11 // pred_check
          %p345 = pneg %p138
        $region26: #{tpu_custom_call.1} parent=11 // pred_check_branch
          %347 = sbr.rel (%p345) target = $region28
        $region27: #{tpu_custom_call.1} parent=11 // pred_region
          %349 = vsyncadd [#allocation9], 0
          %s351 = sshll.u32 %s4, 4
          %s352 = int_to_ptr.hbm [resolvable:$true] %s351
          %s353 = sshll.u32 [#allocation10], 4
          %s354 = int_to_ptr.vmem [resolvable:$true] %s353
          %356 = dma.hbm_to_vmem [thread:$0]  %s352, 32, %s354, [#allocation9]
        $region28: #{tpu_custom_call.1} parent=11 // pred_fallthru
          _
        // Predicated region
        $region29: #{tpu_custom_call.1} parent=11 // pred_check
          %p357 = pneg %p159
        $region30: #{tpu_custom_call.1} parent=11 // pred_check_branch
          %359 = sbr.rel (%p357) target = $region32
        $region31: #{tpu_custom_call.1} parent=11 // pred_region
          %361 = vsyncadd [#allocation12], 0
          %s362 = sshll.u32 %s5, 4
          %s363 = int_to_ptr.hbm [resolvable:$true] %s362
          %s364 = sshll.u32 [#allocation11], 4
          %s365 = int_to_ptr.vmem [resolvable:$true] %s364
          %370 = dma.hbm_to_vmem [thread:$0]  %s363, 6400, %s365, [#allocation12], 128, 128, 8
        $region32: #{tpu_custom_call.1} parent=11 // pred_fallthru
          _
        // Predicated region
        $region33: #{tpu_custom_call.1} parent=11 // pred_check
          %p371 = pneg %p180
        $region34: #{tpu_custom_call.1} parent=11 // pred_check_branch
          %373 = sbr.rel (%p371) target = $region36
        $region35: #{tpu_custom_call.1} parent=11 // pred_region
          %375 = vsyncadd [#allocation12], 0
          %s377 = sshll.u32 %s6, 4
          %s378 = int_to_ptr.hbm [resolvable:$true] %s377
          %s379 = sshll.u32 [#allocation13], 4
          %s380 = int_to_ptr.vmem [resolvable:$true] %s379
          %382 = dma.hbm_to_vmem [thread:$0]  %s378, 16, %s380, [#allocation12]
        $region36: #{tpu_custom_call.1} parent=11 // pred_fallthru
          _
        // Predicated region
        $region37: #{tpu_custom_call.1} parent=11 // pred_check
          %p383 = pneg %p201
        $region38: #{tpu_custom_call.1} parent=11 // pred_check_branch
          %385 = sbr.rel (%p383) target = $region40
        $region39: #{tpu_custom_call.1} parent=11 // pred_region
          %387 = vsyncadd [#allocation15], 0
          %s388 = sshll.u32 %s7, 4
          %s389 = int_to_ptr.hbm [resolvable:$true] %s388
          %s390 = sshll.u32 [#allocation14], 4
          %s391 = int_to_ptr.vmem [resolvable:$true] %s390
          %396 = dma.hbm_to_vmem [thread:$0]  %s389, 2048, %s391, [#allocation15], 128, 128, 8
        $region40: #{tpu_custom_call.1} parent=11 // pred_fallthru
          _
        // Predicated region
        $region41: #{tpu_custom_call.1} parent=11 // pred_check
          %p397 = pneg %p222
        $region42: #{tpu_custom_call.1} parent=11 // pred_check_branch
          %399 = sbr.rel (%p397) target = $region44
        $region43: #{tpu_custom_call.1} parent=11 // pred_region
          %401 = vsyncadd [#allocation15], 0
          %s403 = sshll.u32 %s8, 4
          %s404 = int_to_ptr.hbm [resolvable:$true] %s403
          %s405 = sshll.u32 [#allocation16], 4
          %s406 = int_to_ptr.vmem [resolvable:$true] %s405
          %408 = dma.hbm_to_vmem [thread:$0]  %s404, 16, %s406, [#allocation15]
        $region44: #{tpu_custom_call.1} parent=11 // pred_fallthru
          _
        // Predicated region
        $region45: #{tpu_custom_call.1} parent=11 // pred_check
          %p409 = pneg %p243
        $region46: #{tpu_custom_call.1} parent=11 // pred_check_branch
          %411 = sbr.rel (%p409) target = $region48
        $region47: #{tpu_custom_call.1} parent=11 // pred_region
          %413 = vsyncadd [#allocation18], 0
          %s414 = sshll.u32 %s9, 4
          %s415 = int_to_ptr.hbm [resolvable:$true] %s414
          %s416 = sshll.u32 [#allocation17], 4
          %s417 = int_to_ptr.vmem [resolvable:$true] %s416
          %422 = dma.hbm_to_vmem [thread:$0]  %s415, 2048, %s417, [#allocation18], 128, 128, 8
        $region48: #{tpu_custom_call.1} parent=11 // pred_fallthru
          _
        // Predicated region
        $region49: #{tpu_custom_call.1} parent=11 // pred_check
          %p423 = pneg %p264
        $region50: #{tpu_custom_call.1} parent=11 // pred_check_branch
          %425 = sbr.rel (%p423) target = $region52
        $region51: #{tpu_custom_call.1} parent=11 // pred_region
          %427 = vsyncadd [#allocation18], 0
          %s429 = sshll.u32 %s10, 4
          %s430 = int_to_ptr.hbm [resolvable:$true] %s429
          %s431 = sshll.u32 [#allocation19], 4
          %s432 = int_to_ptr.vmem [resolvable:$true] %s431
          %434 = dma.hbm_to_vmem [thread:$0]  %s430, 16, %s432, [#allocation18]
        $region52: #{tpu_custom_call.1} parent=11 // pred_fallthru
          _
      $region12: #{tpu_custom_call.1} parent=5 // pred_fallthru
        _
      %p435 = scmp.lt.s32.totalorder %s28, 2
      // Predicated region
      $region53: #{tpu_custom_call.1} parent=5 // pred_check
        %p436 = pneg %p435
      $region54: #{tpu_custom_call.1} parent=5 // pred_check_branch
        %438 = sbr.rel (%p436) target = $region56
      $region55: #{tpu_custom_call.1} parent=5 // pred_region
        // Predicated region
        $region57: #{tpu_custom_call.1} parent=55 // pred_check
          %p439 = pneg %p48
        $region58: #{tpu_custom_call.1} parent=55 // pred_check_branch
          %441 = sbr.rel (%p439) target = $region60
        $region59: #{tpu_custom_call.1} parent=55 // pred_region
          %s442 = sand.u32 %s38, 1
          %s443 = scalar_lea.sflag [#allocation3], %s442
          %s444 = sand.u32 %s38, 1
          %s445 = smul.addr %s444, 64
          %s446 = scalar_lea.vmem [#allocation2], %s445
          %448 = vsyncadd %s443, 0
          %s449 = smul.addr %s28, 8
          %s450 = smul.addr %s449, 8
          %s451 = scalar_lea.hbm %s0, %s450
          %s452 = sshll.u32 %s451, 4
          %s453 = int_to_ptr.hbm [resolvable:$true] %s452
          %s454 = sshll.u32 %s446, 4
          %s455 = int_to_ptr.vmem [resolvable:$true] %s454
          %460 = dma.hbm_to_vmem [thread:$0]  %s453, 1024, %s455, %s443, 128, 128, 8
        $region60: #{tpu_custom_call.1} parent=55 // pred_fallthru
          _
      $region56: #{tpu_custom_call.1} parent=5 // pred_fallthru
        _
      %p461 = scmp.le.s32.totalorder 1, %s28
      %p462 = scmp.lt.s32.totalorder %s28, 3
      %p463 = pnand %p461, %p462
      %p464 = pneg %p463
      // Predicated region
      $region61: #{tpu_custom_call.1} parent=5 // pred_check
        _
      $region62: #{tpu_custom_call.1} parent=5 // pred_check_branch
        %466 = sbr.rel (%p463) target = $region64
      $region63: #{tpu_custom_call.1} parent=5 // pred_region
        %s467 = ssub.s32 %s28, 1
        %s468 = sand.u32 %s41, 1
        %s469 = scalar_lea.sflag [#allocation3], %s468
        %s470 = sand.u32 %s41, 1
        %s471 = smul.addr %s470, 64
        %s472 = scalar_lea.vmem [#allocation2], %s471
        // Predicated region
        $region65: #{tpu_custom_call.1} parent=63 // pred_check
          %p473 = pneg %p54
        $region66: #{tpu_custom_call.1} parent=63 // pred_check_branch
          %475 = sbr.rel (%p473) target = $region68
        $region67: #{tpu_custom_call.1} parent=63 // pred_region
          %477 = dma.done %s469, 1024
        $region68: #{tpu_custom_call.1} parent=63 // pred_fallthru
          _
        // Predicated region
        $region69: #{tpu_custom_call.1} parent=63 // pred_check
          %p478 = pneg %p75
        $region70: #{tpu_custom_call.1} parent=63 // pred_check_branch
          %480 = sbr.rel (%p478) target = $region72
        $region71: #{tpu_custom_call.1} parent=63 // pred_region
          %482 = dma.done [#allocation6], 19200
        $region72: #{tpu_custom_call.1} parent=63 // pred_fallthru
          _
        // Predicated region
        $region73: #{tpu_custom_call.1} parent=63 // pred_check
          %p483 = pneg %p96
        $region74: #{tpu_custom_call.1} parent=63 // pred_check_branch
          %485 = sbr.rel (%p483) target = $region76
        $region75: #{tpu_custom_call.1} parent=63 // pred_region
          %487 = dma.done [#allocation6], 16
        $region76: #{tpu_custom_call.1} parent=63 // pred_fallthru
          _
        // Predicated region
        $region77: #{tpu_custom_call.1} parent=63 // pred_check
          %p488 = pneg %p117
        $region78: #{tpu_custom_call.1} parent=63 // pred_check_branch
          %490 = sbr.rel (%p488) target = $region80
        $region79: #{tpu_custom_call.1} parent=63 // pred_region
          %492 = dma.done [#allocation9], 64000
        $region80: #{tpu_custom_call.1} parent=63 // pred_fallthru
          _
        // Predicated region
        $region81: #{tpu_custom_call.1} parent=63 // pred_check
          %p493 = pneg %p138
        $region82: #{tpu_custom_call.1} parent=63 // pred_check_branch
          %495 = sbr.rel (%p493) target = $region84
        $region83: #{tpu_custom_call.1} parent=63 // pred_region
          %497 = dma.done [#allocation9], 32
        $region84: #{tpu_custom_call.1} parent=63 // pred_fallthru
          _
        // Predicated region
        $region85: #{tpu_custom_call.1} parent=63 // pred_check
          %p498 = pneg %p159
        $region86: #{tpu_custom_call.1} parent=63 // pred_check_branch
          %500 = sbr.rel (%p498) target = $region88
        $region87: #{tpu_custom_call.1} parent=63 // pred_region
          %502 = dma.done [#allocation12], 6400
        $region88: #{tpu_custom_call.1} parent=63 // pred_fallthru
          _
        // Predicated region
        $region89: #{tpu_custom_call.1} parent=63 // pred_check
          %p503 = pneg %p180
        $region90: #{tpu_custom_call.1} parent=63 // pred_check_branch
          %505 = sbr.rel (%p503) target = $region92
        $region91: #{tpu_custom_call.1} parent=63 // pred_region
          %507 = dma.done [#allocation12], 16
        $region92: #{tpu_custom_call.1} parent=63 // pred_fallthru
          _
        // Predicated region
        $region93: #{tpu_custom_call.1} parent=63 // pred_check
          %p508 = pneg %p201
        $region94: #{tpu_custom_call.1} parent=63 // pred_check_branch
          %510 = sbr.rel (%p508) target = $region96
        $region95: #{tpu_custom_call.1} parent=63 // pred_region
          %512 = dma.done [#allocation15], 2048
        $region96: #{tpu_custom_call.1} parent=63 // pred_fallthru
          _
        // Predicated region
        $region97: #{tpu_custom_call.1} parent=63 // pred_check
          %p513 = pneg %p222
        $region98: #{tpu_custom_call.1} parent=63 // pred_check_branch
          %515 = sbr.rel (%p513) target = $region100
        $region99: #{tpu_custom_call.1} parent=63 // pred_region
          %517 = dma.done [#allocation15], 16
        $region100: #{tpu_custom_call.1} parent=63 // pred_fallthru
          _
        // Predicated region
        $region101: #{tpu_custom_call.1} parent=63 // pred_check
          %p518 = pneg %p243
        $region102: #{tpu_custom_call.1} parent=63 // pred_check_branch
          %520 = sbr.rel (%p518) target = $region104
        $region103: #{tpu_custom_call.1} parent=63 // pred_region
          %522 = dma.done [#allocation18], 2048
        $region104: #{tpu_custom_call.1} parent=63 // pred_fallthru
          _
        // Predicated region
        $region105: #{tpu_custom_call.1} parent=63 // pred_check
          %p523 = pneg %p264
        $region106: #{tpu_custom_call.1} parent=63 // pred_check_branch
          %525 = sbr.rel (%p523) target = $region108
        $region107: #{tpu_custom_call.1} parent=63 // pred_region
          %527 = dma.done [#allocation18], 16
        $region108: #{tpu_custom_call.1} parent=63 // pred_fallthru
          _
        %s528 = sand.u32 %s41, 1
        %s529 = scalar_lea.sflag [#allocation3], %s528
        %s530 = sand.u32 %s41, 1
        %s531 = smul.addr %s530, 64
        %s532 = scalar_lea.vmem [#allocation2], %s531
        %p533 = pneg %p54
        %p534 = pneg %p51
        %p535 = pneg %p75
        %p536 = pneg %p72
        %p537 = pneg %p96
        %p538 = pneg %p93
        %p539 = pneg %p117
        %p540 = pneg %p114
        %p541 = pneg %p138
        %p542 = pneg %p135
        %p543 = pneg %p159
        %p544 = pneg %p156
        %p545 = pneg %p180
        %p546 = pneg %p177
        %p547 = pneg %p201
        %p548 = pneg %p198
        %p549 = pneg %p222
        %p550 = pneg %p219
        %p551 = pneg %p243
        %p552 = pneg %p240
        %p553 = pneg %p264
        %p554 = pneg %p261
        %p555 = pneg %p290
        %p556 = pneg %p287
        %s557 = sand.u32 %s277, 1
        %s558 = scalar_lea.sflag [#allocation4], %s557
        %s559 = sand.u32 %s277, 1
        %s560 = scalar_lea.vmem [#allocation20], %s559
        %v561 = vld [vmem:[%s472] sm:$0xff]
        %v562 = vld [vmem:[%s472 + $0x8] sm:$0xff]
        %v563 = vld [vmem:[%s472 + $0x10] sm:$0xff]
        %v564 = vld [vmem:[%s472 + $0x18] sm:$0xff]
        %v565 = vld [vmem:[%s472 + $0x20] sm:$0xff]
        %v566 = vld [vmem:[%s472 + $0x28] sm:$0xff]
        %v567 = vld [vmem:[%s472 + $0x30] sm:$0xff]
        %v568 = vld [vmem:[%s472 + $0x38] sm:$0xff]
        %v569 = vld [vmem:[#allocation5] sm:$0xff]
        %v570 = vld [vmem:[#allocation5 + $0x8] sm:$0xff]
        %v571 = vld [vmem:[#allocation5 + $0x10] sm:$0xff]
        %v572 = vld [vmem:[#allocation5 + $0x18] sm:$0xff]
        %v573 = vld [vmem:[#allocation5 + $0x20] sm:$0xff]
        %v574 = vld [vmem:[#allocation5 + $0x28] sm:$0x3]
        %s575 = scalar_lea.vmem [#allocation5], 48
        %v576 = vld [vmem:[%s575] sm:$0xff]
        %v577 = vld [vmem:[%s575 + $0x8] sm:$0xff]
        %v578 = vld [vmem:[%s575 + $0x10] sm:$0xff]
        %v579 = vld [vmem:[%s575 + $0x18] sm:$0xff]
        %v580 = vld [vmem:[%s575 + $0x20] sm:$0xff]
        %v581 = vld [vmem:[%s575 + $0x28] sm:$0x3]
        %vm582 = vcmask 343040
        %v584 = vsel %vm582, %v563, 0
        %v587 = vsel %vm582, %v564, 0
        %vm589 = vcmask 1041408
        %v591 = vsel %vm589, %v581, 0
        %593 = vmatpush.msra.mxu0 0.0
        %594 = vmatpush.msra.mxu0 0.0
        %595 = vmatpush.msra.mxu0 0.0
        %596 = vmatpush.msra.mxu0 0.0
        %597 = vmatpush.msra.mxu0 0.0
        %598 = vmatpush.msra.mxu0 0.0
        %599 = vmatpush.msra.mxu0 0.0
        %600 = vmatpush.msra.mxu0 0.0
        %601 = vmatpush.msra.mxu0 0.0
        %602 = vmatpush.msra.mxu0 0.0
        %603 = vmatpush.msra.mxu0 %v591
        %604 = vmatpush.msra.mxu0 %v580
        %605 = vmatpush.msra.mxu0 %v579
        %606 = vmatpush.msra.mxu0 %v578
        %607 = vmatpush.msra.mxu0 %v577
        %608 = vmatpush.msra.mxu0 %v576
        %609 = vmatmul.f32.gmra.mxu0 %v584
        %v610 = vpop.f32.mrf.mxu0
        %v611 = vadd.f32 0.0, %v610
        %612 = vmatmul.f32.gmra.mxu0 %v587
        %v613 = vpop.f32.mrf.mxu0
        %v614 = vadd.f32 0.0, %v613
        %615 = vdwg.mxu0
        %v617 = vsel %vm582, %v561, 0
        %v620 = vsel %vm582, %v562, 0
        %v623 = vsel %vm589, %v574, 0
        %625 = vmatpush.msra.mxu0 0.0
        %626 = vmatpush.msra.mxu0 0.0
        %627 = vmatpush.msra.mxu0 0.0
        %628 = vmatpush.msra.mxu0 0.0
        %629 = vmatpush.msra.mxu0 0.0
        %630 = vmatpush.msra.mxu0 0.0
        %631 = vmatpush.msra.mxu0 0.0
        %632 = vmatpush.msra.mxu0 0.0
        %633 = vmatpush.msra.mxu0 0.0
        %634 = vmatpush.msra.mxu0 0.0
        %635 = vmatpush.msra.mxu0 %v623
        %636 = vmatpush.msra.mxu0 %v573
        %637 = vmatpush.msra.mxu0 %v572
        %638 = vmatpush.msra.mxu0 %v571
        %639 = vmatpush.msra.mxu0 %v570
        %640 = vmatpush.msra.mxu0 %v569
        %641 = vmatmul.f32.gmra.mxu0 %v617
        %v642 = vpop.f32.mrf.mxu0
        %v643 = vadd.f32 %v611, %v642
        %644 = vmatmul.f32.gmra.mxu0 %v620
        %v645 = vpop.f32.mrf.mxu0
        %v646 = vadd.f32 %v614, %v645
        %647 = vdwg.mxu0
        %s648 = scalar_lea.vmem [#allocation5], 96
        %v649 = vld [vmem:[%s648] sm:$0xff]
        %v650 = vld [vmem:[%s648 + $0x8] sm:$0xff]
        %v651 = vld [vmem:[%s648 + $0x10] sm:$0xff]
        %v652 = vld [vmem:[%s648 + $0x18] sm:$0xff]
        %v653 = vld [vmem:[%s648 + $0x20] sm:$0xff]
        %v654 = vld [vmem:[%s648 + $0x28] sm:$0x3]
        %655 = vrot.lane.b32.xlu0 %v561, 125
        %v656 = vpop.permute.xlu0 %655
        %657 = vrot.lane.b32.xlu0 %v562, 125
        %v658 = vpop.permute.xlu0 %657
        %v659 = vsel %vm582, %v656, 0
        %v661 = vsel %vm582, %v658, 0
        %v664 = vsel %vm589, %v654, 0
        %666 = vmatpush.msra.mxu0 0.0
        %667 = vmatpush.msra.mxu0 0.0
        %668 = vmatpush.msra.mxu0 0.0
        %669 = vmatpush.msra.mxu0 0.0
        %670 = vmatpush.msra.mxu0 0.0
        %671 = vmatpush.msra.mxu0 0.0
        %672 = vmatpush.msra.mxu0 0.0
        %673 = vmatpush.msra.mxu0 0.0
        %674 = vmatpush.msra.mxu0 0.0
        %675 = vmatpush.msra.mxu0 0.0
        %676 = vmatpush.msra.mxu0 %v664
        %677 = vmatpush.msra.mxu0 %v653
        %678 = vmatpush.msra.mxu0 %v652
        %679 = vmatpush.msra.mxu0 %v651
        %680 = vmatpush.msra.mxu0 %v650
        %681 = vmatpush.msra.mxu0 %v649
        %682 = vmatmul.f32.gmra.mxu0 %v659
        %v683 = vpop.f32.mrf.mxu0
        %v684 = vadd.f32 0.0, %v683
        %685 = vmatmul.f32.gmra.mxu0 %v661
        %v686 = vpop.f32.mrf.mxu0
        %v687 = vadd.f32 0.0, %v686
        %688 = vdwg.mxu0
        %v689 = vadd.f32 %v643, %v684
        %v690 = vadd.f32 %v646, %v687
        %s691 = scalar_lea.vmem [#allocation5], 144
        %v692 = vld [vmem:[%s691] sm:$0xff]
        %v693 = vld [vmem:[%s691 + $0x8] sm:$0xff]
        %v694 = vld [vmem:[%s691 + $0x10] sm:$0xff]
        %v695 = vld [vmem:[%s691 + $0x18] sm:$0xff]
        %v696 = vld [vmem:[%s691 + $0x20] sm:$0xff]
        %v697 = vld [vmem:[%s691 + $0x28] sm:$0x3]
        %698 = vrot.lane.b32.xlu0 %v563, 125
        %v699 = vpop.permute.xlu0 %698
        %700 = vrot.lane.b32.xlu0 %v564, 125
        %v701 = vpop.permute.xlu0 %700
        %v702 = vsel %vm582, %v699, 0
        %v704 = vsel %vm582, %v701, 0
        %v707 = vsel %vm589, %v697, 0
        %709 = vmatpush.msra.mxu0 0.0
        %710 = vmatpush.msra.mxu0 0.0
        %711 = vmatpush.msra.mxu0 0.0
        %712 = vmatpush.msra.mxu0 0.0
        %713 = vmatpush.msra.mxu0 0.0
        %714 = vmatpush.msra.mxu0 0.0
        %715 = vmatpush.msra.mxu0 0.0
        %716 = vmatpush.msra.mxu0 0.0
        %717 = vmatpush.msra.mxu0 0.0
        %718 = vmatpush.msra.mxu0 0.0
        %719 = vmatpush.msra.mxu0 %v707
        %720 = vmatpush.msra.mxu0 %v696
        %721 = vmatpush.msra.mxu0 %v695
        %722 = vmatpush.msra.mxu0 %v694
        %723 = vmatpush.msra.mxu0 %v693
        %724 = vmatpush.msra.mxu0 %v692
        %725 = vmatmul.f32.gmra.mxu0 %v702
        %v726 = vpop.f32.mrf.mxu0
        %v727 = vadd.f32 0.0, %v726
        %728 = vmatmul.f32.gmra.mxu0 %v704
        %v729 = vpop.f32.mrf.mxu0
        %v730 = vadd.f32 0.0, %v729
        %731 = vdwg.mxu0
        %v732 = vadd.f32 %v689, %v727
        %v733 = vadd.f32 %v690, %v730
        %s734 = scalar_lea.vmem [#allocation5], 192
        %v735 = vld [vmem:[%s734] sm:$0xff]
        %v736 = vld [vmem:[%s734 + $0x8] sm:$0xff]
        %v737 = vld [vmem:[%s734 + $0x10] sm:$0xff]
        %v738 = vld [vmem:[%s734 + $0x18] sm:$0xff]
        %v739 = vld [vmem:[%s734 + $0x20] sm:$0xff]
        %v740 = vld [vmem:[%s734 + $0x28] sm:$0x3]
        %741 = vrot.lane.b32.xlu0 %v561, 122
        %v742 = vpop.permute.xlu0 %741
        %743 = vrot.lane.b32.xlu0 %v562, 122
        %v744 = vpop.permute.xlu0 %743
        %v745 = vsel %vm582, %v742, 0
        %v747 = vsel %vm582, %v744, 0
        %v750 = vsel %vm589, %v740, 0
        %752 = vmatpush.msra.mxu0 0.0
        %753 = vmatpush.msra.mxu0 0.0
        %754 = vmatpush.msra.mxu0 0.0
        %755 = vmatpush.msra.mxu0 0.0
        %756 = vmatpush.msra.mxu0 0.0
        %757 = vmatpush.msra.mxu0 0.0
        %758 = vmatpush.msra.mxu0 0.0
        %759 = vmatpush.msra.mxu0 0.0
        %760 = vmatpush.msra.mxu0 0.0
        %761 = vmatpush.msra.mxu0 0.0
        %762 = vmatpush.msra.mxu0 %v750
        %763 = vmatpush.msra.mxu0 %v739
        %764 = vmatpush.msra.mxu0 %v738
        %765 = vmatpush.msra.mxu0 %v737
        %766 = vmatpush.msra.mxu0 %v736
        %767 = vmatpush.msra.mxu0 %v735
        %768 = vmatmul.f32.gmra.mxu0 %v745
        %v769 = vpop.f32.mrf.mxu0
        %v770 = vadd.f32 0.0, %v769
        %771 = vmatmul.f32.gmra.mxu0 %v747
        %v772 = vpop.f32.mrf.mxu0
        %v773 = vadd.f32 0.0, %v772
        %774 = vdwg.mxu0
        %v775 = vadd.f32 %v732, %v770
        %v776 = vadd.f32 %v733, %v773
        %s777 = scalar_lea.vmem [#allocation5], 240
        %v778 = vld [vmem:[%s777] sm:$0xff]
        %v779 = vld [vmem:[%s777 + $0x8] sm:$0xff]
        %v780 = vld [vmem:[%s777 + $0x10] sm:$0xff]
        %v781 = vld [vmem:[%s777 + $0x18] sm:$0xff]
        %v782 = vld [vmem:[%s777 + $0x20] sm:$0xff]
        %v783 = vld [vmem:[%s777 + $0x28] sm:$0x3]
        %v785 = vsel %vm582, %v565, 0
        %v788 = vsel %vm582, %v566, 0
        %v791 = vsel %vm589, %v783, 0
        %793 = vmatpush.msra.mxu0 0.0
        %794 = vmatpush.msra.mxu0 0.0
        %795 = vmatpush.msra.mxu0 0.0
        %796 = vmatpush.msra.mxu0 0.0
        %797 = vmatpush.msra.mxu0 0.0
        %798 = vmatpush.msra.mxu0 0.0
        %799 = vmatpush.msra.mxu0 0.0
        %800 = vmatpush.msra.mxu0 0.0
        %801 = vmatpush.msra.mxu0 0.0
        %802 = vmatpush.msra.mxu0 0.0
        %803 = vmatpush.msra.mxu0 %v791
        %804 = vmatpush.msra.mxu0 %v782
        %805 = vmatpush.msra.mxu0 %v781
        %806 = vmatpush.msra.mxu0 %v780
        %807 = vmatpush.msra.mxu0 %v779
        %808 = vmatpush.msra.mxu0 %v778
        %809 = vmatmul.f32.gmra.mxu0 %v785
        %v810 = vpop.f32.mrf.mxu0
        %v811 = vadd.f32 0.0, %v810
        %812 = vmatmul.f32.gmra.mxu0 %v788
        %v813 = vpop.f32.mrf.mxu0
        %v814 = vadd.f32 0.0, %v813
        %815 = vdwg.mxu0
        %v816 = vadd.f32 %v775, %v811
        %v817 = vadd.f32 %v776, %v814
        %s818 = scalar_lea.vmem [#allocation5], 288
        %v819 = vld [vmem:[%s818] sm:$0xff]
        %v820 = vld [vmem:[%s818 + $0x8] sm:$0xff]
        %v821 = vld [vmem:[%s818 + $0x10] sm:$0xff]
        %v822 = vld [vmem:[%s818 + $0x18] sm:$0xff]
        %v823 = vld [vmem:[%s818 + $0x20] sm:$0xff]
        %v824 = vld [vmem:[%s818 + $0x28] sm:$0x3]
        %v826 = vsel %vm582, %v567, 0
        %v829 = vsel %vm582, %v568, 0
        %v832 = vsel %vm589, %v824, 0
        %834 = vmatpush.msra.mxu0 0.0
        %835 = vmatpush.msra.mxu0 0.0
        %836 = vmatpush.msra.mxu0 0.0
        %837 = vmatpush.msra.mxu0 0.0
        %838 = vmatpush.msra.mxu0 0.0
        %839 = vmatpush.msra.mxu0 0.0
        %840 = vmatpush.msra.mxu0 0.0
        %841 = vmatpush.msra.mxu0 0.0
        %842 = vmatpush.msra.mxu0 0.0
        %843 = vmatpush.msra.mxu0 0.0
        %844 = vmatpush.msra.mxu0 %v832
        %845 = vmatpush.msra.mxu0 %v823
        %846 = vmatpush.msra.mxu0 %v822
        %847 = vmatpush.msra.mxu0 %v821
        %848 = vmatpush.msra.mxu0 %v820
        %849 = vmatpush.msra.mxu0 %v819
        %850 = vmatmul.f32.gmra.mxu0 %v826
        %v851 = vpop.f32.mrf.mxu0
        %v852 = vadd.f32 0.0, %v851
        %853 = vmatmul.f32.gmra.mxu0 %v829
        %v854 = vpop.f32.mrf.mxu0
        %v855 = vadd.f32 0.0, %v854
        %856 = vdwg.mxu0
        %v857 = vadd.f32 %v816, %v852
        %v858 = vadd.f32 %v817, %v855
        %s859 = scalar_lea.vmem [#allocation5], 336
        %v860 = vld [vmem:[%s859] sm:$0xff]
        %v861 = vld [vmem:[%s859 + $0x8] sm:$0xff]
        %v862 = vld [vmem:[%s859 + $0x10] sm:$0xff]
        %v863 = vld [vmem:[%s859 + $0x18] sm:$0xff]
        %v864 = vld [vmem:[%s859 + $0x20] sm:$0xff]
        %v865 = vld [vmem:[%s859 + $0x28] sm:$0x3]
        %866 = vrot.lane.b32.xlu0 %v565, 125
        %v867 = vpop.permute.xlu0 %866
        %868 = vrot.lane.b32.xlu0 %v566, 125
        %v869 = vpop.permute.xlu0 %868
        %v870 = vsel %vm582, %v867, 0
        %v872 = vsel %vm582, %v869, 0
        %v875 = vsel %vm589, %v865, 0
        %877 = vmatpush.msra.mxu0 0.0
        %878 = vmatpush.msra.mxu0 0.0
        %879 = vmatpush.msra.mxu0 0.0
        %880 = vmatpush.msra.mxu0 0.0
        %881 = vmatpush.msra.mxu0 0.0
        %882 = vmatpush.msra.mxu0 0.0
        %883 = vmatpush.msra.mxu0 0.0
        %884 = vmatpush.msra.mxu0 0.0
        %885 = vmatpush.msra.mxu0 0.0
        %886 = vmatpush.msra.mxu0 0.0
        %887 = vmatpush.msra.mxu0 %v875
        %888 = vmatpush.msra.mxu0 %v864
        %889 = vmatpush.msra.mxu0 %v863
        %890 = vmatpush.msra.mxu0 %v862
        %891 = vmatpush.msra.mxu0 %v861
        %892 = vmatpush.msra.mxu0 %v860
        %893 = vmatmul.f32.gmra.mxu0 %v870
        %v894 = vpop.f32.mrf.mxu0
        %v895 = vadd.f32 0.0, %v894
        %896 = vmatmul.f32.gmra.mxu0 %v872
        %v897 = vpop.f32.mrf.mxu0
        %v898 = vadd.f32 0.0, %v897
        %899 = vdwg.mxu0
        %v900 = vadd.f32 %v857, %v895
        %v901 = vadd.f32 %v858, %v898
        %s902 = scalar_lea.vmem [#allocation5], 384
        %v903 = vld [vmem:[%s902] sm:$0xff]
        %v904 = vld [vmem:[%s902 + $0x8] sm:$0xff]
        %v905 = vld [vmem:[%s902 + $0x10] sm:$0xff]
        %v906 = vld [vmem:[%s902 + $0x18] sm:$0xff]
        %v907 = vld [vmem:[%s902 + $0x20] sm:$0xff]
        %v908 = vld [vmem:[%s902 + $0x28] sm:$0x3]
        %909 = vrot.lane.b32.xlu0 %v567, 125
        %v910 = vpop.permute.xlu0 %909
        %911 = vrot.lane.b32.xlu0 %v568, 125
        %v912 = vpop.permute.xlu0 %911
        %v913 = vsel %vm582, %v910, 0
        %v915 = vsel %vm582, %v912, 0
        %v918 = vsel %vm589, %v908, 0
        %920 = vmatpush.msra.mxu0 0.0
        %921 = vmatpush.msra.mxu0 0.0
        %922 = vmatpush.msra.mxu0 0.0
        %923 = vmatpush.msra.mxu0 0.0
        %924 = vmatpush.msra.mxu0 0.0
        %925 = vmatpush.msra.mxu0 0.0
        %926 = vmatpush.msra.mxu0 0.0
        %927 = vmatpush.msra.mxu0 0.0
        %928 = vmatpush.msra.mxu0 0.0
        %929 = vmatpush.msra.mxu0 0.0
        %930 = vmatpush.msra.mxu0 %v918
        %931 = vmatpush.msra.mxu0 %v907
        %932 = vmatpush.msra.mxu0 %v906
        %933 = vmatpush.msra.mxu0 %v905
        %934 = vmatpush.msra.mxu0 %v904
        %935 = vmatpush.msra.mxu0 %v903
        %936 = vmatmul.f32.gmra.mxu0 %v913
        %v937 = vpop.f32.mrf.mxu0
        %v938 = vadd.f32 0.0, %v937
        %939 = vmatmul.f32.gmra.mxu0 %v915
        %v940 = vpop.f32.mrf.mxu0
        %v941 = vadd.f32 0.0, %v940
        %942 = vdwg.mxu0
        %v943 = vadd.f32 %v900, %v938
        %v944 = vadd.f32 %v901, %v941
        %s945 = scalar_lea.vmem [#allocation5], 432
        %v946 = vld [vmem:[%s945] sm:$0xff]
        %v947 = vld [vmem:[%s945 + $0x8] sm:$0xff]
        %v948 = vld [vmem:[%s945 + $0x10] sm:$0xff]
        %v949 = vld [vmem:[%s945 + $0x18] sm:$0xff]
        %v950 = vld [vmem:[%s945 + $0x20] sm:$0xff]
        %v951 = vld [vmem:[%s945 + $0x28] sm:$0x3]
        %952 = vrot.lane.b32.xlu0 %v565, 122
        %v953 = vpop.permute.xlu0 %952
        %954 = vrot.lane.b32.xlu0 %v566, 122
        %v955 = vpop.permute.xlu0 %954
        %v956 = vsel %vm582, %v953, 0
        %v958 = vsel %vm582, %v955, 0
        %v961 = vsel %vm589, %v951, 0
        %963 = vmatpush.msra.mxu0 0.0
        %964 = vmatpush.msra.mxu0 0.0
        %965 = vmatpush.msra.mxu0 0.0
        %966 = vmatpush.msra.mxu0 0.0
        %967 = vmatpush.msra.mxu0 0.0
        %968 = vmatpush.msra.mxu0 0.0
        %969 = vmatpush.msra.mxu0 0.0
        %970 = vmatpush.msra.mxu0 0.0
        %971 = vmatpush.msra.mxu0 0.0
        %972 = vmatpush.msra.mxu0 0.0
        %973 = vmatpush.msra.mxu0 %v961
        %974 = vmatpush.msra.mxu0 %v950
        %975 = vmatpush.msra.mxu0 %v949
        %976 = vmatpush.msra.mxu0 %v948
        %977 = vmatpush.msra.mxu0 %v947
        %978 = vmatpush.msra.mxu0 %v946
        %979 = vmatmul.f32.gmra.mxu0 %v956
        %v980 = vpop.f32.mrf.mxu0
        %v981 = vadd.f32 0.0, %v980
        %982 = vmatmul.f32.gmra.mxu0 %v958
        %v983 = vpop.f32.mrf.mxu0
        %v984 = vadd.f32 0.0, %v983
        %985 = vdwg.mxu0
        %v986 = vadd.f32 %v943, %v981
        %v987 = vadd.f32 %v944, %v984
        %s988 = scalar_lea.vmem [#allocation5], 480
        %v989 = vld [vmem:[%s988] sm:$0xff]
        %v990 = vld [vmem:[%s988 + $0x8] sm:$0xff]
        %v991 = vld [vmem:[%s988 + $0x10] sm:$0xff]
        %v992 = vld [vmem:[%s988 + $0x18] sm:$0xff]
        %v993 = vld [vmem:[%s988 + $0x20] sm:$0xff]
        %v994 = vld [vmem:[%s988 + $0x28] sm:$0x3]
        %vm995 = vcmask 1046528
        %v996 = vrot.slane %v561, 1
        %v997 = vrot.slane %v562, 1
        %v998 = vsel %vm995, %v996, %v997
        %v999 = vsel %vm582, %v998, 0
        %v1001 = vsel %vm582, %v997, 0
        %v1004 = vsel %vm589, %v994, 0
        %1006 = vmatpush.msra.mxu0 0.0
        %1007 = vmatpush.msra.mxu0 0.0
        %1008 = vmatpush.msra.mxu0 0.0
        %1009 = vmatpush.msra.mxu0 0.0
        %1010 = vmatpush.msra.mxu0 0.0
        %1011 = vmatpush.msra.mxu0 0.0
        %1012 = vmatpush.msra.mxu0 0.0
        %1013 = vmatpush.msra.mxu0 0.0
        %1014 = vmatpush.msra.mxu0 0.0
        %1015 = vmatpush.msra.mxu0 0.0
        %1016 = vmatpush.msra.mxu0 %v1004
        %1017 = vmatpush.msra.mxu0 %v993
        %1018 = vmatpush.msra.mxu0 %v992
        %1019 = vmatpush.msra.mxu0 %v991
        %1020 = vmatpush.msra.mxu0 %v990
        %1021 = vmatpush.msra.mxu0 %v989
        %1022 = vmatmul.f32.gmra.mxu0 %v999
        %v1023 = vpop.f32.mrf.mxu0
        %v1024 = vadd.f32 0.0, %v1023
        %1025 = vmatmul.f32.gmra.mxu0 %v1001
        %v1026 = vpop.f32.mrf.mxu0
        %v1027 = vadd.f32 0.0, %v1026
        %1028 = vdwg.mxu0
        %v1029 = vadd.f32 %v986, %v1024
        %v1030 = vadd.f32 %v987, %v1027
        %s1031 = scalar_lea.vmem [#allocation5], 528
        %v1032 = vld [vmem:[%s1031] sm:$0xff]
        %v1033 = vld [vmem:[%s1031 + $0x8] sm:$0xff]
        %v1034 = vld [vmem:[%s1031 + $0x10] sm:$0xff]
        %v1035 = vld [vmem:[%s1031 + $0x18] sm:$0xff]
        %v1036 = vld [vmem:[%s1031 + $0x20] sm:$0xff]
        %v1037 = vld [vmem:[%s1031 + $0x28] sm:$0x3]
        %v1038 = vrot.slane %v563, 1
        %v1039 = vrot.slane %v564, 1
        %v1040 = vsel %vm995, %v1038, %v1039
        %v1041 = vsel %vm582, %v1040, 0
        %v1043 = vsel %vm582, %v1039, 0
        %v1046 = vsel %vm589, %v1037, 0
        %1048 = vmatpush.msra.mxu0 0.0
        %1049 = vmatpush.msra.mxu0 0.0
        %1050 = vmatpush.msra.mxu0 0.0
        %1051 = vmatpush.msra.mxu0 0.0
        %1052 = vmatpush.msra.mxu0 0.0
        %1053 = vmatpush.msra.mxu0 0.0
        %1054 = vmatpush.msra.mxu0 0.0
        %1055 = vmatpush.msra.mxu0 0.0
        %1056 = vmatpush.msra.mxu0 0.0
        %1057 = vmatpush.msra.mxu0 0.0
        %1058 = vmatpush.msra.mxu0 %v1046
        %1059 = vmatpush.msra.mxu0 %v1036
        %1060 = vmatpush.msra.mxu0 %v1035
        %1061 = vmatpush.msra.mxu0 %v1034
        %1062 = vmatpush.msra.mxu0 %v1033
        %1063 = vmatpush.msra.mxu0 %v1032
        %1064 = vmatmul.f32.gmra.mxu0 %v1041
        %v1065 = vpop.f32.mrf.mxu0
        %v1066 = vadd.f32 0.0, %v1065
        %1067 = vmatmul.f32.gmra.mxu0 %v1043
        %v1068 = vpop.f32.mrf.mxu0
        %v1069 = vadd.f32 0.0, %v1068
        %1070 = vdwg.mxu0
        %v1071 = vadd.f32 %v1029, %v1066
        %v1072 = vadd.f32 %v1030, %v1069
        %s1073 = scalar_lea.vmem [#allocation5], 576
        %v1074 = vld [vmem:[%s1073] sm:$0xff]
        %v1075 = vld [vmem:[%s1073 + $0x8] sm:$0xff]
        %v1076 = vld [vmem:[%s1073 + $0x10] sm:$0xff]
        %v1077 = vld [vmem:[%s1073 + $0x18] sm:$0xff]
        %v1078 = vld [vmem:[%s1073 + $0x20] sm:$0xff]
        %v1079 = vld [vmem:[%s1073 + $0x28] sm:$0x3]
        %1080 = vrot.lane.b32.xlu0 %v998, 125
        %v1081 = vpop.permute.xlu0 %1080
        %1082 = vrot.lane.b32.xlu0 %v997, 125
        %v1083 = vpop.permute.xlu0 %1082
        %v1084 = vsel %vm582, %v1081, 0
        %v1086 = vsel %vm582, %v1083, 0
        %v1089 = vsel %vm589, %v1079, 0
        %1091 = vmatpush.msra.mxu0 0.0
        %1092 = vmatpush.msra.mxu0 0.0
        %1093 = vmatpush.msra.mxu0 0.0
        %1094 = vmatpush.msra.mxu0 0.0
        %1095 = vmatpush.msra.mxu0 0.0
        %1096 = vmatpush.msra.mxu0 0.0
        %1097 = vmatpush.msra.mxu0 0.0
        %1098 = vmatpush.msra.mxu0 0.0
        %1099 = vmatpush.msra.mxu0 0.0
        %1100 = vmatpush.msra.mxu0 0.0
        %1101 = vmatpush.msra.mxu0 %v1089
        %1102 = vmatpush.msra.mxu0 %v1078
        %1103 = vmatpush.msra.mxu0 %v1077
        %1104 = vmatpush.msra.mxu0 %v1076
        %1105 = vmatpush.msra.mxu0 %v1075
        %1106 = vmatpush.msra.mxu0 %v1074
        %1107 = vmatmul.f32.gmra.mxu0 %v1084
        %v1108 = vpop.f32.mrf.mxu0
        %v1109 = vadd.f32 0.0, %v1108
        %1110 = vmatmul.f32.gmra.mxu0 %v1086
        %v1111 = vpop.f32.mrf.mxu0
        %v1112 = vadd.f32 0.0, %v1111
        %1113 = vdwg.mxu0
        %v1114 = vadd.f32 %v1071, %v1109
        %v1115 = vadd.f32 %v1072, %v1112
        %s1116 = scalar_lea.vmem [#allocation5], 624
        %v1117 = vld [vmem:[%s1116] sm:$0xff]
        %v1118 = vld [vmem:[%s1116 + $0x8] sm:$0xff]
        %v1119 = vld [vmem:[%s1116 + $0x10] sm:$0xff]
        %v1120 = vld [vmem:[%s1116 + $0x18] sm:$0xff]
        %v1121 = vld [vmem:[%s1116 + $0x20] sm:$0xff]
        %v1122 = vld [vmem:[%s1116 + $0x28] sm:$0x3]
        %1123 = vrot.lane.b32.xlu0 %v1040, 125
        %v1124 = vpop.permute.xlu0 %1123
        %1125 = vrot.lane.b32.xlu0 %v1039, 125
        %v1126 = vpop.permute.xlu0 %1125
        %v1127 = vsel %vm582, %v1124, 0
        %v1129 = vsel %vm582, %v1126, 0
        %v1132 = vsel %vm589, %v1122, 0
        %1134 = vmatpush.msra.mxu0 0.0
        %1135 = vmatpush.msra.mxu0 0.0
        %1136 = vmatpush.msra.mxu0 0.0
        %1137 = vmatpush.msra.mxu0 0.0
        %1138 = vmatpush.msra.mxu0 0.0
        %1139 = vmatpush.msra.mxu0 0.0
        %1140 = vmatpush.msra.mxu0 0.0
        %1141 = vmatpush.msra.mxu0 0.0
        %1142 = vmatpush.msra.mxu0 0.0
        %1143 = vmatpush.msra.mxu0 0.0
        %1144 = vmatpush.msra.mxu0 %v1132
        %1145 = vmatpush.msra.mxu0 %v1121
        %1146 = vmatpush.msra.mxu0 %v1120
        %1147 = vmatpush.msra.mxu0 %v1119
        %1148 = vmatpush.msra.mxu0 %v1118
        %1149 = vmatpush.msra.mxu0 %v1117
        %1150 = vmatmul.f32.gmra.mxu0 %v1127
        %v1151 = vpop.f32.mrf.mxu0
        %v1152 = vadd.f32 0.0, %v1151
        %1153 = vmatmul.f32.gmra.mxu0 %v1129
        %v1154 = vpop.f32.mrf.mxu0
        %v1155 = vadd.f32 0.0, %v1154
        %1156 = vdwg.mxu0
        %v1157 = vadd.f32 %v1114, %v1152
        %v1158 = vadd.f32 %v1115, %v1155
        %s1159 = scalar_lea.vmem [#allocation5], 672
        %v1160 = vld [vmem:[%s1159] sm:$0xff]
        %v1161 = vld [vmem:[%s1159 + $0x8] sm:$0xff]
        %v1162 = vld [vmem:[%s1159 + $0x10] sm:$0xff]
        %v1163 = vld [vmem:[%s1159 + $0x18] sm:$0xff]
        %v1164 = vld [vmem:[%s1159 + $0x20] sm:$0xff]
        %v1165 = vld [vmem:[%s1159 + $0x28] sm:$0x3]
        %1166 = vrot.lane.b32.xlu0 %v998, 122
        %v1167 = vpop.permute.xlu0 %1166
        %1168 = vrot.lane.b32.xlu0 %v997, 122
        %v1169 = vpop.permute.xlu0 %1168
        %v1170 = vsel %vm582, %v1167, 0
        %v1172 = vsel %vm582, %v1169, 0
        %v1175 = vsel %vm589, %v1165, 0
        %1177 = vmatpush.msra.mxu0 0.0
        %1178 = vmatpush.msra.mxu0 0.0
        %1179 = vmatpush.msra.mxu0 0.0
        %1180 = vmatpush.msra.mxu0 0.0
        %1181 = vmatpush.msra.mxu0 0.0
        %1182 = vmatpush.msra.mxu0 0.0
        %1183 = vmatpush.msra.mxu0 0.0
        %1184 = vmatpush.msra.mxu0 0.0
        %1185 = vmatpush.msra.mxu0 0.0
        %1186 = vmatpush.msra.mxu0 0.0
        %1187 = vmatpush.msra.mxu0 %v1175
        %1188 = vmatpush.msra.mxu0 %v1164
        %1189 = vmatpush.msra.mxu0 %v1163
        %1190 = vmatpush.msra.mxu0 %v1162
        %1191 = vmatpush.msra.mxu0 %v1161
        %1192 = vmatpush.msra.mxu0 %v1160
        %1193 = vmatmul.f32.gmra.mxu0 %v1170
        %v1194 = vpop.f32.mrf.mxu0
        %v1195 = vadd.f32 0.0, %v1194
        %1196 = vmatmul.f32.gmra.mxu0 %v1172
        %v1197 = vpop.f32.mrf.mxu0
        %v1198 = vadd.f32 0.0, %v1197
        %1199 = vdwg.mxu0
        %v1200 = vadd.f32 %v1157, %v1195
        %v1201 = vadd.f32 %v1158, %v1198
        %s1202 = scalar_lea.vmem [#allocation5], 720
        %v1203 = vld [vmem:[%s1202] sm:$0xff]
        %v1204 = vld [vmem:[%s1202 + $0x8] sm:$0xff]
        %v1205 = vld [vmem:[%s1202 + $0x10] sm:$0xff]
        %v1206 = vld [vmem:[%s1202 + $0x18] sm:$0xff]
        %v1207 = vld [vmem:[%s1202 + $0x20] sm:$0xff]
        %v1208 = vld [vmem:[%s1202 + $0x28] sm:$0x3]
        %v1209 = vrot.slane %v565, 1
        %v1210 = vrot.slane %v566, 1
        %v1211 = vsel %vm995, %v1209, %v1210
        %v1212 = vsel %vm582, %v1211, 0
        %v1214 = vsel %vm582, %v1210, 0
        %v1217 = vsel %vm589, %v1208, 0
        %1219 = vmatpush.msra.mxu0 0.0
        %1220 = vmatpush.msra.mxu0 0.0
        %1221 = vmatpush.msra.mxu0 0.0
        %1222 = vmatpush.msra.mxu0 0.0
        %1223 = vmatpush.msra.mxu0 0.0
        %1224 = vmatpush.msra.mxu0 0.0
        %1225 = vmatpush.msra.mxu0 0.0
        %1226 = vmatpush.msra.mxu0 0.0
        %1227 = vmatpush.msra.mxu0 0.0
        %1228 = vmatpush.msra.mxu0 0.0
        %1229 = vmatpush.msra.mxu0 %v1217
        %1230 = vmatpush.msra.mxu0 %v1207
        %1231 = vmatpush.msra.mxu0 %v1206
        %1232 = vmatpush.msra.mxu0 %v1205
        %1233 = vmatpush.msra.mxu0 %v1204
        %1234 = vmatpush.msra.mxu0 %v1203
        %1235 = vmatmul.f32.gmra.mxu0 %v1212
        %v1236 = vpop.f32.mrf.mxu0
        %v1237 = vadd.f32 0.0, %v1236
        %1238 = vmatmul.f32.gmra.mxu0 %v1214
        %v1239 = vpop.f32.mrf.mxu0
        %v1240 = vadd.f32 0.0, %v1239
        %1241 = vdwg.mxu0
        %v1242 = vadd.f32 %v1200, %v1237
        %v1243 = vadd.f32 %v1201, %v1240
        %s1244 = scalar_lea.vmem [#allocation5], 768
        %v1245 = vld [vmem:[%s1244] sm:$0xff]
        %v1246 = vld [vmem:[%s1244 + $0x8] sm:$0xff]
        %v1247 = vld [vmem:[%s1244 + $0x10] sm:$0xff]
        %v1248 = vld [vmem:[%s1244 + $0x18] sm:$0xff]
        %v1249 = vld [vmem:[%s1244 + $0x20] sm:$0xff]
        %v1250 = vld [vmem:[%s1244 + $0x28] sm:$0x3]
        %v1251 = vrot.slane %v567, 1
        %v1252 = vrot.slane %v568, 1
        %v1253 = vsel %vm995, %v1251, %v1252
        %v1254 = vsel %vm582, %v1253, 0
        %v1256 = vsel %vm582, %v1252, 0
        %v1259 = vsel %vm589, %v1250, 0
        %1261 = vmatpush.msra.mxu0 0.0
        %1262 = vmatpush.msra.mxu0 0.0
        %1263 = vmatpush.msra.mxu0 0.0
        %1264 = vmatpush.msra.mxu0 0.0
        %1265 = vmatpush.msra.mxu0 0.0
        %1266 = vmatpush.msra.mxu0 0.0
        %1267 = vmatpush.msra.mxu0 0.0
        %1268 = vmatpush.msra.mxu0 0.0
        %1269 = vmatpush.msra.mxu0 0.0
        %1270 = vmatpush.msra.mxu0 0.0
        %1271 = vmatpush.msra.mxu0 %v1259
        %1272 = vmatpush.msra.mxu0 %v1249
        %1273 = vmatpush.msra.mxu0 %v1248
        %1274 = vmatpush.msra.mxu0 %v1247
        %1275 = vmatpush.msra.mxu0 %v1246
        %1276 = vmatpush.msra.mxu0 %v1245
        %1277 = vmatmul.f32.gmra.mxu0 %v1254
        %v1278 = vpop.f32.mrf.mxu0
        %v1279 = vadd.f32 0.0, %v1278
        %1280 = vmatmul.f32.gmra.mxu0 %v1256
        %v1281 = vpop.f32.mrf.mxu0
        %v1282 = vadd.f32 0.0, %v1281
        %1283 = vdwg.mxu0
        %v1284 = vadd.f32 %v1242, %v1279
        %v1285 = vadd.f32 %v1243, %v1282
        %s1286 = scalar_lea.vmem [#allocation5], 816
        %v1287 = vld [vmem:[%s1286] sm:$0xff]
        %v1288 = vld [vmem:[%s1286 + $0x8] sm:$0xff]
        %v1289 = vld [vmem:[%s1286 + $0x10] sm:$0xff]
        %v1290 = vld [vmem:[%s1286 + $0x18] sm:$0xff]
        %v1291 = vld [vmem:[%s1286 + $0x20] sm:$0xff]
        %v1292 = vld [vmem:[%s1286 + $0x28] sm:$0x3]
        %1293 = vrot.lane.b32.xlu0 %v1211, 125
        %v1294 = vpop.permute.xlu0 %1293
        %1295 = vrot.lane.b32.xlu0 %v1210, 125
        %v1296 = vpop.permute.xlu0 %1295
        %v1297 = vsel %vm582, %v1294, 0
        %v1299 = vsel %vm582, %v1296, 0
        %v1302 = vsel %vm589, %v1292, 0
        %1304 = vmatpush.msra.mxu0 0.0
        %1305 = vmatpush.msra.mxu0 0.0
        %1306 = vmatpush.msra.mxu0 0.0
        %1307 = vmatpush.msra.mxu0 0.0
        %1308 = vmatpush.msra.mxu0 0.0
        %1309 = vmatpush.msra.mxu0 0.0
        %1310 = vmatpush.msra.mxu0 0.0
        %1311 = vmatpush.msra.mxu0 0.0
        %1312 = vmatpush.msra.mxu0 0.0
        %1313 = vmatpush.msra.mxu0 0.0
        %1314 = vmatpush.msra.mxu0 %v1302
        %1315 = vmatpush.msra.mxu0 %v1291
        %1316 = vmatpush.msra.mxu0 %v1290
        %1317 = vmatpush.msra.mxu0 %v1289
        %1318 = vmatpush.msra.mxu0 %v1288
        %1319 = vmatpush.msra.mxu0 %v1287
        %1320 = vmatmul.f32.gmra.mxu0 %v1297
        %v1321 = vpop.f32.mrf.mxu0
        %v1322 = vadd.f32 0.0, %v1321
        %1323 = vmatmul.f32.gmra.mxu0 %v1299
        %v1324 = vpop.f32.mrf.mxu0
        %v1325 = vadd.f32 0.0, %v1324
        %1326 = vdwg.mxu0
        %v1327 = vadd.f32 %v1284, %v1322
        %v1328 = vadd.f32 %v1285, %v1325
        %s1329 = scalar_lea.vmem [#allocation5], 864
        %v1330 = vld [vmem:[%s1329] sm:$0xff]
        %v1331 = vld [vmem:[%s1329 + $0x8] sm:$0xff]
        %v1332 = vld [vmem:[%s1329 + $0x10] sm:$0xff]
        %v1333 = vld [vmem:[%s1329 + $0x18] sm:$0xff]
        %v1334 = vld [vmem:[%s1329 + $0x20] sm:$0xff]
        %v1335 = vld [vmem:[%s1329 + $0x28] sm:$0x3]
        %1336 = vrot.lane.b32.xlu0 %v1253, 125
        %v1337 = vpop.permute.xlu0 %1336
        %1338 = vrot.lane.b32.xlu0 %v1252, 125
        %v1339 = vpop.permute.xlu0 %1338
        %v1340 = vsel %vm582, %v1337, 0
        %v1342 = vsel %vm582, %v1339, 0
        %v1345 = vsel %vm589, %v1335, 0
        %1347 = vmatpush.msra.mxu0 0.0
        %1348 = vmatpush.msra.mxu0 0.0
        %1349 = vmatpush.msra.mxu0 0.0
        %1350 = vmatpush.msra.mxu0 0.0
        %1351 = vmatpush.msra.mxu0 0.0
        %1352 = vmatpush.msra.mxu0 0.0
        %1353 = vmatpush.msra.mxu0 0.0
        %1354 = vmatpush.msra.mxu0 0.0
        %1355 = vmatpush.msra.mxu0 0.0
        %1356 = vmatpush.msra.mxu0 0.0
        %1357 = vmatpush.msra.mxu0 %v1345
        %1358 = vmatpush.msra.mxu0 %v1334
        %1359 = vmatpush.msra.mxu0 %v1333
        %1360 = vmatpush.msra.mxu0 %v1332
        %1361 = vmatpush.msra.mxu0 %v1331
        %1362 = vmatpush.msra.mxu0 %v1330
        %1363 = vmatmul.f32.gmra.mxu0 %v1340
        %v1364 = vpop.f32.mrf.mxu0
        %v1365 = vadd.f32 0.0, %v1364
        %1366 = vmatmul.f32.gmra.mxu0 %v1342
        %v1367 = vpop.f32.mrf.mxu0
        %v1368 = vadd.f32 0.0, %v1367
        %1369 = vdwg.mxu0
        %v1370 = vadd.f32 %v1327, %v1365
        %v1371 = vadd.f32 %v1328, %v1368
        %s1372 = scalar_lea.vmem [#allocation5], 912
        %v1373 = vld [vmem:[%s1372] sm:$0xff]
        %v1374 = vld [vmem:[%s1372 + $0x8] sm:$0xff]
        %v1375 = vld [vmem:[%s1372 + $0x10] sm:$0xff]
        %v1376 = vld [vmem:[%s1372 + $0x18] sm:$0xff]
        %v1377 = vld [vmem:[%s1372 + $0x20] sm:$0xff]
        %v1378 = vld [vmem:[%s1372 + $0x28] sm:$0x3]
        %1379 = vrot.lane.b32.xlu0 %v1211, 122
        %v1380 = vpop.permute.xlu0 %1379
        %1381 = vrot.lane.b32.xlu0 %v1210, 122
        %v1382 = vpop.permute.xlu0 %1381
        %v1383 = vsel %vm582, %v1380, 0
        %v1385 = vsel %vm582, %v1382, 0
        %v1388 = vsel %vm589, %v1378, 0
        %1390 = vmatpush.msra.mxu0 0.0
        %1391 = vmatpush.msra.mxu0 0.0
        %1392 = vmatpush.msra.mxu0 0.0
        %1393 = vmatpush.msra.mxu0 0.0
        %1394 = vmatpush.msra.mxu0 0.0
        %1395 = vmatpush.msra.mxu0 0.0
        %1396 = vmatpush.msra.mxu0 0.0
        %1397 = vmatpush.msra.mxu0 0.0
        %1398 = vmatpush.msra.mxu0 0.0
        %1399 = vmatpush.msra.mxu0 0.0
        %1400 = vmatpush.msra.mxu0 %v1388
        %1401 = vmatpush.msra.mxu0 %v1377
        %1402 = vmatpush.msra.mxu0 %v1376
        %1403 = vmatpush.msra.mxu0 %v1375
        %1404 = vmatpush.msra.mxu0 %v1374
        %1405 = vmatpush.msra.mxu0 %v1373
        %1406 = vmatmul.f32.gmra.mxu0 %v1383
        %v1407 = vpop.f32.mrf.mxu0
        %v1408 = vadd.f32 0.0, %v1407
        %1409 = vmatmul.f32.gmra.mxu0 %v1385
        %v1410 = vpop.f32.mrf.mxu0
        %v1411 = vadd.f32 0.0, %v1410
        %1412 = vdwg.mxu0
        %v1413 = vadd.f32 %v1370, %v1408
        %v1414 = vadd.f32 %v1371, %v1411
        %s1415 = scalar_lea.vmem [#allocation5], 960
        %v1416 = vld [vmem:[%s1415] sm:$0xff]
        %v1417 = vld [vmem:[%s1415 + $0x8] sm:$0xff]
        %v1418 = vld [vmem:[%s1415 + $0x10] sm:$0xff]
        %v1419 = vld [vmem:[%s1415 + $0x18] sm:$0xff]
        %v1420 = vld [vmem:[%s1415 + $0x20] sm:$0xff]
        %v1421 = vld [vmem:[%s1415 + $0x28] sm:$0x3]
        %vm1422 = vcmask 1045504
        %v1423 = vrot.slane %v561, 2
        %v1424 = vrot.slane %v562, 2
        %v1425 = vsel %vm1422, %v1423, %v1424
        %v1426 = vsel %vm582, %v1425, 0
        %v1428 = vsel %vm582, %v1424, 0
        %v1431 = vsel %vm589, %v1421, 0
        %1433 = vmatpush.msra.mxu0 0.0
        %1434 = vmatpush.msra.mxu0 0.0
        %1435 = vmatpush.msra.mxu0 0.0
        %1436 = vmatpush.msra.mxu0 0.0
        %1437 = vmatpush.msra.mxu0 0.0
        %1438 = vmatpush.msra.mxu0 0.0
        %1439 = vmatpush.msra.mxu0 0.0
        %1440 = vmatpush.msra.mxu0 0.0
        %1441 = vmatpush.msra.mxu0 0.0
        %1442 = vmatpush.msra.mxu0 0.0
        %1443 = vmatpush.msra.mxu0 %v1431
        %1444 = vmatpush.msra.mxu0 %v1420
        %1445 = vmatpush.msra.mxu0 %v1419
        %1446 = vmatpush.msra.mxu0 %v1418
        %1447 = vmatpush.msra.mxu0 %v1417
        %1448 = vmatpush.msra.mxu0 %v1416
        %1449 = vmatmul.f32.gmra.mxu0 %v1426
        %v1450 = vpop.f32.mrf.mxu0
        %v1451 = vadd.f32 0.0, %v1450
        %1452 = vmatmul.f32.gmra.mxu0 %v1428
        %v1453 = vpop.f32.mrf.mxu0
        %v1454 = vadd.f32 0.0, %v1453
        %1455 = vdwg.mxu0
        %v1456 = vadd.f32 %v1413, %v1451
        %v1457 = vadd.f32 %v1414, %v1454
        %s1458 = scalar_lea.vmem [#allocation5], 1008
        %v1459 = vld [vmem:[%s1458] sm:$0xff]
        %v1460 = vld [vmem:[%s1458 + $0x8] sm:$0xff]
        %v1461 = vld [vmem:[%s1458 + $0x10] sm:$0xff]
        %v1462 = vld [vmem:[%s1458 + $0x18] sm:$0xff]
        %v1463 = vld [vmem:[%s1458 + $0x20] sm:$0xff]
        %v1464 = vld [vmem:[%s1458 + $0x28] sm:$0x3]
        %v1465 = vrot.slane %v563, 2
        %v1466 = vrot.slane %v564, 2
        %v1467 = vsel %vm1422, %v1465, %v1466
        %v1468 = vsel %vm582, %v1467, 0
        %v1470 = vsel %vm582, %v1466, 0
        %v1473 = vsel %vm589, %v1464, 0
        %1475 = vmatpush.msra.mxu0 0.0
        %1476 = vmatpush.msra.mxu0 0.0
        %1477 = vmatpush.msra.mxu0 0.0
        %1478 = vmatpush.msra.mxu0 0.0
        %1479 = vmatpush.msra.mxu0 0.0
        %1480 = vmatpush.msra.mxu0 0.0
        %1481 = vmatpush.msra.mxu0 0.0
        %1482 = vmatpush.msra.mxu0 0.0
        %1483 = vmatpush.msra.mxu0 0.0
        %1484 = vmatpush.msra.mxu0 0.0
        %1485 = vmatpush.msra.mxu0 %v1473
        %1486 = vmatpush.msra.mxu0 %v1463
        %1487 = vmatpush.msra.mxu0 %v1462
        %1488 = vmatpush.msra.mxu0 %v1461
        %1489 = vmatpush.msra.mxu0 %v1460
        %1490 = vmatpush.msra.mxu0 %v1459
        %1491 = vmatmul.f32.gmra.mxu0 %v1468
        %v1492 = vpop.f32.mrf.mxu0
        %v1493 = vadd.f32 0.0, %v1492
        %1494 = vmatmul.f32.gmra.mxu0 %v1470
        %v1495 = vpop.f32.mrf.mxu0
        %v1496 = vadd.f32 0.0, %v1495
        %1497 = vdwg.mxu0
        %v1498 = vadd.f32 %v1456, %v1493
        %v1499 = vadd.f32 %v1457, %v1496
        %s1500 = scalar_lea.vmem [#allocation5], 1056
        %v1501 = vld [vmem:[%s1500] sm:$0xff]
        %v1502 = vld [vmem:[%s1500 + $0x8] sm:$0xff]
        %v1503 = vld [vmem:[%s1500 + $0x10] sm:$0xff]
        %v1504 = vld [vmem:[%s1500 + $0x18] sm:$0xff]
        %v1505 = vld [vmem:[%s1500 + $0x20] sm:$0xff]
        %v1506 = vld [vmem:[%s1500 + $0x28] sm:$0x3]
        %1507 = vrot.lane.b32.xlu0 %v1425, 125
        %v1508 = vpop.permute.xlu0 %1507
        %1509 = vrot.lane.b32.xlu0 %v1424, 125
        %v1510 = vpop.permute.xlu0 %1509
        %v1511 = vsel %vm582, %v1508, 0
        %v1513 = vsel %vm582, %v1510, 0
        %v1516 = vsel %vm589, %v1506, 0
        %1518 = vmatpush.msra.mxu0 0.0
        %1519 = vmatpush.msra.mxu0 0.0
        %1520 = vmatpush.msra.mxu0 0.0
        %1521 = vmatpush.msra.mxu0 0.0
        %1522 = vmatpush.msra.mxu0 0.0
        %1523 = vmatpush.msra.mxu0 0.0
        %1524 = vmatpush.msra.mxu0 0.0
        %1525 = vmatpush.msra.mxu0 0.0
        %1526 = vmatpush.msra.mxu0 0.0
        %1527 = vmatpush.msra.mxu0 0.0
        %1528 = vmatpush.msra.mxu0 %v1516
        %1529 = vmatpush.msra.mxu0 %v1505
        %1530 = vmatpush.msra.mxu0 %v1504
        %1531 = vmatpush.msra.mxu0 %v1503
        %1532 = vmatpush.msra.mxu0 %v1502
        %1533 = vmatpush.msra.mxu0 %v1501
        %1534 = vmatmul.f32.gmra.mxu0 %v1511
        %v1535 = vpop.f32.mrf.mxu0
        %v1536 = vadd.f32 0.0, %v1535
        %1537 = vmatmul.f32.gmra.mxu0 %v1513
        %v1538 = vpop.f32.mrf.mxu0
        %v1539 = vadd.f32 0.0, %v1538
        %1540 = vdwg.mxu0
        %v1541 = vadd.f32 %v1498, %v1536
        %v1542 = vadd.f32 %v1499, %v1539
        %s1543 = scalar_lea.vmem [#allocation5], 1104
        %v1544 = vld [vmem:[%s1543] sm:$0xff]
        %v1545 = vld [vmem:[%s1543 + $0x8] sm:$0xff]
        %v1546 = vld [vmem:[%s1543 + $0x10] sm:$0xff]
        %v1547 = vld [vmem:[%s1543 + $0x18] sm:$0xff]
        %v1548 = vld [vmem:[%s1543 + $0x20] sm:$0xff]
        %v1549 = vld [vmem:[%s1543 + $0x28] sm:$0x3]
        %1550 = vrot.lane.b32.xlu0 %v1467, 125
        %v1551 = vpop.permute.xlu0 %1550
        %1552 = vrot.lane.b32.xlu0 %v1466, 125
        %v1553 = vpop.permute.xlu0 %1552
        %v1554 = vsel %vm582, %v1551, 0
        %v1556 = vsel %vm582, %v1553, 0
        %v1559 = vsel %vm589, %v1549, 0
        %1561 = vmatpush.msra.mxu0 0.0
        %1562 = vmatpush.msra.mxu0 0.0
        %1563 = vmatpush.msra.mxu0 0.0
        %1564 = vmatpush.msra.mxu0 0.0
        %1565 = vmatpush.msra.mxu0 0.0
        %1566 = vmatpush.msra.mxu0 0.0
        %1567 = vmatpush.msra.mxu0 0.0
        %1568 = vmatpush.msra.mxu0 0.0
        %1569 = vmatpush.msra.mxu0 0.0
        %1570 = vmatpush.msra.mxu0 0.0
        %1571 = vmatpush.msra.mxu0 %v1559
        %1572 = vmatpush.msra.mxu0 %v1548
        %1573 = vmatpush.msra.mxu0 %v1547
        %1574 = vmatpush.msra.mxu0 %v1546
        %1575 = vmatpush.msra.mxu0 %v1545
        %1576 = vmatpush.msra.mxu0 %v1544
        %1577 = vmatmul.f32.gmra.mxu0 %v1554
        %v1578 = vpop.f32.mrf.mxu0
        %v1579 = vadd.f32 0.0, %v1578
        %1580 = vmatmul.f32.gmra.mxu0 %v1556
        %v1581 = vpop.f32.mrf.mxu0
        %v1582 = vadd.f32 0.0, %v1581
        %1583 = vdwg.mxu0
        %v1584 = vadd.f32 %v1541, %v1579
        %v1585 = vadd.f32 %v1542, %v1582
        %s1586 = scalar_lea.vmem [#allocation5], 1152
        %v1587 = vld [vmem:[%s1586] sm:$0xff]
        %v1588 = vld [vmem:[%s1586 + $0x8] sm:$0xff]
        %v1589 = vld [vmem:[%s1586 + $0x10] sm:$0xff]
        %v1590 = vld [vmem:[%s1586 + $0x18] sm:$0xff]
        %v1591 = vld [vmem:[%s1586 + $0x20] sm:$0xff]
        %v1592 = vld [vmem:[%s1586 + $0x28] sm:$0x3]
        %1593 = vrot.lane.b32.xlu0 %v1425, 122
        %v1594 = vpop.permute.xlu0 %1593
        %1595 = vrot.lane.b32.xlu0 %v1424, 122
        %v1596 = vpop.permute.xlu0 %1595
        %v1597 = vsel %vm582, %v1594, 0
        %v1599 = vsel %vm582, %v1596, 0
        %v1602 = vsel %vm589, %v1592, 0
        %1604 = vmatpush.msra.mxu0 0.0
        %1605 = vmatpush.msra.mxu0 0.0
        %1606 = vmatpush.msra.mxu0 0.0
        %1607 = vmatpush.msra.mxu0 0.0
        %1608 = vmatpush.msra.mxu0 0.0
        %1609 = vmatpush.msra.mxu0 0.0
        %1610 = vmatpush.msra.mxu0 0.0
        %1611 = vmatpush.msra.mxu0 0.0
        %1612 = vmatpush.msra.mxu0 0.0
        %1613 = vmatpush.msra.mxu0 0.0
        %1614 = vmatpush.msra.mxu0 %v1602
        %1615 = vmatpush.msra.mxu0 %v1591
        %1616 = vmatpush.msra.mxu0 %v1590
        %1617 = vmatpush.msra.mxu0 %v1589
        %1618 = vmatpush.msra.mxu0 %v1588
        %1619 = vmatpush.msra.mxu0 %v1587
        %1620 = vmatmul.f32.gmra.mxu0 %v1597
        %v1621 = vpop.f32.mrf.mxu0
        %v1622 = vadd.f32 0.0, %v1621
        %1623 = vmatmul.f32.gmra.mxu0 %v1599
        %v1624 = vpop.f32.mrf.mxu0
        %v1625 = vadd.f32 0.0, %v1624
        %1626 = vdwg.mxu0
        %v1627 = vadd.f32 %v1584, %v1622
        %v1628 = vadd.f32 %v1585, %v1625
        %v1629 = vld [vmem:[#allocation7] sm:$0x1]
        %v1631 = vperm.slane %v1629, 0
        %v1633 = vadd.f32 %v1627, %v1631
        %v1634 = vadd.f32 %v1628, %v1631
        %v1635 = vmax.f32 %v1633, 0.0
        %v1636 = vmax.f32 %v1634, 0.0
        %1637 = vmatpush.msra.mxu0 0.0
        %1638 = vmatpush.msra.mxu0 0.0
        %1639 = vmatpush.msra.mxu0 0.0
        %1640 = vmatpush.msra.mxu0 0.0
        %1641 = vmatpush.msra.mxu0 0.0
        %1642 = vmatpush.msra.mxu0 0.0
        %1643 = vmatpush.msra.mxu0 0.0
        %1644 = vmatpush.msra.mxu0 0.0
        %1645 = vmatpush.msra.mxu0 0.0
        %1646 = vmatpush.msra.mxu0 0.0
        %1647 = vmatpush.msra.mxu0 %v591
        %1648 = vmatpush.msra.mxu0 %v580
        %1649 = vmatpush.msra.mxu0 %v579
        %1650 = vmatpush.msra.mxu0 %v578
        %1651 = vmatpush.msra.mxu0 %v577
        %1652 = vmatpush.msra.mxu0 %v576
        %1653 = vmatmul.f32.gmra.mxu0 %v659
        %v1654 = vpop.f32.mrf.mxu0
        %v1655 = vadd.f32 0.0, %v1654
        %1656 = vmatmul.f32.gmra.mxu0 %v661
        %v1657 = vpop.f32.mrf.mxu0
        %v1658 = vadd.f32 0.0, %v1657
        %1659 = vdwg.mxu0
        %1660 = vmatpush.msra.mxu0 0.0
        %1661 = vmatpush.msra.mxu0 0.0
        %1662 = vmatpush.msra.mxu0 0.0
        %1663 = vmatpush.msra.mxu0 0.0
        %1664 = vmatpush.msra.mxu0 0.0
        %1665 = vmatpush.msra.mxu0 0.0
        %1666 = vmatpush.msra.mxu0 0.0
        %1667 = vmatpush.msra.mxu0 0.0
        %1668 = vmatpush.msra.mxu0 0.0
        %1669 = vmatpush.msra.mxu0 0.0
        %1670 = vmatpush.msra.mxu0 %v623
        %1671 = vmatpush.msra.mxu0 %v573
        %1672 = vmatpush.msra.mxu0 %v572
        %1673 = vmatpush.msra.mxu0 %v571
        %1674 = vmatpush.msra.mxu0 %v570
        %1675 = vmatpush.msra.mxu0 %v569
        %1676 = vmatmul.f32.gmra.mxu0 %v584
        %v1677 = vpop.f32.mrf.mxu0
        %v1678 = vadd.f32 %v1655, %v1677
        %1679 = vmatmul.f32.gmra.mxu0 %v587
        %v1680 = vpop.f32.mrf.mxu0
        %v1681 = vadd.f32 %v1658, %v1680
        %1682 = vdwg.mxu0
        %1683 = vmatpush.msra.mxu0 0.0
        %1684 = vmatpush.msra.mxu0 0.0
        %1685 = vmatpush.msra.mxu0 0.0
        %1686 = vmatpush.msra.mxu0 0.0
        %1687 = vmatpush.msra.mxu0 0.0
        %1688 = vmatpush.msra.mxu0 0.0
        %1689 = vmatpush.msra.mxu0 0.0
        %1690 = vmatpush.msra.mxu0 0.0
        %1691 = vmatpush.msra.mxu0 0.0
        %1692 = vmatpush.msra.mxu0 0.0
        %1693 = vmatpush.msra.mxu0 %v664
        %1694 = vmatpush.msra.mxu0 %v653
        %1695 = vmatpush.msra.mxu0 %v652
        %1696 = vmatpush.msra.mxu0 %v651
        %1697 = vmatpush.msra.mxu0 %v650
        %1698 = vmatpush.msra.mxu0 %v649
        %1699 = vmatmul.f32.gmra.mxu0 %v702
        %v1700 = vpop.f32.mrf.mxu0
        %v1701 = vadd.f32 0.0, %v1700
        %1702 = vmatmul.f32.gmra.mxu0 %v704
        %v1703 = vpop.f32.mrf.mxu0
        %v1704 = vadd.f32 0.0, %v1703
        %1705 = vdwg.mxu0
        %v1706 = vadd.f32 %v1678, %v1701
        %v1707 = vadd.f32 %v1681, %v1704
        %1708 = vmatpush.msra.mxu0 0.0
        %1709 = vmatpush.msra.mxu0 0.0
        %1710 = vmatpush.msra.mxu0 0.0
        %1711 = vmatpush.msra.mxu0 0.0
        %1712 = vmatpush.msra.mxu0 0.0
        %1713 = vmatpush.msra.mxu0 0.0
        %1714 = vmatpush.msra.mxu0 0.0
        %1715 = vmatpush.msra.mxu0 0.0
        %1716 = vmatpush.msra.mxu0 0.0
        %1717 = vmatpush.msra.mxu0 0.0
        %1718 = vmatpush.msra.mxu0 %v707
        %1719 = vmatpush.msra.mxu0 %v696
        %1720 = vmatpush.msra.mxu0 %v695
        %1721 = vmatpush.msra.mxu0 %v694
        %1722 = vmatpush.msra.mxu0 %v693
        %1723 = vmatpush.msra.mxu0 %v692
        %1724 = vmatmul.f32.gmra.mxu0 %v745
        %v1725 = vpop.f32.mrf.mxu0
        %v1726 = vadd.f32 0.0, %v1725
        %1727 = vmatmul.f32.gmra.mxu0 %v747
        %v1728 = vpop.f32.mrf.mxu0
        %v1729 = vadd.f32 0.0, %v1728
        %1730 = vdwg.mxu0
        %v1731 = vadd.f32 %v1706, %v1726
        %v1732 = vadd.f32 %v1707, %v1729
        %1733 = vrot.lane.b32.xlu0 %v563, 122
        %v1734 = vpop.permute.xlu0 %1733
        %1735 = vrot.lane.b32.xlu0 %v564, 122
        %v1736 = vpop.permute.xlu0 %1735
        %v1737 = vsel %vm582, %v1734, 0
        %v1739 = vsel %vm582, %v1736, 0
        %1741 = vmatpush.msra.mxu0 0.0
        %1742 = vmatpush.msra.mxu0 0.0
        %1743 = vmatpush.msra.mxu0 0.0
        %1744 = vmatpush.msra.mxu0 0.0
        %1745 = vmatpush.msra.mxu0 0.0
        %1746 = vmatpush.msra.mxu0 0.0
        %1747 = vmatpush.msra.mxu0 0.0
        %1748 = vmatpush.msra.mxu0 0.0
        %1749 = vmatpush.msra.mxu0 0.0
        %1750 = vmatpush.msra.mxu0 0.0
        %1751 = vmatpush.msra.mxu0 %v750
        %1752 = vmatpush.msra.mxu0 %v739
        %1753 = vmatpush.msra.mxu0 %v738
        %1754 = vmatpush.msra.mxu0 %v737
        %1755 = vmatpush.msra.mxu0 %v736
        %1756 = vmatpush.msra.mxu0 %v735
        %1757 = vmatmul.f32.gmra.mxu0 %v1737
        %v1758 = vpop.f32.mrf.mxu0
        %v1759 = vadd.f32 0.0, %v1758
        %1760 = vmatmul.f32.gmra.mxu0 %v1739
        %v1761 = vpop.f32.mrf.mxu0
        %v1762 = vadd.f32 0.0, %v1761
        %1763 = vdwg.mxu0
        %v1764 = vadd.f32 %v1731, %v1759
        %v1765 = vadd.f32 %v1732, %v1762
        %1766 = vmatpush.msra.mxu0 0.0
        %1767 = vmatpush.msra.mxu0 0.0
        %1768 = vmatpush.msra.mxu0 0.0
        %1769 = vmatpush.msra.mxu0 0.0
        %1770 = vmatpush.msra.mxu0 0.0
        %1771 = vmatpush.msra.mxu0 0.0
        %1772 = vmatpush.msra.mxu0 0.0
        %1773 = vmatpush.msra.mxu0 0.0
        %1774 = vmatpush.msra.mxu0 0.0
        %1775 = vmatpush.msra.mxu0 0.0
        %1776 = vmatpush.msra.mxu0 %v791
        %1777 = vmatpush.msra.mxu0 %v782
        %1778 = vmatpush.msra.mxu0 %v781
        %1779 = vmatpush.msra.mxu0 %v780
        %1780 = vmatpush.msra.mxu0 %v779
        %1781 = vmatpush.msra.mxu0 %v778
        %1782 = vmatmul.f32.gmra.mxu0 %v826
        %v1783 = vpop.f32.mrf.mxu0
        %v1784 = vadd.f32 0.0, %v1783
        %1785 = vmatmul.f32.gmra.mxu0 %v829
        %v1786 = vpop.f32.mrf.mxu0
        %v1787 = vadd.f32 0.0, %v1786
        %1788 = vdwg.mxu0
        %v1789 = vadd.f32 %v1764, %v1784
        %v1790 = vadd.f32 %v1765, %v1787
        %1791 = vmatpush.msra.mxu0 0.0
        %1792 = vmatpush.msra.mxu0 0.0
        %1793 = vmatpush.msra.mxu0 0.0
        %1794 = vmatpush.msra.mxu0 0.0
        %1795 = vmatpush.msra.mxu0 0.0
        %1796 = vmatpush.msra.mxu0 0.0
        %1797 = vmatpush.msra.mxu0 0.0
        %1798 = vmatpush.msra.mxu0 0.0
        %1799 = vmatpush.msra.mxu0 0.0
        %1800 = vmatpush.msra.mxu0 0.0
        %1801 = vmatpush.msra.mxu0 %v832
        %1802 = vmatpush.msra.mxu0 %v823
        %1803 = vmatpush.msra.mxu0 %v822
        %1804 = vmatpush.msra.mxu0 %v821
        %1805 = vmatpush.msra.mxu0 %v820
        %1806 = vmatpush.msra.mxu0 %v819
        %1807 = vmatmul.f32.gmra.mxu0 %v870
        %v1808 = vpop.f32.mrf.mxu0
        %v1809 = vadd.f32 0.0, %v1808
        %1810 = vmatmul.f32.gmra.mxu0 %v872
        %v1811 = vpop.f32.mrf.mxu0
        %v1812 = vadd.f32 0.0, %v1811
        %1813 = vdwg.mxu0
        %v1814 = vadd.f32 %v1789, %v1809
        %v1815 = vadd.f32 %v1790, %v1812
        %1816 = vmatpush.msra.mxu0 0.0
        %1817 = vmatpush.msra.mxu0 0.0
        %1818 = vmatpush.msra.mxu0 0.0
        %1819 = vmatpush.msra.mxu0 0.0
        %1820 = vmatpush.msra.mxu0 0.0
        %1821 = vmatpush.msra.mxu0 0.0
        %1822 = vmatpush.msra.mxu0 0.0
        %1823 = vmatpush.msra.mxu0 0.0
        %1824 = vmatpush.msra.mxu0 0.0
        %1825 = vmatpush.msra.mxu0 0.0
        %1826 = vmatpush.msra.mxu0 %v875
        %1827 = vmatpush.msra.mxu0 %v864
        %1828 = vmatpush.msra.mxu0 %v863
        %1829 = vmatpush.msra.mxu0 %v862
        %1830 = vmatpush.msra.mxu0 %v861
        %1831 = vmatpush.msra.mxu0 %v860
        %1832 = vmatmul.f32.gmra.mxu0 %v913
        %v1833 = vpop.f32.mrf.mxu0
        %v1834 = vadd.f32 0.0, %v1833
        %1835 = vmatmul.f32.gmra.mxu0 %v915
        %v1836 = vpop.f32.mrf.mxu0
        %v1837 = vadd.f32 0.0, %v1836
        %1838 = vdwg.mxu0
        %v1839 = vadd.f32 %v1814, %v1834
        %v1840 = vadd.f32 %v1815, %v1837
        %1841 = vmatpush.msra.mxu0 0.0
        %1842 = vmatpush.msra.mxu0 0.0
        %1843 = vmatpush.msra.mxu0 0.0
        %1844 = vmatpush.msra.mxu0 0.0
        %1845 = vmatpush.msra.mxu0 0.0
        %1846 = vmatpush.msra.mxu0 0.0
        %1847 = vmatpush.msra.mxu0 0.0
        %1848 = vmatpush.msra.mxu0 0.0
        %1849 = vmatpush.msra.mxu0 0.0
        %1850 = vmatpush.msra.mxu0 0.0
        %1851 = vmatpush.msra.mxu0 %v918
        %1852 = vmatpush.msra.mxu0 %v907
        %1853 = vmatpush.msra.mxu0 %v906
        %1854 = vmatpush.msra.mxu0 %v905
        %1855 = vmatpush.msra.mxu0 %v904
        %1856 = vmatpush.msra.mxu0 %v903
        %1857 = vmatmul.f32.gmra.mxu0 %v956
        %v1858 = vpop.f32.mrf.mxu0
        %v1859 = vadd.f32 0.0, %v1858
        %1860 = vmatmul.f32.gmra.mxu0 %v958
        %v1861 = vpop.f32.mrf.mxu0
        %v1862 = vadd.f32 0.0, %v1861
        %1863 = vdwg.mxu0
        %v1864 = vadd.f32 %v1839, %v1859
        %v1865 = vadd.f32 %v1840, %v1862
        %1866 = vrot.lane.b32.xlu0 %v567, 122
        %v1867 = vpop.permute.xlu0 %1866
        %1868 = vrot.lane.b32.xlu0 %v568, 122
        %v1869 = vpop.permute.xlu0 %1868
        %v1870 = vsel %vm582, %v1867, 0
        %v1872 = vsel %vm582, %v1869, 0
        %1874 = vmatpush.msra.mxu0 0.0
        %1875 = vmatpush.msra.mxu0 0.0
        %1876 = vmatpush.msra.mxu0 0.0
        %1877 = vmatpush.msra.mxu0 0.0
        %1878 = vmatpush.msra.mxu0 0.0
        %1879 = vmatpush.msra.mxu0 0.0
        %1880 = vmatpush.msra.mxu0 0.0
        %1881 = vmatpush.msra.mxu0 0.0
        %1882 = vmatpush.msra.mxu0 0.0
        %1883 = vmatpush.msra.mxu0 0.0
        %1884 = vmatpush.msra.mxu0 %v961
        %1885 = vmatpush.msra.mxu0 %v950
        %1886 = vmatpush.msra.mxu0 %v949
        %1887 = vmatpush.msra.mxu0 %v948
        %1888 = vmatpush.msra.mxu0 %v947
        %1889 = vmatpush.msra.mxu0 %v946
        %1890 = vmatmul.f32.gmra.mxu0 %v1870
        %v1891 = vpop.f32.mrf.mxu0
        %v1892 = vadd.f32 0.0, %v1891
        %1893 = vmatmul.f32.gmra.mxu0 %v1872
        %v1894 = vpop.f32.mrf.mxu0
        %v1895 = vadd.f32 0.0, %v1894
        %1896 = vdwg.mxu0
        %v1897 = vadd.f32 %v1864, %v1892
        %v1898 = vadd.f32 %v1865, %v1895
        %1899 = vmatpush.msra.mxu0 0.0
        %1900 = vmatpush.msra.mxu0 0.0
        %1901 = vmatpush.msra.mxu0 0.0
        %1902 = vmatpush.msra.mxu0 0.0
        %1903 = vmatpush.msra.mxu0 0.0
        %1904 = vmatpush.msra.mxu0 0.0
        %1905 = vmatpush.msra.mxu0 0.0
        %1906 = vmatpush.msra.mxu0 0.0
        %1907 = vmatpush.msra.mxu0 0.0
        %1908 = vmatpush.msra.mxu0 0.0
        %1909 = vmatpush.msra.mxu0 %v1004
        %1910 = vmatpush.msra.mxu0 %v993
        %1911 = vmatpush.msra.mxu0 %v992
        %1912 = vmatpush.msra.mxu0 %v991
        %1913 = vmatpush.msra.mxu0 %v990
        %1914 = vmatpush.msra.mxu0 %v989
        %1915 = vmatmul.f32.gmra.mxu0 %v1041
        %v1916 = vpop.f32.mrf.mxu0
        %v1917 = vadd.f32 0.0, %v1916
        %1918 = vmatmul.f32.gmra.mxu0 %v1043
        %v1919 = vpop.f32.mrf.mxu0
        %v1920 = vadd.f32 0.0, %v1919
        %1921 = vdwg.mxu0
        %v1922 = vadd.f32 %v1897, %v1917
        %v1923 = vadd.f32 %v1898, %v1920
        %1924 = vmatpush.msra.mxu0 0.0
        %1925 = vmatpush.msra.mxu0 0.0
        %1926 = vmatpush.msra.mxu0 0.0
        %1927 = vmatpush.msra.mxu0 0.0
        %1928 = vmatpush.msra.mxu0 0.0
        %1929 = vmatpush.msra.mxu0 0.0
        %1930 = vmatpush.msra.mxu0 0.0
        %1931 = vmatpush.msra.mxu0 0.0
        %1932 = vmatpush.msra.mxu0 0.0
        %1933 = vmatpush.msra.mxu0 0.0
        %1934 = vmatpush.msra.mxu0 %v1046
        %1935 = vmatpush.msra.mxu0 %v1036
        %1936 = vmatpush.msra.mxu0 %v1035
        %1937 = vmatpush.msra.mxu0 %v1034
        %1938 = vmatpush.msra.mxu0 %v1033
        %1939 = vmatpush.msra.mxu0 %v1032
        %1940 = vmatmul.f32.gmra.mxu0 %v1084
        %v1941 = vpop.f32.mrf.mxu0
        %v1942 = vadd.f32 0.0, %v1941
        %1943 = vmatmul.f32.gmra.mxu0 %v1086
        %v1944 = vpop.f32.mrf.mxu0
        %v1945 = vadd.f32 0.0, %v1944
        %1946 = vdwg.mxu0
        %v1947 = vadd.f32 %v1922, %v1942
        %v1948 = vadd.f32 %v1923, %v1945
        %1949 = vmatpush.msra.mxu0 0.0
        %1950 = vmatpush.msra.mxu0 0.0
        %1951 = vmatpush.msra.mxu0 0.0
        %1952 = vmatpush.msra.mxu0 0.0
        %1953 = vmatpush.msra.mxu0 0.0
        %1954 = vmatpush.msra.mxu0 0.0
        %1955 = vmatpush.msra.mxu0 0.0
        %1956 = vmatpush.msra.mxu0 0.0
        %1957 = vmatpush.msra.mxu0 0.0
        %1958 = vmatpush.msra.mxu0 0.0
        %1959 = vmatpush.msra.mxu0 %v1089
        %1960 = vmatpush.msra.mxu0 %v1078
        %1961 = vmatpush.msra.mxu0 %v1077
        %1962 = vmatpush.msra.mxu0 %v1076
        %1963 = vmatpush.msra.mxu0 %v1075
        %1964 = vmatpush.msra.mxu0 %v1074
        %1965 = vmatmul.f32.gmra.mxu0 %v1127
        %v1966 = vpop.f32.mrf.mxu0
        %v1967 = vadd.f32 0.0, %v1966
        %1968 = vmatmul.f32.gmra.mxu0 %v1129
        %v1969 = vpop.f32.mrf.mxu0
        %v1970 = vadd.f32 0.0, %v1969
        %1971 = vdwg.mxu0
        %v1972 = vadd.f32 %v1947, %v1967
        %v1973 = vadd.f32 %v1948, %v1970
        %1974 = vmatpush.msra.mxu0 0.0
        %1975 = vmatpush.msra.mxu0 0.0
        %1976 = vmatpush.msra.mxu0 0.0
        %1977 = vmatpush.msra.mxu0 0.0
        %1978 = vmatpush.msra.mxu0 0.0
        %1979 = vmatpush.msra.mxu0 0.0
        %1980 = vmatpush.msra.mxu0 0.0
        %1981 = vmatpush.msra.mxu0 0.0
        %1982 = vmatpush.msra.mxu0 0.0
        %1983 = vmatpush.msra.mxu0 0.0
        %1984 = vmatpush.msra.mxu0 %v1132
        %1985 = vmatpush.msra.mxu0 %v1121
        %1986 = vmatpush.msra.mxu0 %v1120
        %1987 = vmatpush.msra.mxu0 %v1119
        %1988 = vmatpush.msra.mxu0 %v1118
        %1989 = vmatpush.msra.mxu0 %v1117
        %1990 = vmatmul.f32.gmra.mxu0 %v1170
        %v1991 = vpop.f32.mrf.mxu0
        %v1992 = vadd.f32 0.0, %v1991
        %1993 = vmatmul.f32.gmra.mxu0 %v1172
        %v1994 = vpop.f32.mrf.mxu0
        %v1995 = vadd.f32 0.0, %v1994
        %1996 = vdwg.mxu0
        %v1997 = vadd.f32 %v1972, %v1992
        %v1998 = vadd.f32 %v1973, %v1995
        %1999 = vrot.lane.b32.xlu0 %v1040, 122
        %v2000 = vpop.permute.xlu0 %1999
        %2001 = vrot.lane.b32.xlu0 %v1039, 122
        %v2002 = vpop.permute.xlu0 %2001
        %v2003 = vsel %vm582, %v2000, 0
        %v2005 = vsel %vm582, %v2002, 0
        %2007 = vmatpush.msra.mxu0 0.0
        %2008 = vmatpush.msra.mxu0 0.0
        %2009 = vmatpush.msra.mxu0 0.0
        %2010 = vmatpush.msra.mxu0 0.0
        %2011 = vmatpush.msra.mxu0 0.0
        %2012 = vmatpush.msra.mxu0 0.0
        %2013 = vmatpush.msra.mxu0 0.0
        %2014 = vmatpush.msra.mxu0 0.0
        %2015 = vmatpush.msra.mxu0 0.0
        %2016 = vmatpush.msra.mxu0 0.0
        %2017 = vmatpush.msra.mxu0 %v1175
        %2018 = vmatpush.msra.mxu0 %v1164
        %2019 = vmatpush.msra.mxu0 %v1163
        %2020 = vmatpush.msra.mxu0 %v1162
        %2021 = vmatpush.msra.mxu0 %v1161
        %2022 = vmatpush.msra.mxu0 %v1160
        %2023 = vmatmul.f32.gmra.mxu0 %v2003
        %v2024 = vpop.f32.mrf.mxu0
        %v2025 = vadd.f32 0.0, %v2024
        %2026 = vmatmul.f32.gmra.mxu0 %v2005
        %v2027 = vpop.f32.mrf.mxu0
        %v2028 = vadd.f32 0.0, %v2027
        %2029 = vdwg.mxu0
        %v2030 = vadd.f32 %v1997, %v2025
        %v2031 = vadd.f32 %v1998, %v2028
        %2032 = vmatpush.msra.mxu0 0.0
        %2033 = vmatpush.msra.mxu0 0.0
        %2034 = vmatpush.msra.mxu0 0.0
        %2035 = vmatpush.msra.mxu0 0.0
        %2036 = vmatpush.msra.mxu0 0.0
        %2037 = vmatpush.msra.mxu0 0.0
        %2038 = vmatpush.msra.mxu0 0.0
        %2039 = vmatpush.msra.mxu0 0.0
        %2040 = vmatpush.msra.mxu0 0.0
        %2041 = vmatpush.msra.mxu0 0.0
        %2042 = vmatpush.msra.mxu0 %v1217
        %2043 = vmatpush.msra.mxu0 %v1207
        %2044 = vmatpush.msra.mxu0 %v1206
        %2045 = vmatpush.msra.mxu0 %v1205
        %2046 = vmatpush.msra.mxu0 %v1204
        %2047 = vmatpush.msra.mxu0 %v1203
        %2048 = vmatmul.f32.gmra.mxu0 %v1254
        %v2049 = vpop.f32.mrf.mxu0
        %v2050 = vadd.f32 0.0, %v2049
        %2051 = vmatmul.f32.gmra.mxu0 %v1256
        %v2052 = vpop.f32.mrf.mxu0
        %v2053 = vadd.f32 0.0, %v2052
        %2054 = vdwg.mxu0
        %v2055 = vadd.f32 %v2030, %v2050
        %v2056 = vadd.f32 %v2031, %v2053
        %2057 = vmatpush.msra.mxu0 0.0
        %2058 = vmatpush.msra.mxu0 0.0
        %2059 = vmatpush.msra.mxu0 0.0
        %2060 = vmatpush.msra.mxu0 0.0
        %2061 = vmatpush.msra.mxu0 0.0
        %2062 = vmatpush.msra.mxu0 0.0
        %2063 = vmatpush.msra.mxu0 0.0
        %2064 = vmatpush.msra.mxu0 0.0
        %2065 = vmatpush.msra.mxu0 0.0
        %2066 = vmatpush.msra.mxu0 0.0
        %2067 = vmatpush.msra.mxu0 %v1259
        %2068 = vmatpush.msra.mxu0 %v1249
        %2069 = vmatpush.msra.mxu0 %v1248
        %2070 = vmatpush.msra.mxu0 %v1247
        %2071 = vmatpush.msra.mxu0 %v1246
        %2072 = vmatpush.msra.mxu0 %v1245
        %2073 = vmatmul.f32.gmra.mxu0 %v1297
        %v2074 = vpop.f32.mrf.mxu0
        %v2075 = vadd.f32 0.0, %v2074
        %2076 = vmatmul.f32.gmra.mxu0 %v1299
        %v2077 = vpop.f32.mrf.mxu0
        %v2078 = vadd.f32 0.0, %v2077
        %2079 = vdwg.mxu0
        %v2080 = vadd.f32 %v2055, %v2075
        %v2081 = vadd.f32 %v2056, %v2078
        %2082 = vmatpush.msra.mxu0 0.0
        %2083 = vmatpush.msra.mxu0 0.0
        %2084 = vmatpush.msra.mxu0 0.0
        %2085 = vmatpush.msra.mxu0 0.0
        %2086 = vmatpush.msra.mxu0 0.0
        %2087 = vmatpush.msra.mxu0 0.0
        %2088 = vmatpush.msra.mxu0 0.0
        %2089 = vmatpush.msra.mxu0 0.0
        %2090 = vmatpush.msra.mxu0 0.0
        %2091 = vmatpush.msra.mxu0 0.0
        %2092 = vmatpush.msra.mxu0 %v1302
        %2093 = vmatpush.msra.mxu0 %v1291
        %2094 = vmatpush.msra.mxu0 %v1290
        %2095 = vmatpush.msra.mxu0 %v1289
        %2096 = vmatpush.msra.mxu0 %v1288
        %2097 = vmatpush.msra.mxu0 %v1287
        %2098 = vmatmul.f32.gmra.mxu0 %v1340
        %v2099 = vpop.f32.mrf.mxu0
        %v2100 = vadd.f32 0.0, %v2099
        %2101 = vmatmul.f32.gmra.mxu0 %v1342
        %v2102 = vpop.f32.mrf.mxu0
        %v2103 = vadd.f32 0.0, %v2102
        %2104 = vdwg.mxu0
        %v2105 = vadd.f32 %v2080, %v2100
        %v2106 = vadd.f32 %v2081, %v2103
        %2107 = vmatpush.msra.mxu0 0.0
        %2108 = vmatpush.msra.mxu0 0.0
        %2109 = vmatpush.msra.mxu0 0.0
        %2110 = vmatpush.msra.mxu0 0.0
        %2111 = vmatpush.msra.mxu0 0.0
        %2112 = vmatpush.msra.mxu0 0.0
        %2113 = vmatpush.msra.mxu0 0.0
        %2114 = vmatpush.msra.mxu0 0.0
        %2115 = vmatpush.msra.mxu0 0.0
        %2116 = vmatpush.msra.mxu0 0.0
        %2117 = vmatpush.msra.mxu0 %v1345
        %2118 = vmatpush.msra.mxu0 %v1334
        %2119 = vmatpush.msra.mxu0 %v1333
        %2120 = vmatpush.msra.mxu0 %v1332
        %2121 = vmatpush.msra.mxu0 %v1331
        %2122 = vmatpush.msra.mxu0 %v1330
        %2123 = vmatmul.f32.gmra.mxu0 %v1383
        %v2124 = vpop.f32.mrf.mxu0
        %v2125 = vadd.f32 0.0, %v2124
        %2126 = vmatmul.f32.gmra.mxu0 %v1385
        %v2127 = vpop.f32.mrf.mxu0
        %v2128 = vadd.f32 0.0, %v2127
        %2129 = vdwg.mxu0
        %v2130 = vadd.f32 %v2105, %v2125
        %v2131 = vadd.f32 %v2106, %v2128
        %2132 = vrot.lane.b32.xlu0 %v1253, 122
        %v2133 = vpop.permute.xlu0 %2132
        %2134 = vrot.lane.b32.xlu0 %v1252, 122
        %v2135 = vpop.permute.xlu0 %2134
        %v2136 = vsel %vm582, %v2133, 0
        %v2138 = vsel %vm582, %v2135, 0
        %2140 = vmatpush.msra.mxu0 0.0
        %2141 = vmatpush.msra.mxu0 0.0
        %2142 = vmatpush.msra.mxu0 0.0
        %2143 = vmatpush.msra.mxu0 0.0
        %2144 = vmatpush.msra.mxu0 0.0
        %2145 = vmatpush.msra.mxu0 0.0
        %2146 = vmatpush.msra.mxu0 0.0
        %2147 = vmatpush.msra.mxu0 0.0
        %2148 = vmatpush.msra.mxu0 0.0
        %2149 = vmatpush.msra.mxu0 0.0
        %2150 = vmatpush.msra.mxu0 %v1388
        %2151 = vmatpush.msra.mxu0 %v1377
        %2152 = vmatpush.msra.mxu0 %v1376
        %2153 = vmatpush.msra.mxu0 %v1375
        %2154 = vmatpush.msra.mxu0 %v1374
        %2155 = vmatpush.msra.mxu0 %v1373
        %2156 = vmatmul.f32.gmra.mxu0 %v2136
        %v2157 = vpop.f32.mrf.mxu0
        %v2158 = vadd.f32 0.0, %v2157
        %2159 = vmatmul.f32.gmra.mxu0 %v2138
        %v2160 = vpop.f32.mrf.mxu0
        %v2161 = vadd.f32 0.0, %v2160
        %2162 = vdwg.mxu0
        %v2163 = vadd.f32 %v2130, %v2158
        %v2164 = vadd.f32 %v2131, %v2161
        %2165 = vmatpush.msra.mxu0 0.0
        %2166 = vmatpush.msra.mxu0 0.0
        %2167 = vmatpush.msra.mxu0 0.0
        %2168 = vmatpush.msra.mxu0 0.0
        %2169 = vmatpush.msra.mxu0 0.0
        %2170 = vmatpush.msra.mxu0 0.0
        %2171 = vmatpush.msra.mxu0 0.0
        %2172 = vmatpush.msra.mxu0 0.0
        %2173 = vmatpush.msra.mxu0 0.0
        %2174 = vmatpush.msra.mxu0 0.0
        %2175 = vmatpush.msra.mxu0 %v1431
        %2176 = vmatpush.msra.mxu0 %v1420
        %2177 = vmatpush.msra.mxu0 %v1419
        %2178 = vmatpush.msra.mxu0 %v1418
        %2179 = vmatpush.msra.mxu0 %v1417
        %2180 = vmatpush.msra.mxu0 %v1416
        %2181 = vmatmul.f32.gmra.mxu0 %v1468
        %v2182 = vpop.f32.mrf.mxu0
        %v2183 = vadd.f32 0.0, %v2182
        %2184 = vmatmul.f32.gmra.mxu0 %v1470
        %v2185 = vpop.f32.mrf.mxu0
        %v2186 = vadd.f32 0.0, %v2185
        %2187 = vdwg.mxu0
        %v2188 = vadd.f32 %v2163, %v2183
        %v2189 = vadd.f32 %v2164, %v2186
        %2190 = vmatpush.msra.mxu0 0.0
        %2191 = vmatpush.msra.mxu0 0.0
        %2192 = vmatpush.msra.mxu0 0.0
        %2193 = vmatpush.msra.mxu0 0.0
        %2194 = vmatpush.msra.mxu0 0.0
        %2195 = vmatpush.msra.mxu0 0.0
        %2196 = vmatpush.msra.mxu0 0.0
        %2197 = vmatpush.msra.mxu0 0.0
        %2198 = vmatpush.msra.mxu0 0.0
        %2199 = vmatpush.msra.mxu0 0.0
        %2200 = vmatpush.msra.mxu0 %v1473
        %2201 = vmatpush.msra.mxu0 %v1463
        %2202 = vmatpush.msra.mxu0 %v1462
        %2203 = vmatpush.msra.mxu0 %v1461
        %2204 = vmatpush.msra.mxu0 %v1460
        %2205 = vmatpush.msra.mxu0 %v1459
        %2206 = vmatmul.f32.gmra.mxu0 %v1511
        %v2207 = vpop.f32.mrf.mxu0
        %v2208 = vadd.f32 0.0, %v2207
        %2209 = vmatmul.f32.gmra.mxu0 %v1513
        %v2210 = vpop.f32.mrf.mxu0
        %v2211 = vadd.f32 0.0, %v2210
        %2212 = vdwg.mxu0
        %v2213 = vadd.f32 %v2188, %v2208
        %v2214 = vadd.f32 %v2189, %v2211
        %2215 = vmatpush.msra.mxu0 0.0
        %2216 = vmatpush.msra.mxu0 0.0
        %2217 = vmatpush.msra.mxu0 0.0
        %2218 = vmatpush.msra.mxu0 0.0
        %2219 = vmatpush.msra.mxu0 0.0
        %2220 = vmatpush.msra.mxu0 0.0
        %2221 = vmatpush.msra.mxu0 0.0
        %2222 = vmatpush.msra.mxu0 0.0
        %2223 = vmatpush.msra.mxu0 0.0
        %2224 = vmatpush.msra.mxu0 0.0
        %2225 = vmatpush.msra.mxu0 %v1516
        %2226 = vmatpush.msra.mxu0 %v1505
        %2227 = vmatpush.msra.mxu0 %v1504
        %2228 = vmatpush.msra.mxu0 %v1503
        %2229 = vmatpush.msra.mxu0 %v1502
        %2230 = vmatpush.msra.mxu0 %v1501
        %2231 = vmatmul.f32.gmra.mxu0 %v1554
        %v2232 = vpop.f32.mrf.mxu0
        %v2233 = vadd.f32 0.0, %v2232
        %2234 = vmatmul.f32.gmra.mxu0 %v1556
        %v2235 = vpop.f32.mrf.mxu0
        %v2236 = vadd.f32 0.0, %v2235
        %2237 = vdwg.mxu0
        %v2238 = vadd.f32 %v2213, %v2233
        %v2239 = vadd.f32 %v2214, %v2236
        %2240 = vmatpush.msra.mxu0 0.0
        %2241 = vmatpush.msra.mxu0 0.0
        %2242 = vmatpush.msra.mxu0 0.0
        %2243 = vmatpush.msra.mxu0 0.0
        %2244 = vmatpush.msra.mxu0 0.0
        %2245 = vmatpush.msra.mxu0 0.0
        %2246 = vmatpush.msra.mxu0 0.0
        %2247 = vmatpush.msra.mxu0 0.0
        %2248 = vmatpush.msra.mxu0 0.0
        %2249 = vmatpush.msra.mxu0 0.0
        %2250 = vmatpush.msra.mxu0 %v1559
        %2251 = vmatpush.msra.mxu0 %v1548
        %2252 = vmatpush.msra.mxu0 %v1547
        %2253 = vmatpush.msra.mxu0 %v1546
        %2254 = vmatpush.msra.mxu0 %v1545
        %2255 = vmatpush.msra.mxu0 %v1544
        %2256 = vmatmul.f32.gmra.mxu0 %v1597
        %v2257 = vpop.f32.mrf.mxu0
        %v2258 = vadd.f32 0.0, %v2257
        %2259 = vmatmul.f32.gmra.mxu0 %v1599
        %v2260 = vpop.f32.mrf.mxu0
        %v2261 = vadd.f32 0.0, %v2260
        %2262 = vdwg.mxu0
        %v2263 = vadd.f32 %v2238, %v2258
        %v2264 = vadd.f32 %v2239, %v2261
        %2265 = vrot.lane.b32.xlu0 %v1467, 122
        %v2266 = vpop.permute.xlu0 %2265
        %2267 = vrot.lane.b32.xlu0 %v1466, 122
        %v2268 = vpop.permute.xlu0 %2267
        %v2269 = vsel %vm582, %v2266, 0
        %v2271 = vsel %vm582, %v2268, 0
        %2273 = vmatpush.msra.mxu0 0.0
        %2274 = vmatpush.msra.mxu0 0.0
        %2275 = vmatpush.msra.mxu0 0.0
        %2276 = vmatpush.msra.mxu0 0.0
        %2277 = vmatpush.msra.mxu0 0.0
        %2278 = vmatpush.msra.mxu0 0.0
        %2279 = vmatpush.msra.mxu0 0.0
        %2280 = vmatpush.msra.mxu0 0.0
        %2281 = vmatpush.msra.mxu0 0.0
        %2282 = vmatpush.msra.mxu0 0.0
        %2283 = vmatpush.msra.mxu0 %v1602
        %2284 = vmatpush.msra.mxu0 %v1591
        %2285 = vmatpush.msra.mxu0 %v1590
        %2286 = vmatpush.msra.mxu0 %v1589
        %2287 = vmatpush.msra.mxu0 %v1588
        %2288 = vmatpush.msra.mxu0 %v1587
        %2289 = vmatmul.f32.gmra.mxu0 %v2269
        %v2290 = vpop.f32.mrf.mxu0
        %v2291 = vadd.f32 0.0, %v2290
        %2292 = vmatmul.f32.gmra.mxu0 %v2271
        %v2293 = vpop.f32.mrf.mxu0
        %v2294 = vadd.f32 0.0, %v2293
        %2295 = vdwg.mxu0
        %v2296 = vadd.f32 %v2263, %v2291
        %v2297 = vadd.f32 %v2264, %v2294
        %v2298 = vadd.f32 %v2296, %v1631
        %v2299 = vadd.f32 %v2297, %v1631
        %v2300 = vmax.f32 %v2298, 0.0
        %v2301 = vmax.f32 %v2299, 0.0
        %v2302 = vmax.f32 %v1635, %v2300
        %v2303 = vmax.f32 %v1636, %v2301
        %2304 = vmatpush.msra.mxu0 0.0
        %2305 = vmatpush.msra.mxu0 0.0
        %2306 = vmatpush.msra.mxu0 0.0
        %2307 = vmatpush.msra.mxu0 0.0
        %2308 = vmatpush.msra.mxu0 0.0
        %2309 = vmatpush.msra.mxu0 0.0
        %2310 = vmatpush.msra.mxu0 0.0
        %2311 = vmatpush.msra.mxu0 0.0
        %2312 = vmatpush.msra.mxu0 0.0
        %2313 = vmatpush.msra.mxu0 0.0
        %2314 = vmatpush.msra.mxu0 %v591
        %2315 = vmatpush.msra.mxu0 %v580
        %2316 = vmatpush.msra.mxu0 %v579
        %2317 = vmatpush.msra.mxu0 %v578
        %2318 = vmatpush.msra.mxu0 %v577
        %2319 = vmatpush.msra.mxu0 %v576
        %2320 = vmatmul.f32.gmra.mxu0 %v826
        %v2321 = vpop.f32.mrf.mxu0
        %v2322 = vadd.f32 0.0, %v2321
        %2323 = vmatmul.f32.gmra.mxu0 %v829
        %v2324 = vpop.f32.mrf.mxu0
        %v2325 = vadd.f32 0.0, %v2324
        %2326 = vdwg.mxu0
        %2327 = vmatpush.msra.mxu0 0.0
        %2328 = vmatpush.msra.mxu0 0.0
        %2329 = vmatpush.msra.mxu0 0.0
        %2330 = vmatpush.msra.mxu0 0.0
        %2331 = vmatpush.msra.mxu0 0.0
        %2332 = vmatpush.msra.mxu0 0.0
        %2333 = vmatpush.msra.mxu0 0.0
        %2334 = vmatpush.msra.mxu0 0.0
        %2335 = vmatpush.msra.mxu0 0.0
        %2336 = vmatpush.msra.mxu0 0.0
        %2337 = vmatpush.msra.mxu0 %v623
        %2338 = vmatpush.msra.mxu0 %v573
        %2339 = vmatpush.msra.mxu0 %v572
        %2340 = vmatpush.msra.mxu0 %v571
        %2341 = vmatpush.msra.mxu0 %v570
        %2342 = vmatpush.msra.mxu0 %v569
        %2343 = vmatmul.f32.gmra.mxu0 %v785
        %v2344 = vpop.f32.mrf.mxu0
        %v2345 = vadd.f32 %v2322, %v2344
        %2346 = vmatmul.f32.gmra.mxu0 %v788
        %v2347 = vpop.f32.mrf.mxu0
        %v2348 = vadd.f32 %v2325, %v2347
        %2349 = vdwg.mxu0
        %2350 = vmatpush.msra.mxu0 0.0
        %2351 = vmatpush.msra.mxu0 0.0
        %2352 = vmatpush.msra.mxu0 0.0
        %2353 = vmatpush.msra.mxu0 0.0
        %2354 = vmatpush.msra.mxu0 0.0
        %2355 = vmatpush.msra.mxu0 0.0
        %2356 = vmatpush.msra.mxu0 0.0
        %2357 = vmatpush.msra.mxu0 0.0
        %2358 = vmatpush.msra.mxu0 0.0
        %2359 = vmatpush.msra.mxu0 0.0
        %2360 = vmatpush.msra.mxu0 %v664
        %2361 = vmatpush.msra.mxu0 %v653
        %2362 = vmatpush.msra.mxu0 %v652
        %2363 = vmatpush.msra.mxu0 %v651
        %2364 = vmatpush.msra.mxu0 %v650
        %2365 = vmatpush.msra.mxu0 %v649
        %2366 = vmatmul.f32.gmra.mxu0 %v870
        %v2367 = vpop.f32.mrf.mxu0
        %v2368 = vadd.f32 0.0, %v2367
        %2369 = vmatmul.f32.gmra.mxu0 %v872
        %v2370 = vpop.f32.mrf.mxu0
        %v2371 = vadd.f32 0.0, %v2370
        %2372 = vdwg.mxu0
        %v2373 = vadd.f32 %v2345, %v2368
        %v2374 = vadd.f32 %v2348, %v2371
        %2375 = vmatpush.msra.mxu0 0.0
        %2376 = vmatpush.msra.mxu0 0.0
        %2377 = vmatpush.msra.mxu0 0.0
        %2378 = vmatpush.msra.mxu0 0.0
        %2379 = vmatpush.msra.mxu0 0.0
        %2380 = vmatpush.msra.mxu0 0.0
        %2381 = vmatpush.msra.mxu0 0.0
        %2382 = vmatpush.msra.mxu0 0.0
        %2383 = vmatpush.msra.mxu0 0.0
        %2384 = vmatpush.msra.mxu0 0.0
        %2385 = vmatpush.msra.mxu0 %v707
        %2386 = vmatpush.msra.mxu0 %v696
        %2387 = vmatpush.msra.mxu0 %v695
        %2388 = vmatpush.msra.mxu0 %v694
        %2389 = vmatpush.msra.mxu0 %v693
        %2390 = vmatpush.msra.mxu0 %v692
        %2391 = vmatmul.f32.gmra.mxu0 %v913
        %v2392 = vpop.f32.mrf.mxu0
        %v2393 = vadd.f32 0.0, %v2392
        %2394 = vmatmul.f32.gmra.mxu0 %v915
        %v2395 = vpop.f32.mrf.mxu0
        %v2396 = vadd.f32 0.0, %v2395
        %2397 = vdwg.mxu0
        %v2398 = vadd.f32 %v2373, %v2393
        %v2399 = vadd.f32 %v2374, %v2396
        %2400 = vmatpush.msra.mxu0 0.0
        %2401 = vmatpush.msra.mxu0 0.0
        %2402 = vmatpush.msra.mxu0 0.0
        %2403 = vmatpush.msra.mxu0 0.0
        %2404 = vmatpush.msra.mxu0 0.0
        %2405 = vmatpush.msra.mxu0 0.0
        %2406 = vmatpush.msra.mxu0 0.0
        %2407 = vmatpush.msra.mxu0 0.0
        %2408 = vmatpush.msra.mxu0 0.0
        %2409 = vmatpush.msra.mxu0 0.0
        %2410 = vmatpush.msra.mxu0 %v750
        %2411 = vmatpush.msra.mxu0 %v739
        %2412 = vmatpush.msra.mxu0 %v738
        %2413 = vmatpush.msra.mxu0 %v737
        %2414 = vmatpush.msra.mxu0 %v736
        %2415 = vmatpush.msra.mxu0 %v735
        %2416 = vmatmul.f32.gmra.mxu0 %v956
        %v2417 = vpop.f32.mrf.mxu0
        %v2418 = vadd.f32 0.0, %v2417
        %2419 = vmatmul.f32.gmra.mxu0 %v958
        %v2420 = vpop.f32.mrf.mxu0
        %v2421 = vadd.f32 0.0, %v2420
        %2422 = vdwg.mxu0
        %v2423 = vadd.f32 %v2398, %v2418
        %v2424 = vadd.f32 %v2399, %v2421
        %2425 = vmatpush.msra.mxu0 0.0
        %2426 = vmatpush.msra.mxu0 0.0
        %2427 = vmatpush.msra.mxu0 0.0
        %2428 = vmatpush.msra.mxu0 0.0
        %2429 = vmatpush.msra.mxu0 0.0
        %2430 = vmatpush.msra.mxu0 0.0
        %2431 = vmatpush.msra.mxu0 0.0
        %2432 = vmatpush.msra.mxu0 0.0
        %2433 = vmatpush.msra.mxu0 0.0
        %2434 = vmatpush.msra.mxu0 0.0
        %2435 = vmatpush.msra.mxu0 %v791
        %2436 = vmatpush.msra.mxu0 %v782
        %2437 = vmatpush.msra.mxu0 %v781
        %2438 = vmatpush.msra.mxu0 %v780
        %2439 = vmatpush.msra.mxu0 %v779
        %2440 = vmatpush.msra.mxu0 %v778
        %2441 = vmatmul.f32.gmra.mxu0 %v999
        %v2442 = vpop.f32.mrf.mxu0
        %v2443 = vadd.f32 0.0, %v2442
        %2444 = vmatmul.f32.gmra.mxu0 %v1001
        %v2445 = vpop.f32.mrf.mxu0
        %v2446 = vadd.f32 0.0, %v2445
        %2447 = vdwg.mxu0
        %v2448 = vadd.f32 %v2423, %v2443
        %v2449 = vadd.f32 %v2424, %v2446
        %2450 = vmatpush.msra.mxu0 0.0
        %2451 = vmatpush.msra.mxu0 0.0
        %2452 = vmatpush.msra.mxu0 0.0
        %2453 = vmatpush.msra.mxu0 0.0
        %2454 = vmatpush.msra.mxu0 0.0
        %2455 = vmatpush.msra.mxu0 0.0
        %2456 = vmatpush.msra.mxu0 0.0
        %2457 = vmatpush.msra.mxu0 0.0
        %2458 = vmatpush.msra.mxu0 0.0
        %2459 = vmatpush.msra.mxu0 0.0
        %2460 = vmatpush.msra.mxu0 %v832
        %2461 = vmatpush.msra.mxu0 %v823
        %2462 = vmatpush.msra.mxu0 %v822
        %2463 = vmatpush.msra.mxu0 %v821
        %2464 = vmatpush.msra.mxu0 %v820
        %2465 = vmatpush.msra.mxu0 %v819
        %2466 = vmatmul.f32.gmra.mxu0 %v1041
        %v2467 = vpop.f32.mrf.mxu0
        %v2468 = vadd.f32 0.0, %v2467
        %2469 = vmatmul.f32.gmra.mxu0 %v1043
        %v2470 = vpop.f32.mrf.mxu0
        %v2471 = vadd.f32 0.0, %v2470
        %2472 = vdwg.mxu0
        %v2473 = vadd.f32 %v2448, %v2468
        %v2474 = vadd.f32 %v2449, %v2471
        %2475 = vmatpush.msra.mxu0 0.0
        %2476 = vmatpush.msra.mxu0 0.0
        %2477 = vmatpush.msra.mxu0 0.0
        %2478 = vmatpush.msra.mxu0 0.0
        %2479 = vmatpush.msra.mxu0 0.0
        %2480 = vmatpush.msra.mxu0 0.0
        %2481 = vmatpush.msra.mxu0 0.0
        %2482 = vmatpush.msra.mxu0 0.0
        %2483 = vmatpush.msra.mxu0 0.0
        %2484 = vmatpush.msra.mxu0 0.0
        %2485 = vmatpush.msra.mxu0 %v875
        %2486 = vmatpush.msra.mxu0 %v864
        %2487 = vmatpush.msra.mxu0 %v863
        %2488 = vmatpush.msra.mxu0 %v862
        %2489 = vmatpush.msra.mxu0 %v861
        %2490 = vmatpush.msra.mxu0 %v860
        %2491 = vmatmul.f32.gmra.mxu0 %v1084
        %v2492 = vpop.f32.mrf.mxu0
        %v2493 = vadd.f32 0.0, %v2492
        %2494 = vmatmul.f32.gmra.mxu0 %v1086
        %v2495 = vpop.f32.mrf.mxu0
        %v2496 = vadd.f32 0.0, %v2495
        %2497 = vdwg.mxu0
        %v2498 = vadd.f32 %v2473, %v2493
        %v2499 = vadd.f32 %v2474, %v2496
        %2500 = vmatpush.msra.mxu0 0.0
        %2501 = vmatpush.msra.mxu0 0.0
        %2502 = vmatpush.msra.mxu0 0.0
        %2503 = vmatpush.msra.mxu0 0.0
        %2504 = vmatpush.msra.mxu0 0.0
        %2505 = vmatpush.msra.mxu0 0.0
        %2506 = vmatpush.msra.mxu0 0.0
        %2507 = vmatpush.msra.mxu0 0.0
        %2508 = vmatpush.msra.mxu0 0.0
        %2509 = vmatpush.msra.mxu0 0.0
        %2510 = vmatpush.msra.mxu0 %v918
        %2511 = vmatpush.msra.mxu0 %v907
        %2512 = vmatpush.msra.mxu0 %v906
        %2513 = vmatpush.msra.mxu0 %v905
        %2514 = vmatpush.msra.mxu0 %v904
        %2515 = vmatpush.msra.mxu0 %v903
        %2516 = vmatmul.f32.gmra.mxu0 %v1127
        %v2517 = vpop.f32.mrf.mxu0
        %v2518 = vadd.f32 0.0, %v2517
        %2519 = vmatmul.f32.gmra.mxu0 %v1129
        %v2520 = vpop.f32.mrf.mxu0
        %v2521 = vadd.f32 0.0, %v2520
        %2522 = vdwg.mxu0
        %v2523 = vadd.f32 %v2498, %v2518
        %v2524 = vadd.f32 %v2499, %v2521
        %2525 = vmatpush.msra.mxu0 0.0
        %2526 = vmatpush.msra.mxu0 0.0
        %2527 = vmatpush.msra.mxu0 0.0
        %2528 = vmatpush.msra.mxu0 0.0
        %2529 = vmatpush.msra.mxu0 0.0
        %2530 = vmatpush.msra.mxu0 0.0
        %2531 = vmatpush.msra.mxu0 0.0
        %2532 = vmatpush.msra.mxu0 0.0
        %2533 = vmatpush.msra.mxu0 0.0
        %2534 = vmatpush.msra.mxu0 0.0
        %2535 = vmatpush.msra.mxu0 %v961
        %2536 = vmatpush.msra.mxu0 %v950
        %2537 = vmatpush.msra.mxu0 %v949
        %2538 = vmatpush.msra.mxu0 %v948
        %2539 = vmatpush.msra.mxu0 %v947
        %2540 = vmatpush.msra.mxu0 %v946
        %2541 = vmatmul.f32.gmra.mxu0 %v1170
        %v2542 = vpop.f32.mrf.mxu0
        %v2543 = vadd.f32 0.0, %v2542
        %2544 = vmatmul.f32.gmra.mxu0 %v1172
        %v2545 = vpop.f32.mrf.mxu0
        %v2546 = vadd.f32 0.0, %v2545
        %2547 = vdwg.mxu0
        %v2548 = vadd.f32 %v2523, %v2543
        %v2549 = vadd.f32 %v2524, %v2546
        %2550 = vmatpush.msra.mxu0 0.0
        %2551 = vmatpush.msra.mxu0 0.0
        %2552 = vmatpush.msra.mxu0 0.0
        %2553 = vmatpush.msra.mxu0 0.0
        %2554 = vmatpush.msra.mxu0 0.0
        %2555 = vmatpush.msra.mxu0 0.0
        %2556 = vmatpush.msra.mxu0 0.0
        %2557 = vmatpush.msra.mxu0 0.0
        %2558 = vmatpush.msra.mxu0 0.0
        %2559 = vmatpush.msra.mxu0 0.0
        %2560 = vmatpush.msra.mxu0 %v1004
        %2561 = vmatpush.msra.mxu0 %v993
        %2562 = vmatpush.msra.mxu0 %v992
        %2563 = vmatpush.msra.mxu0 %v991
        %2564 = vmatpush.msra.mxu0 %v990
        %2565 = vmatpush.msra.mxu0 %v989
        %2566 = vmatmul.f32.gmra.mxu0 %v1212
        %v2567 = vpop.f32.mrf.mxu0
        %v2568 = vadd.f32 0.0, %v2567
        %2569 = vmatmul.f32.gmra.mxu0 %v1214
        %v2570 = vpop.f32.mrf.mxu0
        %v2571 = vadd.f32 0.0, %v2570
        %2572 = vdwg.mxu0
        %v2573 = vadd.f32 %v2548, %v2568
        %v2574 = vadd.f32 %v2549, %v2571
        %2575 = vmatpush.msra.mxu0 0.0
        %2576 = vmatpush.msra.mxu0 0.0
        %2577 = vmatpush.msra.mxu0 0.0
        %2578 = vmatpush.msra.mxu0 0.0
        %2579 = vmatpush.msra.mxu0 0.0
        %2580 = vmatpush.msra.mxu0 0.0
        %2581 = vmatpush.msra.mxu0 0.0
        %2582 = vmatpush.msra.mxu0 0.0
        %2583 = vmatpush.msra.mxu0 0.0
        %2584 = vmatpush.msra.mxu0 0.0
        %2585 = vmatpush.msra.mxu0 %v1046
        %2586 = vmatpush.msra.mxu0 %v1036
        %2587 = vmatpush.msra.mxu0 %v1035
        %2588 = vmatpush.msra.mxu0 %v1034
        %2589 = vmatpush.msra.mxu0 %v1033
        %2590 = vmatpush.msra.mxu0 %v1032
        %2591 = vmatmul.f32.gmra.mxu0 %v1254
        %v2592 = vpop.f32.mrf.mxu0
        %v2593 = vadd.f32 0.0, %v2592
        %2594 = vmatmul.f32.gmra.mxu0 %v1256
        %v2595 = vpop.f32.mrf.mxu0
        %v2596 = vadd.f32 0.0, %v2595
        %2597 = vdwg.mxu0
        %v2598 = vadd.f32 %v2573, %v2593
        %v2599 = vadd.f32 %v2574, %v2596
        %2600 = vmatpush.msra.mxu0 0.0
        %2601 = vmatpush.msra.mxu0 0.0
        %2602 = vmatpush.msra.mxu0 0.0
        %2603 = vmatpush.msra.mxu0 0.0
        %2604 = vmatpush.msra.mxu0 0.0
        %2605 = vmatpush.msra.mxu0 0.0
        %2606 = vmatpush.msra.mxu0 0.0
        %2607 = vmatpush.msra.mxu0 0.0
        %2608 = vmatpush.msra.mxu0 0.0
        %2609 = vmatpush.msra.mxu0 0.0
        %2610 = vmatpush.msra.mxu0 %v1089
        %2611 = vmatpush.msra.mxu0 %v1078
        %2612 = vmatpush.msra.mxu0 %v1077
        %2613 = vmatpush.msra.mxu0 %v1076
        %2614 = vmatpush.msra.mxu0 %v1075
        %2615 = vmatpush.msra.mxu0 %v1074
        %2616 = vmatmul.f32.gmra.mxu0 %v1297
        %v2617 = vpop.f32.mrf.mxu0
        %v2618 = vadd.f32 0.0, %v2617
        %2619 = vmatmul.f32.gmra.mxu0 %v1299
        %v2620 = vpop.f32.mrf.mxu0
        %v2621 = vadd.f32 0.0, %v2620
        %2622 = vdwg.mxu0
        %v2623 = vadd.f32 %v2598, %v2618
        %v2624 = vadd.f32 %v2599, %v2621
        %2625 = vmatpush.msra.mxu0 0.0
        %2626 = vmatpush.msra.mxu0 0.0
        %2627 = vmatpush.msra.mxu0 0.0
        %2628 = vmatpush.msra.mxu0 0.0
        %2629 = vmatpush.msra.mxu0 0.0
        %2630 = vmatpush.msra.mxu0 0.0
        %2631 = vmatpush.msra.mxu0 0.0
        %2632 = vmatpush.msra.mxu0 0.0
        %2633 = vmatpush.msra.mxu0 0.0
        %2634 = vmatpush.msra.mxu0 0.0
        %2635 = vmatpush.msra.mxu0 %v1132
        %2636 = vmatpush.msra.mxu0 %v1121
        %2637 = vmatpush.msra.mxu0 %v1120
        %2638 = vmatpush.msra.mxu0 %v1119
        %2639 = vmatpush.msra.mxu0 %v1118
        %2640 = vmatpush.msra.mxu0 %v1117
        %2641 = vmatmul.f32.gmra.mxu0 %v1340
        %v2642 = vpop.f32.mrf.mxu0
        %v2643 = vadd.f32 0.0, %v2642
        %2644 = vmatmul.f32.gmra.mxu0 %v1342
        %v2645 = vpop.f32.mrf.mxu0
        %v2646 = vadd.f32 0.0, %v2645
        %2647 = vdwg.mxu0
        %v2648 = vadd.f32 %v2623, %v2643
        %v2649 = vadd.f32 %v2624, %v2646
        %2650 = vmatpush.msra.mxu0 0.0
        %2651 = vmatpush.msra.mxu0 0.0
        %2652 = vmatpush.msra.mxu0 0.0
        %2653 = vmatpush.msra.mxu0 0.0
        %2654 = vmatpush.msra.mxu0 0.0
        %2655 = vmatpush.msra.mxu0 0.0
        %2656 = vmatpush.msra.mxu0 0.0
        %2657 = vmatpush.msra.mxu0 0.0
        %2658 = vmatpush.msra.mxu0 0.0
        %2659 = vmatpush.msra.mxu0 0.0
        %2660 = vmatpush.msra.mxu0 %v1175
        %2661 = vmatpush.msra.mxu0 %v1164
        %2662 = vmatpush.msra.mxu0 %v1163
        %2663 = vmatpush.msra.mxu0 %v1162
        %2664 = vmatpush.msra.mxu0 %v1161
        %2665 = vmatpush.msra.mxu0 %v1160
        %2666 = vmatmul.f32.gmra.mxu0 %v1383
        %v2667 = vpop.f32.mrf.mxu0
        %v2668 = vadd.f32 0.0, %v2667
        %2669 = vmatmul.f32.gmra.mxu0 %v1385
        %v2670 = vpop.f32.mrf.mxu0
        %v2671 = vadd.f32 0.0, %v2670
        %2672 = vdwg.mxu0
        %v2673 = vadd.f32 %v2648, %v2668
        %v2674 = vadd.f32 %v2649, %v2671
        %2675 = vmatpush.msra.mxu0 0.0
        %2676 = vmatpush.msra.mxu0 0.0
        %2677 = vmatpush.msra.mxu0 0.0
        %2678 = vmatpush.msra.mxu0 0.0
        %2679 = vmatpush.msra.mxu0 0.0
        %2680 = vmatpush.msra.mxu0 0.0
        %2681 = vmatpush.msra.mxu0 0.0
        %2682 = vmatpush.msra.mxu0 0.0
        %2683 = vmatpush.msra.mxu0 0.0
        %2684 = vmatpush.msra.mxu0 0.0
        %2685 = vmatpush.msra.mxu0 %v1217
        %2686 = vmatpush.msra.mxu0 %v1207
        %2687 = vmatpush.msra.mxu0 %v1206
        %2688 = vmatpush.msra.mxu0 %v1205
        %2689 = vmatpush.msra.mxu0 %v1204
        %2690 = vmatpush.msra.mxu0 %v1203
        %2691 = vmatmul.f32.gmra.mxu0 %v1426
        %v2692 = vpop.f32.mrf.mxu0
        %v2693 = vadd.f32 0.0, %v2692
        %2694 = vmatmul.f32.gmra.mxu0 %v1428
        %v2695 = vpop.f32.mrf.mxu0
        %v2696 = vadd.f32 0.0, %v2695
        %2697 = vdwg.mxu0
        %v2698 = vadd.f32 %v2673, %v2693
        %v2699 = vadd.f32 %v2674, %v2696
        %2700 = vmatpush.msra.mxu0 0.0
        %2701 = vmatpush.msra.mxu0 0.0
        %2702 = vmatpush.msra.mxu0 0.0
        %2703 = vmatpush.msra.mxu0 0.0
        %2704 = vmatpush.msra.mxu0 0.0
        %2705 = vmatpush.msra.mxu0 0.0
        %2706 = vmatpush.msra.mxu0 0.0
        %2707 = vmatpush.msra.mxu0 0.0
        %2708 = vmatpush.msra.mxu0 0.0
        %2709 = vmatpush.msra.mxu0 0.0
        %2710 = vmatpush.msra.mxu0 %v1259
        %2711 = vmatpush.msra.mxu0 %v1249
        %2712 = vmatpush.msra.mxu0 %v1248
        %2713 = vmatpush.msra.mxu0 %v1247
        %2714 = vmatpush.msra.mxu0 %v1246
        %2715 = vmatpush.msra.mxu0 %v1245
        %2716 = vmatmul.f32.gmra.mxu0 %v1468
        %v2717 = vpop.f32.mrf.mxu0
        %v2718 = vadd.f32 0.0, %v2717
        %2719 = vmatmul.f32.gmra.mxu0 %v1470
        %v2720 = vpop.f32.mrf.mxu0
        %v2721 = vadd.f32 0.0, %v2720
        %2722 = vdwg.mxu0
        %v2723 = vadd.f32 %v2698, %v2718
        %v2724 = vadd.f32 %v2699, %v2721
        %2725 = vmatpush.msra.mxu0 0.0
        %2726 = vmatpush.msra.mxu0 0.0
        %2727 = vmatpush.msra.mxu0 0.0
        %2728 = vmatpush.msra.mxu0 0.0
        %2729 = vmatpush.msra.mxu0 0.0
        %2730 = vmatpush.msra.mxu0 0.0
        %2731 = vmatpush.msra.mxu0 0.0
        %2732 = vmatpush.msra.mxu0 0.0
        %2733 = vmatpush.msra.mxu0 0.0
        %2734 = vmatpush.msra.mxu0 0.0
        %2735 = vmatpush.msra.mxu0 %v1302
        %2736 = vmatpush.msra.mxu0 %v1291
        %2737 = vmatpush.msra.mxu0 %v1290
        %2738 = vmatpush.msra.mxu0 %v1289
        %2739 = vmatpush.msra.mxu0 %v1288
        %2740 = vmatpush.msra.mxu0 %v1287
        %2741 = vmatmul.f32.gmra.mxu0 %v1511
        %v2742 = vpop.f32.mrf.mxu0
        %v2743 = vadd.f32 0.0, %v2742
        %2744 = vmatmul.f32.gmra.mxu0 %v1513
        %v2745 = vpop.f32.mrf.mxu0
        %v2746 = vadd.f32 0.0, %v2745
        %2747 = vdwg.mxu0
        %v2748 = vadd.f32 %v2723, %v2743
        %v2749 = vadd.f32 %v2724, %v2746
        %2750 = vmatpush.msra.mxu0 0.0
        %2751 = vmatpush.msra.mxu0 0.0
        %2752 = vmatpush.msra.mxu0 0.0
        %2753 = vmatpush.msra.mxu0 0.0
        %2754 = vmatpush.msra.mxu0 0.0
        %2755 = vmatpush.msra.mxu0 0.0
        %2756 = vmatpush.msra.mxu0 0.0
        %2757 = vmatpush.msra.mxu0 0.0
        %2758 = vmatpush.msra.mxu0 0.0
        %2759 = vmatpush.msra.mxu0 0.0
        %2760 = vmatpush.msra.mxu0 %v1345
        %2761 = vmatpush.msra.mxu0 %v1334
        %2762 = vmatpush.msra.mxu0 %v1333
        %2763 = vmatpush.msra.mxu0 %v1332
        %2764 = vmatpush.msra.mxu0 %v1331
        %2765 = vmatpush.msra.mxu0 %v1330
        %2766 = vmatmul.f32.gmra.mxu0 %v1554
        %v2767 = vpop.f32.mrf.mxu0
        %v2768 = vadd.f32 0.0, %v2767
        %2769 = vmatmul.f32.gmra.mxu0 %v1556
        %v2770 = vpop.f32.mrf.mxu0
        %v2771 = vadd.f32 0.0, %v2770
        %2772 = vdwg.mxu0
        %v2773 = vadd.f32 %v2748, %v2768
        %v2774 = vadd.f32 %v2749, %v2771
        %2775 = vmatpush.msra.mxu0 0.0
        %2776 = vmatpush.msra.mxu0 0.0
        %2777 = vmatpush.msra.mxu0 0.0
        %2778 = vmatpush.msra.mxu0 0.0
        %2779 = vmatpush.msra.mxu0 0.0
        %2780 = vmatpush.msra.mxu0 0.0
        %2781 = vmatpush.msra.mxu0 0.0
        %2782 = vmatpush.msra.mxu0 0.0
        %2783 = vmatpush.msra.mxu0 0.0
        %2784 = vmatpush.msra.mxu0 0.0
        %2785 = vmatpush.msra.mxu0 %v1388
        %2786 = vmatpush.msra.mxu0 %v1377
        %2787 = vmatpush.msra.mxu0 %v1376
        %2788 = vmatpush.msra.mxu0 %v1375
        %2789 = vmatpush.msra.mxu0 %v1374
        %2790 = vmatpush.msra.mxu0 %v1373
        %2791 = vmatmul.f32.gmra.mxu0 %v1597
        %v2792 = vpop.f32.mrf.mxu0
        %v2793 = vadd.f32 0.0, %v2792
        %2794 = vmatmul.f32.gmra.mxu0 %v1599
        %v2795 = vpop.f32.mrf.mxu0
        %v2796 = vadd.f32 0.0, %v2795
        %2797 = vdwg.mxu0
        %v2798 = vadd.f32 %v2773, %v2793
        %v2799 = vadd.f32 %v2774, %v2796
        %v2800 = vrot.slane %v565, 2
        %v2801 = vrot.slane %v566, 2
        %v2802 = vsel %vm1422, %v2800, %v2801
        %v2803 = vsel %vm582, %v2802, 0
        %v2805 = vsel %vm582, %v2801, 0
        %2807 = vmatpush.msra.mxu0 0.0
        %2808 = vmatpush.msra.mxu0 0.0
        %2809 = vmatpush.msra.mxu0 0.0
        %2810 = vmatpush.msra.mxu0 0.0
        %2811 = vmatpush.msra.mxu0 0.0
        %2812 = vmatpush.msra.mxu0 0.0
        %2813 = vmatpush.msra.mxu0 0.0
        %2814 = vmatpush.msra.mxu0 0.0
        %2815 = vmatpush.msra.mxu0 0.0
        %2816 = vmatpush.msra.mxu0 0.0
        %2817 = vmatpush.msra.mxu0 %v1431
        %2818 = vmatpush.msra.mxu0 %v1420
        %2819 = vmatpush.msra.mxu0 %v1419
        %2820 = vmatpush.msra.mxu0 %v1418
        %2821 = vmatpush.msra.mxu0 %v1417
        %2822 = vmatpush.msra.mxu0 %v1416
        %2823 = vmatmul.f32.gmra.mxu0 %v2803
        %v2824 = vpop.f32.mrf.mxu0
        %v2825 = vadd.f32 0.0, %v2824
        %2826 = vmatmul.f32.gmra.mxu0 %v2805
        %v2827 = vpop.f32.mrf.mxu0
        %v2828 = vadd.f32 0.0, %v2827
        %2829 = vdwg.mxu0
        %v2830 = vadd.f32 %v2798, %v2825
        %v2831 = vadd.f32 %v2799, %v2828
        %v2832 = vrot.slane %v567, 2
        %v2833 = vrot.slane %v568, 2
        %v2834 = vsel %vm1422, %v2832, %v2833
        %v2835 = vsel %vm582, %v2834, 0
        %v2837 = vsel %vm582, %v2833, 0
        %2839 = vmatpush.msra.mxu0 0.0
        %2840 = vmatpush.msra.mxu0 0.0
        %2841 = vmatpush.msra.mxu0 0.0
        %2842 = vmatpush.msra.mxu0 0.0
        %2843 = vmatpush.msra.mxu0 0.0
        %2844 = vmatpush.msra.mxu0 0.0
        %2845 = vmatpush.msra.mxu0 0.0
        %2846 = vmatpush.msra.mxu0 0.0
        %2847 = vmatpush.msra.mxu0 0.0
        %2848 = vmatpush.msra.mxu0 0.0
        %2849 = vmatpush.msra.mxu0 %v1473
        %2850 = vmatpush.msra.mxu0 %v1463
        %2851 = vmatpush.msra.mxu0 %v1462
        %2852 = vmatpush.msra.mxu0 %v1461
        %2853 = vmatpush.msra.mxu0 %v1460
        %2854 = vmatpush.msra.mxu0 %v1459
        %2855 = vmatmul.f32.gmra.mxu0 %v2835
        %v2856 = vpop.f32.mrf.mxu0
        %v2857 = vadd.f32 0.0, %v2856
        %2858 = vmatmul.f32.gmra.mxu0 %v2837
        %v2859 = vpop.f32.mrf.mxu0
        %v2860 = vadd.f32 0.0, %v2859
        %2861 = vdwg.mxu0
        %v2862 = vadd.f32 %v2830, %v2857
        %v2863 = vadd.f32 %v2831, %v2860
        %2864 = vrot.lane.b32.xlu0 %v2802, 125
        %v2865 = vpop.permute.xlu0 %2864
        %2866 = vrot.lane.b32.xlu0 %v2801, 125
        %v2867 = vpop.permute.xlu0 %2866
        %v2868 = vsel %vm582, %v2865, 0
        %v2870 = vsel %vm582, %v2867, 0
        %2872 = vmatpush.msra.mxu0 0.0
        %2873 = vmatpush.msra.mxu0 0.0
        %2874 = vmatpush.msra.mxu0 0.0
        %2875 = vmatpush.msra.mxu0 0.0
        %2876 = vmatpush.msra.mxu0 0.0
        %2877 = vmatpush.msra.mxu0 0.0
        %2878 = vmatpush.msra.mxu0 0.0
        %2879 = vmatpush.msra.mxu0 0.0
        %2880 = vmatpush.msra.mxu0 0.0
        %2881 = vmatpush.msra.mxu0 0.0
        %2882 = vmatpush.msra.mxu0 %v1516
        %2883 = vmatpush.msra.mxu0 %v1505
        %2884 = vmatpush.msra.mxu0 %v1504
        %2885 = vmatpush.msra.mxu0 %v1503
        %2886 = vmatpush.msra.mxu0 %v1502
        %2887 = vmatpush.msra.mxu0 %v1501
        %2888 = vmatmul.f32.gmra.mxu0 %v2868
        %v2889 = vpop.f32.mrf.mxu0
        %v2890 = vadd.f32 0.0, %v2889
        %2891 = vmatmul.f32.gmra.mxu0 %v2870
        %v2892 = vpop.f32.mrf.mxu0
        %v2893 = vadd.f32 0.0, %v2892
        %2894 = vdwg.mxu0
        %v2895 = vadd.f32 %v2862, %v2890
        %v2896 = vadd.f32 %v2863, %v2893
        %2897 = vrot.lane.b32.xlu0 %v2834, 125
        %v2898 = vpop.permute.xlu0 %2897
        %2899 = vrot.lane.b32.xlu0 %v2833, 125
        %v2900 = vpop.permute.xlu0 %2899
        %v2901 = vsel %vm582, %v2898, 0
        %v2903 = vsel %vm582, %v2900, 0
        %2905 = vmatpush.msra.mxu0 0.0
        %2906 = vmatpush.msra.mxu0 0.0
        %2907 = vmatpush.msra.mxu0 0.0
        %2908 = vmatpush.msra.mxu0 0.0
        %2909 = vmatpush.msra.mxu0 0.0
        %2910 = vmatpush.msra.mxu0 0.0
        %2911 = vmatpush.msra.mxu0 0.0
        %2912 = vmatpush.msra.mxu0 0.0
        %2913 = vmatpush.msra.mxu0 0.0
        %2914 = vmatpush.msra.mxu0 0.0
        %2915 = vmatpush.msra.mxu0 %v1559
        %2916 = vmatpush.msra.mxu0 %v1548
        %2917 = vmatpush.msra.mxu0 %v1547
        %2918 = vmatpush.msra.mxu0 %v1546
        %2919 = vmatpush.msra.mxu0 %v1545
        %2920 = vmatpush.msra.mxu0 %v1544
        %2921 = vmatmul.f32.gmra.mxu0 %v2901
        %v2922 = vpop.f32.mrf.mxu0
        %v2923 = vadd.f32 0.0, %v2922
        %2924 = vmatmul.f32.gmra.mxu0 %v2903
        %v2925 = vpop.f32.mrf.mxu0
        %v2926 = vadd.f32 0.0, %v2925
        %2927 = vdwg.mxu0
        %v2928 = vadd.f32 %v2895, %v2923
        %v2929 = vadd.f32 %v2896, %v2926
        %2930 = vrot.lane.b32.xlu0 %v2802, 122
        %v2931 = vpop.permute.xlu0 %2930
        %2932 = vrot.lane.b32.xlu0 %v2801, 122
        %v2933 = vpop.permute.xlu0 %2932
        %v2934 = vsel %vm582, %v2931, 0
        %v2936 = vsel %vm582, %v2933, 0
        %2938 = vmatpush.msra.mxu0 0.0
        %2939 = vmatpush.msra.mxu0 0.0
        %2940 = vmatpush.msra.mxu0 0.0
        %2941 = vmatpush.msra.mxu0 0.0
        %2942 = vmatpush.msra.mxu0 0.0
        %2943 = vmatpush.msra.mxu0 0.0
        %2944 = vmatpush.msra.mxu0 0.0
        %2945 = vmatpush.msra.mxu0 0.0
        %2946 = vmatpush.msra.mxu0 0.0
        %2947 = vmatpush.msra.mxu0 0.0
        %2948 = vmatpush.msra.mxu0 %v1602
        %2949 = vmatpush.msra.mxu0 %v1591
        %2950 = vmatpush.msra.mxu0 %v1590
        %2951 = vmatpush.msra.mxu0 %v1589
        %2952 = vmatpush.msra.mxu0 %v1588
        %2953 = vmatpush.msra.mxu0 %v1587
        %2954 = vmatmul.f32.gmra.mxu0 %v2934
        %v2955 = vpop.f32.mrf.mxu0
        %v2956 = vadd.f32 0.0, %v2955
        %2957 = vmatmul.f32.gmra.mxu0 %v2936
        %v2958 = vpop.f32.mrf.mxu0
        %v2959 = vadd.f32 0.0, %v2958
        %2960 = vdwg.mxu0
        %v2961 = vadd.f32 %v2928, %v2956
        %v2962 = vadd.f32 %v2929, %v2959
        %v2963 = vadd.f32 %v2961, %v1631
        %v2964 = vadd.f32 %v2962, %v1631
        %v2965 = vmax.f32 %v2963, 0.0
        %v2966 = vmax.f32 %v2964, 0.0
        %v2967 = vmax.f32 %v2302, %v2965
        %v2968 = vmax.f32 %v2303, %v2966
        %2969 = vmatpush.msra.mxu0 0.0
        %2970 = vmatpush.msra.mxu0 0.0
        %2971 = vmatpush.msra.mxu0 0.0
        %2972 = vmatpush.msra.mxu0 0.0
        %2973 = vmatpush.msra.mxu0 0.0
        %2974 = vmatpush.msra.mxu0 0.0
        %2975 = vmatpush.msra.mxu0 0.0
        %2976 = vmatpush.msra.mxu0 0.0
        %2977 = vmatpush.msra.mxu0 0.0
        %2978 = vmatpush.msra.mxu0 0.0
        %2979 = vmatpush.msra.mxu0 %v591
        %2980 = vmatpush.msra.mxu0 %v580
        %2981 = vmatpush.msra.mxu0 %v579
        %2982 = vmatpush.msra.mxu0 %v578
        %2983 = vmatpush.msra.mxu0 %v577
        %2984 = vmatpush.msra.mxu0 %v576
        %2985 = vmatmul.f32.gmra.mxu0 %v870
        %v2986 = vpop.f32.mrf.mxu0
        %v2987 = vadd.f32 0.0, %v2986
        %2988 = vmatmul.f32.gmra.mxu0 %v872
        %v2989 = vpop.f32.mrf.mxu0
        %v2990 = vadd.f32 0.0, %v2989
        %2991 = vdwg.mxu0
        %2992 = vmatpush.msra.mxu0 0.0
        %2993 = vmatpush.msra.mxu0 0.0
        %2994 = vmatpush.msra.mxu0 0.0
        %2995 = vmatpush.msra.mxu0 0.0
        %2996 = vmatpush.msra.mxu0 0.0
        %2997 = vmatpush.msra.mxu0 0.0
        %2998 = vmatpush.msra.mxu0 0.0
        %2999 = vmatpush.msra.mxu0 0.0
        %3000 = vmatpush.msra.mxu0 0.0
        %3001 = vmatpush.msra.mxu0 0.0
        %3002 = vmatpush.msra.mxu0 %v623
        %3003 = vmatpush.msra.mxu0 %v573
        %3004 = vmatpush.msra.mxu0 %v572
        %3005 = vmatpush.msra.mxu0 %v571
        %3006 = vmatpush.msra.mxu0 %v570
        %3007 = vmatpush.msra.mxu0 %v569
        %3008 = vmatmul.f32.gmra.mxu0 %v826
        %v3009 = vpop.f32.mrf.mxu0
        %v3010 = vadd.f32 %v2987, %v3009
        %3011 = vmatmul.f32.gmra.mxu0 %v829
        %v3012 = vpop.f32.mrf.mxu0
        %v3013 = vadd.f32 %v2990, %v3012
        %3014 = vdwg.mxu0
        %3015 = vmatpush.msra.mxu0 0.0
        %3016 = vmatpush.msra.mxu0 0.0
        %3017 = vmatpush.msra.mxu0 0.0
        %3018 = vmatpush.msra.mxu0 0.0
        %3019 = vmatpush.msra.mxu0 0.0
        %3020 = vmatpush.msra.mxu0 0.0
        %3021 = vmatpush.msra.mxu0 0.0
        %3022 = vmatpush.msra.mxu0 0.0
        %3023 = vmatpush.msra.mxu0 0.0
        %3024 = vmatpush.msra.mxu0 0.0
        %3025 = vmatpush.msra.mxu0 %v664
        %3026 = vmatpush.msra.mxu0 %v653
        %3027 = vmatpush.msra.mxu0 %v652
        %3028 = vmatpush.msra.mxu0 %v651
        %3029 = vmatpush.msra.mxu0 %v650
        %3030 = vmatpush.msra.mxu0 %v649
        %3031 = vmatmul.f32.gmra.mxu0 %v913
        %v3032 = vpop.f32.mrf.mxu0
        %v3033 = vadd.f32 0.0, %v3032
        %3034 = vmatmul.f32.gmra.mxu0 %v915
        %v3035 = vpop.f32.mrf.mxu0
        %v3036 = vadd.f32 0.0, %v3035
        %3037 = vdwg.mxu0
        %v3038 = vadd.f32 %v3010, %v3033
        %v3039 = vadd.f32 %v3013, %v3036
        %3040 = vmatpush.msra.mxu0 0.0
        %3041 = vmatpush.msra.mxu0 0.0
        %3042 = vmatpush.msra.mxu0 0.0
        %3043 = vmatpush.msra.mxu0 0.0
        %3044 = vmatpush.msra.mxu0 0.0
        %3045 = vmatpush.msra.mxu0 0.0
        %3046 = vmatpush.msra.mxu0 0.0
        %3047 = vmatpush.msra.mxu0 0.0
        %3048 = vmatpush.msra.mxu0 0.0
        %3049 = vmatpush.msra.mxu0 0.0
        %3050 = vmatpush.msra.mxu0 %v707
        %3051 = vmatpush.msra.mxu0 %v696
        %3052 = vmatpush.msra.mxu0 %v695
        %3053 = vmatpush.msra.mxu0 %v694
        %3054 = vmatpush.msra.mxu0 %v693
        %3055 = vmatpush.msra.mxu0 %v692
        %3056 = vmatmul.f32.gmra.mxu0 %v956
        %v3057 = vpop.f32.mrf.mxu0
        %v3058 = vadd.f32 0.0, %v3057
        %3059 = vmatmul.f32.gmra.mxu0 %v958
        %v3060 = vpop.f32.mrf.mxu0
        %v3061 = vadd.f32 0.0, %v3060
        %3062 = vdwg.mxu0
        %v3063 = vadd.f32 %v3038, %v3058
        %v3064 = vadd.f32 %v3039, %v3061
        %3065 = vmatpush.msra.mxu0 0.0
        %3066 = vmatpush.msra.mxu0 0.0
        %3067 = vmatpush.msra.mxu0 0.0
        %3068 = vmatpush.msra.mxu0 0.0
        %3069 = vmatpush.msra.mxu0 0.0
        %3070 = vmatpush.msra.mxu0 0.0
        %3071 = vmatpush.msra.mxu0 0.0
        %3072 = vmatpush.msra.mxu0 0.0
        %3073 = vmatpush.msra.mxu0 0.0
        %3074 = vmatpush.msra.mxu0 0.0
        %3075 = vmatpush.msra.mxu0 %v750
        %3076 = vmatpush.msra.mxu0 %v739
        %3077 = vmatpush.msra.mxu0 %v738
        %3078 = vmatpush.msra.mxu0 %v737
        %3079 = vmatpush.msra.mxu0 %v736
        %3080 = vmatpush.msra.mxu0 %v735
        %3081 = vmatmul.f32.gmra.mxu0 %v1870
        %v3082 = vpop.f32.mrf.mxu0
        %v3083 = vadd.f32 0.0, %v3082
        %3084 = vmatmul.f32.gmra.mxu0 %v1872
        %v3085 = vpop.f32.mrf.mxu0
        %v3086 = vadd.f32 0.0, %v3085
        %3087 = vdwg.mxu0
        %v3088 = vadd.f32 %v3063, %v3083
        %v3089 = vadd.f32 %v3064, %v3086
        %3090 = vmatpush.msra.mxu0 0.0
        %3091 = vmatpush.msra.mxu0 0.0
        %3092 = vmatpush.msra.mxu0 0.0
        %3093 = vmatpush.msra.mxu0 0.0
        %3094 = vmatpush.msra.mxu0 0.0
        %3095 = vmatpush.msra.mxu0 0.0
        %3096 = vmatpush.msra.mxu0 0.0
        %3097 = vmatpush.msra.mxu0 0.0
        %3098 = vmatpush.msra.mxu0 0.0
        %3099 = vmatpush.msra.mxu0 0.0
        %3100 = vmatpush.msra.mxu0 %v791
        %3101 = vmatpush.msra.mxu0 %v782
        %3102 = vmatpush.msra.mxu0 %v781
        %3103 = vmatpush.msra.mxu0 %v780
        %3104 = vmatpush.msra.mxu0 %v779
        %3105 = vmatpush.msra.mxu0 %v778
        %3106 = vmatmul.f32.gmra.mxu0 %v1041
        %v3107 = vpop.f32.mrf.mxu0
        %v3108 = vadd.f32 0.0, %v3107
        %3109 = vmatmul.f32.gmra.mxu0 %v1043
        %v3110 = vpop.f32.mrf.mxu0
        %v3111 = vadd.f32 0.0, %v3110
        %3112 = vdwg.mxu0
        %v3113 = vadd.f32 %v3088, %v3108
        %v3114 = vadd.f32 %v3089, %v3111
        %3115 = vmatpush.msra.mxu0 0.0
        %3116 = vmatpush.msra.mxu0 0.0
        %3117 = vmatpush.msra.mxu0 0.0
        %3118 = vmatpush.msra.mxu0 0.0
        %3119 = vmatpush.msra.mxu0 0.0
        %3120 = vmatpush.msra.mxu0 0.0
        %3121 = vmatpush.msra.mxu0 0.0
        %3122 = vmatpush.msra.mxu0 0.0
        %3123 = vmatpush.msra.mxu0 0.0
        %3124 = vmatpush.msra.mxu0 0.0
        %3125 = vmatpush.msra.mxu0 %v832
        %3126 = vmatpush.msra.mxu0 %v823
        %3127 = vmatpush.msra.mxu0 %v822
        %3128 = vmatpush.msra.mxu0 %v821
        %3129 = vmatpush.msra.mxu0 %v820
        %3130 = vmatpush.msra.mxu0 %v819
        %3131 = vmatmul.f32.gmra.mxu0 %v1084
        %v3132 = vpop.f32.mrf.mxu0
        %v3133 = vadd.f32 0.0, %v3132
        %3134 = vmatmul.f32.gmra.mxu0 %v1086
        %v3135 = vpop.f32.mrf.mxu0
        %v3136 = vadd.f32 0.0, %v3135
        %3137 = vdwg.mxu0
        %v3138 = vadd.f32 %v3113, %v3133
        %v3139 = vadd.f32 %v3114, %v3136
        %3140 = vmatpush.msra.mxu0 0.0
        %3141 = vmatpush.msra.mxu0 0.0
        %3142 = vmatpush.msra.mxu0 0.0
        %3143 = vmatpush.msra.mxu0 0.0
        %3144 = vmatpush.msra.mxu0 0.0
        %3145 = vmatpush.msra.mxu0 0.0
        %3146 = vmatpush.msra.mxu0 0.0
        %3147 = vmatpush.msra.mxu0 0.0
        %3148 = vmatpush.msra.mxu0 0.0
        %3149 = vmatpush.msra.mxu0 0.0
        %3150 = vmatpush.msra.mxu0 %v875
        %3151 = vmatpush.msra.mxu0 %v864
        %3152 = vmatpush.msra.mxu0 %v863
        %3153 = vmatpush.msra.mxu0 %v862
        %3154 = vmatpush.msra.mxu0 %v861
        %3155 = vmatpush.msra.mxu0 %v860
        %3156 = vmatmul.f32.gmra.mxu0 %v1127
        %v3157 = vpop.f32.mrf.mxu0
        %v3158 = vadd.f32 0.0, %v3157
        %3159 = vmatmul.f32.gmra.mxu0 %v1129
        %v3160 = vpop.f32.mrf.mxu0
        %v3161 = vadd.f32 0.0, %v3160
        %3162 = vdwg.mxu0
        %v3163 = vadd.f32 %v3138, %v3158
        %v3164 = vadd.f32 %v3139, %v3161
        %3165 = vmatpush.msra.mxu0 0.0
        %3166 = vmatpush.msra.mxu0 0.0
        %3167 = vmatpush.msra.mxu0 0.0
        %3168 = vmatpush.msra.mxu0 0.0
        %3169 = vmatpush.msra.mxu0 0.0
        %3170 = vmatpush.msra.mxu0 0.0
        %3171 = vmatpush.msra.mxu0 0.0
        %3172 = vmatpush.msra.mxu0 0.0
        %3173 = vmatpush.msra.mxu0 0.0
        %3174 = vmatpush.msra.mxu0 0.0
        %3175 = vmatpush.msra.mxu0 %v918
        %3176 = vmatpush.msra.mxu0 %v907
        %3177 = vmatpush.msra.mxu0 %v906
        %3178 = vmatpush.msra.mxu0 %v905
        %3179 = vmatpush.msra.mxu0 %v904
        %3180 = vmatpush.msra.mxu0 %v903
        %3181 = vmatmul.f32.gmra.mxu0 %v1170
        %v3182 = vpop.f32.mrf.mxu0
        %v3183 = vadd.f32 0.0, %v3182
        %3184 = vmatmul.f32.gmra.mxu0 %v1172
        %v3185 = vpop.f32.mrf.mxu0
        %v3186 = vadd.f32 0.0, %v3185
        %3187 = vdwg.mxu0
        %v3188 = vadd.f32 %v3163, %v3183
        %v3189 = vadd.f32 %v3164, %v3186
        %3190 = vmatpush.msra.mxu0 0.0
        %3191 = vmatpush.msra.mxu0 0.0
        %3192 = vmatpush.msra.mxu0 0.0
        %3193 = vmatpush.msra.mxu0 0.0
        %3194 = vmatpush.msra.mxu0 0.0
        %3195 = vmatpush.msra.mxu0 0.0
        %3196 = vmatpush.msra.mxu0 0.0
        %3197 = vmatpush.msra.mxu0 0.0
        %3198 = vmatpush.msra.mxu0 0.0
        %3199 = vmatpush.msra.mxu0 0.0
        %3200 = vmatpush.msra.mxu0 %v961
        %3201 = vmatpush.msra.mxu0 %v950
        %3202 = vmatpush.msra.mxu0 %v949
        %3203 = vmatpush.msra.mxu0 %v948
        %3204 = vmatpush.msra.mxu0 %v947
        %3205 = vmatpush.msra.mxu0 %v946
        %3206 = vmatmul.f32.gmra.mxu0 %v2003
        %v3207 = vpop.f32.mrf.mxu0
        %v3208 = vadd.f32 0.0, %v3207
        %3209 = vmatmul.f32.gmra.mxu0 %v2005
        %v3210 = vpop.f32.mrf.mxu0
        %v3211 = vadd.f32 0.0, %v3210
        %3212 = vdwg.mxu0
        %v3213 = vadd.f32 %v3188, %v3208
        %v3214 = vadd.f32 %v3189, %v3211
        %3215 = vmatpush.msra.mxu0 0.0
        %3216 = vmatpush.msra.mxu0 0.0
        %3217 = vmatpush.msra.mxu0 0.0
        %3218 = vmatpush.msra.mxu0 0.0
        %3219 = vmatpush.msra.mxu0 0.0
        %3220 = vmatpush.msra.mxu0 0.0
        %3221 = vmatpush.msra.mxu0 0.0
        %3222 = vmatpush.msra.mxu0 0.0
        %3223 = vmatpush.msra.mxu0 0.0
        %3224 = vmatpush.msra.mxu0 0.0
        %3225 = vmatpush.msra.mxu0 %v1004
        %3226 = vmatpush.msra.mxu0 %v993
        %3227 = vmatpush.msra.mxu0 %v992
        %3228 = vmatpush.msra.mxu0 %v991
        %3229 = vmatpush.msra.mxu0 %v990
        %3230 = vmatpush.msra.mxu0 %v989
        %3231 = vmatmul.f32.gmra.mxu0 %v1254
        %v3232 = vpop.f32.mrf.mxu0
        %v3233 = vadd.f32 0.0, %v3232
        %3234 = vmatmul.f32.gmra.mxu0 %v1256
        %v3235 = vpop.f32.mrf.mxu0
        %v3236 = vadd.f32 0.0, %v3235
        %3237 = vdwg.mxu0
        %v3238 = vadd.f32 %v3213, %v3233
        %v3239 = vadd.f32 %v3214, %v3236
        %3240 = vmatpush.msra.mxu0 0.0
        %3241 = vmatpush.msra.mxu0 0.0
        %3242 = vmatpush.msra.mxu0 0.0
        %3243 = vmatpush.msra.mxu0 0.0
        %3244 = vmatpush.msra.mxu0 0.0
        %3245 = vmatpush.msra.mxu0 0.0
        %3246 = vmatpush.msra.mxu0 0.0
        %3247 = vmatpush.msra.mxu0 0.0
        %3248 = vmatpush.msra.mxu0 0.0
        %3249 = vmatpush.msra.mxu0 0.0
        %3250 = vmatpush.msra.mxu0 %v1046
        %3251 = vmatpush.msra.mxu0 %v1036
        %3252 = vmatpush.msra.mxu0 %v1035
        %3253 = vmatpush.msra.mxu0 %v1034
        %3254 = vmatpush.msra.mxu0 %v1033
        %3255 = vmatpush.msra.mxu0 %v1032
        %3256 = vmatmul.f32.gmra.mxu0 %v1297
        %v3257 = vpop.f32.mrf.mxu0
        %v3258 = vadd.f32 0.0, %v3257
        %3259 = vmatmul.f32.gmra.mxu0 %v1299
        %v3260 = vpop.f32.mrf.mxu0
        %v3261 = vadd.f32 0.0, %v3260
        %3262 = vdwg.mxu0
        %v3263 = vadd.f32 %v3238, %v3258
        %v3264 = vadd.f32 %v3239, %v3261
        %3265 = vmatpush.msra.mxu0 0.0
        %3266 = vmatpush.msra.mxu0 0.0
        %3267 = vmatpush.msra.mxu0 0.0
        %3268 = vmatpush.msra.mxu0 0.0
        %3269 = vmatpush.msra.mxu0 0.0
        %3270 = vmatpush.msra.mxu0 0.0
        %3271 = vmatpush.msra.mxu0 0.0
        %3272 = vmatpush.msra.mxu0 0.0
        %3273 = vmatpush.msra.mxu0 0.0
        %3274 = vmatpush.msra.mxu0 0.0
        %3275 = vmatpush.msra.mxu0 %v1089
        %3276 = vmatpush.msra.mxu0 %v1078
        %3277 = vmatpush.msra.mxu0 %v1077
        %3278 = vmatpush.msra.mxu0 %v1076
        %3279 = vmatpush.msra.mxu0 %v1075
        %3280 = vmatpush.msra.mxu0 %v1074
        %3281 = vmatmul.f32.gmra.mxu0 %v1340
        %v3282 = vpop.f32.mrf.mxu0
        %v3283 = vadd.f32 0.0, %v3282
        %3284 = vmatmul.f32.gmra.mxu0 %v1342
        %v3285 = vpop.f32.mrf.mxu0
        %v3286 = vadd.f32 0.0, %v3285
        %3287 = vdwg.mxu0
        %v3288 = vadd.f32 %v3263, %v3283
        %v3289 = vadd.f32 %v3264, %v3286
        %3290 = vmatpush.msra.mxu0 0.0
        %3291 = vmatpush.msra.mxu0 0.0
        %3292 = vmatpush.msra.mxu0 0.0
        %3293 = vmatpush.msra.mxu0 0.0
        %3294 = vmatpush.msra.mxu0 0.0
        %3295 = vmatpush.msra.mxu0 0.0
        %3296 = vmatpush.msra.mxu0 0.0
        %3297 = vmatpush.msra.mxu0 0.0
        %3298 = vmatpush.msra.mxu0 0.0
        %3299 = vmatpush.msra.mxu0 0.0
        %3300 = vmatpush.msra.mxu0 %v1132
        %3301 = vmatpush.msra.mxu0 %v1121
        %3302 = vmatpush.msra.mxu0 %v1120
        %3303 = vmatpush.msra.mxu0 %v1119
        %3304 = vmatpush.msra.mxu0 %v1118
        %3305 = vmatpush.msra.mxu0 %v1117
        %3306 = vmatmul.f32.gmra.mxu0 %v1383
        %v3307 = vpop.f32.mrf.mxu0
        %v3308 = vadd.f32 0.0, %v3307
        %3309 = vmatmul.f32.gmra.mxu0 %v1385
        %v3310 = vpop.f32.mrf.mxu0
        %v3311 = vadd.f32 0.0, %v3310
        %3312 = vdwg.mxu0
        %v3313 = vadd.f32 %v3288, %v3308
        %v3314 = vadd.f32 %v3289, %v3311
        %3315 = vmatpush.msra.mxu0 0.0
        %3316 = vmatpush.msra.mxu0 0.0
        %3317 = vmatpush.msra.mxu0 0.0
        %3318 = vmatpush.msra.mxu0 0.0
        %3319 = vmatpush.msra.mxu0 0.0
        %3320 = vmatpush.msra.mxu0 0.0
        %3321 = vmatpush.msra.mxu0 0.0
        %3322 = vmatpush.msra.mxu0 0.0
        %3323 = vmatpush.msra.mxu0 0.0
        %3324 = vmatpush.msra.mxu0 0.0
        %3325 = vmatpush.msra.mxu0 %v1175
        %3326 = vmatpush.msra.mxu0 %v1164
        %3327 = vmatpush.msra.mxu0 %v1163
        %3328 = vmatpush.msra.mxu0 %v1162
        %3329 = vmatpush.msra.mxu0 %v1161
        %3330 = vmatpush.msra.mxu0 %v1160
        %3331 = vmatmul.f32.gmra.mxu0 %v2136
        %v3332 = vpop.f32.mrf.mxu0
        %v3333 = vadd.f32 0.0, %v3332
        %3334 = vmatmul.f32.gmra.mxu0 %v2138
        %v3335 = vpop.f32.mrf.mxu0
        %v3336 = vadd.f32 0.0, %v3335
        %3337 = vdwg.mxu0
        %v3338 = vadd.f32 %v3313, %v3333
        %v3339 = vadd.f32 %v3314, %v3336
        %3340 = vmatpush.msra.mxu0 0.0
        %3341 = vmatpush.msra.mxu0 0.0
        %3342 = vmatpush.msra.mxu0 0.0
        %3343 = vmatpush.msra.mxu0 0.0
        %3344 = vmatpush.msra.mxu0 0.0
        %3345 = vmatpush.msra.mxu0 0.0
        %3346 = vmatpush.msra.mxu0 0.0
        %3347 = vmatpush.msra.mxu0 0.0
        %3348 = vmatpush.msra.mxu0 0.0
        %3349 = vmatpush.msra.mxu0 0.0
        %3350 = vmatpush.msra.mxu0 %v1217
        %3351 = vmatpush.msra.mxu0 %v1207
        %3352 = vmatpush.msra.mxu0 %v1206
        %3353 = vmatpush.msra.mxu0 %v1205
        %3354 = vmatpush.msra.mxu0 %v1204
        %3355 = vmatpush.msra.mxu0 %v1203
        %3356 = vmatmul.f32.gmra.mxu0 %v1468
        %v3357 = vpop.f32.mrf.mxu0
        %v3358 = vadd.f32 0.0, %v3357
        %3359 = vmatmul.f32.gmra.mxu0 %v1470
        %v3360 = vpop.f32.mrf.mxu0
        %v3361 = vadd.f32 0.0, %v3360
        %3362 = vdwg.mxu0
        %v3363 = vadd.f32 %v3338, %v3358
        %v3364 = vadd.f32 %v3339, %v3361
        %3365 = vmatpush.msra.mxu0 0.0
        %3366 = vmatpush.msra.mxu0 0.0
        %3367 = vmatpush.msra.mxu0 0.0
        %3368 = vmatpush.msra.mxu0 0.0
        %3369 = vmatpush.msra.mxu0 0.0
        %3370 = vmatpush.msra.mxu0 0.0
        %3371 = vmatpush.msra.mxu0 0.0
        %3372 = vmatpush.msra.mxu0 0.0
        %3373 = vmatpush.msra.mxu0 0.0
        %3374 = vmatpush.msra.mxu0 0.0
        %3375 = vmatpush.msra.mxu0 %v1259
        %3376 = vmatpush.msra.mxu0 %v1249
        %3377 = vmatpush.msra.mxu0 %v1248
        %3378 = vmatpush.msra.mxu0 %v1247
        %3379 = vmatpush.msra.mxu0 %v1246
        %3380 = vmatpush.msra.mxu0 %v1245
        %3381 = vmatmul.f32.gmra.mxu0 %v1511
        %v3382 = vpop.f32.mrf.mxu0
        %v3383 = vadd.f32 0.0, %v3382
        %3384 = vmatmul.f32.gmra.mxu0 %v1513
        %v3385 = vpop.f32.mrf.mxu0
        %v3386 = vadd.f32 0.0, %v3385
        %3387 = vdwg.mxu0
        %v3388 = vadd.f32 %v3363, %v3383
        %v3389 = vadd.f32 %v3364, %v3386
        %3390 = vmatpush.msra.mxu0 0.0
        %3391 = vmatpush.msra.mxu0 0.0
        %3392 = vmatpush.msra.mxu0 0.0
        %3393 = vmatpush.msra.mxu0 0.0
        %3394 = vmatpush.msra.mxu0 0.0
        %3395 = vmatpush.msra.mxu0 0.0
        %3396 = vmatpush.msra.mxu0 0.0
        %3397 = vmatpush.msra.mxu0 0.0
        %3398 = vmatpush.msra.mxu0 0.0
        %3399 = vmatpush.msra.mxu0 0.0
        %3400 = vmatpush.msra.mxu0 %v1302
        %3401 = vmatpush.msra.mxu0 %v1291
        %3402 = vmatpush.msra.mxu0 %v1290
        %3403 = vmatpush.msra.mxu0 %v1289
        %3404 = vmatpush.msra.mxu0 %v1288
        %3405 = vmatpush.msra.mxu0 %v1287
        %3406 = vmatmul.f32.gmra.mxu0 %v1554
        %v3407 = vpop.f32.mrf.mxu0
        %v3408 = vadd.f32 0.0, %v3407
        %3409 = vmatmul.f32.gmra.mxu0 %v1556
        %v3410 = vpop.f32.mrf.mxu0
        %v3411 = vadd.f32 0.0, %v3410
        %3412 = vdwg.mxu0
        %v3413 = vadd.f32 %v3388, %v3408
        %v3414 = vadd.f32 %v3389, %v3411
        %3415 = vmatpush.msra.mxu0 0.0
        %3416 = vmatpush.msra.mxu0 0.0
        %3417 = vmatpush.msra.mxu0 0.0
        %3418 = vmatpush.msra.mxu0 0.0
        %3419 = vmatpush.msra.mxu0 0.0
        %3420 = vmatpush.msra.mxu0 0.0
        %3421 = vmatpush.msra.mxu0 0.0
        %3422 = vmatpush.msra.mxu0 0.0
        %3423 = vmatpush.msra.mxu0 0.0
        %3424 = vmatpush.msra.mxu0 0.0
        %3425 = vmatpush.msra.mxu0 %v1345
        %3426 = vmatpush.msra.mxu0 %v1334
        %3427 = vmatpush.msra.mxu0 %v1333
        %3428 = vmatpush.msra.mxu0 %v1332
        %3429 = vmatpush.msra.mxu0 %v1331
        %3430 = vmatpush.msra.mxu0 %v1330
        %3431 = vmatmul.f32.gmra.mxu0 %v1597
        %v3432 = vpop.f32.mrf.mxu0
        %v3433 = vadd.f32 0.0, %v3432
        %3434 = vmatmul.f32.gmra.mxu0 %v1599
        %v3435 = vpop.f32.mrf.mxu0
        %v3436 = vadd.f32 0.0, %v3435
        %3437 = vdwg.mxu0
        %v3438 = vadd.f32 %v3413, %v3433
        %v3439 = vadd.f32 %v3414, %v3436
        %3440 = vmatpush.msra.mxu0 0.0
        %3441 = vmatpush.msra.mxu0 0.0
        %3442 = vmatpush.msra.mxu0 0.0
        %3443 = vmatpush.msra.mxu0 0.0
        %3444 = vmatpush.msra.mxu0 0.0
        %3445 = vmatpush.msra.mxu0 0.0
        %3446 = vmatpush.msra.mxu0 0.0
        %3447 = vmatpush.msra.mxu0 0.0
        %3448 = vmatpush.msra.mxu0 0.0
        %3449 = vmatpush.msra.mxu0 0.0
        %3450 = vmatpush.msra.mxu0 %v1388
        %3451 = vmatpush.msra.mxu0 %v1377
        %3452 = vmatpush.msra.mxu0 %v1376
        %3453 = vmatpush.msra.mxu0 %v1375
        %3454 = vmatpush.msra.mxu0 %v1374
        %3455 = vmatpush.msra.mxu0 %v1373
        %3456 = vmatmul.f32.gmra.mxu0 %v2269
        %v3457 = vpop.f32.mrf.mxu0
        %v3458 = vadd.f32 0.0, %v3457
        %3459 = vmatmul.f32.gmra.mxu0 %v2271
        %v3460 = vpop.f32.mrf.mxu0
        %v3461 = vadd.f32 0.0, %v3460
        %3462 = vdwg.mxu0
        %v3463 = vadd.f32 %v3438, %v3458
        %v3464 = vadd.f32 %v3439, %v3461
        %3465 = vmatpush.msra.mxu0 0.0
        %3466 = vmatpush.msra.mxu0 0.0
        %3467 = vmatpush.msra.mxu0 0.0
        %3468 = vmatpush.msra.mxu0 0.0
        %3469 = vmatpush.msra.mxu0 0.0
        %3470 = vmatpush.msra.mxu0 0.0
        %3471 = vmatpush.msra.mxu0 0.0
        %3472 = vmatpush.msra.mxu0 0.0
        %3473 = vmatpush.msra.mxu0 0.0
        %3474 = vmatpush.msra.mxu0 0.0
        %3475 = vmatpush.msra.mxu0 %v1431
        %3476 = vmatpush.msra.mxu0 %v1420
        %3477 = vmatpush.msra.mxu0 %v1419
        %3478 = vmatpush.msra.mxu0 %v1418
        %3479 = vmatpush.msra.mxu0 %v1417
        %3480 = vmatpush.msra.mxu0 %v1416
        %3481 = vmatmul.f32.gmra.mxu0 %v2835
        %v3482 = vpop.f32.mrf.mxu0
        %v3483 = vadd.f32 0.0, %v3482
        %3484 = vmatmul.f32.gmra.mxu0 %v2837
        %v3485 = vpop.f32.mrf.mxu0
        %v3486 = vadd.f32 0.0, %v3485
        %3487 = vdwg.mxu0
        %v3488 = vadd.f32 %v3463, %v3483
        %v3489 = vadd.f32 %v3464, %v3486
        %3490 = vmatpush.msra.mxu0 0.0
        %3491 = vmatpush.msra.mxu0 0.0
        %3492 = vmatpush.msra.mxu0 0.0
        %3493 = vmatpush.msra.mxu0 0.0
        %3494 = vmatpush.msra.mxu0 0.0
        %3495 = vmatpush.msra.mxu0 0.0
        %3496 = vmatpush.msra.mxu0 0.0
        %3497 = vmatpush.msra.mxu0 0.0
        %3498 = vmatpush.msra.mxu0 0.0
        %3499 = vmatpush.msra.mxu0 0.0
        %3500 = vmatpush.msra.mxu0 %v1473
        %3501 = vmatpush.msra.mxu0 %v1463
        %3502 = vmatpush.msra.mxu0 %v1462
        %3503 = vmatpush.msra.mxu0 %v1461
        %3504 = vmatpush.msra.mxu0 %v1460
        %3505 = vmatpush.msra.mxu0 %v1459
        %3506 = vmatmul.f32.gmra.mxu0 %v2868
        %v3507 = vpop.f32.mrf.mxu0
        %v3508 = vadd.f32 0.0, %v3507
        %3509 = vmatmul.f32.gmra.mxu0 %v2870
        %v3510 = vpop.f32.mrf.mxu0
        %v3511 = vadd.f32 0.0, %v3510
        %3512 = vdwg.mxu0
        %v3513 = vadd.f32 %v3488, %v3508
        %v3514 = vadd.f32 %v3489, %v3511
        %3515 = vmatpush.msra.mxu0 0.0
        %3516 = vmatpush.msra.mxu0 0.0
        %3517 = vmatpush.msra.mxu0 0.0
        %3518 = vmatpush.msra.mxu0 0.0
        %3519 = vmatpush.msra.mxu0 0.0
        %3520 = vmatpush.msra.mxu0 0.0
        %3521 = vmatpush.msra.mxu0 0.0
        %3522 = vmatpush.msra.mxu0 0.0
        %3523 = vmatpush.msra.mxu0 0.0
        %3524 = vmatpush.msra.mxu0 0.0
        %3525 = vmatpush.msra.mxu0 %v1516
        %3526 = vmatpush.msra.mxu0 %v1505
        %3527 = vmatpush.msra.mxu0 %v1504
        %3528 = vmatpush.msra.mxu0 %v1503
        %3529 = vmatpush.msra.mxu0 %v1502
        %3530 = vmatpush.msra.mxu0 %v1501
        %3531 = vmatmul.f32.gmra.mxu0 %v2901
        %v3532 = vpop.f32.mrf.mxu0
        %v3533 = vadd.f32 0.0, %v3532
        %3534 = vmatmul.f32.gmra.mxu0 %v2903
        %v3535 = vpop.f32.mrf.mxu0
        %v3536 = vadd.f32 0.0, %v3535
        %3537 = vdwg.mxu0
        %v3538 = vadd.f32 %v3513, %v3533
        %v3539 = vadd.f32 %v3514, %v3536
        %3540 = vmatpush.msra.mxu0 0.0
        %3541 = vmatpush.msra.mxu0 0.0
        %3542 = vmatpush.msra.mxu0 0.0
        %3543 = vmatpush.msra.mxu0 0.0
        %3544 = vmatpush.msra.mxu0 0.0
        %3545 = vmatpush.msra.mxu0 0.0
        %3546 = vmatpush.msra.mxu0 0.0
        %3547 = vmatpush.msra.mxu0 0.0
        %3548 = vmatpush.msra.mxu0 0.0
        %3549 = vmatpush.msra.mxu0 0.0
        %3550 = vmatpush.msra.mxu0 %v1559
        %3551 = vmatpush.msra.mxu0 %v1548
        %3552 = vmatpush.msra.mxu0 %v1547
        %3553 = vmatpush.msra.mxu0 %v1546
        %3554 = vmatpush.msra.mxu0 %v1545
        %3555 = vmatpush.msra.mxu0 %v1544
        %3556 = vmatmul.f32.gmra.mxu0 %v2934
        %v3557 = vpop.f32.mrf.mxu0
        %v3558 = vadd.f32 0.0, %v3557
        %3559 = vmatmul.f32.gmra.mxu0 %v2936
        %v3560 = vpop.f32.mrf.mxu0
        %v3561 = vadd.f32 0.0, %v3560
        %3562 = vdwg.mxu0
        %v3563 = vadd.f32 %v3538, %v3558
        %v3564 = vadd.f32 %v3539, %v3561
        %3565 = vrot.lane.b32.xlu0 %v2834, 122
        %v3566 = vpop.permute.xlu0 %3565
        %3567 = vrot.lane.b32.xlu0 %v2833, 122
        %v3568 = vpop.permute.xlu0 %3567
        %v3569 = vsel %vm582, %v3566, 0
        %v3571 = vsel %vm582, %v3568, 0
        %3573 = vmatpush.msra.mxu0 0.0
        %3574 = vmatpush.msra.mxu0 0.0
        %3575 = vmatpush.msra.mxu0 0.0
        %3576 = vmatpush.msra.mxu0 0.0
        %3577 = vmatpush.msra.mxu0 0.0
        %3578 = vmatpush.msra.mxu0 0.0
        %3579 = vmatpush.msra.mxu0 0.0
        %3580 = vmatpush.msra.mxu0 0.0
        %3581 = vmatpush.msra.mxu0 0.0
        %3582 = vmatpush.msra.mxu0 0.0
        %3583 = vmatpush.msra.mxu0 %v1602
        %3584 = vmatpush.msra.mxu0 %v1591
        %3585 = vmatpush.msra.mxu0 %v1590
        %3586 = vmatpush.msra.mxu0 %v1589
        %3587 = vmatpush.msra.mxu0 %v1588
        %3588 = vmatpush.msra.mxu0 %v1587
        %3589 = vmatmul.f32.gmra.mxu0 %v3569
        %v3590 = vpop.f32.mrf.mxu0
        %v3591 = vadd.f32 0.0, %v3590
        %3592 = vmatmul.f32.gmra.mxu0 %v3571
        %v3593 = vpop.f32.mrf.mxu0
        %v3594 = vadd.f32 0.0, %v3593
        %3595 = vdwg.mxu0
        %v3596 = vadd.f32 %v3563, %v3591
        %v3597 = vadd.f32 %v3564, %v3594
        %v3598 = vadd.f32 %v3596, %v1631
        %v3599 = vadd.f32 %v3597, %v1631
        %v3600 = vmax.f32 %v3598, 0.0
        %v3601 = vmax.f32 %v3599, 0.0
        %v3602 = vmax.f32 %v2967, %v3600
        %v3603 = vmax.f32 %v2968, %v3601
        %v3604 = vld [vmem:[#allocation8] sm:$0xff]
        %v3605 = vld [vmem:[#allocation8 + $0x8] sm:$0xff]
        %v3606 = vld [vmem:[#allocation8 + $0x10] sm:$0xff]
        %v3607 = vld [vmem:[#allocation8 + $0x18] sm:$0xff]
        %v3608 = vld [vmem:[#allocation8 + $0x20] sm:$0xff]
        %v3609 = vld [vmem:[#allocation8 + $0x28] sm:$0xff]
        %v3610 = vld [vmem:[#allocation8 + $0x30] sm:$0xff]
        %v3611 = vld [vmem:[#allocation8 + $0x38] sm:$0xff]
        %v3612 = vld [vmem:[#allocation8 + $0x40] sm:$0xff]
        %v3613 = vld [vmem:[#allocation8 + $0x48] sm:$0xff]
        %v3614 = vld [vmem:[#allocation8 + $0x50] sm:$0xff]
        %v3615 = vld [vmem:[#allocation8 + $0x58] sm:$0xff]
        %v3616 = vld [vmem:[#allocation8 + $0x60] sm:$0xff]
        %v3617 = vld [vmem:[#allocation8 + $0x68] sm:$0xff]
        %v3618 = vld [vmem:[#allocation8 + $0x70] sm:$0xff]
        %v3619 = vld [vmem:[#allocation8 + $0x78] sm:$0xff]
        %v3620 = vld [vmem:[#allocation8 + $0x80] sm:$0xff]
        %v3621 = vld [vmem:[#allocation8 + $0x88] sm:$0xff]
        %v3622 = vld [vmem:[#allocation8 + $0x90] sm:$0xff]
        %v3623 = vld [vmem:[#allocation8 + $0x98] sm:$0xff]
        %s3624 = scalar_lea.vmem [#allocation8], 160
        %v3625 = vld [vmem:[%s3624] sm:$0xff]
        %v3626 = vld [vmem:[%s3624 + $0x8] sm:$0xff]
        %v3627 = vld [vmem:[%s3624 + $0x10] sm:$0xff]
        %v3628 = vld [vmem:[%s3624 + $0x18] sm:$0xff]
        %v3629 = vld [vmem:[%s3624 + $0x20] sm:$0xff]
        %v3630 = vld [vmem:[%s3624 + $0x28] sm:$0xff]
        %v3631 = vld [vmem:[%s3624 + $0x30] sm:$0xff]
        %v3632 = vld [vmem:[%s3624 + $0x38] sm:$0xff]
        %v3633 = vld [vmem:[%s3624 + $0x40] sm:$0xff]
        %v3634 = vld [vmem:[%s3624 + $0x48] sm:$0xff]
        %v3635 = vld [vmem:[%s3624 + $0x50] sm:$0xff]
        %v3636 = vld [vmem:[%s3624 + $0x58] sm:$0xff]
        %v3637 = vld [vmem:[%s3624 + $0x60] sm:$0xff]
        %v3638 = vld [vmem:[%s3624 + $0x68] sm:$0xff]
        %v3639 = vld [vmem:[%s3624 + $0x70] sm:$0xff]
        %v3640 = vld [vmem:[%s3624 + $0x78] sm:$0xff]
        %v3641 = vld [vmem:[%s3624 + $0x80] sm:$0xff]
        %v3642 = vld [vmem:[%s3624 + $0x88] sm:$0xff]
        %v3643 = vld [vmem:[%s3624 + $0x90] sm:$0xff]
        %v3644 = vld [vmem:[%s3624 + $0x98] sm:$0xff]
        %3647 = vrot.lane.b32.xlu0 %v3602, 120
        %v3648 = vpop.permute.xlu0 %3647
        %3649 = vrot.lane.b32.xlu0 %v3603, 120
        %v3650 = vpop.permute.xlu0 %3649
        %vm3651 = vcmask 654336
        %v3652 = vsel %vm3651, %v3648, 0
        %v3654 = vsel %vm3651, %v3650, 0
        %3656 = vmatpush.msra.mxu0 0.0
        %3657 = vmatpush.msra.mxu0 0.0
        %3658 = vmatpush.msra.mxu0 0.0
        %3659 = vmatpush.msra.mxu0 0.0
        %3660 = vmatpush.msra.mxu0 0.0
        %3661 = vmatpush.msra.mxu0 0.0
        %3662 = vmatpush.msra.mxu0 %v3643
        %3663 = vmatpush.msra.mxu0 %v3641
        %3664 = vmatpush.msra.mxu0 %v3639
        %3665 = vmatpush.msra.mxu0 %v3637
        %3666 = vmatpush.msra.mxu0 %v3635
        %3667 = vmatpush.msra.mxu0 %v3633
        %3668 = vmatpush.msra.mxu0 %v3631
        %3669 = vmatpush.msra.mxu0 %v3629
        %3670 = vmatpush.msra.mxu0 %v3627
        %3671 = vmatpush.msra.mxu0 %v3625
        %3672 = vmatmul.f32.gmra.mxu0 %v3652
        %v3673 = vpop.f32.mrf.mxu0
        %v3674 = vadd.f32 0.0, %v3673
        %3675 = vmatmul.f32.gmra.mxu0 %v3654
        %v3676 = vpop.f32.mrf.mxu0
        %v3677 = vadd.f32 0.0, %v3676
        %3678 = vdwg.mxu0
        %3679 = vmatpush.msra.mxu0 0.0
        %3680 = vmatpush.msra.mxu0 0.0
        %3681 = vmatpush.msra.mxu0 0.0
        %3682 = vmatpush.msra.mxu0 0.0
        %3683 = vmatpush.msra.mxu0 0.0
        %3684 = vmatpush.msra.mxu0 0.0
        %3685 = vmatpush.msra.mxu0 %v3644
        %3686 = vmatpush.msra.mxu0 %v3642
        %3687 = vmatpush.msra.mxu0 %v3640
        %3688 = vmatpush.msra.mxu0 %v3638
        %3689 = vmatpush.msra.mxu0 %v3636
        %3690 = vmatpush.msra.mxu0 %v3634
        %3691 = vmatpush.msra.mxu0 %v3632
        %3692 = vmatpush.msra.mxu0 %v3630
        %3693 = vmatpush.msra.mxu0 %v3628
        %3694 = vmatpush.msra.mxu0 %v3626
        %3695 = vmatmul.f32.gmra.mxu0 %v3652
        %v3696 = vpop.f32.mrf.mxu0
        %v3697 = vadd.f32 0.0, %v3696
        %3698 = vmatmul.f32.gmra.mxu0 %v3654
        %v3699 = vpop.f32.mrf.mxu0
        %v3700 = vadd.f32 0.0, %v3699
        %3701 = vdwg.mxu0
        %v3702 = vsel %vm3651, %v3602, 0
        %v3704 = vsel %vm3651, %v3603, 0
        %3706 = vmatpush.msra.mxu0 0.0
        %3707 = vmatpush.msra.mxu0 0.0
        %3708 = vmatpush.msra.mxu0 0.0
        %3709 = vmatpush.msra.mxu0 0.0
        %3710 = vmatpush.msra.mxu0 0.0
        %3711 = vmatpush.msra.mxu0 0.0
        %3712 = vmatpush.msra.mxu0 %v3622
        %3713 = vmatpush.msra.mxu0 %v3620
        %3714 = vmatpush.msra.mxu0 %v3618
        %3715 = vmatpush.msra.mxu0 %v3616
        %3716 = vmatpush.msra.mxu0 %v3614
        %3717 = vmatpush.msra.mxu0 %v3612
        %3718 = vmatpush.msra.mxu0 %v3610
        %3719 = vmatpush.msra.mxu0 %v3608
        %3720 = vmatpush.msra.mxu0 %v3606
        %3721 = vmatpush.msra.mxu0 %v3604
        %3722 = vmatmul.f32.gmra.mxu0 %v3702
        %v3723 = vpop.f32.mrf.mxu0
        %v3724 = vadd.f32 %v3674, %v3723
        %3725 = vmatmul.f32.gmra.mxu0 %v3704
        %v3726 = vpop.f32.mrf.mxu0
        %v3727 = vadd.f32 %v3677, %v3726
        %3728 = vdwg.mxu0
        %3729 = vmatpush.msra.mxu0 0.0
        %3730 = vmatpush.msra.mxu0 0.0
        %3731 = vmatpush.msra.mxu0 0.0
        %3732 = vmatpush.msra.mxu0 0.0
        %3733 = vmatpush.msra.mxu0 0.0
        %3734 = vmatpush.msra.mxu0 0.0
        %3735 = vmatpush.msra.mxu0 %v3623
        %3736 = vmatpush.msra.mxu0 %v3621
        %3737 = vmatpush.msra.mxu0 %v3619
        %3738 = vmatpush.msra.mxu0 %v3617
        %3739 = vmatpush.msra.mxu0 %v3615
        %3740 = vmatpush.msra.mxu0 %v3613
        %3741 = vmatpush.msra.mxu0 %v3611
        %3742 = vmatpush.msra.mxu0 %v3609
        %3743 = vmatpush.msra.mxu0 %v3607
        %3744 = vmatpush.msra.mxu0 %v3605
        %3745 = vmatmul.f32.gmra.mxu0 %v3702
        %v3746 = vpop.f32.mrf.mxu0
        %v3747 = vadd.f32 %v3697, %v3746
        %3748 = vmatmul.f32.gmra.mxu0 %v3704
        %v3749 = vpop.f32.mrf.mxu0
        %v3750 = vadd.f32 %v3700, %v3749
        %3751 = vdwg.mxu0
        %s3752 = scalar_lea.vmem [#allocation8], 320
        %v3753 = vld [vmem:[%s3752] sm:$0xff]
        %v3754 = vld [vmem:[%s3752 + $0x8] sm:$0xff]
        %v3755 = vld [vmem:[%s3752 + $0x10] sm:$0xff]
        %v3756 = vld [vmem:[%s3752 + $0x18] sm:$0xff]
        %v3757 = vld [vmem:[%s3752 + $0x20] sm:$0xff]
        %v3758 = vld [vmem:[%s3752 + $0x28] sm:$0xff]
        %v3759 = vld [vmem:[%s3752 + $0x30] sm:$0xff]
        %v3760 = vld [vmem:[%s3752 + $0x38] sm:$0xff]
        %v3761 = vld [vmem:[%s3752 + $0x40] sm:$0xff]
        %v3762 = vld [vmem:[%s3752 + $0x48] sm:$0xff]
        %v3763 = vld [vmem:[%s3752 + $0x50] sm:$0xff]
        %v3764 = vld [vmem:[%s3752 + $0x58] sm:$0xff]
        %v3765 = vld [vmem:[%s3752 + $0x60] sm:$0xff]
        %v3766 = vld [vmem:[%s3752 + $0x68] sm:$0xff]
        %v3767 = vld [vmem:[%s3752 + $0x70] sm:$0xff]
        %v3768 = vld [vmem:[%s3752 + $0x78] sm:$0xff]
        %v3769 = vld [vmem:[%s3752 + $0x80] sm:$0xff]
        %v3770 = vld [vmem:[%s3752 + $0x88] sm:$0xff]
        %v3771 = vld [vmem:[%s3752 + $0x90] sm:$0xff]
        %v3772 = vld [vmem:[%s3752 + $0x98] sm:$0xff]
        %3773 = vrot.lane.b32.xlu0 %v3602, 112
        %v3774 = vpop.permute.xlu0 %3773
        %3775 = vrot.lane.b32.xlu0 %v3603, 112
        %v3776 = vpop.permute.xlu0 %3775
        %v3777 = vsel %vm3651, %v3774, 0
        %v3779 = vsel %vm3651, %v3776, 0
        %3781 = vmatpush.msra.mxu0 0.0
        %3782 = vmatpush.msra.mxu0 0.0
        %3783 = vmatpush.msra.mxu0 0.0
        %3784 = vmatpush.msra.mxu0 0.0
        %3785 = vmatpush.msra.mxu0 0.0
        %3786 = vmatpush.msra.mxu0 0.0
        %3787 = vmatpush.msra.mxu0 %v3771
        %3788 = vmatpush.msra.mxu0 %v3769
        %3789 = vmatpush.msra.mxu0 %v3767
        %3790 = vmatpush.msra.mxu0 %v3765
        %3791 = vmatpush.msra.mxu0 %v3763
        %3792 = vmatpush.msra.mxu0 %v3761
        %3793 = vmatpush.msra.mxu0 %v3759
        %3794 = vmatpush.msra.mxu0 %v3757
        %3795 = vmatpush.msra.mxu0 %v3755
        %3796 = vmatpush.msra.mxu0 %v3753
        %3797 = vmatmul.f32.gmra.mxu0 %v3777
        %v3798 = vpop.f32.mrf.mxu0
        %v3799 = vadd.f32 0.0, %v3798
        %3800 = vmatmul.f32.gmra.mxu0 %v3779
        %v3801 = vpop.f32.mrf.mxu0
        %v3802 = vadd.f32 0.0, %v3801
        %3803 = vdwg.mxu0
        %3804 = vmatpush.msra.mxu0 0.0
        %3805 = vmatpush.msra.mxu0 0.0
        %3806 = vmatpush.msra.mxu0 0.0
        %3807 = vmatpush.msra.mxu0 0.0
        %3808 = vmatpush.msra.mxu0 0.0
        %3809 = vmatpush.msra.mxu0 0.0
        %3810 = vmatpush.msra.mxu0 %v3772
        %3811 = vmatpush.msra.mxu0 %v3770
        %3812 = vmatpush.msra.mxu0 %v3768
        %3813 = vmatpush.msra.mxu0 %v3766
        %3814 = vmatpush.msra.mxu0 %v3764
        %3815 = vmatpush.msra.mxu0 %v3762
        %3816 = vmatpush.msra.mxu0 %v3760
        %3817 = vmatpush.msra.mxu0 %v3758
        %3818 = vmatpush.msra.mxu0 %v3756
        %3819 = vmatpush.msra.mxu0 %v3754
        %3820 = vmatmul.f32.gmra.mxu0 %v3777
        %v3821 = vpop.f32.mrf.mxu0
        %v3822 = vadd.f32 0.0, %v3821
        %3823 = vmatmul.f32.gmra.mxu0 %v3779
        %v3824 = vpop.f32.mrf.mxu0
        %v3825 = vadd.f32 0.0, %v3824
        %3826 = vdwg.mxu0
        %v3827 = vadd.f32 %v3724, %v3799
        %v3828 = vadd.f32 %v3747, %v3822
        %v3829 = vadd.f32 %v3727, %v3802
        %v3830 = vadd.f32 %v3750, %v3825
        %s3831 = scalar_lea.vmem [#allocation8], 480
        %v3832 = vld [vmem:[%s3831] sm:$0xff]
        %v3833 = vld [vmem:[%s3831 + $0x8] sm:$0xff]
        %v3834 = vld [vmem:[%s3831 + $0x10] sm:$0xff]
        %v3835 = vld [vmem:[%s3831 + $0x18] sm:$0xff]
        %v3836 = vld [vmem:[%s3831 + $0x20] sm:$0xff]
        %v3837 = vld [vmem:[%s3831 + $0x28] sm:$0xff]
        %v3838 = vld [vmem:[%s3831 + $0x30] sm:$0xff]
        %v3839 = vld [vmem:[%s3831 + $0x38] sm:$0xff]
        %v3840 = vld [vmem:[%s3831 + $0x40] sm:$0xff]
        %v3841 = vld [vmem:[%s3831 + $0x48] sm:$0xff]
        %v3842 = vld [vmem:[%s3831 + $0x50] sm:$0xff]
        %v3843 = vld [vmem:[%s3831 + $0x58] sm:$0xff]
        %v3844 = vld [vmem:[%s3831 + $0x60] sm:$0xff]
        %v3845 = vld [vmem:[%s3831 + $0x68] sm:$0xff]
        %v3846 = vld [vmem:[%s3831 + $0x70] sm:$0xff]
        %v3847 = vld [vmem:[%s3831 + $0x78] sm:$0xff]
        %v3848 = vld [vmem:[%s3831 + $0x80] sm:$0xff]
        %v3849 = vld [vmem:[%s3831 + $0x88] sm:$0xff]
        %v3850 = vld [vmem:[%s3831 + $0x90] sm:$0xff]
        %v3851 = vld [vmem:[%s3831 + $0x98] sm:$0xff]
        %3852 = vrot.lane.b32.xlu0 %v3602, 104
        %v3853 = vpop.permute.xlu0 %3852
        %3854 = vrot.lane.b32.xlu0 %v3603, 104
        %v3855 = vpop.permute.xlu0 %3854
        %v3856 = vsel %vm3651, %v3853, 0
        %v3858 = vsel %vm3651, %v3855, 0
        %3860 = vmatpush.msra.mxu0 0.0
        %3861 = vmatpush.msra.mxu0 0.0
        %3862 = vmatpush.msra.mxu0 0.0
        %3863 = vmatpush.msra.mxu0 0.0
        %3864 = vmatpush.msra.mxu0 0.0
        %3865 = vmatpush.msra.mxu0 0.0
        %3866 = vmatpush.msra.mxu0 %v3850
        %3867 = vmatpush.msra.mxu0 %v3848
        %3868 = vmatpush.msra.mxu0 %v3846
        %3869 = vmatpush.msra.mxu0 %v3844
        %3870 = vmatpush.msra.mxu0 %v3842
        %3871 = vmatpush.msra.mxu0 %v3840
        %3872 = vmatpush.msra.mxu0 %v3838
        %3873 = vmatpush.msra.mxu0 %v3836
        %3874 = vmatpush.msra.mxu0 %v3834
        %3875 = vmatpush.msra.mxu0 %v3832
        %3876 = vmatmul.f32.gmra.mxu0 %v3856
        %v3877 = vpop.f32.mrf.mxu0
        %v3878 = vadd.f32 0.0, %v3877
        %3879 = vmatmul.f32.gmra.mxu0 %v3858
        %v3880 = vpop.f32.mrf.mxu0
        %v3881 = vadd.f32 0.0, %v3880
        %3882 = vdwg.mxu0
        %3883 = vmatpush.msra.mxu0 0.0
        %3884 = vmatpush.msra.mxu0 0.0
        %3885 = vmatpush.msra.mxu0 0.0
        %3886 = vmatpush.msra.mxu0 0.0
        %3887 = vmatpush.msra.mxu0 0.0
        %3888 = vmatpush.msra.mxu0 0.0
        %3889 = vmatpush.msra.mxu0 %v3851
        %3890 = vmatpush.msra.mxu0 %v3849
        %3891 = vmatpush.msra.mxu0 %v3847
        %3892 = vmatpush.msra.mxu0 %v3845
        %3893 = vmatpush.msra.mxu0 %v3843
        %3894 = vmatpush.msra.mxu0 %v3841
        %3895 = vmatpush.msra.mxu0 %v3839
        %3896 = vmatpush.msra.mxu0 %v3837
        %3897 = vmatpush.msra.mxu0 %v3835
        %3898 = vmatpush.msra.mxu0 %v3833
        %3899 = vmatmul.f32.gmra.mxu0 %v3856
        %v3900 = vpop.f32.mrf.mxu0
        %v3901 = vadd.f32 0.0, %v3900
        %3902 = vmatmul.f32.gmra.mxu0 %v3858
        %v3903 = vpop.f32.mrf.mxu0
        %v3904 = vadd.f32 0.0, %v3903
        %3905 = vdwg.mxu0
        %v3906 = vadd.f32 %v3827, %v3878
        %v3907 = vadd.f32 %v3828, %v3901
        %v3908 = vadd.f32 %v3829, %v3881
        %v3909 = vadd.f32 %v3830, %v3904
        %s3910 = scalar_lea.vmem [#allocation8], 640
        %v3911 = vld [vmem:[%s3910] sm:$0xff]
        %v3912 = vld [vmem:[%s3910 + $0x8] sm:$0xff]
        %v3913 = vld [vmem:[%s3910 + $0x10] sm:$0xff]
        %v3914 = vld [vmem:[%s3910 + $0x18] sm:$0xff]
        %v3915 = vld [vmem:[%s3910 + $0x20] sm:$0xff]
        %v3916 = vld [vmem:[%s3910 + $0x28] sm:$0xff]
        %v3917 = vld [vmem:[%s3910 + $0x30] sm:$0xff]
        %v3918 = vld [vmem:[%s3910 + $0x38] sm:$0xff]
        %v3919 = vld [vmem:[%s3910 + $0x40] sm:$0xff]
        %v3920 = vld [vmem:[%s3910 + $0x48] sm:$0xff]
        %v3921 = vld [vmem:[%s3910 + $0x50] sm:$0xff]
        %v3922 = vld [vmem:[%s3910 + $0x58] sm:$0xff]
        %v3923 = vld [vmem:[%s3910 + $0x60] sm:$0xff]
        %v3924 = vld [vmem:[%s3910 + $0x68] sm:$0xff]
        %v3925 = vld [vmem:[%s3910 + $0x70] sm:$0xff]
        %v3926 = vld [vmem:[%s3910 + $0x78] sm:$0xff]
        %v3927 = vld [vmem:[%s3910 + $0x80] sm:$0xff]
        %v3928 = vld [vmem:[%s3910 + $0x88] sm:$0xff]
        %v3929 = vld [vmem:[%s3910 + $0x90] sm:$0xff]
        %v3930 = vld [vmem:[%s3910 + $0x98] sm:$0xff]
        %3931 = vrot.lane.b32.xlu0 %v3602, 96
        %v3932 = vpop.permute.xlu0 %3931
        %3933 = vrot.lane.b32.xlu0 %v3603, 96
        %v3934 = vpop.permute.xlu0 %3933
        %v3935 = vsel %vm3651, %v3932, 0
        %v3937 = vsel %vm3651, %v3934, 0
        %3939 = vmatpush.msra.mxu0 0.0
        %3940 = vmatpush.msra.mxu0 0.0
        %3941 = vmatpush.msra.mxu0 0.0
        %3942 = vmatpush.msra.mxu0 0.0
        %3943 = vmatpush.msra.mxu0 0.0
        %3944 = vmatpush.msra.mxu0 0.0
        %3945 = vmatpush.msra.mxu0 %v3929
        %3946 = vmatpush.msra.mxu0 %v3927
        %3947 = vmatpush.msra.mxu0 %v3925
        %3948 = vmatpush.msra.mxu0 %v3923
        %3949 = vmatpush.msra.mxu0 %v3921
        %3950 = vmatpush.msra.mxu0 %v3919
        %3951 = vmatpush.msra.mxu0 %v3917
        %3952 = vmatpush.msra.mxu0 %v3915
        %3953 = vmatpush.msra.mxu0 %v3913
        %3954 = vmatpush.msra.mxu0 %v3911
        %3955 = vmatmul.f32.gmra.mxu0 %v3935
        %v3956 = vpop.f32.mrf.mxu0
        %v3957 = vadd.f32 0.0, %v3956
        %3958 = vmatmul.f32.gmra.mxu0 %v3937
        %v3959 = vpop.f32.mrf.mxu0
        %v3960 = vadd.f32 0.0, %v3959
        %3961 = vdwg.mxu0
        %3962 = vmatpush.msra.mxu0 0.0
        %3963 = vmatpush.msra.mxu0 0.0
        %3964 = vmatpush.msra.mxu0 0.0
        %3965 = vmatpush.msra.mxu0 0.0
        %3966 = vmatpush.msra.mxu0 0.0
        %3967 = vmatpush.msra.mxu0 0.0
        %3968 = vmatpush.msra.mxu0 %v3930
        %3969 = vmatpush.msra.mxu0 %v3928
        %3970 = vmatpush.msra.mxu0 %v3926
        %3971 = vmatpush.msra.mxu0 %v3924
        %3972 = vmatpush.msra.mxu0 %v3922
        %3973 = vmatpush.msra.mxu0 %v3920
        %3974 = vmatpush.msra.mxu0 %v3918
        %3975 = vmatpush.msra.mxu0 %v3916
        %3976 = vmatpush.msra.mxu0 %v3914
        %3977 = vmatpush.msra.mxu0 %v3912
        %3978 = vmatmul.f32.gmra.mxu0 %v3935
        %v3979 = vpop.f32.mrf.mxu0
        %v3980 = vadd.f32 0.0, %v3979
        %3981 = vmatmul.f32.gmra.mxu0 %v3937
        %v3982 = vpop.f32.mrf.mxu0
        %v3983 = vadd.f32 0.0, %v3982
        %3984 = vdwg.mxu0
        %v3985 = vadd.f32 %v3906, %v3957
        %v3986 = vadd.f32 %v3907, %v3980
        %v3987 = vadd.f32 %v3908, %v3960
        %v3988 = vadd.f32 %v3909, %v3983
        %s3989 = scalar_lea.vmem [#allocation8], 800
        %v3990 = vld [vmem:[%s3989] sm:$0xff]
        %v3991 = vld [vmem:[%s3989 + $0x8] sm:$0xff]
        %v3992 = vld [vmem:[%s3989 + $0x10] sm:$0xff]
        %v3993 = vld [vmem:[%s3989 + $0x18] sm:$0xff]
        %v3994 = vld [vmem:[%s3989 + $0x20] sm:$0xff]
        %v3995 = vld [vmem:[%s3989 + $0x28] sm:$0xff]
        %v3996 = vld [vmem:[%s3989 + $0x30] sm:$0xff]
        %v3997 = vld [vmem:[%s3989 + $0x38] sm:$0xff]
        %v3998 = vld [vmem:[%s3989 + $0x40] sm:$0xff]
        %v3999 = vld [vmem:[%s3989 + $0x48] sm:$0xff]
        %v4000 = vld [vmem:[%s3989 + $0x50] sm:$0xff]
        %v4001 = vld [vmem:[%s3989 + $0x58] sm:$0xff]
        %v4002 = vld [vmem:[%s3989 + $0x60] sm:$0xff]
        %v4003 = vld [vmem:[%s3989 + $0x68] sm:$0xff]
        %v4004 = vld [vmem:[%s3989 + $0x70] sm:$0xff]
        %v4005 = vld [vmem:[%s3989 + $0x78] sm:$0xff]
        %v4006 = vld [vmem:[%s3989 + $0x80] sm:$0xff]
        %v4007 = vld [vmem:[%s3989 + $0x88] sm:$0xff]
        %v4008 = vld [vmem:[%s3989 + $0x90] sm:$0xff]
        %v4009 = vld [vmem:[%s3989 + $0x98] sm:$0xff]
        %v4010 = vrot.slane %v3602, 1
        %v4011 = vrot.slane %v3603, 1
        %v4012 = vsel %vm995, %v4010, %v4011
        %v4013 = vsel %vm3651, %v4012, 0
        %v4015 = vsel %vm3651, %v4011, 0
        %4017 = vmatpush.msra.mxu0 0.0
        %4018 = vmatpush.msra.mxu0 0.0
        %4019 = vmatpush.msra.mxu0 0.0
        %4020 = vmatpush.msra.mxu0 0.0
        %4021 = vmatpush.msra.mxu0 0.0
        %4022 = vmatpush.msra.mxu0 0.0
        %4023 = vmatpush.msra.mxu0 %v4008
        %4024 = vmatpush.msra.mxu0 %v4006
        %4025 = vmatpush.msra.mxu0 %v4004
        %4026 = vmatpush.msra.mxu0 %v4002
        %4027 = vmatpush.msra.mxu0 %v4000
        %4028 = vmatpush.msra.mxu0 %v3998
        %4029 = vmatpush.msra.mxu0 %v3996
        %4030 = vmatpush.msra.mxu0 %v3994
        %4031 = vmatpush.msra.mxu0 %v3992
        %4032 = vmatpush.msra.mxu0 %v3990
        %4033 = vmatmul.f32.gmra.mxu0 %v4013
        %v4034 = vpop.f32.mrf.mxu0
        %v4035 = vadd.f32 0.0, %v4034
        %4036 = vmatmul.f32.gmra.mxu0 %v4015
        %v4037 = vpop.f32.mrf.mxu0
        %v4038 = vadd.f32 0.0, %v4037
        %4039 = vdwg.mxu0
        %4040 = vmatpush.msra.mxu0 0.0
        %4041 = vmatpush.msra.mxu0 0.0
        %4042 = vmatpush.msra.mxu0 0.0
        %4043 = vmatpush.msra.mxu0 0.0
        %4044 = vmatpush.msra.mxu0 0.0
        %4045 = vmatpush.msra.mxu0 0.0
        %4046 = vmatpush.msra.mxu0 %v4009
        %4047 = vmatpush.msra.mxu0 %v4007
        %4048 = vmatpush.msra.mxu0 %v4005
        %4049 = vmatpush.msra.mxu0 %v4003
        %4050 = vmatpush.msra.mxu0 %v4001
        %4051 = vmatpush.msra.mxu0 %v3999
        %4052 = vmatpush.msra.mxu0 %v3997
        %4053 = vmatpush.msra.mxu0 %v3995
        %4054 = vmatpush.msra.mxu0 %v3993
        %4055 = vmatpush.msra.mxu0 %v3991
        %4056 = vmatmul.f32.gmra.mxu0 %v4013
        %v4057 = vpop.f32.mrf.mxu0
        %v4058 = vadd.f32 0.0, %v4057
        %4059 = vmatmul.f32.gmra.mxu0 %v4015
        %v4060 = vpop.f32.mrf.mxu0
        %v4061 = vadd.f32 0.0, %v4060
        %4062 = vdwg.mxu0
        %v4063 = vadd.f32 %v3985, %v4035
        %v4064 = vadd.f32 %v3986, %v4058
        %v4065 = vadd.f32 %v3987, %v4038
        %v4066 = vadd.f32 %v3988, %v4061
        %s4067 = scalar_lea.vmem [#allocation8], 960
        %v4068 = vld [vmem:[%s4067] sm:$0xff]
        %v4069 = vld [vmem:[%s4067 + $0x8] sm:$0xff]
        %v4070 = vld [vmem:[%s4067 + $0x10] sm:$0xff]
        %v4071 = vld [vmem:[%s4067 + $0x18] sm:$0xff]
        %v4072 = vld [vmem:[%s4067 + $0x20] sm:$0xff]
        %v4073 = vld [vmem:[%s4067 + $0x28] sm:$0xff]
        %v4074 = vld [vmem:[%s4067 + $0x30] sm:$0xff]
        %v4075 = vld [vmem:[%s4067 + $0x38] sm:$0xff]
        %v4076 = vld [vmem:[%s4067 + $0x40] sm:$0xff]
        %v4077 = vld [vmem:[%s4067 + $0x48] sm:$0xff]
        %v4078 = vld [vmem:[%s4067 + $0x50] sm:$0xff]
        %v4079 = vld [vmem:[%s4067 + $0x58] sm:$0xff]
        %v4080 = vld [vmem:[%s4067 + $0x60] sm:$0xff]
        %v4081 = vld [vmem:[%s4067 + $0x68] sm:$0xff]
        %v4082 = vld [vmem:[%s4067 + $0x70] sm:$0xff]
        %v4083 = vld [vmem:[%s4067 + $0x78] sm:$0xff]
        %v4084 = vld [vmem:[%s4067 + $0x80] sm:$0xff]
        %v4085 = vld [vmem:[%s4067 + $0x88] sm:$0xff]
        %v4086 = vld [vmem:[%s4067 + $0x90] sm:$0xff]
        %v4087 = vld [vmem:[%s4067 + $0x98] sm:$0xff]
        %4088 = vrot.lane.b32.xlu0 %v4012, 120
        %v4089 = vpop.permute.xlu0 %4088
        %4090 = vrot.lane.b32.xlu0 %v4011, 120
        %v4091 = vpop.permute.xlu0 %4090
        %v4092 = vsel %vm3651, %v4089, 0
        %v4094 = vsel %vm3651, %v4091, 0
        %4096 = vmatpush.msra.mxu0 0.0
        %4097 = vmatpush.msra.mxu0 0.0
        %4098 = vmatpush.msra.mxu0 0.0
        %4099 = vmatpush.msra.mxu0 0.0
        %4100 = vmatpush.msra.mxu0 0.0
        %4101 = vmatpush.msra.mxu0 0.0
        %4102 = vmatpush.msra.mxu0 %v4086
        %4103 = vmatpush.msra.mxu0 %v4084
        %4104 = vmatpush.msra.mxu0 %v4082
        %4105 = vmatpush.msra.mxu0 %v4080
        %4106 = vmatpush.msra.mxu0 %v4078
        %4107 = vmatpush.msra.mxu0 %v4076
        %4108 = vmatpush.msra.mxu0 %v4074
        %4109 = vmatpush.msra.mxu0 %v4072
        %4110 = vmatpush.msra.mxu0 %v4070
        %4111 = vmatpush.msra.mxu0 %v4068
        %4112 = vmatmul.f32.gmra.mxu0 %v4092
        %v4113 = vpop.f32.mrf.mxu0
        %v4114 = vadd.f32 0.0, %v4113
        %4115 = vmatmul.f32.gmra.mxu0 %v4094
        %v4116 = vpop.f32.mrf.mxu0
        %v4117 = vadd.f32 0.0, %v4116
        %4118 = vdwg.mxu0
        %4119 = vmatpush.msra.mxu0 0.0
        %4120 = vmatpush.msra.mxu0 0.0
        %4121 = vmatpush.msra.mxu0 0.0
        %4122 = vmatpush.msra.mxu0 0.0
        %4123 = vmatpush.msra.mxu0 0.0
        %4124 = vmatpush.msra.mxu0 0.0
        %4125 = vmatpush.msra.mxu0 %v4087
        %4126 = vmatpush.msra.mxu0 %v4085
        %4127 = vmatpush.msra.mxu0 %v4083
        %4128 = vmatpush.msra.mxu0 %v4081
        %4129 = vmatpush.msra.mxu0 %v4079
        %4130 = vmatpush.msra.mxu0 %v4077
        %4131 = vmatpush.msra.mxu0 %v4075
        %4132 = vmatpush.msra.mxu0 %v4073
        %4133 = vmatpush.msra.mxu0 %v4071
        %4134 = vmatpush.msra.mxu0 %v4069
        %4135 = vmatmul.f32.gmra.mxu0 %v4092
        %v4136 = vpop.f32.mrf.mxu0
        %v4137 = vadd.f32 0.0, %v4136
        %4138 = vmatmul.f32.gmra.mxu0 %v4094
        %v4139 = vpop.f32.mrf.mxu0
        %v4140 = vadd.f32 0.0, %v4139
        %4141 = vdwg.mxu0
        %v4142 = vadd.f32 %v4063, %v4114
        %v4143 = vadd.f32 %v4064, %v4137
        %v4144 = vadd.f32 %v4065, %v4117
        %v4145 = vadd.f32 %v4066, %v4140
        %s4146 = scalar_lea.vmem [#allocation8], 1120
        %v4147 = vld [vmem:[%s4146] sm:$0xff]
        %v4148 = vld [vmem:[%s4146 + $0x8] sm:$0xff]
        %v4149 = vld [vmem:[%s4146 + $0x10] sm:$0xff]
        %v4150 = vld [vmem:[%s4146 + $0x18] sm:$0xff]
        %v4151 = vld [vmem:[%s4146 + $0x20] sm:$0xff]
        %v4152 = vld [vmem:[%s4146 + $0x28] sm:$0xff]
        %v4153 = vld [vmem:[%s4146 + $0x30] sm:$0xff]
        %v4154 = vld [vmem:[%s4146 + $0x38] sm:$0xff]
        %v4155 = vld [vmem:[%s4146 + $0x40] sm:$0xff]
        %v4156 = vld [vmem:[%s4146 + $0x48] sm:$0xff]
        %v4157 = vld [vmem:[%s4146 + $0x50] sm:$0xff]
        %v4158 = vld [vmem:[%s4146 + $0x58] sm:$0xff]
        %v4159 = vld [vmem:[%s4146 + $0x60] sm:$0xff]
        %v4160 = vld [vmem:[%s4146 + $0x68] sm:$0xff]
        %v4161 = vld [vmem:[%s4146 + $0x70] sm:$0xff]
        %v4162 = vld [vmem:[%s4146 + $0x78] sm:$0xff]
        %v4163 = vld [vmem:[%s4146 + $0x80] sm:$0xff]
        %v4164 = vld [vmem:[%s4146 + $0x88] sm:$0xff]
        %v4165 = vld [vmem:[%s4146 + $0x90] sm:$0xff]
        %v4166 = vld [vmem:[%s4146 + $0x98] sm:$0xff]
        %4167 = vrot.lane.b32.xlu0 %v4012, 112
        %v4168 = vpop.permute.xlu0 %4167
        %4169 = vrot.lane.b32.xlu0 %v4011, 112
        %v4170 = vpop.permute.xlu0 %4169
        %v4171 = vsel %vm3651, %v4168, 0
        %v4173 = vsel %vm3651, %v4170, 0
        %4175 = vmatpush.msra.mxu0 0.0
        %4176 = vmatpush.msra.mxu0 0.0
        %4177 = vmatpush.msra.mxu0 0.0
        %4178 = vmatpush.msra.mxu0 0.0
        %4179 = vmatpush.msra.mxu0 0.0
        %4180 = vmatpush.msra.mxu0 0.0
        %4181 = vmatpush.msra.mxu0 %v4165
        %4182 = vmatpush.msra.mxu0 %v4163
        %4183 = vmatpush.msra.mxu0 %v4161
        %4184 = vmatpush.msra.mxu0 %v4159
        %4185 = vmatpush.msra.mxu0 %v4157
        %4186 = vmatpush.msra.mxu0 %v4155
        %4187 = vmatpush.msra.mxu0 %v4153
        %4188 = vmatpush.msra.mxu0 %v4151
        %4189 = vmatpush.msra.mxu0 %v4149
        %4190 = vmatpush.msra.mxu0 %v4147
        %4191 = vmatmul.f32.gmra.mxu0 %v4171
        %v4192 = vpop.f32.mrf.mxu0
        %v4193 = vadd.f32 0.0, %v4192
        %4194 = vmatmul.f32.gmra.mxu0 %v4173
        %v4195 = vpop.f32.mrf.mxu0
        %v4196 = vadd.f32 0.0, %v4195
        %4197 = vdwg.mxu0
        %4198 = vmatpush.msra.mxu0 0.0
        %4199 = vmatpush.msra.mxu0 0.0
        %4200 = vmatpush.msra.mxu0 0.0
        %4201 = vmatpush.msra.mxu0 0.0
        %4202 = vmatpush.msra.mxu0 0.0
        %4203 = vmatpush.msra.mxu0 0.0
        %4204 = vmatpush.msra.mxu0 %v4166
        %4205 = vmatpush.msra.mxu0 %v4164
        %4206 = vmatpush.msra.mxu0 %v4162
        %4207 = vmatpush.msra.mxu0 %v4160
        %4208 = vmatpush.msra.mxu0 %v4158
        %4209 = vmatpush.msra.mxu0 %v4156
        %4210 = vmatpush.msra.mxu0 %v4154
        %4211 = vmatpush.msra.mxu0 %v4152
        %4212 = vmatpush.msra.mxu0 %v4150
        %4213 = vmatpush.msra.mxu0 %v4148
        %4214 = vmatmul.f32.gmra.mxu0 %v4171
        %v4215 = vpop.f32.mrf.mxu0
        %v4216 = vadd.f32 0.0, %v4215
        %4217 = vmatmul.f32.gmra.mxu0 %v4173
        %v4218 = vpop.f32.mrf.mxu0
        %v4219 = vadd.f32 0.0, %v4218
        %4220 = vdwg.mxu0
        %v4221 = vadd.f32 %v4142, %v4193
        %v4222 = vadd.f32 %v4143, %v4216
        %v4223 = vadd.f32 %v4144, %v4196
        %v4224 = vadd.f32 %v4145, %v4219
        %s4225 = scalar_lea.vmem [#allocation8], 1280
        %v4226 = vld [vmem:[%s4225] sm:$0xff]
        %v4227 = vld [vmem:[%s4225 + $0x8] sm:$0xff]
        %v4228 = vld [vmem:[%s4225 + $0x10] sm:$0xff]
        %v4229 = vld [vmem:[%s4225 + $0x18] sm:$0xff]
        %v4230 = vld [vmem:[%s4225 + $0x20] sm:$0xff]
        %v4231 = vld [vmem:[%s4225 + $0x28] sm:$0xff]
        %v4232 = vld [vmem:[%s4225 + $0x30] sm:$0xff]
        %v4233 = vld [vmem:[%s4225 + $0x38] sm:$0xff]
        %v4234 = vld [vmem:[%s4225 + $0x40] sm:$0xff]
        %v4235 = vld [vmem:[%s4225 + $0x48] sm:$0xff]
        %v4236 = vld [vmem:[%s4225 + $0x50] sm:$0xff]
        %v4237 = vld [vmem:[%s4225 + $0x58] sm:$0xff]
        %v4238 = vld [vmem:[%s4225 + $0x60] sm:$0xff]
        %v4239 = vld [vmem:[%s4225 + $0x68] sm:$0xff]
        %v4240 = vld [vmem:[%s4225 + $0x70] sm:$0xff]
        %v4241 = vld [vmem:[%s4225 + $0x78] sm:$0xff]
        %v4242 = vld [vmem:[%s4225 + $0x80] sm:$0xff]
        %v4243 = vld [vmem:[%s4225 + $0x88] sm:$0xff]
        %v4244 = vld [vmem:[%s4225 + $0x90] sm:$0xff]
        %v4245 = vld [vmem:[%s4225 + $0x98] sm:$0xff]
        %4246 = vrot.lane.b32.xlu0 %v4012, 104
        %v4247 = vpop.permute.xlu0 %4246
        %4248 = vrot.lane.b32.xlu0 %v4011, 104
        %v4249 = vpop.permute.xlu0 %4248
        %v4250 = vsel %vm3651, %v4247, 0
        %v4252 = vsel %vm3651, %v4249, 0
        %4254 = vmatpush.msra.mxu0 0.0
        %4255 = vmatpush.msra.mxu0 0.0
        %4256 = vmatpush.msra.mxu0 0.0
        %4257 = vmatpush.msra.mxu0 0.0
        %4258 = vmatpush.msra.mxu0 0.0
        %4259 = vmatpush.msra.mxu0 0.0
        %4260 = vmatpush.msra.mxu0 %v4244
        %4261 = vmatpush.msra.mxu0 %v4242
        %4262 = vmatpush.msra.mxu0 %v4240
        %4263 = vmatpush.msra.mxu0 %v4238
        %4264 = vmatpush.msra.mxu0 %v4236
        %4265 = vmatpush.msra.mxu0 %v4234
        %4266 = vmatpush.msra.mxu0 %v4232
        %4267 = vmatpush.msra.mxu0 %v4230
        %4268 = vmatpush.msra.mxu0 %v4228
        %4269 = vmatpush.msra.mxu0 %v4226
        %4270 = vmatmul.f32.gmra.mxu0 %v4250
        %v4271 = vpop.f32.mrf.mxu0
        %v4272 = vadd.f32 0.0, %v4271
        %4273 = vmatmul.f32.gmra.mxu0 %v4252
        %v4274 = vpop.f32.mrf.mxu0
        %v4275 = vadd.f32 0.0, %v4274
        %4276 = vdwg.mxu0
        %4277 = vmatpush.msra.mxu0 0.0
        %4278 = vmatpush.msra.mxu0 0.0
        %4279 = vmatpush.msra.mxu0 0.0
        %4280 = vmatpush.msra.mxu0 0.0
        %4281 = vmatpush.msra.mxu0 0.0
        %4282 = vmatpush.msra.mxu0 0.0
        %4283 = vmatpush.msra.mxu0 %v4245
        %4284 = vmatpush.msra.mxu0 %v4243
        %4285 = vmatpush.msra.mxu0 %v4241
        %4286 = vmatpush.msra.mxu0 %v4239
        %4287 = vmatpush.msra.mxu0 %v4237
        %4288 = vmatpush.msra.mxu0 %v4235
        %4289 = vmatpush.msra.mxu0 %v4233
        %4290 = vmatpush.msra.mxu0 %v4231
        %4291 = vmatpush.msra.mxu0 %v4229
        %4292 = vmatpush.msra.mxu0 %v4227
        %4293 = vmatmul.f32.gmra.mxu0 %v4250
        %v4294 = vpop.f32.mrf.mxu0
        %v4295 = vadd.f32 0.0, %v4294
        %4296 = vmatmul.f32.gmra.mxu0 %v4252
        %v4297 = vpop.f32.mrf.mxu0
        %v4298 = vadd.f32 0.0, %v4297
        %4299 = vdwg.mxu0
        %v4300 = vadd.f32 %v4221, %v4272
        %v4301 = vadd.f32 %v4222, %v4295
        %v4302 = vadd.f32 %v4223, %v4275
        %v4303 = vadd.f32 %v4224, %v4298
        %s4304 = scalar_lea.vmem [#allocation8], 1440
        %v4305 = vld [vmem:[%s4304] sm:$0xff]
        %v4306 = vld [vmem:[%s4304 + $0x8] sm:$0xff]
        %v4307 = vld [vmem:[%s4304 + $0x10] sm:$0xff]
        %v4308 = vld [vmem:[%s4304 + $0x18] sm:$0xff]
        %v4309 = vld [vmem:[%s4304 + $0x20] sm:$0xff]
        %v4310 = vld [vmem:[%s4304 + $0x28] sm:$0xff]
        %v4311 = vld [vmem:[%s4304 + $0x30] sm:$0xff]
        %v4312 = vld [vmem:[%s4304 + $0x38] sm:$0xff]
        %v4313 = vld [vmem:[%s4304 + $0x40] sm:$0xff]
        %v4314 = vld [vmem:[%s4304 + $0x48] sm:$0xff]
        %v4315 = vld [vmem:[%s4304 + $0x50] sm:$0xff]
        %v4316 = vld [vmem:[%s4304 + $0x58] sm:$0xff]
        %v4317 = vld [vmem:[%s4304 + $0x60] sm:$0xff]
        %v4318 = vld [vmem:[%s4304 + $0x68] sm:$0xff]
        %v4319 = vld [vmem:[%s4304 + $0x70] sm:$0xff]
        %v4320 = vld [vmem:[%s4304 + $0x78] sm:$0xff]
        %v4321 = vld [vmem:[%s4304 + $0x80] sm:$0xff]
        %v4322 = vld [vmem:[%s4304 + $0x88] sm:$0xff]
        %v4323 = vld [vmem:[%s4304 + $0x90] sm:$0xff]
        %v4324 = vld [vmem:[%s4304 + $0x98] sm:$0xff]
        %4325 = vrot.lane.b32.xlu0 %v4012, 96
        %v4326 = vpop.permute.xlu0 %4325
        %4327 = vrot.lane.b32.xlu0 %v4011, 96
        %v4328 = vpop.permute.xlu0 %4327
        %v4329 = vsel %vm3651, %v4326, 0
        %v4331 = vsel %vm3651, %v4328, 0
        %4333 = vmatpush.msra.mxu0 0.0
        %4334 = vmatpush.msra.mxu0 0.0
        %4335 = vmatpush.msra.mxu0 0.0
        %4336 = vmatpush.msra.mxu0 0.0
        %4337 = vmatpush.msra.mxu0 0.0
        %4338 = vmatpush.msra.mxu0 0.0
        %4339 = vmatpush.msra.mxu0 %v4323
        %4340 = vmatpush.msra.mxu0 %v4321
        %4341 = vmatpush.msra.mxu0 %v4319
        %4342 = vmatpush.msra.mxu0 %v4317
        %4343 = vmatpush.msra.mxu0 %v4315
        %4344 = vmatpush.msra.mxu0 %v4313
        %4345 = vmatpush.msra.mxu0 %v4311
        %4346 = vmatpush.msra.mxu0 %v4309
        %4347 = vmatpush.msra.mxu0 %v4307
        %4348 = vmatpush.msra.mxu0 %v4305
        %4349 = vmatmul.f32.gmra.mxu0 %v4329
        %v4350 = vpop.f32.mrf.mxu0
        %v4351 = vadd.f32 0.0, %v4350
        %4352 = vmatmul.f32.gmra.mxu0 %v4331
        %v4353 = vpop.f32.mrf.mxu0
        %v4354 = vadd.f32 0.0, %v4353
        %4355 = vdwg.mxu0
        %4356 = vmatpush.msra.mxu0 0.0
        %4357 = vmatpush.msra.mxu0 0.0
        %4358 = vmatpush.msra.mxu0 0.0
        %4359 = vmatpush.msra.mxu0 0.0
        %4360 = vmatpush.msra.mxu0 0.0
        %4361 = vmatpush.msra.mxu0 0.0
        %4362 = vmatpush.msra.mxu0 %v4324
        %4363 = vmatpush.msra.mxu0 %v4322
        %4364 = vmatpush.msra.mxu0 %v4320
        %4365 = vmatpush.msra.mxu0 %v4318
        %4366 = vmatpush.msra.mxu0 %v4316
        %4367 = vmatpush.msra.mxu0 %v4314
        %4368 = vmatpush.msra.mxu0 %v4312
        %4369 = vmatpush.msra.mxu0 %v4310
        %4370 = vmatpush.msra.mxu0 %v4308
        %4371 = vmatpush.msra.mxu0 %v4306
        %4372 = vmatmul.f32.gmra.mxu0 %v4329
        %v4373 = vpop.f32.mrf.mxu0
        %v4374 = vadd.f32 0.0, %v4373
        %4375 = vmatmul.f32.gmra.mxu0 %v4331
        %v4376 = vpop.f32.mrf.mxu0
        %v4377 = vadd.f32 0.0, %v4376
        %4378 = vdwg.mxu0
        %v4379 = vadd.f32 %v4300, %v4351
        %v4380 = vadd.f32 %v4301, %v4374
        %v4381 = vadd.f32 %v4302, %v4354
        %v4382 = vadd.f32 %v4303, %v4377
        %s4383 = scalar_lea.vmem [#allocation8], 1600
        %v4384 = vld [vmem:[%s4383] sm:$0xff]
        %v4385 = vld [vmem:[%s4383 + $0x8] sm:$0xff]
        %v4386 = vld [vmem:[%s4383 + $0x10] sm:$0xff]
        %v4387 = vld [vmem:[%s4383 + $0x18] sm:$0xff]
        %v4388 = vld [vmem:[%s4383 + $0x20] sm:$0xff]
        %v4389 = vld [vmem:[%s4383 + $0x28] sm:$0xff]
        %v4390 = vld [vmem:[%s4383 + $0x30] sm:$0xff]
        %v4391 = vld [vmem:[%s4383 + $0x38] sm:$0xff]
        %v4392 = vld [vmem:[%s4383 + $0x40] sm:$0xff]
        %v4393 = vld [vmem:[%s4383 + $0x48] sm:$0xff]
        %v4394 = vld [vmem:[%s4383 + $0x50] sm:$0xff]
        %v4395 = vld [vmem:[%s4383 + $0x58] sm:$0xff]
        %v4396 = vld [vmem:[%s4383 + $0x60] sm:$0xff]
        %v4397 = vld [vmem:[%s4383 + $0x68] sm:$0xff]
        %v4398 = vld [vmem:[%s4383 + $0x70] sm:$0xff]
        %v4399 = vld [vmem:[%s4383 + $0x78] sm:$0xff]
        %v4400 = vld [vmem:[%s4383 + $0x80] sm:$0xff]
        %v4401 = vld [vmem:[%s4383 + $0x88] sm:$0xff]
        %v4402 = vld [vmem:[%s4383 + $0x90] sm:$0xff]
        %v4403 = vld [vmem:[%s4383 + $0x98] sm:$0xff]
        %v4404 = vrot.slane %v3602, 2
        %v4405 = vrot.slane %v3603, 2
        %v4406 = vsel %vm1422, %v4404, %v4405
        %v4407 = vsel %vm3651, %v4406, 0
        %v4409 = vsel %vm3651, %v4405, 0
        %4411 = vmatpush.msra.mxu0 0.0
        %4412 = vmatpush.msra.mxu0 0.0
        %4413 = vmatpush.msra.mxu0 0.0
        %4414 = vmatpush.msra.mxu0 0.0
        %4415 = vmatpush.msra.mxu0 0.0
        %4416 = vmatpush.msra.mxu0 0.0
        %4417 = vmatpush.msra.mxu0 %v4402
        %4418 = vmatpush.msra.mxu0 %v4400
        %4419 = vmatpush.msra.mxu0 %v4398
        %4420 = vmatpush.msra.mxu0 %v4396
        %4421 = vmatpush.msra.mxu0 %v4394
        %4422 = vmatpush.msra.mxu0 %v4392
        %4423 = vmatpush.msra.mxu0 %v4390
        %4424 = vmatpush.msra.mxu0 %v4388
        %4425 = vmatpush.msra.mxu0 %v4386
        %4426 = vmatpush.msra.mxu0 %v4384
        %4427 = vmatmul.f32.gmra.mxu0 %v4407
        %v4428 = vpop.f32.mrf.mxu0
        %v4429 = vadd.f32 0.0, %v4428
        %4430 = vmatmul.f32.gmra.mxu0 %v4409
        %v4431 = vpop.f32.mrf.mxu0
        %v4432 = vadd.f32 0.0, %v4431
        %4433 = vdwg.mxu0
        %4434 = vmatpush.msra.mxu0 0.0
        %4435 = vmatpush.msra.mxu0 0.0
        %4436 = vmatpush.msra.mxu0 0.0
        %4437 = vmatpush.msra.mxu0 0.0
        %4438 = vmatpush.msra.mxu0 0.0
        %4439 = vmatpush.msra.mxu0 0.0
        %4440 = vmatpush.msra.mxu0 %v4403
        %4441 = vmatpush.msra.mxu0 %v4401
        %4442 = vmatpush.msra.mxu0 %v4399
        %4443 = vmatpush.msra.mxu0 %v4397
        %4444 = vmatpush.msra.mxu0 %v4395
        %4445 = vmatpush.msra.mxu0 %v4393
        %4446 = vmatpush.msra.mxu0 %v4391
        %4447 = vmatpush.msra.mxu0 %v4389
        %4448 = vmatpush.msra.mxu0 %v4387
        %4449 = vmatpush.msra.mxu0 %v4385
        %4450 = vmatmul.f32.gmra.mxu0 %v4407
        %v4451 = vpop.f32.mrf.mxu0
        %v4452 = vadd.f32 0.0, %v4451
        %4453 = vmatmul.f32.gmra.mxu0 %v4409
        %v4454 = vpop.f32.mrf.mxu0
        %v4455 = vadd.f32 0.0, %v4454
        %4456 = vdwg.mxu0
        %v4457 = vadd.f32 %v4379, %v4429
        %v4458 = vadd.f32 %v4380, %v4452
        %v4459 = vadd.f32 %v4381, %v4432
        %v4460 = vadd.f32 %v4382, %v4455
        %s4461 = scalar_lea.vmem [#allocation8], 1760
        %v4462 = vld [vmem:[%s4461] sm:$0xff]
        %v4463 = vld [vmem:[%s4461 + $0x8] sm:$0xff]
        %v4464 = vld [vmem:[%s4461 + $0x10] sm:$0xff]
        %v4465 = vld [vmem:[%s4461 + $0x18] sm:$0xff]
        %v4466 = vld [vmem:[%s4461 + $0x20] sm:$0xff]
        %v4467 = vld [vmem:[%s4461 + $0x28] sm:$0xff]
        %v4468 = vld [vmem:[%s4461 + $0x30] sm:$0xff]
        %v4469 = vld [vmem:[%s4461 + $0x38] sm:$0xff]
        %v4470 = vld [vmem:[%s4461 + $0x40] sm:$0xff]
        %v4471 = vld [vmem:[%s4461 + $0x48] sm:$0xff]
        %v4472 = vld [vmem:[%s4461 + $0x50] sm:$0xff]
        %v4473 = vld [vmem:[%s4461 + $0x58] sm:$0xff]
        %v4474 = vld [vmem:[%s4461 + $0x60] sm:$0xff]
        %v4475 = vld [vmem:[%s4461 + $0x68] sm:$0xff]
        %v4476 = vld [vmem:[%s4461 + $0x70] sm:$0xff]
        %v4477 = vld [vmem:[%s4461 + $0x78] sm:$0xff]
        %v4478 = vld [vmem:[%s4461 + $0x80] sm:$0xff]
        %v4479 = vld [vmem:[%s4461 + $0x88] sm:$0xff]
        %v4480 = vld [vmem:[%s4461 + $0x90] sm:$0xff]
        %v4481 = vld [vmem:[%s4461 + $0x98] sm:$0xff]
        %4482 = vrot.lane.b32.xlu0 %v4406, 120
        %v4483 = vpop.permute.xlu0 %4482
        %4484 = vrot.lane.b32.xlu0 %v4405, 120
        %v4485 = vpop.permute.xlu0 %4484
        %v4486 = vsel %vm3651, %v4483, 0
        %v4488 = vsel %vm3651, %v4485, 0
        %4490 = vmatpush.msra.mxu0 0.0
        %4491 = vmatpush.msra.mxu0 0.0
        %4492 = vmatpush.msra.mxu0 0.0
        %4493 = vmatpush.msra.mxu0 0.0
        %4494 = vmatpush.msra.mxu0 0.0
        %4495 = vmatpush.msra.mxu0 0.0
        %4496 = vmatpush.msra.mxu0 %v4480
        %4497 = vmatpush.msra.mxu0 %v4478
        %4498 = vmatpush.msra.mxu0 %v4476
        %4499 = vmatpush.msra.mxu0 %v4474
        %4500 = vmatpush.msra.mxu0 %v4472
        %4501 = vmatpush.msra.mxu0 %v4470
        %4502 = vmatpush.msra.mxu0 %v4468
        %4503 = vmatpush.msra.mxu0 %v4466
        %4504 = vmatpush.msra.mxu0 %v4464
        %4505 = vmatpush.msra.mxu0 %v4462
        %4506 = vmatmul.f32.gmra.mxu0 %v4486
        %v4507 = vpop.f32.mrf.mxu0
        %v4508 = vadd.f32 0.0, %v4507
        %4509 = vmatmul.f32.gmra.mxu0 %v4488
        %v4510 = vpop.f32.mrf.mxu0
        %v4511 = vadd.f32 0.0, %v4510
        %4512 = vdwg.mxu0
        %4513 = vmatpush.msra.mxu0 0.0
        %4514 = vmatpush.msra.mxu0 0.0
        %4515 = vmatpush.msra.mxu0 0.0
        %4516 = vmatpush.msra.mxu0 0.0
        %4517 = vmatpush.msra.mxu0 0.0
        %4518 = vmatpush.msra.mxu0 0.0
        %4519 = vmatpush.msra.mxu0 %v4481
        %4520 = vmatpush.msra.mxu0 %v4479
        %4521 = vmatpush.msra.mxu0 %v4477
        %4522 = vmatpush.msra.mxu0 %v4475
        %4523 = vmatpush.msra.mxu0 %v4473
        %4524 = vmatpush.msra.mxu0 %v4471
        %4525 = vmatpush.msra.mxu0 %v4469
        %4526 = vmatpush.msra.mxu0 %v4467
        %4527 = vmatpush.msra.mxu0 %v4465
        %4528 = vmatpush.msra.mxu0 %v4463
        %4529 = vmatmul.f32.gmra.mxu0 %v4486
        %v4530 = vpop.f32.mrf.mxu0
        %v4531 = vadd.f32 0.0, %v4530
        %4532 = vmatmul.f32.gmra.mxu0 %v4488
        %v4533 = vpop.f32.mrf.mxu0
        %v4534 = vadd.f32 0.0, %v4533
        %4535 = vdwg.mxu0
        %v4536 = vadd.f32 %v4457, %v4508
        %v4537 = vadd.f32 %v4458, %v4531
        %v4538 = vadd.f32 %v4459, %v4511
        %v4539 = vadd.f32 %v4460, %v4534
        %s4540 = scalar_lea.vmem [#allocation8], 1920
        %v4541 = vld [vmem:[%s4540] sm:$0xff]
        %v4542 = vld [vmem:[%s4540 + $0x8] sm:$0xff]
        %v4543 = vld [vmem:[%s4540 + $0x10] sm:$0xff]
        %v4544 = vld [vmem:[%s4540 + $0x18] sm:$0xff]
        %v4545 = vld [vmem:[%s4540 + $0x20] sm:$0xff]
        %v4546 = vld [vmem:[%s4540 + $0x28] sm:$0xff]
        %v4547 = vld [vmem:[%s4540 + $0x30] sm:$0xff]
        %v4548 = vld [vmem:[%s4540 + $0x38] sm:$0xff]
        %v4549 = vld [vmem:[%s4540 + $0x40] sm:$0xff]
        %v4550 = vld [vmem:[%s4540 + $0x48] sm:$0xff]
        %v4551 = vld [vmem:[%s4540 + $0x50] sm:$0xff]
        %v4552 = vld [vmem:[%s4540 + $0x58] sm:$0xff]
        %v4553 = vld [vmem:[%s4540 + $0x60] sm:$0xff]
        %v4554 = vld [vmem:[%s4540 + $0x68] sm:$0xff]
        %v4555 = vld [vmem:[%s4540 + $0x70] sm:$0xff]
        %v4556 = vld [vmem:[%s4540 + $0x78] sm:$0xff]
        %v4557 = vld [vmem:[%s4540 + $0x80] sm:$0xff]
        %v4558 = vld [vmem:[%s4540 + $0x88] sm:$0xff]
        %v4559 = vld [vmem:[%s4540 + $0x90] sm:$0xff]
        %v4560 = vld [vmem:[%s4540 + $0x98] sm:$0xff]
        %4561 = vrot.lane.b32.xlu0 %v4406, 112
        %v4562 = vpop.permute.xlu0 %4561
        %4563 = vrot.lane.b32.xlu0 %v4405, 112
        %v4564 = vpop.permute.xlu0 %4563
        %v4565 = vsel %vm3651, %v4562, 0
        %v4567 = vsel %vm3651, %v4564, 0
        %4569 = vmatpush.msra.mxu0 0.0
        %4570 = vmatpush.msra.mxu0 0.0
        %4571 = vmatpush.msra.mxu0 0.0
        %4572 = vmatpush.msra.mxu0 0.0
        %4573 = vmatpush.msra.mxu0 0.0
        %4574 = vmatpush.msra.mxu0 0.0
        %4575 = vmatpush.msra.mxu0 %v4559
        %4576 = vmatpush.msra.mxu0 %v4557
        %4577 = vmatpush.msra.mxu0 %v4555
        %4578 = vmatpush.msra.mxu0 %v4553
        %4579 = vmatpush.msra.mxu0 %v4551
        %4580 = vmatpush.msra.mxu0 %v4549
        %4581 = vmatpush.msra.mxu0 %v4547
        %4582 = vmatpush.msra.mxu0 %v4545
        %4583 = vmatpush.msra.mxu0 %v4543
        %4584 = vmatpush.msra.mxu0 %v4541
        %4585 = vmatmul.f32.gmra.mxu0 %v4565
        %v4586 = vpop.f32.mrf.mxu0
        %v4587 = vadd.f32 0.0, %v4586
        %4588 = vmatmul.f32.gmra.mxu0 %v4567
        %v4589 = vpop.f32.mrf.mxu0
        %v4590 = vadd.f32 0.0, %v4589
        %4591 = vdwg.mxu0
        %4592 = vmatpush.msra.mxu0 0.0
        %4593 = vmatpush.msra.mxu0 0.0
        %4594 = vmatpush.msra.mxu0 0.0
        %4595 = vmatpush.msra.mxu0 0.0
        %4596 = vmatpush.msra.mxu0 0.0
        %4597 = vmatpush.msra.mxu0 0.0
        %4598 = vmatpush.msra.mxu0 %v4560
        %4599 = vmatpush.msra.mxu0 %v4558
        %4600 = vmatpush.msra.mxu0 %v4556
        %4601 = vmatpush.msra.mxu0 %v4554
        %4602 = vmatpush.msra.mxu0 %v4552
        %4603 = vmatpush.msra.mxu0 %v4550
        %4604 = vmatpush.msra.mxu0 %v4548
        %4605 = vmatpush.msra.mxu0 %v4546
        %4606 = vmatpush.msra.mxu0 %v4544
        %4607 = vmatpush.msra.mxu0 %v4542
        %4608 = vmatmul.f32.gmra.mxu0 %v4565
        %v4609 = vpop.f32.mrf.mxu0
        %v4610 = vadd.f32 0.0, %v4609
        %4611 = vmatmul.f32.gmra.mxu0 %v4567
        %v4612 = vpop.f32.mrf.mxu0
        %v4613 = vadd.f32 0.0, %v4612
        %4614 = vdwg.mxu0
        %v4615 = vadd.f32 %v4536, %v4587
        %v4616 = vadd.f32 %v4537, %v4610
        %v4617 = vadd.f32 %v4538, %v4590
        %v4618 = vadd.f32 %v4539, %v4613
        %s4619 = scalar_lea.vmem [#allocation8], 2080
        %v4620 = vld [vmem:[%s4619] sm:$0xff]
        %v4621 = vld [vmem:[%s4619 + $0x8] sm:$0xff]
        %v4622 = vld [vmem:[%s4619 + $0x10] sm:$0xff]
        %v4623 = vld [vmem:[%s4619 + $0x18] sm:$0xff]
        %v4624 = vld [vmem:[%s4619 + $0x20] sm:$0xff]
        %v4625 = vld [vmem:[%s4619 + $0x28] sm:$0xff]
        %v4626 = vld [vmem:[%s4619 + $0x30] sm:$0xff]
        %v4627 = vld [vmem:[%s4619 + $0x38] sm:$0xff]
        %v4628 = vld [vmem:[%s4619 + $0x40] sm:$0xff]
        %v4629 = vld [vmem:[%s4619 + $0x48] sm:$0xff]
        %v4630 = vld [vmem:[%s4619 + $0x50] sm:$0xff]
        %v4631 = vld [vmem:[%s4619 + $0x58] sm:$0xff]
        %v4632 = vld [vmem:[%s4619 + $0x60] sm:$0xff]
        %v4633 = vld [vmem:[%s4619 + $0x68] sm:$0xff]
        %v4634 = vld [vmem:[%s4619 + $0x70] sm:$0xff]
        %v4635 = vld [vmem:[%s4619 + $0x78] sm:$0xff]
        %v4636 = vld [vmem:[%s4619 + $0x80] sm:$0xff]
        %v4637 = vld [vmem:[%s4619 + $0x88] sm:$0xff]
        %v4638 = vld [vmem:[%s4619 + $0x90] sm:$0xff]
        %v4639 = vld [vmem:[%s4619 + $0x98] sm:$0xff]
        %4640 = vrot.lane.b32.xlu0 %v4406, 104
        %v4641 = vpop.permute.xlu0 %4640
        %4642 = vrot.lane.b32.xlu0 %v4405, 104
        %v4643 = vpop.permute.xlu0 %4642
        %v4644 = vsel %vm3651, %v4641, 0
        %v4646 = vsel %vm3651, %v4643, 0
        %4648 = vmatpush.msra.mxu0 0.0
        %4649 = vmatpush.msra.mxu0 0.0
        %4650 = vmatpush.msra.mxu0 0.0
        %4651 = vmatpush.msra.mxu0 0.0
        %4652 = vmatpush.msra.mxu0 0.0
        %4653 = vmatpush.msra.mxu0 0.0
        %4654 = vmatpush.msra.mxu0 %v4638
        %4655 = vmatpush.msra.mxu0 %v4636
        %4656 = vmatpush.msra.mxu0 %v4634
        %4657 = vmatpush.msra.mxu0 %v4632
        %4658 = vmatpush.msra.mxu0 %v4630
        %4659 = vmatpush.msra.mxu0 %v4628
        %4660 = vmatpush.msra.mxu0 %v4626
        %4661 = vmatpush.msra.mxu0 %v4624
        %4662 = vmatpush.msra.mxu0 %v4622
        %4663 = vmatpush.msra.mxu0 %v4620
        %4664 = vmatmul.f32.gmra.mxu0 %v4644
        %v4665 = vpop.f32.mrf.mxu0
        %v4666 = vadd.f32 0.0, %v4665
        %4667 = vmatmul.f32.gmra.mxu0 %v4646
        %v4668 = vpop.f32.mrf.mxu0
        %v4669 = vadd.f32 0.0, %v4668
        %4670 = vdwg.mxu0
        %4671 = vmatpush.msra.mxu0 0.0
        %4672 = vmatpush.msra.mxu0 0.0
        %4673 = vmatpush.msra.mxu0 0.0
        %4674 = vmatpush.msra.mxu0 0.0
        %4675 = vmatpush.msra.mxu0 0.0
        %4676 = vmatpush.msra.mxu0 0.0
        %4677 = vmatpush.msra.mxu0 %v4639
        %4678 = vmatpush.msra.mxu0 %v4637
        %4679 = vmatpush.msra.mxu0 %v4635
        %4680 = vmatpush.msra.mxu0 %v4633
        %4681 = vmatpush.msra.mxu0 %v4631
        %4682 = vmatpush.msra.mxu0 %v4629
        %4683 = vmatpush.msra.mxu0 %v4627
        %4684 = vmatpush.msra.mxu0 %v4625
        %4685 = vmatpush.msra.mxu0 %v4623
        %4686 = vmatpush.msra.mxu0 %v4621
        %4687 = vmatmul.f32.gmra.mxu0 %v4644
        %v4688 = vpop.f32.mrf.mxu0
        %v4689 = vadd.f32 0.0, %v4688
        %4690 = vmatmul.f32.gmra.mxu0 %v4646
        %v4691 = vpop.f32.mrf.mxu0
        %v4692 = vadd.f32 0.0, %v4691
        %4693 = vdwg.mxu0
        %v4694 = vadd.f32 %v4615, %v4666
        %v4695 = vadd.f32 %v4616, %v4689
        %v4696 = vadd.f32 %v4617, %v4669
        %v4697 = vadd.f32 %v4618, %v4692
        %s4698 = scalar_lea.vmem [#allocation8], 2240
        %v4699 = vld [vmem:[%s4698] sm:$0xff]
        %v4700 = vld [vmem:[%s4698 + $0x8] sm:$0xff]
        %v4701 = vld [vmem:[%s4698 + $0x10] sm:$0xff]
        %v4702 = vld [vmem:[%s4698 + $0x18] sm:$0xff]
        %v4703 = vld [vmem:[%s4698 + $0x20] sm:$0xff]
        %v4704 = vld [vmem:[%s4698 + $0x28] sm:$0xff]
        %v4705 = vld [vmem:[%s4698 + $0x30] sm:$0xff]
        %v4706 = vld [vmem:[%s4698 + $0x38] sm:$0xff]
        %v4707 = vld [vmem:[%s4698 + $0x40] sm:$0xff]
        %v4708 = vld [vmem:[%s4698 + $0x48] sm:$0xff]
        %v4709 = vld [vmem:[%s4698 + $0x50] sm:$0xff]
        %v4710 = vld [vmem:[%s4698 + $0x58] sm:$0xff]
        %v4711 = vld [vmem:[%s4698 + $0x60] sm:$0xff]
        %v4712 = vld [vmem:[%s4698 + $0x68] sm:$0xff]
        %v4713 = vld [vmem:[%s4698 + $0x70] sm:$0xff]
        %v4714 = vld [vmem:[%s4698 + $0x78] sm:$0xff]
        %v4715 = vld [vmem:[%s4698 + $0x80] sm:$0xff]
        %v4716 = vld [vmem:[%s4698 + $0x88] sm:$0xff]
        %v4717 = vld [vmem:[%s4698 + $0x90] sm:$0xff]
        %v4718 = vld [vmem:[%s4698 + $0x98] sm:$0xff]
        %4719 = vrot.lane.b32.xlu0 %v4406, 96
        %v4720 = vpop.permute.xlu0 %4719
        %4721 = vrot.lane.b32.xlu0 %v4405, 96
        %v4722 = vpop.permute.xlu0 %4721
        %v4723 = vsel %vm3651, %v4720, 0
        %v4725 = vsel %vm3651, %v4722, 0
        %4727 = vmatpush.msra.mxu0 0.0
        %4728 = vmatpush.msra.mxu0 0.0
        %4729 = vmatpush.msra.mxu0 0.0
        %4730 = vmatpush.msra.mxu0 0.0
        %4731 = vmatpush.msra.mxu0 0.0
        %4732 = vmatpush.msra.mxu0 0.0
        %4733 = vmatpush.msra.mxu0 %v4717
        %4734 = vmatpush.msra.mxu0 %v4715
        %4735 = vmatpush.msra.mxu0 %v4713
        %4736 = vmatpush.msra.mxu0 %v4711
        %4737 = vmatpush.msra.mxu0 %v4709
        %4738 = vmatpush.msra.mxu0 %v4707
        %4739 = vmatpush.msra.mxu0 %v4705
        %4740 = vmatpush.msra.mxu0 %v4703
        %4741 = vmatpush.msra.mxu0 %v4701
        %4742 = vmatpush.msra.mxu0 %v4699
        %4743 = vmatmul.f32.gmra.mxu0 %v4723
        %v4744 = vpop.f32.mrf.mxu0
        %v4745 = vadd.f32 0.0, %v4744
        %4746 = vmatmul.f32.gmra.mxu0 %v4725
        %v4747 = vpop.f32.mrf.mxu0
        %v4748 = vadd.f32 0.0, %v4747
        %4749 = vdwg.mxu0
        %4750 = vmatpush.msra.mxu0 0.0
        %4751 = vmatpush.msra.mxu0 0.0
        %4752 = vmatpush.msra.mxu0 0.0
        %4753 = vmatpush.msra.mxu0 0.0
        %4754 = vmatpush.msra.mxu0 0.0
        %4755 = vmatpush.msra.mxu0 0.0
        %4756 = vmatpush.msra.mxu0 %v4718
        %4757 = vmatpush.msra.mxu0 %v4716
        %4758 = vmatpush.msra.mxu0 %v4714
        %4759 = vmatpush.msra.mxu0 %v4712
        %4760 = vmatpush.msra.mxu0 %v4710
        %4761 = vmatpush.msra.mxu0 %v4708
        %4762 = vmatpush.msra.mxu0 %v4706
        %4763 = vmatpush.msra.mxu0 %v4704
        %4764 = vmatpush.msra.mxu0 %v4702
        %4765 = vmatpush.msra.mxu0 %v4700
        %4766 = vmatmul.f32.gmra.mxu0 %v4723
        %v4767 = vpop.f32.mrf.mxu0
        %v4768 = vadd.f32 0.0, %v4767
        %4769 = vmatmul.f32.gmra.mxu0 %v4725
        %v4770 = vpop.f32.mrf.mxu0
        %v4771 = vadd.f32 0.0, %v4770
        %4772 = vdwg.mxu0
        %v4773 = vadd.f32 %v4694, %v4745
        %v4774 = vadd.f32 %v4695, %v4768
        %v4775 = vadd.f32 %v4696, %v4748
        %v4776 = vadd.f32 %v4697, %v4771
        %s4777 = scalar_lea.vmem [#allocation8], 2400
        %v4778 = vld [vmem:[%s4777] sm:$0xff]
        %v4779 = vld [vmem:[%s4777 + $0x8] sm:$0xff]
        %v4780 = vld [vmem:[%s4777 + $0x10] sm:$0xff]
        %v4781 = vld [vmem:[%s4777 + $0x18] sm:$0xff]
        %v4782 = vld [vmem:[%s4777 + $0x20] sm:$0xff]
        %v4783 = vld [vmem:[%s4777 + $0x28] sm:$0xff]
        %v4784 = vld [vmem:[%s4777 + $0x30] sm:$0xff]
        %v4785 = vld [vmem:[%s4777 + $0x38] sm:$0xff]
        %v4786 = vld [vmem:[%s4777 + $0x40] sm:$0xff]
        %v4787 = vld [vmem:[%s4777 + $0x48] sm:$0xff]
        %v4788 = vld [vmem:[%s4777 + $0x50] sm:$0xff]
        %v4789 = vld [vmem:[%s4777 + $0x58] sm:$0xff]
        %v4790 = vld [vmem:[%s4777 + $0x60] sm:$0xff]
        %v4791 = vld [vmem:[%s4777 + $0x68] sm:$0xff]
        %v4792 = vld [vmem:[%s4777 + $0x70] sm:$0xff]
        %v4793 = vld [vmem:[%s4777 + $0x78] sm:$0xff]
        %v4794 = vld [vmem:[%s4777 + $0x80] sm:$0xff]
        %v4795 = vld [vmem:[%s4777 + $0x88] sm:$0xff]
        %v4796 = vld [vmem:[%s4777 + $0x90] sm:$0xff]
        %v4797 = vld [vmem:[%s4777 + $0x98] sm:$0xff]
        %vm4798 = vcmask 1044480
        %v4799 = vrot.slane %v3602, 3
        %v4800 = vrot.slane %v3603, 3
        %v4801 = vsel %vm4798, %v4799, %v4800
        %v4802 = vsel %vm3651, %v4801, 0
        %v4804 = vsel %vm3651, %v4800, 0
        %4806 = vmatpush.msra.mxu0 0.0
        %4807 = vmatpush.msra.mxu0 0.0
        %4808 = vmatpush.msra.mxu0 0.0
        %4809 = vmatpush.msra.mxu0 0.0
        %4810 = vmatpush.msra.mxu0 0.0
        %4811 = vmatpush.msra.mxu0 0.0
        %4812 = vmatpush.msra.mxu0 %v4796
        %4813 = vmatpush.msra.mxu0 %v4794
        %4814 = vmatpush.msra.mxu0 %v4792
        %4815 = vmatpush.msra.mxu0 %v4790
        %4816 = vmatpush.msra.mxu0 %v4788
        %4817 = vmatpush.msra.mxu0 %v4786
        %4818 = vmatpush.msra.mxu0 %v4784
        %4819 = vmatpush.msra.mxu0 %v4782
        %4820 = vmatpush.msra.mxu0 %v4780
        %4821 = vmatpush.msra.mxu0 %v4778
        %4822 = vmatmul.f32.gmra.mxu0 %v4802
        %v4823 = vpop.f32.mrf.mxu0
        %v4824 = vadd.f32 0.0, %v4823
        %4825 = vmatmul.f32.gmra.mxu0 %v4804
        %v4826 = vpop.f32.mrf.mxu0
        %v4827 = vadd.f32 0.0, %v4826
        %4828 = vdwg.mxu0
        %4829 = vmatpush.msra.mxu0 0.0
        %4830 = vmatpush.msra.mxu0 0.0
        %4831 = vmatpush.msra.mxu0 0.0
        %4832 = vmatpush.msra.mxu0 0.0
        %4833 = vmatpush.msra.mxu0 0.0
        %4834 = vmatpush.msra.mxu0 0.0
        %4835 = vmatpush.msra.mxu0 %v4797
        %4836 = vmatpush.msra.mxu0 %v4795
        %4837 = vmatpush.msra.mxu0 %v4793
        %4838 = vmatpush.msra.mxu0 %v4791
        %4839 = vmatpush.msra.mxu0 %v4789
        %4840 = vmatpush.msra.mxu0 %v4787
        %4841 = vmatpush.msra.mxu0 %v4785
        %4842 = vmatpush.msra.mxu0 %v4783
        %4843 = vmatpush.msra.mxu0 %v4781
        %4844 = vmatpush.msra.mxu0 %v4779
        %4845 = vmatmul.f32.gmra.mxu0 %v4802
        %v4846 = vpop.f32.mrf.mxu0
        %v4847 = vadd.f32 0.0, %v4846
        %4848 = vmatmul.f32.gmra.mxu0 %v4804
        %v4849 = vpop.f32.mrf.mxu0
        %v4850 = vadd.f32 0.0, %v4849
        %4851 = vdwg.mxu0
        %v4852 = vadd.f32 %v4773, %v4824
        %v4853 = vadd.f32 %v4774, %v4847
        %v4854 = vadd.f32 %v4775, %v4827
        %v4855 = vadd.f32 %v4776, %v4850
        %s4856 = scalar_lea.vmem [#allocation8], 2560
        %v4857 = vld [vmem:[%s4856] sm:$0xff]
        %v4858 = vld [vmem:[%s4856 + $0x8] sm:$0xff]
        %v4859 = vld [vmem:[%s4856 + $0x10] sm:$0xff]
        %v4860 = vld [vmem:[%s4856 + $0x18] sm:$0xff]
        %v4861 = vld [vmem:[%s4856 + $0x20] sm:$0xff]
        %v4862 = vld [vmem:[%s4856 + $0x28] sm:$0xff]
        %v4863 = vld [vmem:[%s4856 + $0x30] sm:$0xff]
        %v4864 = vld [vmem:[%s4856 + $0x38] sm:$0xff]
        %v4865 = vld [vmem:[%s4856 + $0x40] sm:$0xff]
        %v4866 = vld [vmem:[%s4856 + $0x48] sm:$0xff]
        %v4867 = vld [vmem:[%s4856 + $0x50] sm:$0xff]
        %v4868 = vld [vmem:[%s4856 + $0x58] sm:$0xff]
        %v4869 = vld [vmem:[%s4856 + $0x60] sm:$0xff]
        %v4870 = vld [vmem:[%s4856 + $0x68] sm:$0xff]
        %v4871 = vld [vmem:[%s4856 + $0x70] sm:$0xff]
        %v4872 = vld [vmem:[%s4856 + $0x78] sm:$0xff]
        %v4873 = vld [vmem:[%s4856 + $0x80] sm:$0xff]
        %v4874 = vld [vmem:[%s4856 + $0x88] sm:$0xff]
        %v4875 = vld [vmem:[%s4856 + $0x90] sm:$0xff]
        %v4876 = vld [vmem:[%s4856 + $0x98] sm:$0xff]
        %4877 = vrot.lane.b32.xlu0 %v4801, 120
        %v4878 = vpop.permute.xlu0 %4877
        %4879 = vrot.lane.b32.xlu0 %v4800, 120
        %v4880 = vpop.permute.xlu0 %4879
        %v4881 = vsel %vm3651, %v4878, 0
        %v4883 = vsel %vm3651, %v4880, 0
        %4885 = vmatpush.msra.mxu0 0.0
        %4886 = vmatpush.msra.mxu0 0.0
        %4887 = vmatpush.msra.mxu0 0.0
        %4888 = vmatpush.msra.mxu0 0.0
        %4889 = vmatpush.msra.mxu0 0.0
        %4890 = vmatpush.msra.mxu0 0.0
        %4891 = vmatpush.msra.mxu0 %v4875
        %4892 = vmatpush.msra.mxu0 %v4873
        %4893 = vmatpush.msra.mxu0 %v4871
        %4894 = vmatpush.msra.mxu0 %v4869
        %4895 = vmatpush.msra.mxu0 %v4867
        %4896 = vmatpush.msra.mxu0 %v4865
        %4897 = vmatpush.msra.mxu0 %v4863
        %4898 = vmatpush.msra.mxu0 %v4861
        %4899 = vmatpush.msra.mxu0 %v4859
        %4900 = vmatpush.msra.mxu0 %v4857
        %4901 = vmatmul.f32.gmra.mxu0 %v4881
        %v4902 = vpop.f32.mrf.mxu0
        %v4903 = vadd.f32 0.0, %v4902
        %4904 = vmatmul.f32.gmra.mxu0 %v4883
        %v4905 = vpop.f32.mrf.mxu0
        %v4906 = vadd.f32 0.0, %v4905
        %4907 = vdwg.mxu0
        %4908 = vmatpush.msra.mxu0 0.0
        %4909 = vmatpush.msra.mxu0 0.0
        %4910 = vmatpush.msra.mxu0 0.0
        %4911 = vmatpush.msra.mxu0 0.0
        %4912 = vmatpush.msra.mxu0 0.0
        %4913 = vmatpush.msra.mxu0 0.0
        %4914 = vmatpush.msra.mxu0 %v4876
        %4915 = vmatpush.msra.mxu0 %v4874
        %4916 = vmatpush.msra.mxu0 %v4872
        %4917 = vmatpush.msra.mxu0 %v4870
        %4918 = vmatpush.msra.mxu0 %v4868
        %4919 = vmatpush.msra.mxu0 %v4866
        %4920 = vmatpush.msra.mxu0 %v4864
        %4921 = vmatpush.msra.mxu0 %v4862
        %4922 = vmatpush.msra.mxu0 %v4860
        %4923 = vmatpush.msra.mxu0 %v4858
        %4924 = vmatmul.f32.gmra.mxu0 %v4881
        %v4925 = vpop.f32.mrf.mxu0
        %v4926 = vadd.f32 0.0, %v4925
        %4927 = vmatmul.f32.gmra.mxu0 %v4883
        %v4928 = vpop.f32.mrf.mxu0
        %v4929 = vadd.f32 0.0, %v4928
        %4930 = vdwg.mxu0
        %v4931 = vadd.f32 %v4852, %v4903
        %v4932 = vadd.f32 %v4853, %v4926
        %v4933 = vadd.f32 %v4854, %v4906
        %v4934 = vadd.f32 %v4855, %v4929
        %s4935 = scalar_lea.vmem [#allocation8], 2720
        %v4936 = vld [vmem:[%s4935] sm:$0xff]
        %v4937 = vld [vmem:[%s4935 + $0x8] sm:$0xff]
        %v4938 = vld [vmem:[%s4935 + $0x10] sm:$0xff]
        %v4939 = vld [vmem:[%s4935 + $0x18] sm:$0xff]
        %v4940 = vld [vmem:[%s4935 + $0x20] sm:$0xff]
        %v4941 = vld [vmem:[%s4935 + $0x28] sm:$0xff]
        %v4942 = vld [vmem:[%s4935 + $0x30] sm:$0xff]
        %v4943 = vld [vmem:[%s4935 + $0x38] sm:$0xff]
        %v4944 = vld [vmem:[%s4935 + $0x40] sm:$0xff]
        %v4945 = vld [vmem:[%s4935 + $0x48] sm:$0xff]
        %v4946 = vld [vmem:[%s4935 + $0x50] sm:$0xff]
        %v4947 = vld [vmem:[%s4935 + $0x58] sm:$0xff]
        %v4948 = vld [vmem:[%s4935 + $0x60] sm:$0xff]
        %v4949 = vld [vmem:[%s4935 + $0x68] sm:$0xff]
        %v4950 = vld [vmem:[%s4935 + $0x70] sm:$0xff]
        %v4951 = vld [vmem:[%s4935 + $0x78] sm:$0xff]
        %v4952 = vld [vmem:[%s4935 + $0x80] sm:$0xff]
        %v4953 = vld [vmem:[%s4935 + $0x88] sm:$0xff]
        %v4954 = vld [vmem:[%s4935 + $0x90] sm:$0xff]
        %v4955 = vld [vmem:[%s4935 + $0x98] sm:$0xff]
        %4956 = vrot.lane.b32.xlu0 %v4801, 112
        %v4957 = vpop.permute.xlu0 %4956
        %4958 = vrot.lane.b32.xlu0 %v4800, 112
        %v4959 = vpop.permute.xlu0 %4958
        %v4960 = vsel %vm3651, %v4957, 0
        %v4962 = vsel %vm3651, %v4959, 0
        %4964 = vmatpush.msra.mxu0 0.0
        %4965 = vmatpush.msra.mxu0 0.0
        %4966 = vmatpush.msra.mxu0 0.0
        %4967 = vmatpush.msra.mxu0 0.0
        %4968 = vmatpush.msra.mxu0 0.0
        %4969 = vmatpush.msra.mxu0 0.0
        %4970 = vmatpush.msra.mxu0 %v4954
        %4971 = vmatpush.msra.mxu0 %v4952
        %4972 = vmatpush.msra.mxu0 %v4950
        %4973 = vmatpush.msra.mxu0 %v4948
        %4974 = vmatpush.msra.mxu0 %v4946
        %4975 = vmatpush.msra.mxu0 %v4944
        %4976 = vmatpush.msra.mxu0 %v4942
        %4977 = vmatpush.msra.mxu0 %v4940
        %4978 = vmatpush.msra.mxu0 %v4938
        %4979 = vmatpush.msra.mxu0 %v4936
        %4980 = vmatmul.f32.gmra.mxu0 %v4960
        %v4981 = vpop.f32.mrf.mxu0
        %v4982 = vadd.f32 0.0, %v4981
        %4983 = vmatmul.f32.gmra.mxu0 %v4962
        %v4984 = vpop.f32.mrf.mxu0
        %v4985 = vadd.f32 0.0, %v4984
        %4986 = vdwg.mxu0
        %4987 = vmatpush.msra.mxu0 0.0
        %4988 = vmatpush.msra.mxu0 0.0
        %4989 = vmatpush.msra.mxu0 0.0
        %4990 = vmatpush.msra.mxu0 0.0
        %4991 = vmatpush.msra.mxu0 0.0
        %4992 = vmatpush.msra.mxu0 0.0
        %4993 = vmatpush.msra.mxu0 %v4955
        %4994 = vmatpush.msra.mxu0 %v4953
        %4995 = vmatpush.msra.mxu0 %v4951
        %4996 = vmatpush.msra.mxu0 %v4949
        %4997 = vmatpush.msra.mxu0 %v4947
        %4998 = vmatpush.msra.mxu0 %v4945
        %4999 = vmatpush.msra.mxu0 %v4943
        %5000 = vmatpush.msra.mxu0 %v4941
        %5001 = vmatpush.msra.mxu0 %v4939
        %5002 = vmatpush.msra.mxu0 %v4937
        %5003 = vmatmul.f32.gmra.mxu0 %v4960
        %v5004 = vpop.f32.mrf.mxu0
        %v5005 = vadd.f32 0.0, %v5004
        %5006 = vmatmul.f32.gmra.mxu0 %v4962
        %v5007 = vpop.f32.mrf.mxu0
        %v5008 = vadd.f32 0.0, %v5007
        %5009 = vdwg.mxu0
        %v5010 = vadd.f32 %v4931, %v4982
        %v5011 = vadd.f32 %v4932, %v5005
        %v5012 = vadd.f32 %v4933, %v4985
        %v5013 = vadd.f32 %v4934, %v5008
        %s5014 = scalar_lea.vmem [#allocation8], 2880
        %v5015 = vld [vmem:[%s5014] sm:$0xff]
        %v5016 = vld [vmem:[%s5014 + $0x8] sm:$0xff]
        %v5017 = vld [vmem:[%s5014 + $0x10] sm:$0xff]
        %v5018 = vld [vmem:[%s5014 + $0x18] sm:$0xff]
        %v5019 = vld [vmem:[%s5014 + $0x20] sm:$0xff]
        %v5020 = vld [vmem:[%s5014 + $0x28] sm:$0xff]
        %v5021 = vld [vmem:[%s5014 + $0x30] sm:$0xff]
        %v5022 = vld [vmem:[%s5014 + $0x38] sm:$0xff]
        %v5023 = vld [vmem:[%s5014 + $0x40] sm:$0xff]
        %v5024 = vld [vmem:[%s5014 + $0x48] sm:$0xff]
        %v5025 = vld [vmem:[%s5014 + $0x50] sm:$0xff]
        %v5026 = vld [vmem:[%s5014 + $0x58] sm:$0xff]
        %v5027 = vld [vmem:[%s5014 + $0x60] sm:$0xff]
        %v5028 = vld [vmem:[%s5014 + $0x68] sm:$0xff]
        %v5029 = vld [vmem:[%s5014 + $0x70] sm:$0xff]
        %v5030 = vld [vmem:[%s5014 + $0x78] sm:$0xff]
        %v5031 = vld [vmem:[%s5014 + $0x80] sm:$0xff]
        %v5032 = vld [vmem:[%s5014 + $0x88] sm:$0xff]
        %v5033 = vld [vmem:[%s5014 + $0x90] sm:$0xff]
        %v5034 = vld [vmem:[%s5014 + $0x98] sm:$0xff]
        %5035 = vrot.lane.b32.xlu0 %v4801, 104
        %v5036 = vpop.permute.xlu0 %5035
        %5037 = vrot.lane.b32.xlu0 %v4800, 104
        %v5038 = vpop.permute.xlu0 %5037
        %v5039 = vsel %vm3651, %v5036, 0
        %v5041 = vsel %vm3651, %v5038, 0
        %5043 = vmatpush.msra.mxu0 0.0
        %5044 = vmatpush.msra.mxu0 0.0
        %5045 = vmatpush.msra.mxu0 0.0
        %5046 = vmatpush.msra.mxu0 0.0
        %5047 = vmatpush.msra.mxu0 0.0
        %5048 = vmatpush.msra.mxu0 0.0
        %5049 = vmatpush.msra.mxu0 %v5033
        %5050 = vmatpush.msra.mxu0 %v5031
        %5051 = vmatpush.msra.mxu0 %v5029
        %5052 = vmatpush.msra.mxu0 %v5027
        %5053 = vmatpush.msra.mxu0 %v5025
        %5054 = vmatpush.msra.mxu0 %v5023
        %5055 = vmatpush.msra.mxu0 %v5021
        %5056 = vmatpush.msra.mxu0 %v5019
        %5057 = vmatpush.msra.mxu0 %v5017
        %5058 = vmatpush.msra.mxu0 %v5015
        %5059 = vmatmul.f32.gmra.mxu0 %v5039
        %v5060 = vpop.f32.mrf.mxu0
        %v5061 = vadd.f32 0.0, %v5060
        %5062 = vmatmul.f32.gmra.mxu0 %v5041
        %v5063 = vpop.f32.mrf.mxu0
        %v5064 = vadd.f32 0.0, %v5063
        %5065 = vdwg.mxu0
        %5066 = vmatpush.msra.mxu0 0.0
        %5067 = vmatpush.msra.mxu0 0.0
        %5068 = vmatpush.msra.mxu0 0.0
        %5069 = vmatpush.msra.mxu0 0.0
        %5070 = vmatpush.msra.mxu0 0.0
        %5071 = vmatpush.msra.mxu0 0.0
        %5072 = vmatpush.msra.mxu0 %v5034
        %5073 = vmatpush.msra.mxu0 %v5032
        %5074 = vmatpush.msra.mxu0 %v5030
        %5075 = vmatpush.msra.mxu0 %v5028
        %5076 = vmatpush.msra.mxu0 %v5026
        %5077 = vmatpush.msra.mxu0 %v5024
        %5078 = vmatpush.msra.mxu0 %v5022
        %5079 = vmatpush.msra.mxu0 %v5020
        %5080 = vmatpush.msra.mxu0 %v5018
        %5081 = vmatpush.msra.mxu0 %v5016
        %5082 = vmatmul.f32.gmra.mxu0 %v5039
        %v5083 = vpop.f32.mrf.mxu0
        %v5084 = vadd.f32 0.0, %v5083
        %5085 = vmatmul.f32.gmra.mxu0 %v5041
        %v5086 = vpop.f32.mrf.mxu0
        %v5087 = vadd.f32 0.0, %v5086
        %5088 = vdwg.mxu0
        %v5089 = vadd.f32 %v5010, %v5061
        %v5090 = vadd.f32 %v5011, %v5084
        %v5091 = vadd.f32 %v5012, %v5064
        %v5092 = vadd.f32 %v5013, %v5087
        %s5093 = scalar_lea.vmem [#allocation8], 3040
        %v5094 = vld [vmem:[%s5093] sm:$0xff]
        %v5095 = vld [vmem:[%s5093 + $0x8] sm:$0xff]
        %v5096 = vld [vmem:[%s5093 + $0x10] sm:$0xff]
        %v5097 = vld [vmem:[%s5093 + $0x18] sm:$0xff]
        %v5098 = vld [vmem:[%s5093 + $0x20] sm:$0xff]
        %v5099 = vld [vmem:[%s5093 + $0x28] sm:$0xff]
        %v5100 = vld [vmem:[%s5093 + $0x30] sm:$0xff]
        %v5101 = vld [vmem:[%s5093 + $0x38] sm:$0xff]
        %v5102 = vld [vmem:[%s5093 + $0x40] sm:$0xff]
        %v5103 = vld [vmem:[%s5093 + $0x48] sm:$0xff]
        %v5104 = vld [vmem:[%s5093 + $0x50] sm:$0xff]
        %v5105 = vld [vmem:[%s5093 + $0x58] sm:$0xff]
        %v5106 = vld [vmem:[%s5093 + $0x60] sm:$0xff]
        %v5107 = vld [vmem:[%s5093 + $0x68] sm:$0xff]
        %v5108 = vld [vmem:[%s5093 + $0x70] sm:$0xff]
        %v5109 = vld [vmem:[%s5093 + $0x78] sm:$0xff]
        %v5110 = vld [vmem:[%s5093 + $0x80] sm:$0xff]
        %v5111 = vld [vmem:[%s5093 + $0x88] sm:$0xff]
        %v5112 = vld [vmem:[%s5093 + $0x90] sm:$0xff]
        %v5113 = vld [vmem:[%s5093 + $0x98] sm:$0xff]
        %5114 = vrot.lane.b32.xlu0 %v4801, 96
        %v5115 = vpop.permute.xlu0 %5114
        %5116 = vrot.lane.b32.xlu0 %v4800, 96
        %v5117 = vpop.permute.xlu0 %5116
        %v5118 = vsel %vm3651, %v5115, 0
        %v5120 = vsel %vm3651, %v5117, 0
        %5122 = vmatpush.msra.mxu0 0.0
        %5123 = vmatpush.msra.mxu0 0.0
        %5124 = vmatpush.msra.mxu0 0.0
        %5125 = vmatpush.msra.mxu0 0.0
        %5126 = vmatpush.msra.mxu0 0.0
        %5127 = vmatpush.msra.mxu0 0.0
        %5128 = vmatpush.msra.mxu0 %v5112
        %5129 = vmatpush.msra.mxu0 %v5110
        %5130 = vmatpush.msra.mxu0 %v5108
        %5131 = vmatpush.msra.mxu0 %v5106
        %5132 = vmatpush.msra.mxu0 %v5104
        %5133 = vmatpush.msra.mxu0 %v5102
        %5134 = vmatpush.msra.mxu0 %v5100
        %5135 = vmatpush.msra.mxu0 %v5098
        %5136 = vmatpush.msra.mxu0 %v5096
        %5137 = vmatpush.msra.mxu0 %v5094
        %5138 = vmatmul.f32.gmra.mxu0 %v5118
        %v5139 = vpop.f32.mrf.mxu0
        %v5140 = vadd.f32 0.0, %v5139
        %5141 = vmatmul.f32.gmra.mxu0 %v5120
        %v5142 = vpop.f32.mrf.mxu0
        %v5143 = vadd.f32 0.0, %v5142
        %5144 = vdwg.mxu0
        %5145 = vmatpush.msra.mxu0 0.0
        %5146 = vmatpush.msra.mxu0 0.0
        %5147 = vmatpush.msra.mxu0 0.0
        %5148 = vmatpush.msra.mxu0 0.0
        %5149 = vmatpush.msra.mxu0 0.0
        %5150 = vmatpush.msra.mxu0 0.0
        %5151 = vmatpush.msra.mxu0 %v5113
        %5152 = vmatpush.msra.mxu0 %v5111
        %5153 = vmatpush.msra.mxu0 %v5109
        %5154 = vmatpush.msra.mxu0 %v5107
        %5155 = vmatpush.msra.mxu0 %v5105
        %5156 = vmatpush.msra.mxu0 %v5103
        %5157 = vmatpush.msra.mxu0 %v5101
        %5158 = vmatpush.msra.mxu0 %v5099
        %5159 = vmatpush.msra.mxu0 %v5097
        %5160 = vmatpush.msra.mxu0 %v5095
        %5161 = vmatmul.f32.gmra.mxu0 %v5118
        %v5162 = vpop.f32.mrf.mxu0
        %v5163 = vadd.f32 0.0, %v5162
        %5164 = vmatmul.f32.gmra.mxu0 %v5120
        %v5165 = vpop.f32.mrf.mxu0
        %v5166 = vadd.f32 0.0, %v5165
        %5167 = vdwg.mxu0
        %v5168 = vadd.f32 %v5089, %v5140
        %v5169 = vadd.f32 %v5090, %v5163
        %v5170 = vadd.f32 %v5091, %v5143
        %v5171 = vadd.f32 %v5092, %v5166
        %s5172 = scalar_lea.vmem [#allocation8], 3200
        %v5173 = vld [vmem:[%s5172] sm:$0xff]
        %v5174 = vld [vmem:[%s5172 + $0x8] sm:$0xff]
        %v5175 = vld [vmem:[%s5172 + $0x10] sm:$0xff]
        %v5176 = vld [vmem:[%s5172 + $0x18] sm:$0xff]
        %v5177 = vld [vmem:[%s5172 + $0x20] sm:$0xff]
        %v5178 = vld [vmem:[%s5172 + $0x28] sm:$0xff]
        %v5179 = vld [vmem:[%s5172 + $0x30] sm:$0xff]
        %v5180 = vld [vmem:[%s5172 + $0x38] sm:$0xff]
        %v5181 = vld [vmem:[%s5172 + $0x40] sm:$0xff]
        %v5182 = vld [vmem:[%s5172 + $0x48] sm:$0xff]
        %v5183 = vld [vmem:[%s5172 + $0x50] sm:$0xff]
        %v5184 = vld [vmem:[%s5172 + $0x58] sm:$0xff]
        %v5185 = vld [vmem:[%s5172 + $0x60] sm:$0xff]
        %v5186 = vld [vmem:[%s5172 + $0x68] sm:$0xff]
        %v5187 = vld [vmem:[%s5172 + $0x70] sm:$0xff]
        %v5188 = vld [vmem:[%s5172 + $0x78] sm:$0xff]
        %v5189 = vld [vmem:[%s5172 + $0x80] sm:$0xff]
        %v5190 = vld [vmem:[%s5172 + $0x88] sm:$0xff]
        %v5191 = vld [vmem:[%s5172 + $0x90] sm:$0xff]
        %v5192 = vld [vmem:[%s5172 + $0x98] sm:$0xff]
        %vm5193 = vcmask 1043456
        %v5194 = vrot.slane %v3602, 4
        %v5195 = vrot.slane %v3603, 4
        %v5196 = vsel %vm5193, %v5194, %v5195
        %v5197 = vsel %vm3651, %v5196, 0
        %v5199 = vsel %vm3651, %v5195, 0
        %5201 = vmatpush.msra.mxu0 0.0
        %5202 = vmatpush.msra.mxu0 0.0
        %5203 = vmatpush.msra.mxu0 0.0
        %5204 = vmatpush.msra.mxu0 0.0
        %5205 = vmatpush.msra.mxu0 0.0
        %5206 = vmatpush.msra.mxu0 0.0
        %5207 = vmatpush.msra.mxu0 %v5191
        %5208 = vmatpush.msra.mxu0 %v5189
        %5209 = vmatpush.msra.mxu0 %v5187
        %5210 = vmatpush.msra.mxu0 %v5185
        %5211 = vmatpush.msra.mxu0 %v5183
        %5212 = vmatpush.msra.mxu0 %v5181
        %5213 = vmatpush.msra.mxu0 %v5179
        %5214 = vmatpush.msra.mxu0 %v5177
        %5215 = vmatpush.msra.mxu0 %v5175
        %5216 = vmatpush.msra.mxu0 %v5173
        %5217 = vmatmul.f32.gmra.mxu0 %v5197
        %v5218 = vpop.f32.mrf.mxu0
        %v5219 = vadd.f32 0.0, %v5218
        %5220 = vmatmul.f32.gmra.mxu0 %v5199
        %v5221 = vpop.f32.mrf.mxu0
        %v5222 = vadd.f32 0.0, %v5221
        %5223 = vdwg.mxu0
        %5224 = vmatpush.msra.mxu0 0.0
        %5225 = vmatpush.msra.mxu0 0.0
        %5226 = vmatpush.msra.mxu0 0.0
        %5227 = vmatpush.msra.mxu0 0.0
        %5228 = vmatpush.msra.mxu0 0.0
        %5229 = vmatpush.msra.mxu0 0.0
        %5230 = vmatpush.msra.mxu0 %v5192
        %5231 = vmatpush.msra.mxu0 %v5190
        %5232 = vmatpush.msra.mxu0 %v5188
        %5233 = vmatpush.msra.mxu0 %v5186
        %5234 = vmatpush.msra.mxu0 %v5184
        %5235 = vmatpush.msra.mxu0 %v5182
        %5236 = vmatpush.msra.mxu0 %v5180
        %5237 = vmatpush.msra.mxu0 %v5178
        %5238 = vmatpush.msra.mxu0 %v5176
        %5239 = vmatpush.msra.mxu0 %v5174
        %5240 = vmatmul.f32.gmra.mxu0 %v5197
        %v5241 = vpop.f32.mrf.mxu0
        %v5242 = vadd.f32 0.0, %v5241
        %5243 = vmatmul.f32.gmra.mxu0 %v5199
        %v5244 = vpop.f32.mrf.mxu0
        %v5245 = vadd.f32 0.0, %v5244
        %5246 = vdwg.mxu0
        %v5247 = vadd.f32 %v5168, %v5219
        %v5248 = vadd.f32 %v5169, %v5242
        %v5249 = vadd.f32 %v5170, %v5222
        %v5250 = vadd.f32 %v5171, %v5245
        %s5251 = scalar_lea.vmem [#allocation8], 3360
        %v5252 = vld [vmem:[%s5251] sm:$0xff]
        %v5253 = vld [vmem:[%s5251 + $0x8] sm:$0xff]
        %v5254 = vld [vmem:[%s5251 + $0x10] sm:$0xff]
        %v5255 = vld [vmem:[%s5251 + $0x18] sm:$0xff]
        %v5256 = vld [vmem:[%s5251 + $0x20] sm:$0xff]
        %v5257 = vld [vmem:[%s5251 + $0x28] sm:$0xff]
        %v5258 = vld [vmem:[%s5251 + $0x30] sm:$0xff]
        %v5259 = vld [vmem:[%s5251 + $0x38] sm:$0xff]
        %v5260 = vld [vmem:[%s5251 + $0x40] sm:$0xff]
        %v5261 = vld [vmem:[%s5251 + $0x48] sm:$0xff]
        %v5262 = vld [vmem:[%s5251 + $0x50] sm:$0xff]
        %v5263 = vld [vmem:[%s5251 + $0x58] sm:$0xff]
        %v5264 = vld [vmem:[%s5251 + $0x60] sm:$0xff]
        %v5265 = vld [vmem:[%s5251 + $0x68] sm:$0xff]
        %v5266 = vld [vmem:[%s5251 + $0x70] sm:$0xff]
        %v5267 = vld [vmem:[%s5251 + $0x78] sm:$0xff]
        %v5268 = vld [vmem:[%s5251 + $0x80] sm:$0xff]
        %v5269 = vld [vmem:[%s5251 + $0x88] sm:$0xff]
        %v5270 = vld [vmem:[%s5251 + $0x90] sm:$0xff]
        %v5271 = vld [vmem:[%s5251 + $0x98] sm:$0xff]
        %5272 = vrot.lane.b32.xlu0 %v5196, 120
        %v5273 = vpop.permute.xlu0 %5272
        %5274 = vrot.lane.b32.xlu0 %v5195, 120
        %v5275 = vpop.permute.xlu0 %5274
        %v5276 = vsel %vm3651, %v5273, 0
        %v5278 = vsel %vm3651, %v5275, 0
        %5280 = vmatpush.msra.mxu0 0.0
        %5281 = vmatpush.msra.mxu0 0.0
        %5282 = vmatpush.msra.mxu0 0.0
        %5283 = vmatpush.msra.mxu0 0.0
        %5284 = vmatpush.msra.mxu0 0.0
        %5285 = vmatpush.msra.mxu0 0.0
        %5286 = vmatpush.msra.mxu0 %v5270
        %5287 = vmatpush.msra.mxu0 %v5268
        %5288 = vmatpush.msra.mxu0 %v5266
        %5289 = vmatpush.msra.mxu0 %v5264
        %5290 = vmatpush.msra.mxu0 %v5262
        %5291 = vmatpush.msra.mxu0 %v5260
        %5292 = vmatpush.msra.mxu0 %v5258
        %5293 = vmatpush.msra.mxu0 %v5256
        %5294 = vmatpush.msra.mxu0 %v5254
        %5295 = vmatpush.msra.mxu0 %v5252
        %5296 = vmatmul.f32.gmra.mxu0 %v5276
        %v5297 = vpop.f32.mrf.mxu0
        %v5298 = vadd.f32 0.0, %v5297
        %5299 = vmatmul.f32.gmra.mxu0 %v5278
        %v5300 = vpop.f32.mrf.mxu0
        %v5301 = vadd.f32 0.0, %v5300
        %5302 = vdwg.mxu0
        %5303 = vmatpush.msra.mxu0 0.0
        %5304 = vmatpush.msra.mxu0 0.0
        %5305 = vmatpush.msra.mxu0 0.0
        %5306 = vmatpush.msra.mxu0 0.0
        %5307 = vmatpush.msra.mxu0 0.0
        %5308 = vmatpush.msra.mxu0 0.0
        %5309 = vmatpush.msra.mxu0 %v5271
        %5310 = vmatpush.msra.mxu0 %v5269
        %5311 = vmatpush.msra.mxu0 %v5267
        %5312 = vmatpush.msra.mxu0 %v5265
        %5313 = vmatpush.msra.mxu0 %v5263
        %5314 = vmatpush.msra.mxu0 %v5261
        %5315 = vmatpush.msra.mxu0 %v5259
        %5316 = vmatpush.msra.mxu0 %v5257
        %5317 = vmatpush.msra.mxu0 %v5255
        %5318 = vmatpush.msra.mxu0 %v5253
        %5319 = vmatmul.f32.gmra.mxu0 %v5276
        %v5320 = vpop.f32.mrf.mxu0
        %v5321 = vadd.f32 0.0, %v5320
        %5322 = vmatmul.f32.gmra.mxu0 %v5278
        %v5323 = vpop.f32.mrf.mxu0
        %v5324 = vadd.f32 0.0, %v5323
        %5325 = vdwg.mxu0
        %v5326 = vadd.f32 %v5247, %v5298
        %v5327 = vadd.f32 %v5248, %v5321
        %v5328 = vadd.f32 %v5249, %v5301
        %v5329 = vadd.f32 %v5250, %v5324
        %s5330 = scalar_lea.vmem [#allocation8], 3520
        %v5331 = vld [vmem:[%s5330] sm:$0xff]
        %v5332 = vld [vmem:[%s5330 + $0x8] sm:$0xff]
        %v5333 = vld [vmem:[%s5330 + $0x10] sm:$0xff]
        %v5334 = vld [vmem:[%s5330 + $0x18] sm:$0xff]
        %v5335 = vld [vmem:[%s5330 + $0x20] sm:$0xff]
        %v5336 = vld [vmem:[%s5330 + $0x28] sm:$0xff]
        %v5337 = vld [vmem:[%s5330 + $0x30] sm:$0xff]
        %v5338 = vld [vmem:[%s5330 + $0x38] sm:$0xff]
        %v5339 = vld [vmem:[%s5330 + $0x40] sm:$0xff]
        %v5340 = vld [vmem:[%s5330 + $0x48] sm:$0xff]
        %v5341 = vld [vmem:[%s5330 + $0x50] sm:$0xff]
        %v5342 = vld [vmem:[%s5330 + $0x58] sm:$0xff]
        %v5343 = vld [vmem:[%s5330 + $0x60] sm:$0xff]
        %v5344 = vld [vmem:[%s5330 + $0x68] sm:$0xff]
        %v5345 = vld [vmem:[%s5330 + $0x70] sm:$0xff]
        %v5346 = vld [vmem:[%s5330 + $0x78] sm:$0xff]
        %v5347 = vld [vmem:[%s5330 + $0x80] sm:$0xff]
        %v5348 = vld [vmem:[%s5330 + $0x88] sm:$0xff]
        %v5349 = vld [vmem:[%s5330 + $0x90] sm:$0xff]
        %v5350 = vld [vmem:[%s5330 + $0x98] sm:$0xff]
        %5351 = vrot.lane.b32.xlu0 %v5196, 112
        %v5352 = vpop.permute.xlu0 %5351
        %5353 = vrot.lane.b32.xlu0 %v5195, 112
        %v5354 = vpop.permute.xlu0 %5353
        %v5355 = vsel %vm3651, %v5352, 0
        %v5357 = vsel %vm3651, %v5354, 0
        %5359 = vmatpush.msra.mxu0 0.0
        %5360 = vmatpush.msra.mxu0 0.0
        %5361 = vmatpush.msra.mxu0 0.0
        %5362 = vmatpush.msra.mxu0 0.0
        %5363 = vmatpush.msra.mxu0 0.0
        %5364 = vmatpush.msra.mxu0 0.0
        %5365 = vmatpush.msra.mxu0 %v5349
        %5366 = vmatpush.msra.mxu0 %v5347
        %5367 = vmatpush.msra.mxu0 %v5345
        %5368 = vmatpush.msra.mxu0 %v5343
        %5369 = vmatpush.msra.mxu0 %v5341
        %5370 = vmatpush.msra.mxu0 %v5339
        %5371 = vmatpush.msra.mxu0 %v5337
        %5372 = vmatpush.msra.mxu0 %v5335
        %5373 = vmatpush.msra.mxu0 %v5333
        %5374 = vmatpush.msra.mxu0 %v5331
        %5375 = vmatmul.f32.gmra.mxu0 %v5355
        %v5376 = vpop.f32.mrf.mxu0
        %v5377 = vadd.f32 0.0, %v5376
        %5378 = vmatmul.f32.gmra.mxu0 %v5357
        %v5379 = vpop.f32.mrf.mxu0
        %v5380 = vadd.f32 0.0, %v5379
        %5381 = vdwg.mxu0
        %5382 = vmatpush.msra.mxu0 0.0
        %5383 = vmatpush.msra.mxu0 0.0
        %5384 = vmatpush.msra.mxu0 0.0
        %5385 = vmatpush.msra.mxu0 0.0
        %5386 = vmatpush.msra.mxu0 0.0
        %5387 = vmatpush.msra.mxu0 0.0
        %5388 = vmatpush.msra.mxu0 %v5350
        %5389 = vmatpush.msra.mxu0 %v5348
        %5390 = vmatpush.msra.mxu0 %v5346
        %5391 = vmatpush.msra.mxu0 %v5344
        %5392 = vmatpush.msra.mxu0 %v5342
        %5393 = vmatpush.msra.mxu0 %v5340
        %5394 = vmatpush.msra.mxu0 %v5338
        %5395 = vmatpush.msra.mxu0 %v5336
        %5396 = vmatpush.msra.mxu0 %v5334
        %5397 = vmatpush.msra.mxu0 %v5332
        %5398 = vmatmul.f32.gmra.mxu0 %v5355
        %v5399 = vpop.f32.mrf.mxu0
        %v5400 = vadd.f32 0.0, %v5399
        %5401 = vmatmul.f32.gmra.mxu0 %v5357
        %v5402 = vpop.f32.mrf.mxu0
        %v5403 = vadd.f32 0.0, %v5402
        %5404 = vdwg.mxu0
        %v5405 = vadd.f32 %v5326, %v5377
        %v5406 = vadd.f32 %v5327, %v5400
        %v5407 = vadd.f32 %v5328, %v5380
        %v5408 = vadd.f32 %v5329, %v5403
        %s5409 = scalar_lea.vmem [#allocation8], 3680
        %v5410 = vld [vmem:[%s5409] sm:$0xff]
        %v5411 = vld [vmem:[%s5409 + $0x8] sm:$0xff]
        %v5412 = vld [vmem:[%s5409 + $0x10] sm:$0xff]
        %v5413 = vld [vmem:[%s5409 + $0x18] sm:$0xff]
        %v5414 = vld [vmem:[%s5409 + $0x20] sm:$0xff]
        %v5415 = vld [vmem:[%s5409 + $0x28] sm:$0xff]
        %v5416 = vld [vmem:[%s5409 + $0x30] sm:$0xff]
        %v5417 = vld [vmem:[%s5409 + $0x38] sm:$0xff]
        %v5418 = vld [vmem:[%s5409 + $0x40] sm:$0xff]
        %v5419 = vld [vmem:[%s5409 + $0x48] sm:$0xff]
        %v5420 = vld [vmem:[%s5409 + $0x50] sm:$0xff]
        %v5421 = vld [vmem:[%s5409 + $0x58] sm:$0xff]
        %v5422 = vld [vmem:[%s5409 + $0x60] sm:$0xff]
        %v5423 = vld [vmem:[%s5409 + $0x68] sm:$0xff]
        %v5424 = vld [vmem:[%s5409 + $0x70] sm:$0xff]
        %v5425 = vld [vmem:[%s5409 + $0x78] sm:$0xff]
        %v5426 = vld [vmem:[%s5409 + $0x80] sm:$0xff]
        %v5427 = vld [vmem:[%s5409 + $0x88] sm:$0xff]
        %v5428 = vld [vmem:[%s5409 + $0x90] sm:$0xff]
        %v5429 = vld [vmem:[%s5409 + $0x98] sm:$0xff]
        %5430 = vrot.lane.b32.xlu0 %v5196, 104
        %v5431 = vpop.permute.xlu0 %5430
        %5432 = vrot.lane.b32.xlu0 %v5195, 104
        %v5433 = vpop.permute.xlu0 %5432
        %v5434 = vsel %vm3651, %v5431, 0
        %v5436 = vsel %vm3651, %v5433, 0
        %5438 = vmatpush.msra.mxu0 0.0
        %5439 = vmatpush.msra.mxu0 0.0
        %5440 = vmatpush.msra.mxu0 0.0
        %5441 = vmatpush.msra.mxu0 0.0
        %5442 = vmatpush.msra.mxu0 0.0
        %5443 = vmatpush.msra.mxu0 0.0
        %5444 = vmatpush.msra.mxu0 %v5428
        %5445 = vmatpush.msra.mxu0 %v5426
        %5446 = vmatpush.msra.mxu0 %v5424
        %5447 = vmatpush.msra.mxu0 %v5422
        %5448 = vmatpush.msra.mxu0 %v5420
        %5449 = vmatpush.msra.mxu0 %v5418
        %5450 = vmatpush.msra.mxu0 %v5416
        %5451 = vmatpush.msra.mxu0 %v5414
        %5452 = vmatpush.msra.mxu0 %v5412
        %5453 = vmatpush.msra.mxu0 %v5410
        %5454 = vmatmul.f32.gmra.mxu0 %v5434
        %v5455 = vpop.f32.mrf.mxu0
        %v5456 = vadd.f32 0.0, %v5455
        %5457 = vmatmul.f32.gmra.mxu0 %v5436
        %v5458 = vpop.f32.mrf.mxu0
        %v5459 = vadd.f32 0.0, %v5458
        %5460 = vdwg.mxu0
        %5461 = vmatpush.msra.mxu0 0.0
        %5462 = vmatpush.msra.mxu0 0.0
        %5463 = vmatpush.msra.mxu0 0.0
        %5464 = vmatpush.msra.mxu0 0.0
        %5465 = vmatpush.msra.mxu0 0.0
        %5466 = vmatpush.msra.mxu0 0.0
        %5467 = vmatpush.msra.mxu0 %v5429
        %5468 = vmatpush.msra.mxu0 %v5427
        %5469 = vmatpush.msra.mxu0 %v5425
        %5470 = vmatpush.msra.mxu0 %v5423
        %5471 = vmatpush.msra.mxu0 %v5421
        %5472 = vmatpush.msra.mxu0 %v5419
        %5473 = vmatpush.msra.mxu0 %v5417
        %5474 = vmatpush.msra.mxu0 %v5415
        %5475 = vmatpush.msra.mxu0 %v5413
        %5476 = vmatpush.msra.mxu0 %v5411
        %5477 = vmatmul.f32.gmra.mxu0 %v5434
        %v5478 = vpop.f32.mrf.mxu0
        %v5479 = vadd.f32 0.0, %v5478
        %5480 = vmatmul.f32.gmra.mxu0 %v5436
        %v5481 = vpop.f32.mrf.mxu0
        %v5482 = vadd.f32 0.0, %v5481
        %5483 = vdwg.mxu0
        %v5484 = vadd.f32 %v5405, %v5456
        %v5485 = vadd.f32 %v5406, %v5479
        %v5486 = vadd.f32 %v5407, %v5459
        %v5487 = vadd.f32 %v5408, %v5482
        %s5488 = scalar_lea.vmem [#allocation8], 3840
        %v5489 = vld [vmem:[%s5488] sm:$0xff]
        %v5490 = vld [vmem:[%s5488 + $0x8] sm:$0xff]
        %v5491 = vld [vmem:[%s5488 + $0x10] sm:$0xff]
        %v5492 = vld [vmem:[%s5488 + $0x18] sm:$0xff]
        %v5493 = vld [vmem:[%s5488 + $0x20] sm:$0xff]
        %v5494 = vld [vmem:[%s5488 + $0x28] sm:$0xff]
        %v5495 = vld [vmem:[%s5488 + $0x30] sm:$0xff]
        %v5496 = vld [vmem:[%s5488 + $0x38] sm:$0xff]
        %v5497 = vld [vmem:[%s5488 + $0x40] sm:$0xff]
        %v5498 = vld [vmem:[%s5488 + $0x48] sm:$0xff]
        %v5499 = vld [vmem:[%s5488 + $0x50] sm:$0xff]
        %v5500 = vld [vmem:[%s5488 + $0x58] sm:$0xff]
        %v5501 = vld [vmem:[%s5488 + $0x60] sm:$0xff]
        %v5502 = vld [vmem:[%s5488 + $0x68] sm:$0xff]
        %v5503 = vld [vmem:[%s5488 + $0x70] sm:$0xff]
        %v5504 = vld [vmem:[%s5488 + $0x78] sm:$0xff]
        %v5505 = vld [vmem:[%s5488 + $0x80] sm:$0xff]
        %v5506 = vld [vmem:[%s5488 + $0x88] sm:$0xff]
        %v5507 = vld [vmem:[%s5488 + $0x90] sm:$0xff]
        %v5508 = vld [vmem:[%s5488 + $0x98] sm:$0xff]
        %5509 = vrot.lane.b32.xlu0 %v5196, 96
        %v5510 = vpop.permute.xlu0 %5509
        %5511 = vrot.lane.b32.xlu0 %v5195, 96
        %v5512 = vpop.permute.xlu0 %5511
        %v5513 = vsel %vm3651, %v5510, 0
        %v5515 = vsel %vm3651, %v5512, 0
        %5517 = vmatpush.msra.mxu0 0.0
        %5518 = vmatpush.msra.mxu0 0.0
        %5519 = vmatpush.msra.mxu0 0.0
        %5520 = vmatpush.msra.mxu0 0.0
        %5521 = vmatpush.msra.mxu0 0.0
        %5522 = vmatpush.msra.mxu0 0.0
        %5523 = vmatpush.msra.mxu0 %v5507
        %5524 = vmatpush.msra.mxu0 %v5505
        %5525 = vmatpush.msra.mxu0 %v5503
        %5526 = vmatpush.msra.mxu0 %v5501
        %5527 = vmatpush.msra.mxu0 %v5499
        %5528 = vmatpush.msra.mxu0 %v5497
        %5529 = vmatpush.msra.mxu0 %v5495
        %5530 = vmatpush.msra.mxu0 %v5493
        %5531 = vmatpush.msra.mxu0 %v5491
        %5532 = vmatpush.msra.mxu0 %v5489
        %5533 = vmatmul.f32.gmra.mxu0 %v5513
        %v5534 = vpop.f32.mrf.mxu0
        %v5535 = vadd.f32 0.0, %v5534
        %5536 = vmatmul.f32.gmra.mxu0 %v5515
        %v5537 = vpop.f32.mrf.mxu0
        %v5538 = vadd.f32 0.0, %v5537
        %5539 = vdwg.mxu0
        %5540 = vmatpush.msra.mxu0 0.0
        %5541 = vmatpush.msra.mxu0 0.0
        %5542 = vmatpush.msra.mxu0 0.0
        %5543 = vmatpush.msra.mxu0 0.0
        %5544 = vmatpush.msra.mxu0 0.0
        %5545 = vmatpush.msra.mxu0 0.0
        %5546 = vmatpush.msra.mxu0 %v5508
        %5547 = vmatpush.msra.mxu0 %v5506
        %5548 = vmatpush.msra.mxu0 %v5504
        %5549 = vmatpush.msra.mxu0 %v5502
        %5550 = vmatpush.msra.mxu0 %v5500
        %5551 = vmatpush.msra.mxu0 %v5498
        %5552 = vmatpush.msra.mxu0 %v5496
        %5553 = vmatpush.msra.mxu0 %v5494
        %5554 = vmatpush.msra.mxu0 %v5492
        %5555 = vmatpush.msra.mxu0 %v5490
        %5556 = vmatmul.f32.gmra.mxu0 %v5513
        %v5557 = vpop.f32.mrf.mxu0
        %v5558 = vadd.f32 0.0, %v5557
        %5559 = vmatmul.f32.gmra.mxu0 %v5515
        %v5560 = vpop.f32.mrf.mxu0
        %v5561 = vadd.f32 0.0, %v5560
        %5562 = vdwg.mxu0
        %v5563 = vadd.f32 %v5484, %v5535
        %v5564 = vadd.f32 %v5485, %v5558
        %v5565 = vadd.f32 %v5486, %v5538
        %v5566 = vadd.f32 %v5487, %v5561
        %v5567 = vld [vmem:[#allocation10] sm:$0x3]
        %v5569 = vperm.slane %v5567, 0
        %v5570 = vperm.slane %v5567, 1
        %v5573 = vadd.f32 %v5563, %v5569
        %v5574 = vadd.f32 %v5564, %v5570
        %v5575 = vadd.f32 %v5565, %v5569
        %v5576 = vadd.f32 %v5566, %v5570
        %v5577 = vmax.f32 %v5573, 0.0
        %v5578 = vmax.f32 %v5574, 0.0
        %v5579 = vmax.f32 %v5575, 0.0
        %v5580 = vmax.f32 %v5576, 0.0
        %v5583 = vrot.slane %v5577, 1
        %v5584 = vrot.slane %v5578, 1
        %v5587 = vmax.f32 %v5577, %v5583
        %v5588 = vmax.f32 %v5578, %v5584
        %5590 = vrot.lane.b32.xlu0 %v5587, 112
        %v5591 = vpop.permute.xlu0 %5590
        %v5593 = vmax.f32 %v5587, %v5591
        %v5594 = vld [vmem:[#allocation11] sm:$0xff]
        %v5595 = vld [vmem:[#allocation11 + $0x8] sm:$0xff]
        %s5596 = scalar_lea.vmem [#allocation11], 16
        %v5597 = vld [vmem:[%s5596] sm:$0xff]
        %v5598 = vld [vmem:[%s5596 + $0x8] sm:$0xff]
        %5600 = vrot.lane.b32.xlu0 %v5593, 96
        %v5601 = vpop.permute.xlu0 %5600
        %vm5602 = vcmask 130048
        %v5603 = vsel %vm5602, %v5601, 0
        %5605 = vmatpush.msra.mxu0 0.0
        %5606 = vmatpush.msra.mxu0 0.0
        %5607 = vmatpush.msra.mxu0 0.0
        %5608 = vmatpush.msra.mxu0 0.0
        %5609 = vmatpush.msra.mxu0 0.0
        %5610 = vmatpush.msra.mxu0 0.0
        %5611 = vmatpush.msra.mxu0 0.0
        %5612 = vmatpush.msra.mxu0 0.0
        %5613 = vmatpush.msra.mxu0 0.0
        %5614 = vmatpush.msra.mxu0 0.0
        %5615 = vmatpush.msra.mxu0 0.0
        %5616 = vmatpush.msra.mxu0 0.0
        %5617 = vmatpush.msra.mxu0 0.0
        %5618 = vmatpush.msra.mxu0 0.0
        %5619 = vmatpush.msra.mxu0 %v5598
        %5620 = vmatpush.msra.mxu0 %v5597
        %5621 = vmatmul.f32.gmra.mxu0 %v5603
        %v5622 = vpop.f32.mrf.mxu0
        %v5623 = vadd.f32 0.0, %v5622
        %5624 = vdwg.mxu0
        %v5625 = vsel %vm5602, %v5593, 0
        %5627 = vmatpush.msra.mxu0 0.0
        %5628 = vmatpush.msra.mxu0 0.0
        %5629 = vmatpush.msra.mxu0 0.0
        %5630 = vmatpush.msra.mxu0 0.0
        %5631 = vmatpush.msra.mxu0 0.0
        %5632 = vmatpush.msra.mxu0 0.0
        %5633 = vmatpush.msra.mxu0 0.0
        %5634 = vmatpush.msra.mxu0 0.0
        %5635 = vmatpush.msra.mxu0 0.0
        %5636 = vmatpush.msra.mxu0 0.0
        %5637 = vmatpush.msra.mxu0 0.0
        %5638 = vmatpush.msra.mxu0 0.0
        %5639 = vmatpush.msra.mxu0 0.0
        %5640 = vmatpush.msra.mxu0 0.0
        %5641 = vmatpush.msra.mxu0 %v5595
        %5642 = vmatpush.msra.mxu0 %v5594
        %5643 = vmatmul.f32.gmra.mxu0 %v5625
        %v5644 = vpop.f32.mrf.mxu0
        %v5645 = vadd.f32 %v5623, %v5644
        %5646 = vdwg.mxu0
        %s5647 = scalar_lea.vmem [#allocation11], 32
        %v5648 = vld [vmem:[%s5647] sm:$0xff]
        %v5649 = vld [vmem:[%s5647 + $0x8] sm:$0xff]
        %5650 = vrot.lane.b32.xlu0 %v5593, 64
        %v5651 = vpop.permute.xlu0 %5650
        %v5652 = vsel %vm5602, %v5651, 0
        %5654 = vmatpush.msra.mxu0 0.0
        %5655 = vmatpush.msra.mxu0 0.0
        %5656 = vmatpush.msra.mxu0 0.0
        %5657 = vmatpush.msra.mxu0 0.0
        %5658 = vmatpush.msra.mxu0 0.0
        %5659 = vmatpush.msra.mxu0 0.0
        %5660 = vmatpush.msra.mxu0 0.0
        %5661 = vmatpush.msra.mxu0 0.0
        %5662 = vmatpush.msra.mxu0 0.0
        %5663 = vmatpush.msra.mxu0 0.0
        %5664 = vmatpush.msra.mxu0 0.0
        %5665 = vmatpush.msra.mxu0 0.0
        %5666 = vmatpush.msra.mxu0 0.0
        %5667 = vmatpush.msra.mxu0 0.0
        %5668 = vmatpush.msra.mxu0 %v5649
        %5669 = vmatpush.msra.mxu0 %v5648
        %5670 = vmatmul.f32.gmra.mxu0 %v5652
        %v5671 = vpop.f32.mrf.mxu0
        %v5672 = vadd.f32 0.0, %v5671
        %5673 = vdwg.mxu0
        %v5674 = vadd.f32 %v5645, %v5672
        %s5675 = scalar_lea.vmem [#allocation11], 48
        %v5676 = vld [vmem:[%s5675] sm:$0xff]
        %v5677 = vld [vmem:[%s5675 + $0x8] sm:$0xff]
        %5678 = vrot.lane.b32.xlu0 %v5593, 32
        %v5679 = vpop.permute.xlu0 %5678
        %v5680 = vsel %vm5602, %v5679, 0
        %5682 = vmatpush.msra.mxu0 0.0
        %5683 = vmatpush.msra.mxu0 0.0
        %5684 = vmatpush.msra.mxu0 0.0
        %5685 = vmatpush.msra.mxu0 0.0
        %5686 = vmatpush.msra.mxu0 0.0
        %5687 = vmatpush.msra.mxu0 0.0
        %5688 = vmatpush.msra.mxu0 0.0
        %5689 = vmatpush.msra.mxu0 0.0
        %5690 = vmatpush.msra.mxu0 0.0
        %5691 = vmatpush.msra.mxu0 0.0
        %5692 = vmatpush.msra.mxu0 0.0
        %5693 = vmatpush.msra.mxu0 0.0
        %5694 = vmatpush.msra.mxu0 0.0
        %5695 = vmatpush.msra.mxu0 0.0
        %5696 = vmatpush.msra.mxu0 %v5677
        %5697 = vmatpush.msra.mxu0 %v5676
        %5698 = vmatmul.f32.gmra.mxu0 %v5680
        %v5699 = vpop.f32.mrf.mxu0
        %v5700 = vadd.f32 0.0, %v5699
        %5701 = vdwg.mxu0
        %v5702 = vadd.f32 %v5674, %v5700
        %5704 = vrot.lane.b32.xlu0 %v5588, 112
        %v5705 = vpop.permute.xlu0 %5704
        %v5707 = vmax.f32 %v5588, %v5705
        %s5708 = scalar_lea.vmem [#allocation11], 64
        %v5709 = vld [vmem:[%s5708] sm:$0xff]
        %v5710 = vld [vmem:[%s5708 + $0x8] sm:$0xff]
        %v5712 = vsel %vm5602, %v5707, 0
        %5714 = vmatpush.msra.mxu0 0.0
        %5715 = vmatpush.msra.mxu0 0.0
        %5716 = vmatpush.msra.mxu0 0.0
        %5717 = vmatpush.msra.mxu0 0.0
        %5718 = vmatpush.msra.mxu0 0.0
        %5719 = vmatpush.msra.mxu0 0.0
        %5720 = vmatpush.msra.mxu0 0.0
        %5721 = vmatpush.msra.mxu0 0.0
        %5722 = vmatpush.msra.mxu0 0.0
        %5723 = vmatpush.msra.mxu0 0.0
        %5724 = vmatpush.msra.mxu0 0.0
        %5725 = vmatpush.msra.mxu0 0.0
        %5726 = vmatpush.msra.mxu0 0.0
        %5727 = vmatpush.msra.mxu0 0.0
        %5728 = vmatpush.msra.mxu0 %v5710
        %5729 = vmatpush.msra.mxu0 %v5709
        %5730 = vmatmul.f32.gmra.mxu0 %v5712
        %v5731 = vpop.f32.mrf.mxu0
        %v5732 = vadd.f32 0.0, %v5731
        %5733 = vdwg.mxu0
        %v5734 = vadd.f32 %v5702, %v5732
        %s5735 = scalar_lea.vmem [#allocation11], 80
        %v5736 = vld [vmem:[%s5735] sm:$0xff]
        %v5737 = vld [vmem:[%s5735 + $0x8] sm:$0xff]
        %v5738 = vrot.slane %v5593, 2
        %v5739 = vsel %vm5602, %v5738, 0
        %5741 = vmatpush.msra.mxu0 0.0
        %5742 = vmatpush.msra.mxu0 0.0
        %5743 = vmatpush.msra.mxu0 0.0
        %5744 = vmatpush.msra.mxu0 0.0
        %5745 = vmatpush.msra.mxu0 0.0
        %5746 = vmatpush.msra.mxu0 0.0
        %5747 = vmatpush.msra.mxu0 0.0
        %5748 = vmatpush.msra.mxu0 0.0
        %5749 = vmatpush.msra.mxu0 0.0
        %5750 = vmatpush.msra.mxu0 0.0
        %5751 = vmatpush.msra.mxu0 0.0
        %5752 = vmatpush.msra.mxu0 0.0
        %5753 = vmatpush.msra.mxu0 0.0
        %5754 = vmatpush.msra.mxu0 0.0
        %5755 = vmatpush.msra.mxu0 %v5737
        %5756 = vmatpush.msra.mxu0 %v5736
        %5757 = vmatmul.f32.gmra.mxu0 %v5739
        %v5758 = vpop.f32.mrf.mxu0
        %v5759 = vadd.f32 0.0, %v5758
        %5760 = vdwg.mxu0
        %v5761 = vadd.f32 %v5734, %v5759
        %s5762 = scalar_lea.vmem [#allocation11], 96
        %v5763 = vld [vmem:[%s5762] sm:$0xff]
        %v5764 = vld [vmem:[%s5762 + $0x8] sm:$0xff]
        %5765 = vrot.lane.b32.xlu0 %v5738, 96
        %v5766 = vpop.permute.xlu0 %5765
        %v5767 = vsel %vm5602, %v5766, 0
        %5769 = vmatpush.msra.mxu0 0.0
        %5770 = vmatpush.msra.mxu0 0.0
        %5771 = vmatpush.msra.mxu0 0.0
        %5772 = vmatpush.msra.mxu0 0.0
        %5773 = vmatpush.msra.mxu0 0.0
        %5774 = vmatpush.msra.mxu0 0.0
        %5775 = vmatpush.msra.mxu0 0.0
        %5776 = vmatpush.msra.mxu0 0.0
        %5777 = vmatpush.msra.mxu0 0.0
        %5778 = vmatpush.msra.mxu0 0.0
        %5779 = vmatpush.msra.mxu0 0.0
        %5780 = vmatpush.msra.mxu0 0.0
        %5781 = vmatpush.msra.mxu0 0.0
        %5782 = vmatpush.msra.mxu0 0.0
        %5783 = vmatpush.msra.mxu0 %v5764
        %5784 = vmatpush.msra.mxu0 %v5763
        %5785 = vmatmul.f32.gmra.mxu0 %v5767
        %v5786 = vpop.f32.mrf.mxu0
        %v5787 = vadd.f32 0.0, %v5786
        %5788 = vdwg.mxu0
        %v5789 = vadd.f32 %v5761, %v5787
        %s5790 = scalar_lea.vmem [#allocation11], 112
        %v5791 = vld [vmem:[%s5790] sm:$0xff]
        %v5792 = vld [vmem:[%s5790 + $0x8] sm:$0xff]
        %5793 = vrot.lane.b32.xlu0 %v5738, 64
        %v5794 = vpop.permute.xlu0 %5793
        %v5795 = vsel %vm5602, %v5794, 0
        %5797 = vmatpush.msra.mxu0 0.0
        %5798 = vmatpush.msra.mxu0 0.0
        %5799 = vmatpush.msra.mxu0 0.0
        %5800 = vmatpush.msra.mxu0 0.0
        %5801 = vmatpush.msra.mxu0 0.0
        %5802 = vmatpush.msra.mxu0 0.0
        %5803 = vmatpush.msra.mxu0 0.0
        %5804 = vmatpush.msra.mxu0 0.0
        %5805 = vmatpush.msra.mxu0 0.0
        %5806 = vmatpush.msra.mxu0 0.0
        %5807 = vmatpush.msra.mxu0 0.0
        %5808 = vmatpush.msra.mxu0 0.0
        %5809 = vmatpush.msra.mxu0 0.0
        %5810 = vmatpush.msra.mxu0 0.0
        %5811 = vmatpush.msra.mxu0 %v5792
        %5812 = vmatpush.msra.mxu0 %v5791
        %5813 = vmatmul.f32.gmra.mxu0 %v5795
        %v5814 = vpop.f32.mrf.mxu0
        %v5815 = vadd.f32 0.0, %v5814
        %5816 = vdwg.mxu0
        %v5817 = vadd.f32 %v5789, %v5815
        %s5818 = scalar_lea.vmem [#allocation11], 128
        %v5819 = vld [vmem:[%s5818] sm:$0xff]
        %v5820 = vld [vmem:[%s5818 + $0x8] sm:$0xff]
        %5821 = vrot.lane.b32.xlu0 %v5738, 32
        %v5822 = vpop.permute.xlu0 %5821
        %v5823 = vsel %vm5602, %v5822, 0
        %5825 = vmatpush.msra.mxu0 0.0
        %5826 = vmatpush.msra.mxu0 0.0
        %5827 = vmatpush.msra.mxu0 0.0
        %5828 = vmatpush.msra.mxu0 0.0
        %5829 = vmatpush.msra.mxu0 0.0
        %5830 = vmatpush.msra.mxu0 0.0
        %5831 = vmatpush.msra.mxu0 0.0
        %5832 = vmatpush.msra.mxu0 0.0
        %5833 = vmatpush.msra.mxu0 0.0
        %5834 = vmatpush.msra.mxu0 0.0
        %5835 = vmatpush.msra.mxu0 0.0
        %5836 = vmatpush.msra.mxu0 0.0
        %5837 = vmatpush.msra.mxu0 0.0
        %5838 = vmatpush.msra.mxu0 0.0
        %5839 = vmatpush.msra.mxu0 %v5820
        %5840 = vmatpush.msra.mxu0 %v5819
        %5841 = vmatmul.f32.gmra.mxu0 %v5823
        %v5842 = vpop.f32.mrf.mxu0
        %v5843 = vadd.f32 0.0, %v5842
        %5844 = vdwg.mxu0
        %v5845 = vadd.f32 %v5817, %v5843
        %s5846 = scalar_lea.vmem [#allocation11], 144
        %v5847 = vld [vmem:[%s5846] sm:$0xff]
        %v5848 = vld [vmem:[%s5846 + $0x8] sm:$0xff]
        %v5849 = vrot.slane %v5707, 2
        %v5850 = vsel %vm5602, %v5849, 0
        %5852 = vmatpush.msra.mxu0 0.0
        %5853 = vmatpush.msra.mxu0 0.0
        %5854 = vmatpush.msra.mxu0 0.0
        %5855 = vmatpush.msra.mxu0 0.0
        %5856 = vmatpush.msra.mxu0 0.0
        %5857 = vmatpush.msra.mxu0 0.0
        %5858 = vmatpush.msra.mxu0 0.0
        %5859 = vmatpush.msra.mxu0 0.0
        %5860 = vmatpush.msra.mxu0 0.0
        %5861 = vmatpush.msra.mxu0 0.0
        %5862 = vmatpush.msra.mxu0 0.0
        %5863 = vmatpush.msra.mxu0 0.0
        %5864 = vmatpush.msra.mxu0 0.0
        %5865 = vmatpush.msra.mxu0 0.0
        %5866 = vmatpush.msra.mxu0 %v5848
        %5867 = vmatpush.msra.mxu0 %v5847
        %5868 = vmatmul.f32.gmra.mxu0 %v5850
        %v5869 = vpop.f32.mrf.mxu0
        %v5870 = vadd.f32 0.0, %v5869
        %5871 = vdwg.mxu0
        %v5872 = vadd.f32 %v5845, %v5870
        %s5873 = scalar_lea.vmem [#allocation11], 160
        %v5874 = vld [vmem:[%s5873] sm:$0xff]
        %v5875 = vld [vmem:[%s5873 + $0x8] sm:$0xff]
        %v5876 = vrot.slane %v5593, 4
        %v5877 = vsel %vm5602, %v5876, 0
        %5879 = vmatpush.msra.mxu0 0.0
        %5880 = vmatpush.msra.mxu0 0.0
        %5881 = vmatpush.msra.mxu0 0.0
        %5882 = vmatpush.msra.mxu0 0.0
        %5883 = vmatpush.msra.mxu0 0.0
        %5884 = vmatpush.msra.mxu0 0.0
        %5885 = vmatpush.msra.mxu0 0.0
        %5886 = vmatpush.msra.mxu0 0.0
        %5887 = vmatpush.msra.mxu0 0.0
        %5888 = vmatpush.msra.mxu0 0.0
        %5889 = vmatpush.msra.mxu0 0.0
        %5890 = vmatpush.msra.mxu0 0.0
        %5891 = vmatpush.msra.mxu0 0.0
        %5892 = vmatpush.msra.mxu0 0.0
        %5893 = vmatpush.msra.mxu0 %v5875
        %5894 = vmatpush.msra.mxu0 %v5874
        %5895 = vmatmul.f32.gmra.mxu0 %v5877
        %v5896 = vpop.f32.mrf.mxu0
        %v5897 = vadd.f32 0.0, %v5896
        %5898 = vdwg.mxu0
        %v5899 = vadd.f32 %v5872, %v5897
        %s5900 = scalar_lea.vmem [#allocation11], 176
        %v5901 = vld [vmem:[%s5900] sm:$0xff]
        %v5902 = vld [vmem:[%s5900 + $0x8] sm:$0xff]
        %5903 = vrot.lane.b32.xlu0 %v5876, 96
        %v5904 = vpop.permute.xlu0 %5903
        %v5905 = vsel %vm5602, %v5904, 0
        %5907 = vmatpush.msra.mxu0 0.0
        %5908 = vmatpush.msra.mxu0 0.0
        %5909 = vmatpush.msra.mxu0 0.0
        %5910 = vmatpush.msra.mxu0 0.0
        %5911 = vmatpush.msra.mxu0 0.0
        %5912 = vmatpush.msra.mxu0 0.0
        %5913 = vmatpush.msra.mxu0 0.0
        %5914 = vmatpush.msra.mxu0 0.0
        %5915 = vmatpush.msra.mxu0 0.0
        %5916 = vmatpush.msra.mxu0 0.0
        %5917 = vmatpush.msra.mxu0 0.0
        %5918 = vmatpush.msra.mxu0 0.0
        %5919 = vmatpush.msra.mxu0 0.0
        %5920 = vmatpush.msra.mxu0 0.0
        %5921 = vmatpush.msra.mxu0 %v5902
        %5922 = vmatpush.msra.mxu0 %v5901
        %5923 = vmatmul.f32.gmra.mxu0 %v5905
        %v5924 = vpop.f32.mrf.mxu0
        %v5925 = vadd.f32 0.0, %v5924
        %5926 = vdwg.mxu0
        %v5927 = vadd.f32 %v5899, %v5925
        %s5928 = scalar_lea.vmem [#allocation11], 192
        %v5929 = vld [vmem:[%s5928] sm:$0xff]
        %v5930 = vld [vmem:[%s5928 + $0x8] sm:$0xff]
        %5931 = vrot.lane.b32.xlu0 %v5876, 64
        %v5932 = vpop.permute.xlu0 %5931
        %v5933 = vsel %vm5602, %v5932, 0
        %5935 = vmatpush.msra.mxu0 0.0
        %5936 = vmatpush.msra.mxu0 0.0
        %5937 = vmatpush.msra.mxu0 0.0
        %5938 = vmatpush.msra.mxu0 0.0
        %5939 = vmatpush.msra.mxu0 0.0
        %5940 = vmatpush.msra.mxu0 0.0
        %5941 = vmatpush.msra.mxu0 0.0
        %5942 = vmatpush.msra.mxu0 0.0
        %5943 = vmatpush.msra.mxu0 0.0
        %5944 = vmatpush.msra.mxu0 0.0
        %5945 = vmatpush.msra.mxu0 0.0
        %5946 = vmatpush.msra.mxu0 0.0
        %5947 = vmatpush.msra.mxu0 0.0
        %5948 = vmatpush.msra.mxu0 0.0
        %5949 = vmatpush.msra.mxu0 %v5930
        %5950 = vmatpush.msra.mxu0 %v5929
        %5951 = vmatmul.f32.gmra.mxu0 %v5933
        %v5952 = vpop.f32.mrf.mxu0
        %v5953 = vadd.f32 0.0, %v5952
        %5954 = vdwg.mxu0
        %v5955 = vadd.f32 %v5927, %v5953
        %s5956 = scalar_lea.vmem [#allocation11], 208
        %v5957 = vld [vmem:[%s5956] sm:$0xff]
        %v5958 = vld [vmem:[%s5956 + $0x8] sm:$0xff]
        %5959 = vrot.lane.b32.xlu0 %v5876, 32
        %v5960 = vpop.permute.xlu0 %5959
        %v5961 = vsel %vm5602, %v5960, 0
        %5963 = vmatpush.msra.mxu0 0.0
        %5964 = vmatpush.msra.mxu0 0.0
        %5965 = vmatpush.msra.mxu0 0.0
        %5966 = vmatpush.msra.mxu0 0.0
        %5967 = vmatpush.msra.mxu0 0.0
        %5968 = vmatpush.msra.mxu0 0.0
        %5969 = vmatpush.msra.mxu0 0.0
        %5970 = vmatpush.msra.mxu0 0.0
        %5971 = vmatpush.msra.mxu0 0.0
        %5972 = vmatpush.msra.mxu0 0.0
        %5973 = vmatpush.msra.mxu0 0.0
        %5974 = vmatpush.msra.mxu0 0.0
        %5975 = vmatpush.msra.mxu0 0.0
        %5976 = vmatpush.msra.mxu0 0.0
        %5977 = vmatpush.msra.mxu0 %v5958
        %5978 = vmatpush.msra.mxu0 %v5957
        %5979 = vmatmul.f32.gmra.mxu0 %v5961
        %v5980 = vpop.f32.mrf.mxu0
        %v5981 = vadd.f32 0.0, %v5980
        %5982 = vdwg.mxu0
        %v5983 = vadd.f32 %v5955, %v5981
        %s5984 = scalar_lea.vmem [#allocation11], 224
        %v5985 = vld [vmem:[%s5984] sm:$0xff]
        %v5986 = vld [vmem:[%s5984 + $0x8] sm:$0xff]
        %v5987 = vrot.slane %v5707, 4
        %v5988 = vsel %vm5602, %v5987, 0
        %5990 = vmatpush.msra.mxu0 0.0
        %5991 = vmatpush.msra.mxu0 0.0
        %5992 = vmatpush.msra.mxu0 0.0
        %5993 = vmatpush.msra.mxu0 0.0
        %5994 = vmatpush.msra.mxu0 0.0
        %5995 = vmatpush.msra.mxu0 0.0
        %5996 = vmatpush.msra.mxu0 0.0
        %5997 = vmatpush.msra.mxu0 0.0
        %5998 = vmatpush.msra.mxu0 0.0
        %5999 = vmatpush.msra.mxu0 0.0
        %6000 = vmatpush.msra.mxu0 0.0
        %6001 = vmatpush.msra.mxu0 0.0
        %6002 = vmatpush.msra.mxu0 0.0
        %6003 = vmatpush.msra.mxu0 0.0
        %6004 = vmatpush.msra.mxu0 %v5986
        %6005 = vmatpush.msra.mxu0 %v5985
        %6006 = vmatmul.f32.gmra.mxu0 %v5988
        %v6007 = vpop.f32.mrf.mxu0
        %v6008 = vadd.f32 0.0, %v6007
        %6009 = vdwg.mxu0
        %v6010 = vadd.f32 %v5983, %v6008
        %s6011 = scalar_lea.vmem [#allocation11], 240
        %v6012 = vld [vmem:[%s6011] sm:$0xff]
        %v6013 = vld [vmem:[%s6011 + $0x8] sm:$0xff]
        %v6014 = vrot.slane %v5593, 6
        %v6015 = vsel %vm5602, %v6014, 0
        %6017 = vmatpush.msra.mxu0 0.0
        %6018 = vmatpush.msra.mxu0 0.0
        %6019 = vmatpush.msra.mxu0 0.0
        %6020 = vmatpush.msra.mxu0 0.0
        %6021 = vmatpush.msra.mxu0 0.0
        %6022 = vmatpush.msra.mxu0 0.0
        %6023 = vmatpush.msra.mxu0 0.0
        %6024 = vmatpush.msra.mxu0 0.0
        %6025 = vmatpush.msra.mxu0 0.0
        %6026 = vmatpush.msra.mxu0 0.0
        %6027 = vmatpush.msra.mxu0 0.0
        %6028 = vmatpush.msra.mxu0 0.0
        %6029 = vmatpush.msra.mxu0 0.0
        %6030 = vmatpush.msra.mxu0 0.0
        %6031 = vmatpush.msra.mxu0 %v6013
        %6032 = vmatpush.msra.mxu0 %v6012
        %6033 = vmatmul.f32.gmra.mxu0 %v6015
        %v6034 = vpop.f32.mrf.mxu0
        %v6035 = vadd.f32 0.0, %v6034
        %6036 = vdwg.mxu0
        %v6037 = vadd.f32 %v6010, %v6035
        %s6038 = scalar_lea.vmem [#allocation11], 256
        %v6039 = vld [vmem:[%s6038] sm:$0xff]
        %v6040 = vld [vmem:[%s6038 + $0x8] sm:$0xff]
        %6041 = vrot.lane.b32.xlu0 %v6014, 96
        %v6042 = vpop.permute.xlu0 %6041
        %v6043 = vsel %vm5602, %v6042, 0
        %6045 = vmatpush.msra.mxu0 0.0
        %6046 = vmatpush.msra.mxu0 0.0
        %6047 = vmatpush.msra.mxu0 0.0
        %6048 = vmatpush.msra.mxu0 0.0
        %6049 = vmatpush.msra.mxu0 0.0
        %6050 = vmatpush.msra.mxu0 0.0
        %6051 = vmatpush.msra.mxu0 0.0
        %6052 = vmatpush.msra.mxu0 0.0
        %6053 = vmatpush.msra.mxu0 0.0
        %6054 = vmatpush.msra.mxu0 0.0
        %6055 = vmatpush.msra.mxu0 0.0
        %6056 = vmatpush.msra.mxu0 0.0
        %6057 = vmatpush.msra.mxu0 0.0
        %6058 = vmatpush.msra.mxu0 0.0
        %6059 = vmatpush.msra.mxu0 %v6040
        %6060 = vmatpush.msra.mxu0 %v6039
        %6061 = vmatmul.f32.gmra.mxu0 %v6043
        %v6062 = vpop.f32.mrf.mxu0
        %v6063 = vadd.f32 0.0, %v6062
        %6064 = vdwg.mxu0
        %v6065 = vadd.f32 %v6037, %v6063
        %s6066 = scalar_lea.vmem [#allocation11], 272
        %v6067 = vld [vmem:[%s6066] sm:$0xff]
        %v6068 = vld [vmem:[%s6066 + $0x8] sm:$0xff]
        %6069 = vrot.lane.b32.xlu0 %v6014, 64
        %v6070 = vpop.permute.xlu0 %6069
        %v6071 = vsel %vm5602, %v6070, 0
        %6073 = vmatpush.msra.mxu0 0.0
        %6074 = vmatpush.msra.mxu0 0.0
        %6075 = vmatpush.msra.mxu0 0.0
        %6076 = vmatpush.msra.mxu0 0.0
        %6077 = vmatpush.msra.mxu0 0.0
        %6078 = vmatpush.msra.mxu0 0.0
        %6079 = vmatpush.msra.mxu0 0.0
        %6080 = vmatpush.msra.mxu0 0.0
        %6081 = vmatpush.msra.mxu0 0.0
        %6082 = vmatpush.msra.mxu0 0.0
        %6083 = vmatpush.msra.mxu0 0.0
        %6084 = vmatpush.msra.mxu0 0.0
        %6085 = vmatpush.msra.mxu0 0.0
        %6086 = vmatpush.msra.mxu0 0.0
        %6087 = vmatpush.msra.mxu0 %v6068
        %6088 = vmatpush.msra.mxu0 %v6067
        %6089 = vmatmul.f32.gmra.mxu0 %v6071
        %v6090 = vpop.f32.mrf.mxu0
        %v6091 = vadd.f32 0.0, %v6090
        %6092 = vdwg.mxu0
        %v6093 = vadd.f32 %v6065, %v6091
        %s6094 = scalar_lea.vmem [#allocation11], 288
        %v6095 = vld [vmem:[%s6094] sm:$0xff]
        %v6096 = vld [vmem:[%s6094 + $0x8] sm:$0xff]
        %6097 = vrot.lane.b32.xlu0 %v6014, 32
        %v6098 = vpop.permute.xlu0 %6097
        %v6099 = vsel %vm5602, %v6098, 0
        %6101 = vmatpush.msra.mxu0 0.0
        %6102 = vmatpush.msra.mxu0 0.0
        %6103 = vmatpush.msra.mxu0 0.0
        %6104 = vmatpush.msra.mxu0 0.0
        %6105 = vmatpush.msra.mxu0 0.0
        %6106 = vmatpush.msra.mxu0 0.0
        %6107 = vmatpush.msra.mxu0 0.0
        %6108 = vmatpush.msra.mxu0 0.0
        %6109 = vmatpush.msra.mxu0 0.0
        %6110 = vmatpush.msra.mxu0 0.0
        %6111 = vmatpush.msra.mxu0 0.0
        %6112 = vmatpush.msra.mxu0 0.0
        %6113 = vmatpush.msra.mxu0 0.0
        %6114 = vmatpush.msra.mxu0 0.0
        %6115 = vmatpush.msra.mxu0 %v6096
        %6116 = vmatpush.msra.mxu0 %v6095
        %6117 = vmatmul.f32.gmra.mxu0 %v6099
        %v6118 = vpop.f32.mrf.mxu0
        %v6119 = vadd.f32 0.0, %v6118
        %6120 = vdwg.mxu0
        %v6121 = vadd.f32 %v6093, %v6119
        %s6122 = scalar_lea.vmem [#allocation11], 304
        %v6123 = vld [vmem:[%s6122] sm:$0xff]
        %v6124 = vld [vmem:[%s6122 + $0x8] sm:$0xff]
        %v6125 = vrot.slane %v5707, 6
        %v6126 = vsel %vm5602, %v6125, 0
        %6128 = vmatpush.msra.mxu0 0.0
        %6129 = vmatpush.msra.mxu0 0.0
        %6130 = vmatpush.msra.mxu0 0.0
        %6131 = vmatpush.msra.mxu0 0.0
        %6132 = vmatpush.msra.mxu0 0.0
        %6133 = vmatpush.msra.mxu0 0.0
        %6134 = vmatpush.msra.mxu0 0.0
        %6135 = vmatpush.msra.mxu0 0.0
        %6136 = vmatpush.msra.mxu0 0.0
        %6137 = vmatpush.msra.mxu0 0.0
        %6138 = vmatpush.msra.mxu0 0.0
        %6139 = vmatpush.msra.mxu0 0.0
        %6140 = vmatpush.msra.mxu0 0.0
        %6141 = vmatpush.msra.mxu0 0.0
        %6142 = vmatpush.msra.mxu0 %v6124
        %6143 = vmatpush.msra.mxu0 %v6123
        %6144 = vmatmul.f32.gmra.mxu0 %v6126
        %v6145 = vpop.f32.mrf.mxu0
        %v6146 = vadd.f32 0.0, %v6145
        %6147 = vdwg.mxu0
        %v6148 = vadd.f32 %v6121, %v6146
        %v6151 = vrot.slane %v5579, 1
        %v6152 = vrot.slane %v5580, 1
        %v6155 = vmax.f32 %v5579, %v6151
        %v6156 = vmax.f32 %v5580, %v6152
        %6158 = vrot.lane.b32.xlu0 %v6155, 112
        %v6159 = vpop.permute.xlu0 %6158
        %v6161 = vmax.f32 %v6155, %v6159
        %s6162 = scalar_lea.vmem [#allocation11], 320
        %v6163 = vld [vmem:[%s6162] sm:$0xff]
        %v6164 = vld [vmem:[%s6162 + $0x8] sm:$0xff]
        %v6166 = vsel %vm5602, %v6161, 0
        %6168 = vmatpush.msra.mxu0 0.0
        %6169 = vmatpush.msra.mxu0 0.0
        %6170 = vmatpush.msra.mxu0 0.0
        %6171 = vmatpush.msra.mxu0 0.0
        %6172 = vmatpush.msra.mxu0 0.0
        %6173 = vmatpush.msra.mxu0 0.0
        %6174 = vmatpush.msra.mxu0 0.0
        %6175 = vmatpush.msra.mxu0 0.0
        %6176 = vmatpush.msra.mxu0 0.0
        %6177 = vmatpush.msra.mxu0 0.0
        %6178 = vmatpush.msra.mxu0 0.0
        %6179 = vmatpush.msra.mxu0 0.0
        %6180 = vmatpush.msra.mxu0 0.0
        %6181 = vmatpush.msra.mxu0 0.0
        %6182 = vmatpush.msra.mxu0 %v6164
        %6183 = vmatpush.msra.mxu0 %v6163
        %6184 = vmatmul.f32.gmra.mxu0 %v6166
        %v6185 = vpop.f32.mrf.mxu0
        %v6186 = vadd.f32 0.0, %v6185
        %6187 = vdwg.mxu0
        %v6188 = vadd.f32 %v6148, %v6186
        %s6189 = scalar_lea.vmem [#allocation11], 336
        %v6190 = vld [vmem:[%s6189] sm:$0xff]
        %v6191 = vld [vmem:[%s6189 + $0x8] sm:$0xff]
        %6192 = vrot.lane.b32.xlu0 %v6161, 96
        %v6193 = vpop.permute.xlu0 %6192
        %v6194 = vsel %vm5602, %v6193, 0
        %6196 = vmatpush.msra.mxu0 0.0
        %6197 = vmatpush.msra.mxu0 0.0
        %6198 = vmatpush.msra.mxu0 0.0
        %6199 = vmatpush.msra.mxu0 0.0
        %6200 = vmatpush.msra.mxu0 0.0
        %6201 = vmatpush.msra.mxu0 0.0
        %6202 = vmatpush.msra.mxu0 0.0
        %6203 = vmatpush.msra.mxu0 0.0
        %6204 = vmatpush.msra.mxu0 0.0
        %6205 = vmatpush.msra.mxu0 0.0
        %6206 = vmatpush.msra.mxu0 0.0
        %6207 = vmatpush.msra.mxu0 0.0
        %6208 = vmatpush.msra.mxu0 0.0
        %6209 = vmatpush.msra.mxu0 0.0
        %6210 = vmatpush.msra.mxu0 %v6191
        %6211 = vmatpush.msra.mxu0 %v6190
        %6212 = vmatmul.f32.gmra.mxu0 %v6194
        %v6213 = vpop.f32.mrf.mxu0
        %v6214 = vadd.f32 0.0, %v6213
        %6215 = vdwg.mxu0
        %v6216 = vadd.f32 %v6188, %v6214
        %s6217 = scalar_lea.vmem [#allocation11], 352
        %v6218 = vld [vmem:[%s6217] sm:$0xff]
        %v6219 = vld [vmem:[%s6217 + $0x8] sm:$0xff]
        %6220 = vrot.lane.b32.xlu0 %v6161, 64
        %v6221 = vpop.permute.xlu0 %6220
        %v6222 = vsel %vm5602, %v6221, 0
        %6224 = vmatpush.msra.mxu0 0.0
        %6225 = vmatpush.msra.mxu0 0.0
        %6226 = vmatpush.msra.mxu0 0.0
        %6227 = vmatpush.msra.mxu0 0.0
        %6228 = vmatpush.msra.mxu0 0.0
        %6229 = vmatpush.msra.mxu0 0.0
        %6230 = vmatpush.msra.mxu0 0.0
        %6231 = vmatpush.msra.mxu0 0.0
        %6232 = vmatpush.msra.mxu0 0.0
        %6233 = vmatpush.msra.mxu0 0.0
        %6234 = vmatpush.msra.mxu0 0.0
        %6235 = vmatpush.msra.mxu0 0.0
        %6236 = vmatpush.msra.mxu0 0.0
        %6237 = vmatpush.msra.mxu0 0.0
        %6238 = vmatpush.msra.mxu0 %v6219
        %6239 = vmatpush.msra.mxu0 %v6218
        %6240 = vmatmul.f32.gmra.mxu0 %v6222
        %v6241 = vpop.f32.mrf.mxu0
        %v6242 = vadd.f32 0.0, %v6241
        %6243 = vdwg.mxu0
        %v6244 = vadd.f32 %v6216, %v6242
        %s6245 = scalar_lea.vmem [#allocation11], 368
        %v6246 = vld [vmem:[%s6245] sm:$0xff]
        %v6247 = vld [vmem:[%s6245 + $0x8] sm:$0xff]
        %6248 = vrot.lane.b32.xlu0 %v6161, 32
        %v6249 = vpop.permute.xlu0 %6248
        %v6250 = vsel %vm5602, %v6249, 0
        %6252 = vmatpush.msra.mxu0 0.0
        %6253 = vmatpush.msra.mxu0 0.0
        %6254 = vmatpush.msra.mxu0 0.0
        %6255 = vmatpush.msra.mxu0 0.0
        %6256 = vmatpush.msra.mxu0 0.0
        %6257 = vmatpush.msra.mxu0 0.0
        %6258 = vmatpush.msra.mxu0 0.0
        %6259 = vmatpush.msra.mxu0 0.0
        %6260 = vmatpush.msra.mxu0 0.0
        %6261 = vmatpush.msra.mxu0 0.0
        %6262 = vmatpush.msra.mxu0 0.0
        %6263 = vmatpush.msra.mxu0 0.0
        %6264 = vmatpush.msra.mxu0 0.0
        %6265 = vmatpush.msra.mxu0 0.0
        %6266 = vmatpush.msra.mxu0 %v6247
        %6267 = vmatpush.msra.mxu0 %v6246
        %6268 = vmatmul.f32.gmra.mxu0 %v6250
        %v6269 = vpop.f32.mrf.mxu0
        %v6270 = vadd.f32 0.0, %v6269
        %6271 = vdwg.mxu0
        %v6272 = vadd.f32 %v6244, %v6270
        %6274 = vrot.lane.b32.xlu0 %v6156, 112
        %v6275 = vpop.permute.xlu0 %6274
        %v6277 = vmax.f32 %v6156, %v6275
        %s6278 = scalar_lea.vmem [#allocation11], 384
        %v6279 = vld [vmem:[%s6278] sm:$0xff]
        %v6280 = vld [vmem:[%s6278 + $0x8] sm:$0xff]
        %v6282 = vsel %vm5602, %v6277, 0
        %6284 = vmatpush.msra.mxu0 0.0
        %6285 = vmatpush.msra.mxu0 0.0
        %6286 = vmatpush.msra.mxu0 0.0
        %6287 = vmatpush.msra.mxu0 0.0
        %6288 = vmatpush.msra.mxu0 0.0
        %6289 = vmatpush.msra.mxu0 0.0
        %6290 = vmatpush.msra.mxu0 0.0
        %6291 = vmatpush.msra.mxu0 0.0
        %6292 = vmatpush.msra.mxu0 0.0
        %6293 = vmatpush.msra.mxu0 0.0
        %6294 = vmatpush.msra.mxu0 0.0
        %6295 = vmatpush.msra.mxu0 0.0
        %6296 = vmatpush.msra.mxu0 0.0
        %6297 = vmatpush.msra.mxu0 0.0
        %6298 = vmatpush.msra.mxu0 %v6280
        %6299 = vmatpush.msra.mxu0 %v6279
        %6300 = vmatmul.f32.gmra.mxu0 %v6282
        %v6301 = vpop.f32.mrf.mxu0
        %v6302 = vadd.f32 0.0, %v6301
        %6303 = vdwg.mxu0
        %v6304 = vadd.f32 %v6272, %v6302
        %v6305 = vld [vmem:[#allocation13] sm:$0x1]
        %v6306 = vadd.f32 %v6304, %v6305
        %v6307 = vmax.f32 %v6306, 0.0
        %v6308 = vld [vmem:[#allocation14] sm:$0xff]
        %v6309 = vld [vmem:[#allocation14 + $0x8] sm:$0xff]
        %v6310 = vld [vmem:[#allocation14 + $0x10] sm:$0xff]
        %v6311 = vld [vmem:[#allocation14 + $0x18] sm:$0xff]
        %v6312 = vld [vmem:[#allocation14 + $0x20] sm:$0xff]
        %v6313 = vld [vmem:[#allocation14 + $0x28] sm:$0xff]
        %v6314 = vld [vmem:[#allocation14 + $0x30] sm:$0xff]
        %v6315 = vld [vmem:[#allocation14 + $0x38] sm:$0xff]
        %v6316 = vld [vmem:[#allocation14 + $0x40] sm:$0xff]
        %v6317 = vld [vmem:[#allocation14 + $0x48] sm:$0xff]
        %v6318 = vld [vmem:[#allocation14 + $0x50] sm:$0xff]
        %v6319 = vld [vmem:[#allocation14 + $0x58] sm:$0xff]
        %v6320 = vld [vmem:[#allocation14 + $0x60] sm:$0xff]
        %v6321 = vld [vmem:[#allocation14 + $0x68] sm:$0xff]
        %v6322 = vld [vmem:[#allocation14 + $0x70] sm:$0xff]
        %v6323 = vld [vmem:[#allocation14 + $0x78] sm:$0xff]
        %v6324 = vld [vmem:[#allocation16] sm:$0x1]
        %6325 = vmatpush.msra.mxu0 %v6323
        %6326 = vmatpush.msra.mxu0 %v6322
        %6327 = vmatpush.msra.mxu0 %v6321
        %6328 = vmatpush.msra.mxu0 %v6320
        %6329 = vmatpush.msra.mxu0 %v6319
        %6330 = vmatpush.msra.mxu0 %v6318
        %6331 = vmatpush.msra.mxu0 %v6317
        %6332 = vmatpush.msra.mxu0 %v6316
        %6333 = vmatpush.msra.mxu0 %v6315
        %6334 = vmatpush.msra.mxu0 %v6314
        %6335 = vmatpush.msra.mxu0 %v6313
        %6336 = vmatpush.msra.mxu0 %v6312
        %6337 = vmatpush.msra.mxu0 %v6311
        %6338 = vmatpush.msra.mxu0 %v6310
        %6339 = vmatpush.msra.mxu0 %v6309
        %6340 = vmatpush.msra.mxu0 %v6308
        %6341 = vmatmul.f32.gmra.mxu0 %v6307
        %v6342 = vpop.f32.mrf.mxu0
        %v6343 = vadd.f32 %v6324, %v6342
        %6344 = vdwg.mxu0
        %v6345 = vmax.f32 %v6343, 0.0
        %v6346 = vld [vmem:[#allocation17] sm:$0xff]
        %v6347 = vld [vmem:[#allocation17 + $0x8] sm:$0xff]
        %v6348 = vld [vmem:[#allocation17 + $0x10] sm:$0xff]
        %v6349 = vld [vmem:[#allocation17 + $0x18] sm:$0xff]
        %v6350 = vld [vmem:[#allocation17 + $0x20] sm:$0xff]
        %v6351 = vld [vmem:[#allocation17 + $0x28] sm:$0xff]
        %v6352 = vld [vmem:[#allocation17 + $0x30] sm:$0xff]
        %v6353 = vld [vmem:[#allocation17 + $0x38] sm:$0xff]
        %v6354 = vld [vmem:[#allocation17 + $0x40] sm:$0xff]
        %v6355 = vld [vmem:[#allocation17 + $0x48] sm:$0xff]
        %v6356 = vld [vmem:[#allocation17 + $0x50] sm:$0xff]
        %v6357 = vld [vmem:[#allocation17 + $0x58] sm:$0xff]
        %v6358 = vld [vmem:[#allocation17 + $0x60] sm:$0xff]
        %v6359 = vld [vmem:[#allocation17 + $0x68] sm:$0xff]
        %v6360 = vld [vmem:[#allocation17 + $0x70] sm:$0xff]
        %v6361 = vld [vmem:[#allocation17 + $0x78] sm:$0xff]
        %v6362 = vld [vmem:[#allocation19] sm:$0x1]
        %6363 = vmatpush.msra.mxu0 %v6361
        %6364 = vmatpush.msra.mxu0 %v6360
        %6365 = vmatpush.msra.mxu0 %v6359
        %6366 = vmatpush.msra.mxu0 %v6358
        %6367 = vmatpush.msra.mxu0 %v6357
        %6368 = vmatpush.msra.mxu0 %v6356
        %6369 = vmatpush.msra.mxu0 %v6355
        %6370 = vmatpush.msra.mxu0 %v6354
        %6371 = vmatpush.msra.mxu0 %v6353
        %6372 = vmatpush.msra.mxu0 %v6352
        %6373 = vmatpush.msra.mxu0 %v6351
        %6374 = vmatpush.msra.mxu0 %v6350
        %6375 = vmatpush.msra.mxu0 %v6349
        %6376 = vmatpush.msra.mxu0 %v6348
        %6377 = vmatpush.msra.mxu0 %v6347
        %6378 = vmatpush.msra.mxu0 %v6346
        %6379 = vmatmul.f32.gmra.mxu0 %v6345
        %v6380 = vpop.f32.mrf.mxu0
        %v6381 = vadd.f32 %v6362, %v6380
        %6382 = vdwg.mxu0
        %6383 = vst [vmem:[%s560] sm:$0x1] %v6381
        %s6384 = sand.u32 %s277, 1
        %s6385 = scalar_lea.sflag [#allocation4], %s6384
        %s6386 = sand.u32 %s277, 1
        %s6387 = scalar_lea.vmem [#allocation20], %s6386
        // Predicated region
        $region109: #{tpu_custom_call.1} parent=63 // pred_check
          %p6388 = pneg %p287
        $region110: #{tpu_custom_call.1} parent=63 // pred_check_branch
          %6390 = sbr.rel (%p6388) target = $region112
        $region111: #{tpu_custom_call.1} parent=63 // pred_region
          %6392 = vsyncadd %s6385, 0
          %s6393 = scalar_lea.hbm %s11, %s33
          %s6395 = sshll.u32 %s6387, 4
          %s6396 = int_to_ptr.vmem [resolvable:$true] %s6395
          %s6397 = sshll.u32 %s6393, 4
          %s6398 = int_to_ptr.hbm [resolvable:$true] %s6397
          %6400 = dma.vmem_to_hbm [thread:$0]  %s6396, 16, %s6398, %s6385
        $region112: #{tpu_custom_call.1} parent=63 // pred_fallthru
          _
      $region64: #{tpu_custom_call.1} parent=5 // pred_fallthru
        _
      %p6401 = scmp.le.s32.totalorder 2, %s28
      // Predicated region
      $region113: #{tpu_custom_call.1} parent=5 // pred_check
        %p6402 = pneg %p6401
      $region114: #{tpu_custom_call.1} parent=5 // pred_check_branch
        %6404 = sbr.rel (%p6402) target = $region116
      $region115: #{tpu_custom_call.1} parent=5 // pred_region
        %s6405 = ssub.s32 %s28, 2
        // Predicated region
        $region117: #{tpu_custom_call.1} parent=115 // pred_check
          %p6406 = pneg %p293
        $region118: #{tpu_custom_call.1} parent=115 // pred_check_branch
          %6408 = sbr.rel (%p6406) target = $region120
        $region119: #{tpu_custom_call.1} parent=115 // pred_region
          %s6409 = sand.u32 %s278, 1
          %s6410 = scalar_lea.sflag [#allocation4], %s6409
          %s6411 = sand.u32 %s278, 1
          %s6412 = scalar_lea.vmem [#allocation20], %s6411
          %6414 = dma.done %s6410, 16
        $region120: #{tpu_custom_call.1} parent=115 // pred_fallthru
          _
      $region116: #{tpu_custom_call.1} parent=5 // pred_fallthru
        _
    $region6: #{tpu_custom_call.1} parent=1 // loop_footer
      %s32 = sadd.s32 1, %s28
    $region7: #{tpu_custom_call.1} parent=1 // loop_footer_branch
      %27 = sbr.rel target = $region3
    $region8: #{tpu_custom_call.1} parent=1 // loop_exit
      _
    %6415 = vsyncpa [#allocation3], 1
    %s6416 = scalar_lea.sflag [#allocation3], 1
    %6417 = vsyncpa %s6416, 1
    %6418 = vsyncpa [#allocation6], 1
    %6419 = vsyncpa [#allocation9], 1
    %6420 = vsyncpa [#allocation12], 1
    %6421 = vsyncpa [#allocation15], 1
    %6422 = vsyncpa [#allocation18], 1
    %6423 = vsyncpa [#allocation4], 1
    %s6424 = scalar_lea.sflag [#allocation4], 1
    %6425 = vsyncpa %s6424, 1

</llo_original>
